<compile_context>
chip_gen: v7x
topology: tpu7x:2x2x1
jax: 0.10.0
libtpu: 0.0.40
codegen_flags: <defaults>
</compile_context>

<pallas_src>
import jax
import jax.numpy as jnp
from jax import lax
from jax.experimental import pallas as pl
from jax.experimental.pallas import tpu as pltpu

LANE = 128


def _zero_halo(ref, H, W):
    """Zero only the 1-pixel halo border of a (H+2, W+2, C) scratch plane."""
    C = ref.shape[2]
    zrow = jnp.zeros((1, W + 2, C), ref.dtype)
    ref[0:1, :, :] = zrow
    ref[H + 1:H + 2, :, :] = zrow
    zcol = jnp.zeros((H, 1, C), ref.dtype)
    ref[1:H + 1, 0:1, :] = zcol
    ref[1:H + 1, W + 1:W + 2, :] = zcol


def _conv3x3_bn_relu(src_ref, w_ref, b_ref, H, W):
    """One fused conv3x3 (+ folded-BN shift + ReLU) stage.

    src_ref: (H+2, W+2, C)   zero-halo padded source, bf16 VMEM
    w_ref:   (3, 3, C, Co)   weights ordered (kx, ky, cin, cout), BN scale folded
    b_ref:   (1, Co)         BN shift (f32)
    returns: (H*W, Co)       f32, post-ReLU
    """
    C = src_ref.shape[2]
    Co = w_ref.shape[3]
    acc = jnp.zeros((H * W, Co), jnp.float32)
    for dx in range(3):
        # One sublane-shifted load per kx (instead of 9 shifted tap loads).
        shifted = src_ref[:, dx:dx + W, :]                       # (H+2, W, C)
        # The 3 ky taps are cheap leading-axis slices of that load.
        taps = [shifted[dy:dy + H].reshape(H * W, C) for dy in range(3)]
        if C % LANE == 0:
            # Lane-aligned channels: fuse the 3 ky taps into one 3*C-deep MXU
            # contraction (keeps depth >= 384 for real channel counts).
            group = jnp.concatenate(taps, axis=-1)               # (H*W, 3C)
            acc = acc + jnp.dot(group, w_ref[dx].reshape(3 * C, Co),
                                preferred_element_type=jnp.float32)
        else:
            # Tiny / unaligned channel counts: contract over the real channels
            # only -- no zero padding, no patch materialization.
            for dy in range(3):
                acc = acc + jnp.dot(taps[dy], w_ref[dx, dy],
                                    preferred_element_type=jnp.float32)
    # BN scale is already folded into w; apply shift + ReLU.
    return jnp.maximum(acc + b_ref[...], 0.0)


def fused_double_conv_kernel(x_ref, w1_ref, b1_ref, w2_ref, b2_ref, o_ref,
                             xpad_ref, y1pad_ref):
    """Fused (conv3x3 + BN + ReLU) x 2 for one batch element.

    x_ref:     (1, H, W, Cin)        bf16 input
    w1_ref:    (3, 3, Cin, Cmid)     bf16, BN1 scale folded
    b1_ref:    (1, Cmid)             f32 BN1 shift
    w2_ref:    (3, 3, Cmid, Cout)    bf16, BN2 scale folded
    b2_ref:    (1, Cout)             f32 BN2 shift
    o_ref:     (1, H, W, Cout)       f32 output (unpadded channels)
    xpad_ref:  (H+2, W+2, Cin)       bf16 VMEM scratch (padded input)
    y1pad_ref: (H+2, W+2, Cmid)      bf16 VMEM scratch (padded stage-1 act)
    """
    H, W = o_ref.shape[1], o_ref.shape[2]
    Cmid = y1pad_ref.shape[2]
    Cout = o_ref.shape[3]

    # Thin halo clears every step (cheap, megacore-safe); interiors below.
    _zero_halo(xpad_ref, H, W)
    _zero_halo(y1pad_ref, H, W)

    # ---- stage 1 -----------------------------------------------------------
    xpad_ref[1:H + 1, 1:W + 1, :] = x_ref[0]
    y1 = _conv3x3_bn_relu(xpad_ref, w1_ref, b1_ref, H, W)        # (H*W, Cmid) f32

    # ---- stage 2: stage-1 activation stays in VMEM (no HBM round trip) -----
    y1pad_ref[1:H + 1, 1:W + 1, :] = (
        y1.reshape(H, W, Cmid).astype(y1pad_ref.dtype))
    y2 = _conv3x3_bn_relu(y1pad_ref, w2_ref, b2_ref, H, W)       # (H*W, Cout) f32

    o_ref[0] = y2.reshape(H, W, Cout).astype(o_ref.dtype)


def fold_bn(gamma, beta, running_mean, running_var, eps=1e-5):
    scale = gamma / jnp.sqrt(running_var + eps)
    shift = beta - running_mean * scale
    return scale, shift


def prep_weights(w_oihw, bn_scale):
    """(Cout, Cin, 3, 3) torch OIHW -> (kx, ky, Cin, Cout) bf16 with the BN
    scale folded into the output channels.  Grouped by kx so the kernel does
    one sublane-shifted load per kx and contracts over (ky, cin)."""
    w = jnp.transpose(w_oihw, (3, 2, 1, 0))                # (kx, ky, Cin, Cout)
    w = w * bn_scale[None, None, None, :]
    return w.astype(jnp.bfloat16)


def prep_shift(shift):
    return shift.reshape(1, -1).astype(jnp.float32)


def _vmem_limit_bytes():
    # Per review: never claim the full physical VMEM (v7x only has 64 MiB/TC);
    # leave ~15% headroom for compiler scratch / double buffering.
    try:
        return int(pltpu.get_tpu_info().vmem_capacity_bytes * 0.85)
    except Exception:
        return None   # fall back to the compiler default


def double_conv(x_nchw, params):
    """DoubleConv forward. x_nchw: (N, Cin, H, W) f32. Returns (N, Cout, H, W) f32."""
    # NCHW -> NHWC fused with the bf16 cast: one pass, half the HBM input bytes.
    x = jnp.transpose(x_nchw, (0, 2, 3, 1)).astype(jnp.bfloat16)
    N, H, W, Cin = x.shape
    Cmid = params["conv1_w"].shape[0]
    Cout = params["conv2_w"].shape[0]

    s1, b1 = fold_bn(params["bn1_gamma"], params["bn1_beta"],
                     params["bn1_mean"], params["bn1_var"])
    s2, b2 = fold_bn(params["bn2_gamma"], params["bn2_beta"],
                     params["bn2_mean"], params["bn2_var"])
    w1 = prep_weights(params["conv1_w"], s1)               # (3, 3, Cin,  Cmid)
    w2 = prep_weights(params["conv2_w"], s2)               # (3, 3, Cmid, Cout)
    b1p = prep_shift(b1)                                   # (1, Cmid)
    b2p = prep_shift(b2)                                   # (1, Cout)

    # TODO(synk): for large planes on v7x (64 MiB VMEM/TC) this whole-plane-per
    # batch grid should be row-tiled (grid=(N, H//TH), TH-row blocks + 1-row
    # halo recompute) so scratch and double-buffered blocks fit; at these
    # shapes one plane per step is far below the limit and N>=2 already feeds
    # both TensorCores via the 'parallel' batch axis.
    out = pl.pallas_call(
        fused_double_conv_kernel,
        out_shape=jax.ShapeDtypeStruct((N, H, W, Cout), jnp.float32),
        grid_spec=pltpu.PrefetchScalarGridSpec(
            num_scalar_prefetch=0,
            grid=(N,),
            in_specs=[
                pl.BlockSpec((1, H, W, Cin), lambda n: (n, 0, 0, 0)),
                # Weight blocks never change across the grid -> single buffer.
                pl.BlockSpec((3, 3, Cin, Cmid), lambda n: (0, 0, 0, 0),
                             pipeline_mode=pl.Buffered(1)),
                pl.BlockSpec((1, Cmid), lambda n: (0, 0)),
                pl.BlockSpec((3, 3, Cmid, Cout), lambda n: (0, 0, 0, 0),
                             pipeline_mode=pl.Buffered(1)),
                pl.BlockSpec((1, Cout), lambda n: (0, 0)),
            ],
            out_specs=pl.BlockSpec((1, H, W, Cout), lambda n: (n, 0, 0, 0)),
            scratch_shapes=[
                pltpu.VMEM((H + 2, W + 2, Cin), jnp.bfloat16),
                pltpu.VMEM((H + 2, W + 2, Cmid), jnp.bfloat16),
            ],
        ),
        compiler_params=pltpu.CompilerParams(
            dimension_semantics=("parallel",),
            vmem_limit_bytes=_vmem_limit_bytes(),
        ),
    )(x, w1, b1p, w2, b2p)

    # Exact-size NHWC -> NCHW (no padded-channel slice: kernel output is
    # already unpadded).
    return jnp.transpose(out, (0, 3, 1, 2))


def reference_double_conv(x_nchw, params):
    """Pure-JAX reference (lax conv, NCHW, f32) for correctness checking."""
    def stage(x, w, gamma, beta, mean, var):
        y = lax.conv_general_dilated(
            x, w, window_strides=(1, 1), padding=((1, 1), (1, 1)),
            dimension_numbers=("NCHW", "OIHW", "NCHW"))
        scale = gamma / jnp.sqrt(var + 1e-5)
        shift = beta - mean * scale
        y = y * scale[None, :, None, None] + shift[None, :, None, None]
        return jnp.maximum(y, 0.0)

    y = stage(x_nchw, params["conv1_w"], params["bn1_gamma"],
              params["bn1_beta"], params["bn1_mean"], params["bn1_var"])
    y = stage(y, params["conv2_w"], params["bn2_gamma"],
              params["bn2_beta"], params["bn2_mean"], params["bn2_var"])
    return y


def make_params(key, in_channels, out_channels):
    ks = jax.random.split(key, 10)
    return {
        "conv1_w": 0.1 * jax.random.normal(
            ks[0], (out_channels, in_channels, 3, 3), jnp.float32),
        "bn1_gamma": 1.0 + 0.1 * jax.random.normal(
            ks[1], (out_channels,), jnp.float32),
        "bn1_beta": 0.1 * jax.random.normal(
            ks[2], (out_channels,), jnp.float32),
        "bn1_mean": 0.1 * jax.random.normal(
            ks[3], (out_channels,), jnp.float32),
        "bn1_var": jnp.abs(jax.random.normal(
            ks[4], (out_channels,), jnp.float32)) + 0.5,
        "conv2_w": 0.1 * jax.random.normal(
            ks[5], (out_channels, out_channels, 3, 3), jnp.float32),
        "bn2_gamma": 1.0 + 0.1 * jax.random.normal(
            ks[6], (out_channels,), jnp.float32),
        "bn2_beta": 0.1 * jax.random.normal(
            ks[7], (out_channels,), jnp.float32),
        "bn2_mean": 0.1 * jax.random.normal(
            ks[8], (out_channels,), jnp.float32),
        "bn2_var": jnp.abs(jax.random.normal(
            ks[9], (out_channels,), jnp.float32)) + 0.5,
    }


if __name__ == "__main__":
    key = jax.random.PRNGKey(0)
    k_x, k_p = jax.random.split(key)

    N, C_IN, C_OUT, H, W = 2, 4, 8, 16, 16
    x = jax.random.normal(k_x, (N, C_IN, H, W), jnp.float32)   # NCHW, like torch
    params = make_params(k_p, C_IN, C_OUT)

    out = jax.jit(double_conv)(x, params)
    out = jax.block_until_ready(out)

    ref = reference_double_conv(x, params)
    assert out.shape == (N, C_OUT, H, W)
    # bf16 MXU operands (f32 accumulation) -> loosened tolerance vs f32 reference.
    assert jnp.allclose(out, ref, atol=5e-2, rtol=5e-2), "mismatch vs reference"

    print("KERNEL_OK")
</pallas_src>

<mosaic_0001>
module attributes {stable_mosaic.version = 11 : i64} {
  func.func @fused_double_conv_kernel(%arg0: i32, %arg1: memref<1x16x16x4xbf16, #tpu.memory_space<vmem>>, %arg2: memref<3x3x4x8xbf16, #tpu.memory_space<vmem>>, %arg3: memref<1x8xf32, #tpu.memory_space<vmem>>, %arg4: memref<3x3x8x8xbf16, #tpu.memory_space<vmem>>, %arg5: memref<1x8xf32, #tpu.memory_space<vmem>>, %arg6: memref<1x16x16x8xf32, #tpu.memory_space<vmem>>, %arg7: memref<18x18x4xbf16, #tpu.memory_space<vmem>>, %arg8: memref<18x18x8xbf16, #tpu.memory_space<vmem>>) attributes {dimension_semantics = [#tpu.dimension_semantics<parallel>], iteration_bounds = array<i64: 2>, scalar_prefetch = 0 : i64, scratch_operands = 2 : i64, tpu.core_type = #tpu.core_type<tc>, window_params = [{transform_indices = @transform_0, window_bounds = array<i64: 1, 16, 16, 4>}, {pipeline_mode = #tpu.pipeline_mode<synchronous>, transform_indices = @transform_1, window_bounds = array<i64: 3, 3, 4, 8>}, {pipeline_mode = #tpu.pipeline_mode<synchronous>, transform_indices = @transform_2, window_bounds = array<i64: 1, 8>}, {pipeline_mode = #tpu.pipeline_mode<synchronous>, transform_indices = @transform_3, window_bounds = array<i64: 3, 3, 8, 8>}, {pipeline_mode = #tpu.pipeline_mode<synchronous>, transform_indices = @transform_4, window_bounds = array<i64: 1, 8>}, {transform_indices = @transform_5, window_bounds = array<i64: 1, 16, 16, 8>}]} {
    %cst = arith.constant 0.000000e+00 : bf16
    %0 = vector.broadcast %cst : bf16 to vector<1x18x4xbf16>
    %c0 = arith.constant 0 : index
    %c0_0 = arith.constant 0 : index
    %c0_1 = arith.constant 0 : index
    %1 = vector.load %arg7[%c0, %c0_0, %c0_1] : memref<18x18x4xbf16, #tpu.memory_space<vmem>>, vector<1x18x4xbf16>
    tpu.vector_store %arg7[%c0, %c0_0, %c0_1], %0 {strides = array<i32>} : memref<18x18x4xbf16, #tpu.memory_space<vmem>>, vector<1x18x4xbf16>,
    %c17 = arith.constant 17 : index
    %c0_2 = arith.constant 0 : index
    %c0_3 = arith.constant 0 : index
    %2 = vector.load %arg7[%c17, %c0_2, %c0_3] : memref<18x18x4xbf16, #tpu.memory_space<vmem>>, vector<1x18x4xbf16>
    tpu.vector_store %arg7[%c17, %c0_2, %c0_3], %0 {strides = array<i32>} : memref<18x18x4xbf16, #tpu.memory_space<vmem>>, vector<1x18x4xbf16>,
    %cst_4 = arith.constant 0.000000e+00 : bf16
    %3 = vector.broadcast %cst_4 : bf16 to vector<16x1x4xbf16>
    %c1 = arith.constant 1 : index
    %c0_5 = arith.constant 0 : index
    %c0_6 = arith.constant 0 : index
    %4 = vector.load %arg7[%c1, %c0_5, %c0_6] : memref<18x18x4xbf16, #tpu.memory_space<vmem>>, vector<16x1x4xbf16>
    tpu.vector_store %arg7[%c1, %c0_5, %c0_6], %3 {strides = array<i32>} : memref<18x18x4xbf16, #tpu.memory_space<vmem>>, vector<16x1x4xbf16>,
    %c1_7 = arith.constant 1 : index
    %c17_8 = arith.constant 17 : index
    %c0_9 = arith.constant 0 : index
    %5 = vector.load %arg7[%c1_7, %c17_8, %c0_9] : memref<18x18x4xbf16, #tpu.memory_space<vmem>>, vector<16x1x4xbf16>
    tpu.vector_store %arg7[%c1_7, %c17_8, %c0_9], %3 {strides = array<i32>} : memref<18x18x4xbf16, #tpu.memory_space<vmem>>, vector<16x1x4xbf16>,
    %cst_10 = arith.constant 0.000000e+00 : bf16
    %6 = vector.broadcast %cst_10 : bf16 to vector<1x18x8xbf16>
    %c0_11 = arith.constant 0 : index
    %c0_12 = arith.constant 0 : index
    %c0_13 = arith.constant 0 : index
    %7 = vector.load %arg8[%c0_11, %c0_12, %c0_13] : memref<18x18x8xbf16, #tpu.memory_space<vmem>>, vector<1x18x8xbf16>
    tpu.vector_store %arg8[%c0_11, %c0_12, %c0_13], %6 {strides = array<i32>} : memref<18x18x8xbf16, #tpu.memory_space<vmem>>, vector<1x18x8xbf16>,
    %c17_14 = arith.constant 17 : index
    %c0_15 = arith.constant 0 : index
    %c0_16 = arith.constant 0 : index
    %8 = vector.load %arg8[%c17_14, %c0_15, %c0_16] : memref<18x18x8xbf16, #tpu.memory_space<vmem>>, vector<1x18x8xbf16>
    tpu.vector_store %arg8[%c17_14, %c0_15, %c0_16], %6 {strides = array<i32>} : memref<18x18x8xbf16, #tpu.memory_space<vmem>>, vector<1x18x8xbf16>,
    %cst_17 = arith.constant 0.000000e+00 : bf16
    %9 = vector.broadcast %cst_17 : bf16 to vector<16x1x8xbf16>
    %c1_18 = arith.constant 1 : index
    %c0_19 = arith.constant 0 : index
    %c0_20 = arith.constant 0 : index
    %10 = vector.load %arg8[%c1_18, %c0_19, %c0_20] : memref<18x18x8xbf16, #tpu.memory_space<vmem>>, vector<16x1x8xbf16>
    tpu.vector_store %arg8[%c1_18, %c0_19, %c0_20], %9 {strides = array<i32>} : memref<18x18x8xbf16, #tpu.memory_space<vmem>>, vector<16x1x8xbf16>,
    %c1_21 = arith.constant 1 : index
    %c17_22 = arith.constant 17 : index
    %c0_23 = arith.constant 0 : index
    %11 = vector.load %arg8[%c1_21, %c17_22, %c0_23] : memref<18x18x8xbf16, #tpu.memory_space<vmem>>, vector<16x1x8xbf16>
    tpu.vector_store %arg8[%c1_21, %c17_22, %c0_23], %9 {strides = array<i32>} : memref<18x18x8xbf16, #tpu.memory_space<vmem>>, vector<16x1x8xbf16>,
    %c0_24 = arith.constant 0 : index
    %c0_25 = arith.constant 0 : index
    %c0_26 = arith.constant 0 : index
    %c0_27 = arith.constant 0 : index
    %12 = vector.load %arg1[%c0_24, %c0_25, %c0_26, %c0_27] : memref<1x16x16x4xbf16, #tpu.memory_space<vmem>>, vector<1x16x16x4xbf16>
    %13 = vector.shape_cast %12 : vector<1x16x16x4xbf16> to vector<16x16x4xbf16>
    %c1_28 = arith.constant 1 : index
    %c1_29 = arith.constant 1 : index
    %c0_30 = arith.constant 0 : index
    %14 = vector.load %arg7[%c1_28, %c1_29, %c0_30] : memref<18x18x4xbf16, #tpu.memory_space<vmem>>, vector<16x16x4xbf16>
    tpu.vector_store %arg7[%c1_28, %c1_29, %c0_30], %13 {strides = array<i32>} : memref<18x18x4xbf16, #tpu.memory_space<vmem>>, vector<16x16x4xbf16>,
    %cst_31 = arith.constant 0.000000e+00 : f32
    %15 = vector.broadcast %cst_31 : f32 to vector<256x8xf32>
    %c0_32 = arith.constant 0 : index
    %c0_33 = arith.constant 0 : index
    %c0_34 = arith.constant 0 : index
    %16 = vector.load %arg7[%c0_32, %c0_33, %c0_34] : memref<18x18x4xbf16, #tpu.memory_space<vmem>>, vector<18x16x4xbf16>
    %17 = vector.extract_strided_slice %16 {offsets = [0, 0, 0], sizes = [16, 16, 4], strides = [1, 1, 1]} : vector<18x16x4xbf16> to vector<16x16x4xbf16>
    %18 = vector.shape_cast %17 : vector<16x16x4xbf16> to vector<256x4xbf16>
    %19 = vector.extract_strided_slice %16 {offsets = [1, 0, 0], sizes = [16, 16, 4], strides = [1, 1, 1]} : vector<18x16x4xbf16> to vector<16x16x4xbf16>
    %20 = vector.shape_cast %19 : vector<16x16x4xbf16> to vector<256x4xbf16>
    %21 = vector.extract_strided_slice %16 {offsets = [2, 0, 0], sizes = [16, 16, 4], strides = [1, 1, 1]} : vector<18x16x4xbf16> to vector<16x16x4xbf16>
    %22 = vector.shape_cast %21 : vector<16x16x4xbf16> to vector<256x4xbf16>
    %c0_35 = arith.constant 0 : index
    %c0_36 = arith.constant 0 : index
    %c0_37 = arith.constant 0 : index
    %c0_38 = arith.constant 0 : index
    %23 = vector.load %arg2[%c0_35, %c0_36, %c0_37, %c0_38] : memref<3x3x4x8xbf16, #tpu.memory_space<vmem>>, vector<1x1x4x8xbf16>
    %24 = vector.shape_cast %23 : vector<1x1x4x8xbf16> to vector<4x8xbf16>
    %cst_39 = arith.constant dense<0.000000e+00> : vector<256x8xf32>
    %25 = tpu.matmul %18, %24, %cst_39 {dimension_numbers = #tpu.dot_dimension_numbers<[1], [0], [0], [1], [0, 0, 1, 1], [], []>} : vector<256x4xbf16>, vector<4x8xbf16>, vector<256x8xf32> -> vector<256x8xf32>
    %26 = arith.addf %15, %25 : vector<256x8xf32>
    %c0_40 = arith.constant 0 : index
    %c1_41 = arith.constant 1 : index
    %c0_42 = arith.constant 0 : index
    %c0_43 = arith.constant 0 : index
    %27 = vector.load %arg2[%c0_40, %c1_41, %c0_42, %c0_43] : memref<3x3x4x8xbf16, #tpu.memory_space<vmem>>, vector<1x1x4x8xbf16>
    %28 = vector.shape_cast %27 : vector<1x1x4x8xbf16> to vector<4x8xbf16>
    %cst_44 = arith.constant dense<0.000000e+00> : vector<256x8xf32>
    %29 = tpu.matmul %20, %28, %cst_44 {dimension_numbers = #tpu.dot_dimension_numbers<[1], [0], [0], [1], [0, 0, 1, 1], [], []>} : vector<256x4xbf16>, vector<4x8xbf16>, vector<256x8xf32> -> vector<256x8xf32>
    %30 = arith.addf %26, %29 : vector<256x8xf32>
    %c0_45 = arith.constant 0 : index
    %c2 = arith.constant 2 : index
    %c0_46 = arith.constant 0 : index
    %c0_47 = arith.constant 0 : index
    %31 = vector.load %arg2[%c0_45, %c2, %c0_46, %c0_47] : memref<3x3x4x8xbf16, #tpu.memory_space<vmem>>, vector<1x1x4x8xbf16>
    %32 = vector.shape_cast %31 : vector<1x1x4x8xbf16> to vector<4x8xbf16>
    %cst_48 = arith.constant dense<0.000000e+00> : vector<256x8xf32>
    %33 = tpu.matmul %22, %32, %cst_48 {dimension_numbers = #tpu.dot_dimension_numbers<[1], [0], [0], [1], [0, 0, 1, 1], [], []>} : vector<256x4xbf16>, vector<4x8xbf16>, vector<256x8xf32> -> vector<256x8xf32>
    %34 = arith.addf %30, %33 : vector<256x8xf32>
    %c0_49 = arith.constant 0 : index
    %c1_50 = arith.constant 1 : index
    %c0_51 = arith.constant 0 : index
    %35 = vector.load %arg7[%c0_49, %c1_50, %c0_51] : memref<18x18x4xbf16, #tpu.memory_space<vmem>>, vector<18x16x4xbf16>
    %36 = vector.extract_strided_slice %35 {offsets = [0, 0, 0], sizes = [16, 16, 4], strides = [1, 1, 1]} : vector<18x16x4xbf16> to vector<16x16x4xbf16>
    %37 = vector.shape_cast %36 : vector<16x16x4xbf16> to vector<256x4xbf16>
    %38 = vector.extract_strided_slice %35 {offsets = [1, 0, 0], sizes = [16, 16, 4], strides = [1, 1, 1]} : vector<18x16x4xbf16> to vector<16x16x4xbf16>
    %39 = vector.shape_cast %38 : vector<16x16x4xbf16> to vector<256x4xbf16>
    %40 = vector.extract_strided_slice %35 {offsets = [2, 0, 0], sizes = [16, 16, 4], strides = [1, 1, 1]} : vector<18x16x4xbf16> to vector<16x16x4xbf16>
    %41 = vector.shape_cast %40 : vector<16x16x4xbf16> to vector<256x4xbf16>
    %c1_52 = arith.constant 1 : index
    %c0_53 = arith.constant 0 : index
    %c0_54 = arith.constant 0 : index
    %c0_55 = arith.constant 0 : index
    %42 = vector.load %arg2[%c1_52, %c0_53, %c0_54, %c0_55] : memref<3x3x4x8xbf16, #tpu.memory_space<vmem>>, vector<1x1x4x8xbf16>
    %43 = vector.shape_cast %42 : vector<1x1x4x8xbf16> to vector<4x8xbf16>
    %cst_56 = arith.constant dense<0.000000e+00> : vector<256x8xf32>
    %44 = tpu.matmul %37, %43, %cst_56 {dimension_numbers = #tpu.dot_dimension_numbers<[1], [0], [0], [1], [0, 0, 1, 1], [], []>} : vector<256x4xbf16>, vector<4x8xbf16>, vector<256x8xf32> -> vector<256x8xf32>
    %45 = arith.addf %34, %44 : vector<256x8xf32>
    %c1_57 = arith.constant 1 : index
    %c1_58 = arith.constant 1 : index
    %c0_59 = arith.constant 0 : index
    %c0_60 = arith.constant 0 : index
    %46 = vector.load %arg2[%c1_57, %c1_58, %c0_59, %c0_60] : memref<3x3x4x8xbf16, #tpu.memory_space<vmem>>, vector<1x1x4x8xbf16>
    %47 = vector.shape_cast %46 : vector<1x1x4x8xbf16> to vector<4x8xbf16>
    %cst_61 = arith.constant dense<0.000000e+00> : vector<256x8xf32>
    %48 = tpu.matmul %39, %47, %cst_61 {dimension_numbers = #tpu.dot_dimension_numbers<[1], [0], [0], [1], [0, 0, 1, 1], [], []>} : vector<256x4xbf16>, vector<4x8xbf16>, vector<256x8xf32> -> vector<256x8xf32>
    %49 = arith.addf %45, %48 : vector<256x8xf32>
    %c1_62 = arith.constant 1 : index
    %c2_63 = arith.constant 2 : index
    %c0_64 = arith.constant 0 : index
    %c0_65 = arith.constant 0 : index
    %50 = vector.load %arg2[%c1_62, %c2_63, %c0_64, %c0_65] : memref<3x3x4x8xbf16, #tpu.memory_space<vmem>>, vector<1x1x4x8xbf16>
    %51 = vector.shape_cast %50 : vector<1x1x4x8xbf16> to vector<4x8xbf16>
    %cst_66 = arith.constant dense<0.000000e+00> : vector<256x8xf32>
    %52 = tpu.matmul %41, %51, %cst_66 {dimension_numbers = #tpu.dot_dimension_numbers<[1], [0], [0], [1], [0, 0, 1, 1], [], []>} : vector<256x4xbf16>, vector<4x8xbf16>, vector<256x8xf32> -> vector<256x8xf32>
    %53 = arith.addf %49, %52 : vector<256x8xf32>
    %c0_67 = arith.constant 0 : index
    %c2_68 = arith.constant 2 : index
    %c0_69 = arith.constant 0 : index
    %54 = vector.load %arg7[%c0_67, %c2_68, %c0_69] : memref<18x18x4xbf16, #tpu.memory_space<vmem>>, vector<18x16x4xbf16>
    %55 = vector.extract_strided_slice %54 {offsets = [0, 0, 0], sizes = [16, 16, 4], strides = [1, 1, 1]} : vector<18x16x4xbf16> to vector<16x16x4xbf16>
    %56 = vector.shape_cast %55 : vector<16x16x4xbf16> to vector<256x4xbf16>
    %57 = vector.extract_strided_slice %54 {offsets = [1, 0, 0], sizes = [16, 16, 4], strides = [1, 1, 1]} : vector<18x16x4xbf16> to vector<16x16x4xbf16>
    %58 = vector.shape_cast %57 : vector<16x16x4xbf16> to vector<256x4xbf16>
    %59 = vector.extract_strided_slice %54 {offsets = [2, 0, 0], sizes = [16, 16, 4], strides = [1, 1, 1]} : vector<18x16x4xbf16> to vector<16x16x4xbf16>
    %60 = vector.shape_cast %59 : vector<16x16x4xbf16> to vector<256x4xbf16>
    %c2_70 = arith.constant 2 : index
    %c0_71 = arith.constant 0 : index
    %c0_72 = arith.constant 0 : index
    %c0_73 = arith.constant 0 : index
    %61 = vector.load %arg2[%c2_70, %c0_71, %c0_72, %c0_73] : memref<3x3x4x8xbf16, #tpu.memory_space<vmem>>, vector<1x1x4x8xbf16>
    %62 = vector.shape_cast %61 : vector<1x1x4x8xbf16> to vector<4x8xbf16>
    %cst_74 = arith.constant dense<0.000000e+00> : vector<256x8xf32>
    %63 = tpu.matmul %56, %62, %cst_74 {dimension_numbers = #tpu.dot_dimension_numbers<[1], [0], [0], [1], [0, 0, 1, 1], [], []>} : vector<256x4xbf16>, vector<4x8xbf16>, vector<256x8xf32> -> vector<256x8xf32>
    %64 = arith.addf %53, %63 : vector<256x8xf32>
    %c2_75 = arith.constant 2 : index
    %c1_76 = arith.constant 1 : index
    %c0_77 = arith.constant 0 : index
    %c0_78 = arith.constant 0 : index
    %65 = vector.load %arg2[%c2_75, %c1_76, %c0_77, %c0_78] : memref<3x3x4x8xbf16, #tpu.memory_space<vmem>>, vector<1x1x4x8xbf16>
    %66 = vector.shape_cast %65 : vector<1x1x4x8xbf16> to vector<4x8xbf16>
    %cst_79 = arith.constant dense<0.000000e+00> : vector<256x8xf32>
    %67 = tpu.matmul %58, %66, %cst_79 {dimension_numbers = #tpu.dot_dimension_numbers<[1], [0], [0], [1], [0, 0, 1, 1], [], []>} : vector<256x4xbf16>, vector<4x8xbf16>, vector<256x8xf32> -> vector<256x8xf32>
    %68 = arith.addf %64, %67 : vector<256x8xf32>
    %c2_80 = arith.constant 2 : index
    %c2_81 = arith.constant 2 : index
    %c0_82 = arith.constant 0 : index
    %c0_83 = arith.constant 0 : index
    %69 = vector.load %arg2[%c2_80, %c2_81, %c0_82, %c0_83] : memref<3x3x4x8xbf16, #tpu.memory_space<vmem>>, vector<1x1x4x8xbf16>
    %70 = vector.shape_cast %69 : vector<1x1x4x8xbf16> to vector<4x8xbf16>
    %cst_84 = arith.constant dense<0.000000e+00> : vector<256x8xf32>
    %71 = tpu.matmul %60, %70, %cst_84 {dimension_numbers = #tpu.dot_dimension_numbers<[1], [0], [0], [1], [0, 0, 1, 1], [], []>} : vector<256x4xbf16>, vector<4x8xbf16>, vector<256x8xf32> -> vector<256x8xf32>
    %72 = arith.addf %68, %71 : vector<256x8xf32>
    %c0_85 = arith.constant 0 : index
    %c0_86 = arith.constant 0 : index
    %73 = vector.load %arg3[%c0_85, %c0_86] : memref<1x8xf32, #tpu.memory_space<vmem>>, vector<1x8xf32>
    %74 = vector.broadcast %73 : vector<1x8xf32> to vector<256x8xf32>
    %75 = arith.addf %72, %74 : vector<256x8xf32>
    %cst_87 = arith.constant 0.000000e+00 : f32
    %76 = vector.broadcast %cst_87 : f32 to vector<256x8xf32>
    %77 = arith.maximumf %75, %76 : vector<256x8xf32>
    %78 = vector.shape_cast %77 : vector<256x8xf32> to vector<16x16x8xf32>
    %79 = arith.truncf %78 : vector<16x16x8xf32> to vector<16x16x8xbf16>
    %c1_88 = arith.constant 1 : index
    %c1_89 = arith.constant 1 : index
    %c0_90 = arith.constant 0 : index
    %80 = vector.load %arg8[%c1_88, %c1_89, %c0_90] : memref<18x18x8xbf16, #tpu.memory_space<vmem>>, vector<16x16x8xbf16>
    tpu.vector_store %arg8[%c1_88, %c1_89, %c0_90], %79 {strides = array<i32>} : memref<18x18x8xbf16, #tpu.memory_space<vmem>>, vector<16x16x8xbf16>,
    %cst_91 = arith.constant 0.000000e+00 : f32
    %81 = vector.broadcast %cst_91 : f32 to vector<256x8xf32>
    %c0_92 = arith.constant 0 : index
    %c0_93 = arith.constant 0 : index
    %c0_94 = arith.constant 0 : index
    %82 = vector.load %arg8[%c0_92, %c0_93, %c0_94] : memref<18x18x8xbf16, #tpu.memory_space<vmem>>, vector<18x16x8xbf16>
    %83 = vector.extract_strided_slice %82 {offsets = [0, 0, 0], sizes = [16, 16, 8], strides = [1, 1, 1]} : vector<18x16x8xbf16> to vector<16x16x8xbf16>
    %84 = vector.shape_cast %83 : vector<16x16x8xbf16> to vector<256x8xbf16>
    %85 = vector.extract_strided_slice %82 {offsets = [1, 0, 0], sizes = [16, 16, 8], strides = [1, 1, 1]} : vector<18x16x8xbf16> to vector<16x16x8xbf16>
    %86 = vector.shape_cast %85 : vector<16x16x8xbf16> to vector<256x8xbf16>
    %87 = vector.extract_strided_slice %82 {offsets = [2, 0, 0], sizes = [16, 16, 8], strides = [1, 1, 1]} : vector<18x16x8xbf16> to vector<16x16x8xbf16>
    %88 = vector.shape_cast %87 : vector<16x16x8xbf16> to vector<256x8xbf16>
    %c0_95 = arith.constant 0 : index
    %c0_96 = arith.constant 0 : index
    %c0_97 = arith.constant 0 : index
    %c0_98 = arith.constant 0 : index
    %89 = vector.load %arg4[%c0_95, %c0_96, %c0_97, %c0_98] : memref<3x3x8x8xbf16, #tpu.memory_space<vmem>>, vector<1x1x8x8xbf16>
    %90 = vector.shape_cast %89 : vector<1x1x8x8xbf16> to vector<8x8xbf16>
    %cst_99 = arith.constant dense<0.000000e+00> : vector<256x8xf32>
    %91 = tpu.matmul %84, %90, %cst_99 {dimension_numbers = #tpu.dot_dimension_numbers<[1], [0], [0], [1], [0, 0, 1, 1], [], []>} : vector<256x8xbf16>, vector<8x8xbf16>, vector<256x8xf32> -> vector<256x8xf32>
    %92 = arith.addf %81, %91 : vector<256x8xf32>
    %c0_100 = arith.constant 0 : index
    %c1_101 = arith.constant 1 : index
    %c0_102 = arith.constant 0 : index
    %c0_103 = arith.constant 0 : index
    %93 = vector.load %arg4[%c0_100, %c1_101, %c0_102, %c0_103] : memref<3x3x8x8xbf16, #tpu.memory_space<vmem>>, vector<1x1x8x8xbf16>
    %94 = vector.shape_cast %93 : vector<1x1x8x8xbf16> to vector<8x8xbf16>
    %cst_104 = arith.constant dense<0.000000e+00> : vector<256x8xf32>
    %95 = tpu.matmul %86, %94, %cst_104 {dimension_numbers = #tpu.dot_dimension_numbers<[1], [0], [0], [1], [0, 0, 1, 1], [], []>} : vector<256x8xbf16>, vector<8x8xbf16>, vector<256x8xf32> -> vector<256x8xf32>
    %96 = arith.addf %92, %95 : vector<256x8xf32>
    %c0_105 = arith.constant 0 : index
    %c2_106 = arith.constant 2 : index
    %c0_107 = arith.constant 0 : index
    %c0_108 = arith.constant 0 : index
    %97 = vector.load %arg4[%c0_105, %c2_106, %c0_107, %c0_108] : memref<3x3x8x8xbf16, #tpu.memory_space<vmem>>, vector<1x1x8x8xbf16>
    %98 = vector.shape_cast %97 : vector<1x1x8x8xbf16> to vector<8x8xbf16>
    %cst_109 = arith.constant dense<0.000000e+00> : vector<256x8xf32>
    %99 = tpu.matmul %88, %98, %cst_109 {dimension_numbers = #tpu.dot_dimension_numbers<[1], [0], [0], [1], [0, 0, 1, 1], [], []>} : vector<256x8xbf16>, vector<8x8xbf16>, vector<256x8xf32> -> vector<256x8xf32>
    %100 = arith.addf %96, %99 : vector<256x8xf32>
    %c0_110 = arith.constant 0 : index
    %c1_111 = arith.constant 1 : index
    %c0_112 = arith.constant 0 : index
    %101 = vector.load %arg8[%c0_110, %c1_111, %c0_112] : memref<18x18x8xbf16, #tpu.memory_space<vmem>>, vector<18x16x8xbf16>
    %102 = vector.extract_strided_slice %101 {offsets = [0, 0, 0], sizes = [16, 16, 8], strides = [1, 1, 1]} : vector<18x16x8xbf16> to vector<16x16x8xbf16>
    %103 = vector.shape_cast %102 : vector<16x16x8xbf16> to vector<256x8xbf16>
    %104 = vector.extract_strided_slice %101 {offsets = [1, 0, 0], sizes = [16, 16, 8], strides = [1, 1, 1]} : vector<18x16x8xbf16> to vector<16x16x8xbf16>
    %105 = vector.shape_cast %104 : vector<16x16x8xbf16> to vector<256x8xbf16>
    %106 = vector.extract_strided_slice %101 {offsets = [2, 0, 0], sizes = [16, 16, 8], strides = [1, 1, 1]} : vector<18x16x8xbf16> to vector<16x16x8xbf16>
    %107 = vector.shape_cast %106 : vector<16x16x8xbf16> to vector<256x8xbf16>
    %c1_113 = arith.constant 1 : index
    %c0_114 = arith.constant 0 : index
    %c0_115 = arith.constant 0 : index
    %c0_116 = arith.constant 0 : index
    %108 = vector.load %arg4[%c1_113, %c0_114, %c0_115, %c0_116] : memref<3x3x8x8xbf16, #tpu.memory_space<vmem>>, vector<1x1x8x8xbf16>
    %109 = vector.shape_cast %108 : vector<1x1x8x8xbf16> to vector<8x8xbf16>
    %cst_117 = arith.constant dense<0.000000e+00> : vector<256x8xf32>
    %110 = tpu.matmul %103, %109, %cst_117 {dimension_numbers = #tpu.dot_dimension_numbers<[1], [0], [0], [1], [0, 0, 1, 1], [], []>} : vector<256x8xbf16>, vector<8x8xbf16>, vector<256x8xf32> -> vector<256x8xf32>
    %111 = arith.addf %100, %110 : vector<256x8xf32>
    %c1_118 = arith.constant 1 : index
    %c1_119 = arith.constant 1 : index
    %c0_120 = arith.constant 0 : index
    %c0_121 = arith.constant 0 : index
    %112 = vector.load %arg4[%c1_118, %c1_119, %c0_120, %c0_121] : memref<3x3x8x8xbf16, #tpu.memory_space<vmem>>, vector<1x1x8x8xbf16>
    %113 = vector.shape_cast %112 : vector<1x1x8x8xbf16> to vector<8x8xbf16>
    %cst_122 = arith.constant dense<0.000000e+00> : vector<256x8xf32>
    %114 = tpu.matmul %105, %113, %cst_122 {dimension_numbers = #tpu.dot_dimension_numbers<[1], [0], [0], [1], [0, 0, 1, 1], [], []>} : vector<256x8xbf16>, vector<8x8xbf16>, vector<256x8xf32> -> vector<256x8xf32>
    %115 = arith.addf %111, %114 : vector<256x8xf32>
    %c1_123 = arith.constant 1 : index
    %c2_124 = arith.constant 2 : index
    %c0_125 = arith.constant 0 : index
    %c0_126 = arith.constant 0 : index
    %116 = vector.load %arg4[%c1_123, %c2_124, %c0_125, %c0_126] : memref<3x3x8x8xbf16, #tpu.memory_space<vmem>>, vector<1x1x8x8xbf16>
    %117 = vector.shape_cast %116 : vector<1x1x8x8xbf16> to vector<8x8xbf16>
    %cst_127 = arith.constant dense<0.000000e+00> : vector<256x8xf32>
    %118 = tpu.matmul %107, %117, %cst_127 {dimension_numbers = #tpu.dot_dimension_numbers<[1], [0], [0], [1], [0, 0, 1, 1], [], []>} : vector<256x8xbf16>, vector<8x8xbf16>, vector<256x8xf32> -> vector<256x8xf32>
    %119 = arith.addf %115, %118 : vector<256x8xf32>
    %c0_128 = arith.constant 0 : index
    %c2_129 = arith.constant 2 : index
    %c0_130 = arith.constant 0 : index
    %120 = vector.load %arg8[%c0_128, %c2_129, %c0_130] : memref<18x18x8xbf16, #tpu.memory_space<vmem>>, vector<18x16x8xbf16>
    %121 = vector.extract_strided_slice %120 {offsets = [0, 0, 0], sizes = [16, 16, 8], strides = [1, 1, 1]} : vector<18x16x8xbf16> to vector<16x16x8xbf16>
    %122 = vector.shape_cast %121 : vector<16x16x8xbf16> to vector<256x8xbf16>
    %123 = vector.extract_strided_slice %120 {offsets = [1, 0, 0], sizes = [16, 16, 8], strides = [1, 1, 1]} : vector<18x16x8xbf16> to vector<16x16x8xbf16>
    %124 = vector.shape_cast %123 : vector<16x16x8xbf16> to vector<256x8xbf16>
    %125 = vector.extract_strided_slice %120 {offsets = [2, 0, 0], sizes = [16, 16, 8], strides = [1, 1, 1]} : vector<18x16x8xbf16> to vector<16x16x8xbf16>
    %126 = vector.shape_cast %125 : vector<16x16x8xbf16> to vector<256x8xbf16>
    %c2_131 = arith.constant 2 : index
    %c0_132 = arith.constant 0 : index
    %c0_133 = arith.constant 0 : index
    %c0_134 = arith.constant 0 : index
    %127 = vector.load %arg4[%c2_131, %c0_132, %c0_133, %c0_134] : memref<3x3x8x8xbf16, #tpu.memory_space<vmem>>, vector<1x1x8x8xbf16>
    %128 = vector.shape_cast %127 : vector<1x1x8x8xbf16> to vector<8x8xbf16>
    %cst_135 = arith.constant dense<0.000000e+00> : vector<256x8xf32>
    %129 = tpu.matmul %122, %128, %cst_135 {dimension_numbers = #tpu.dot_dimension_numbers<[1], [0], [0], [1], [0, 0, 1, 1], [], []>} : vector<256x8xbf16>, vector<8x8xbf16>, vector<256x8xf32> -> vector<256x8xf32>
    %130 = arith.addf %119, %129 : vector<256x8xf32>
    %c2_136 = arith.constant 2 : index
    %c1_137 = arith.constant 1 : index
    %c0_138 = arith.constant 0 : index
    %c0_139 = arith.constant 0 : index
    %131 = vector.load %arg4[%c2_136, %c1_137, %c0_138, %c0_139] : memref<3x3x8x8xbf16, #tpu.memory_space<vmem>>, vector<1x1x8x8xbf16>
    %132 = vector.shape_cast %131 : vector<1x1x8x8xbf16> to vector<8x8xbf16>
    %cst_140 = arith.constant dense<0.000000e+00> : vector<256x8xf32>
    %133 = tpu.matmul %124, %132, %cst_140 {dimension_numbers = #tpu.dot_dimension_numbers<[1], [0], [0], [1], [0, 0, 1, 1], [], []>} : vector<256x8xbf16>, vector<8x8xbf16>, vector<256x8xf32> -> vector<256x8xf32>
    %134 = arith.addf %130, %133 : vector<256x8xf32>
    %c2_141 = arith.constant 2 : index
    %c2_142 = arith.constant 2 : index
    %c0_143 = arith.constant 0 : index
    %c0_144 = arith.constant 0 : index
    %135 = vector.load %arg4[%c2_141, %c2_142, %c0_143, %c0_144] : memref<3x3x8x8xbf16, #tpu.memory_space<vmem>>, vector<1x1x8x8xbf16>
    %136 = vector.shape_cast %135 : vector<1x1x8x8xbf16> to vector<8x8xbf16>
    %cst_145 = arith.constant dense<0.000000e+00> : vector<256x8xf32>
    %137 = tpu.matmul %126, %136, %cst_145 {dimension_numbers = #tpu.dot_dimension_numbers<[1], [0], [0], [1], [0, 0, 1, 1], [], []>} : vector<256x8xbf16>, vector<8x8xbf16>, vector<256x8xf32> -> vector<256x8xf32>
    %138 = arith.addf %134, %137 : vector<256x8xf32>
    %c0_146 = arith.constant 0 : index
    %c0_147 = arith.constant 0 : index
    %139 = vector.load %arg5[%c0_146, %c0_147] : memref<1x8xf32, #tpu.memory_space<vmem>>, vector<1x8xf32>
    %140 = vector.broadcast %139 : vector<1x8xf32> to vector<256x8xf32>
    %141 = arith.addf %138, %140 : vector<256x8xf32>
    %cst_148 = arith.constant 0.000000e+00 : f32
    %142 = vector.broadcast %cst_148 : f32 to vector<256x8xf32>
    %143 = arith.maximumf %141, %142 : vector<256x8xf32>
    %144 = vector.shape_cast %143 : vector<256x8xf32> to vector<16x16x8xf32>
    %c0_149 = arith.constant 0 : index
    %c0_150 = arith.constant 0 : index
    %c0_151 = arith.constant 0 : index
    %c0_152 = arith.constant 0 : index
    %145 = vector.load %arg6[%c0_149, %c0_150, %c0_151, %c0_152] : memref<1x16x16x8xf32, #tpu.memory_space<vmem>>, vector<1x16x16x8xf32>
    %146 = vector.shape_cast %145 : vector<1x16x16x8xf32> to vector<16x16x8xf32>
    %147 = vector.shape_cast %144 : vector<16x16x8xf32> to vector<1x16x16x8xf32>
    tpu.vector_store %arg6[%c0_149, %c0_150, %c0_151, %c0_152], %147 {strides = array<i32>} : memref<1x16x16x8xf32, #tpu.memory_space<vmem>>, vector<1x16x16x8xf32>,
    return
  }
  func.func @transform_0(%arg0: i32) -> (i32, i32, i32, i32) {
    %c0_i32 = arith.constant 0 : i32
    %c0_i32_0 = arith.constant 0 : i32
    %c0_i32_1 = arith.constant 0 : i32
    %c0_i32_2 = arith.constant 0 : i32
    return %arg0, %c0_i32, %c0_i32_0, %c0_i32_1 : i32, i32, i32, i32
  }
  func.func @transform_1(%arg0: i32) -> (i32, i32, i32, i32) {
    %c0_i32 = arith.constant 0 : i32
    %c0_i32_0 = arith.constant 0 : i32
    %c0_i32_1 = arith.constant 0 : i32
    %c0_i32_2 = arith.constant 0 : i32
    %c0_i32_3 = arith.constant 0 : i32
    return %c0_i32, %c0_i32_0, %c0_i32_1, %c0_i32_2 : i32, i32, i32, i32
  }
  func.func @transform_2(%arg0: i32) -> (i32, i32) {
    %c0_i32 = arith.constant 0 : i32
    %c0_i32_0 = arith.constant 0 : i32
    %c0_i32_1 = arith.constant 0 : i32
    return %c0_i32, %c0_i32_0 : i32, i32
  }
  func.func @transform_3(%arg0: i32) -> (i32, i32, i32, i32) {
    %c0_i32 = arith.constant 0 : i32
    %c0_i32_0 = arith.constant 0 : i32
    %c0_i32_1 = arith.constant 0 : i32
    %c0_i32_2 = arith.constant 0 : i32
    %c0_i32_3 = arith.constant 0 : i32
    return %c0_i32, %c0_i32_0, %c0_i32_1, %c0_i32_2 : i32, i32, i32, i32
  }
  func.func @transform_4(%arg0: i32) -> (i32, i32) {
    %c0_i32 = arith.constant 0 : i32
    %c0_i32_0 = arith.constant 0 : i32
    %c0_i32_1 = arith.constant 0 : i32
    return %c0_i32, %c0_i32_0 : i32, i32
  }
  func.func @transform_5(%arg0: i32) -> (i32, i32, i32, i32) {
    %c0_i32 = arith.constant 0 : i32
    %c0_i32_0 = arith.constant 0 : i32
    %c0_i32_1 = arith.constant 0 : i32
    %c0_i32_2 = arith.constant 0 : i32
    return %arg0, %c0_i32, %c0_i32_0, %c0_i32_1 : i32, i32, i32, i32
  }
}

</mosaic_0001>

<llo_original>
// kernel: double_conv.1
$region0: #{double_conv.1}
  #allocation0 [shape = 'u32[]', space=smem, size = 0x4, offset = 0x4, fixed_abs, tag = 'smem constant byte address 0x4 - core index']
  #allocation1 [shape = 'u32[144,128]{1,0:T(1,128)}', space=vmem, size = 0x12000, scoped, tag = 'internal scratch']
  #allocation2 [shape = 'bf16[18,18,4]{2,1,0:T(8,128)(2,1)}', space=vmem, size = 0x1b000, scoped, tag = 'scratch operand']
  #allocation3 [shape = 'bf16[18,18,8]{2,1,0:T(8,128)(2,1)}', space=vmem, size = 0x1b000, scoped, tag = 'scratch operand']
  %s0 = inlined_call_operand.vmem [shape: bf16[2,16,16,4], index: 0, kind: input, shape index: {}]
  %s1 = inlined_call_operand.vmem [shape: bf16[3,3,4,8], index: 1, kind: input, shape index: {}]
  %s2 = inlined_call_operand.vmem [shape: f32[1,8], index: 2, kind: input, shape index: {}]
  %s3 = inlined_call_operand.vmem [shape: bf16[3,3,8,8], index: 3, kind: input, shape index: {}]
  %s4 = inlined_call_operand.vmem [shape: f32[1,8], index: 4, kind: input, shape index: {}]
  %s5 = inlined_call_operand.vmem [shape: f32[2,16,16,8], index: 5, kind: output, shape index: {}]
  %s6 = sld [smem:[#allocation0]]
  $region53: #{double_conv.1} parent=0
    _
  %s8 = ssub.s32 1, %s6
  %s9 = scalar_select 0, %s8, %s6
  loop: start=0, step=1, limit=4
  $region2: #{double_conv.1} parent=0 // loop_pre_header
    _
  $region3: #{double_conv.1} parent=0 // loop_header
    %s11 = sphi 0, %s15
    %p12 = scmp.ge.s32.totalorder %s11, 4
    %s21 = sphi 0, %s23
    %s24 = sphi 0, %s21
    %s25 = sphi 0, %s24
    %s41 = sphi 0, %s25
    %s45 = sphi 0, %s45
    %s47 = sphi 0, %s45
    %s48 = sphi 0, %s47
    %s62 = sphi 0, %s48
    %s66 = sphi 0, %s66
    %s68 = sphi 0, %s66
    %s69 = sphi 0, %s68
    %s83 = sphi 0, %s69
    %s87 = sphi 0, %s87
    %s89 = sphi 0, %s87
    %s90 = sphi 0, %s89
    %s104 = sphi 0, %s90
    %s108 = sphi 0, %s108
    %s110 = sphi 0, %s108
    %s111 = sphi 0, %s110
    %s125 = sphi 0, %s111
    %s131 = sphi 0, %s133
    %s134 = sphi 0, %s131
    %s135 = sphi 0, %s134
    %s151 = sphi 0, %s135
  $region4: #{double_conv.1} parent=0 // loop_header_branch
    %14 = sbr.rel (%p12) target = $region8
  $region5: #{double_conv.1} parent=0 // loop_body
    %s16 = ssub.s32 %s11, 1
    %s17 = ssub.s32 %s11, 2
    %s18 = sadd.s32 %s11, 1
    %s19 = ssub.s32 %s11, %s18
    %p20 = scmp.eq.s32.totalorder %s19, 0
    %s22 = sadd.s32 %s21, 1
    %s23 = scalar_select %p20, %s21, %s22
    %p26 = pneg %p20
    %p27 = scmp.eq.s32.totalorder %s11, 1
    %p28 = por %p26, %p27
    %p29 = scmp.ne.s32.totalorder %s21, %s24
    %p30 = scmp.eq.s32.totalorder %s11, 0
    %p31 = por %p29, %p30
    %p32 = scmp.ne.s32.totalorder %s21, %s24
    %p33 = scmp.eq.s32.totalorder %s16, 1
    %p34 = por %p32, %p33
    %p35 = scmp.ne.s32.totalorder %s24, %s25
    %p36 = scmp.eq.s32.totalorder %s16, 0
    %p37 = por %p35, %p36
    %p38 = scmp.ne.s32.totalorder %s24, %s25
    %p39 = scmp.eq.s32.totalorder %s17, 1
    %p40 = por %p38, %p39
    %p42 = scmp.ne.s32.totalorder %s25, %s41
    %p43 = scmp.eq.s32.totalorder %s17, 0
    %p44 = por %p42, %p43
    %s46 = sadd.s32 %s45, 1
    %p49 = scmp.eq.s32.totalorder %s11, 1
    %p50 = scmp.ne.s32.totalorder %s45, %s47
    %p51 = scmp.eq.s32.totalorder %s11, 0
    %p52 = por %p50, %p51
    %p53 = scmp.ne.s32.totalorder %s45, %s47
    %p54 = scmp.eq.s32.totalorder %s16, 1
    %p55 = por %p53, %p54
    %p56 = scmp.ne.s32.totalorder %s47, %s48
    %p57 = scmp.eq.s32.totalorder %s16, 0
    %p58 = por %p56, %p57
    %p59 = scmp.ne.s32.totalorder %s47, %s48
    %p60 = scmp.eq.s32.totalorder %s17, 1
    %p61 = por %p59, %p60
    %p63 = scmp.ne.s32.totalorder %s48, %s62
    %p64 = scmp.eq.s32.totalorder %s17, 0
    %p65 = por %p63, %p64
    %s67 = sadd.s32 %s66, 1
    %p70 = scmp.eq.s32.totalorder %s11, 1
    %p71 = scmp.ne.s32.totalorder %s66, %s68
    %p72 = scmp.eq.s32.totalorder %s11, 0
    %p73 = por %p71, %p72
    %p74 = scmp.ne.s32.totalorder %s66, %s68
    %p75 = scmp.eq.s32.totalorder %s16, 1
    %p76 = por %p74, %p75
    %p77 = scmp.ne.s32.totalorder %s68, %s69
    %p78 = scmp.eq.s32.totalorder %s16, 0
    %p79 = por %p77, %p78
    %p80 = scmp.ne.s32.totalorder %s68, %s69
    %p81 = scmp.eq.s32.totalorder %s17, 1
    %p82 = por %p80, %p81
    %p84 = scmp.ne.s32.totalorder %s69, %s83
    %p85 = scmp.eq.s32.totalorder %s17, 0
    %p86 = por %p84, %p85
    %s88 = sadd.s32 %s87, 1
    %p91 = scmp.eq.s32.totalorder %s11, 1
    %p92 = scmp.ne.s32.totalorder %s87, %s89
    %p93 = scmp.eq.s32.totalorder %s11, 0
    %p94 = por %p92, %p93
    %p95 = scmp.ne.s32.totalorder %s87, %s89
    %p96 = scmp.eq.s32.totalorder %s16, 1
    %p97 = por %p95, %p96
    %p98 = scmp.ne.s32.totalorder %s89, %s90
    %p99 = scmp.eq.s32.totalorder %s16, 0
    %p100 = por %p98, %p99
    %p101 = scmp.ne.s32.totalorder %s89, %s90
    %p102 = scmp.eq.s32.totalorder %s17, 1
    %p103 = por %p101, %p102
    %p105 = scmp.ne.s32.totalorder %s90, %s104
    %p106 = scmp.eq.s32.totalorder %s17, 0
    %p107 = por %p105, %p106
    %s109 = sadd.s32 %s108, 1
    %p112 = scmp.eq.s32.totalorder %s11, 1
    %p113 = scmp.ne.s32.totalorder %s108, %s110
    %p114 = scmp.eq.s32.totalorder %s11, 0
    %p115 = por %p113, %p114
    %p116 = scmp.ne.s32.totalorder %s108, %s110
    %p117 = scmp.eq.s32.totalorder %s16, 1
    %p118 = por %p116, %p117
    %p119 = scmp.ne.s32.totalorder %s110, %s111
    %p120 = scmp.eq.s32.totalorder %s16, 0
    %p121 = por %p119, %p120
    %p122 = scmp.ne.s32.totalorder %s110, %s111
    %p123 = scmp.eq.s32.totalorder %s17, 1
    %p124 = por %p122, %p123
    %p126 = scmp.ne.s32.totalorder %s111, %s125
    %p127 = scmp.eq.s32.totalorder %s17, 0
    %p128 = por %p126, %p127
    %s129 = ssub.s32 %s11, %s18
    %p130 = scmp.eq.s32.totalorder %s129, 0
    %s132 = sadd.s32 %s131, 1
    %s133 = scalar_select %p130, %s131, %s132
    %p136 = pneg %p130
    %p137 = scmp.eq.s32.totalorder %s11, 1
    %p138 = por %p136, %p137
    %p139 = scmp.ne.s32.totalorder %s131, %s134
    %p140 = scmp.eq.s32.totalorder %s11, 0
    %p141 = por %p139, %p140
    %p142 = scmp.ne.s32.totalorder %s131, %s134
    %p143 = scmp.eq.s32.totalorder %s16, 1
    %p144 = por %p142, %p143
    %p145 = scmp.ne.s32.totalorder %s134, %s135
    %p146 = scmp.eq.s32.totalorder %s16, 0
    %p147 = por %p145, %p146
    %p148 = scmp.ne.s32.totalorder %s134, %s135
    %p149 = scmp.eq.s32.totalorder %s17, 1
    %p150 = por %p148, %p149
    %p152 = scmp.ne.s32.totalorder %s135, %s151
    %p153 = scmp.eq.s32.totalorder %s17, 0
    %p154 = por %p152, %p153
    %p155 = scmp.le.s32.totalorder 1, %s11
    %p156 = scmp.lt.s32.totalorder %s11, 3
    %p157 = pnand %p155, %p156
    %p158 = pneg %p157
    // Predicated region
    $region9: #{double_conv.1} parent=5 // pred_check
      _
    $region10: #{double_conv.1} parent=5 // pred_check_branch
      %160 = sbr.rel (%p157) target = $region12
    $region11: #{double_conv.1} parent=5 // pred_region
      %s161 = ssub.s32 %s11, 1
      // Predicated region
      $region13: #{double_conv.1} parent=11 // pred_check
        %p162 = pneg %p58
      $region14: #{double_conv.1} parent=11 // pred_check_branch
        %164 = sbr.rel (%p162) target = $region16
      $region15: #{double_conv.1} parent=11 // pred_region
        _
      $region16: #{double_conv.1} parent=11 // pred_fallthru
        _
      // Predicated region
      $region17: #{double_conv.1} parent=11 // pred_check
        %p165 = pneg %p79
      $region18: #{double_conv.1} parent=11 // pred_check_branch
        %167 = sbr.rel (%p165) target = $region20
      $region19: #{double_conv.1} parent=11 // pred_region
        _
      $region20: #{double_conv.1} parent=11 // pred_fallthru
        _
      // Predicated region
      $region21: #{double_conv.1} parent=11 // pred_check
        %p168 = pneg %p100
      $region22: #{double_conv.1} parent=11 // pred_check_branch
        %170 = sbr.rel (%p168) target = $region24
      $region23: #{double_conv.1} parent=11 // pred_region
        _
      $region24: #{double_conv.1} parent=11 // pred_fallthru
        _
      // Predicated region
      $region25: #{double_conv.1} parent=11 // pred_check
        %p171 = pneg %p121
      $region26: #{double_conv.1} parent=11 // pred_check_branch
        %173 = sbr.rel (%p171) target = $region28
      $region27: #{double_conv.1} parent=11 // pred_region
        _
      $region28: #{double_conv.1} parent=11 // pred_fallthru
        _
    $region12: #{double_conv.1} parent=5 // pred_fallthru
      _
    %p174 = scmp.lt.s32.totalorder %s11, 2
    // Predicated region
    $region29: #{double_conv.1} parent=5 // pred_check
      %p175 = pneg %p174
    $region30: #{double_conv.1} parent=5 // pred_check_branch
      %177 = sbr.rel (%p175) target = $region32
    $region31: #{double_conv.1} parent=5 // pred_region
      // Predicated region
      $region33: #{double_conv.1} parent=31 // pred_check
        %p178 = pneg %p31
      $region34: #{double_conv.1} parent=31 // pred_check_branch
        %180 = sbr.rel (%p178) target = $region36
      $region35: #{double_conv.1} parent=31 // pred_region
        %p181 = scmp.lt.s32.totalorder %s11, 1
        %s182 = scalar_select %p181, %s11, 1
        %s183 = smul.addr %s182, 32
        %s184 = smul.addr %s183, 4
        %s185 = scalar_lea.vmem %s0, %s184
      $region36: #{double_conv.1} parent=31 // pred_fallthru
        _
    $region32: #{double_conv.1} parent=5 // pred_fallthru
      _
    %p186 = scmp.le.s32.totalorder 1, %s11
    %p187 = scmp.lt.s32.totalorder %s11, 3
    %p188 = pnand %p186, %p187
    %p189 = pneg %p188
    // Predicated region
    $region37: #{double_conv.1} parent=5 // pred_check
      _
    $region38: #{double_conv.1} parent=5 // pred_check_branch
      %191 = sbr.rel (%p188) target = $region40
    $region39: #{double_conv.1} parent=5 // pred_region
      %s192 = ssub.s32 %s11, 1
      %p193 = scmp.lt.s32.totalorder %s16, 1
      %s194 = scalar_select %p193, %s16, 1
      %s195 = smul.addr %s194, 32
      %s196 = smul.addr %s195, 4
      %s197 = scalar_lea.vmem %s0, %s196
      %p198 = pneg %p37
      %p199 = pneg %p34
      %p200 = pneg %p58
      %p201 = pneg %p55
      %p202 = pneg %p79
      %p203 = pneg %p76
      %p204 = pneg %p100
      %p205 = pneg %p97
      %p206 = pneg %p121
      %p207 = pneg %p118
      %p208 = pneg %p147
      %p209 = pneg %p144
      %p210 = scmp.lt.s32.totalorder %s16, 1
      %s211 = scalar_select %p210, %s16, 1
      %s212 = smul.addr %s211, 32
      %s213 = smul.addr %s212, 8
      %s214 = scalar_lea.vmem %s5, %s213
      %p215 = scmp.lt.s32.totalorder %s16, 1
      %s216 = scalar_select %p215, %s16, 1
      %s217 = smul.addr %s216, 32
      %s218 = smul.addr %s217, 4
      %s219 = scalar_lea.vmem %s0, %s218
      %p220 = scmp.lt.s32.totalorder %s16, 1
      %s221 = scalar_select %p220, %s16, 1
      %s222 = smul.addr %s221, 32
      %s223 = smul.addr %s222, 8
      %s224 = scalar_lea.vmem %s5, %s223
      %vm226 = vcmask 27648
      %227 = vst.msk [vmem:[#allocation2] sm:$0xf] %vm226, 0
      %228 = vst.msk [vmem:[#allocation2 + $0x4] sm:$0xf] %vm226, 0
      %vm229 = vcmask 24576
      %230 = vst.msk [vmem:[#allocation2 + $0x8] sm:$0x1] %vm229, 0
      %s231 = scalar_lea.vmem [#allocation2], 204
      %232 = vst.msk [vmem:[%s231] sm:$0xf] %vm226, 0
      %233 = vst.msk [vmem:[%s231 + $0x4] sm:$0xf] %vm226, 0
      %234 = vst.msk [vmem:[%s231 + $0x8] sm:$0x1] %vm229, 0
      %s235 = scalar_lea.vmem [#allocation2], 12
      %vm236 = vcmask 24576
      %vm237 = vsmask.f32 256
      %vm238 = vmand %vm236, %vm237
      %v239 = vld [vmem:[%s235] sm:$0x1]
      %v240 = vsel %vm238, 0, %v239
      %241 = vst [vmem:[%s235] sm:$0x1] %v240
      %v242 = vld [vmem:[%s235 + $0xc] sm:$0x1]
      %v243 = vsel %vm238, 0, %v242
      %244 = vst [vmem:[%s235 + $0xc] sm:$0x1] %v243
      %v245 = vld [vmem:[%s235 + $0x18] sm:$0x1]
      %v246 = vsel %vm238, 0, %v245
      %247 = vst [vmem:[%s235 + $0x18] sm:$0x1] %v246
      %v248 = vld [vmem:[%s235 + $0x24] sm:$0x1]
      %v249 = vsel %vm238, 0, %v248
      %250 = vst [vmem:[%s235 + $0x24] sm:$0x1] %v249
      %v251 = vld [vmem:[%s235 + $0x30] sm:$0x1]
      %v252 = vsel %vm238, 0, %v251
      %253 = vst [vmem:[%s235 + $0x30] sm:$0x1] %v252
      %v254 = vld [vmem:[%s235 + $0x3c] sm:$0x1]
      %v255 = vsel %vm238, 0, %v254
      %256 = vst [vmem:[%s235 + $0x3c] sm:$0x1] %v255
      %v257 = vld [vmem:[%s235 + $0x48] sm:$0x1]
      %v258 = vsel %vm238, 0, %v257
      %259 = vst [vmem:[%s235 + $0x48] sm:$0x1] %v258
      %v260 = vld [vmem:[%s235 + $0x54] sm:$0x1]
      %v261 = vsel %vm238, 0, %v260
      %262 = vst [vmem:[%s235 + $0x54] sm:$0x1] %v261
      %v263 = vld [vmem:[%s235 + $0x60] sm:$0x1]
      %v264 = vsel %vm238, 0, %v263
      %265 = vst [vmem:[%s235 + $0x60] sm:$0x1] %v264
      %v266 = vld [vmem:[%s235 + $0x6c] sm:$0x1]
      %v267 = vsel %vm238, 0, %v266
      %268 = vst [vmem:[%s235 + $0x6c] sm:$0x1] %v267
      %v269 = vld [vmem:[%s235 + $0x78] sm:$0x1]
      %v270 = vsel %vm238, 0, %v269
      %271 = vst [vmem:[%s235 + $0x78] sm:$0x1] %v270
      %v272 = vld [vmem:[%s235 + $0x84] sm:$0x1]
      %v273 = vsel %vm238, 0, %v272
      %274 = vst [vmem:[%s235 + $0x84] sm:$0x1] %v273
      %v275 = vld [vmem:[%s235 + $0x90] sm:$0x1]
      %v276 = vsel %vm238, 0, %v275
      %277 = vst [vmem:[%s235 + $0x90] sm:$0x1] %v276
      %v278 = vld [vmem:[%s235 + $0x9c] sm:$0x1]
      %v279 = vsel %vm238, 0, %v278
      %280 = vst [vmem:[%s235 + $0x9c] sm:$0x1] %v279
      %v281 = vld [vmem:[%s235 + $0xa8] sm:$0x1]
      %v282 = vsel %vm238, 0, %v281
      %283 = vst [vmem:[%s235 + $0xa8] sm:$0x1] %v282
      %v284 = vld [vmem:[%s235 + $0xb4] sm:$0x1]
      %v285 = vsel %vm238, 0, %v284
      %286 = vst [vmem:[%s235 + $0xb4] sm:$0x1] %v285
      %vm287 = vsmask.f32 7938
      %vm288 = vmand %vm236, %vm287
      %v289 = vld [vmem:[%s235 + $0x8] sm:$0x1]
      %v290 = vsel %vm288, 0, %v289
      %291 = vst [vmem:[%s235 + $0x8] sm:$0x1] %v290
      %v292 = vld [vmem:[%s235 + $0x14] sm:$0x1]
      %v293 = vsel %vm288, 0, %v292
      %294 = vst [vmem:[%s235 + $0x14] sm:$0x1] %v293
      %v295 = vld [vmem:[%s235 + $0x20] sm:$0x1]
      %v296 = vsel %vm288, 0, %v295
      %297 = vst [vmem:[%s235 + $0x20] sm:$0x1] %v296
      %v298 = vld [vmem:[%s235 + $0x2c] sm:$0x1]
      %v299 = vsel %vm288, 0, %v298
      %300 = vst [vmem:[%s235 + $0x2c] sm:$0x1] %v299
      %v301 = vld [vmem:[%s235 + $0x38] sm:$0x1]
      %v302 = vsel %vm288, 0, %v301
      %303 = vst [vmem:[%s235 + $0x38] sm:$0x1] %v302
      %v304 = vld [vmem:[%s235 + $0x44] sm:$0x1]
      %v305 = vsel %vm288, 0, %v304
      %306 = vst [vmem:[%s235 + $0x44] sm:$0x1] %v305
      %v307 = vld [vmem:[%s235 + $0x50] sm:$0x1]
      %v308 = vsel %vm288, 0, %v307
      %309 = vst [vmem:[%s235 + $0x50] sm:$0x1] %v308
      %v310 = vld [vmem:[%s235 + $0x5c] sm:$0x1]
      %v311 = vsel %vm288, 0, %v310
      %312 = vst [vmem:[%s235 + $0x5c] sm:$0x1] %v311
      %v313 = vld [vmem:[%s235 + $0x68] sm:$0x1]
      %v314 = vsel %vm288, 0, %v313
      %315 = vst [vmem:[%s235 + $0x68] sm:$0x1] %v314
      %v316 = vld [vmem:[%s235 + $0x74] sm:$0x1]
      %v317 = vsel %vm288, 0, %v316
      %318 = vst [vmem:[%s235 + $0x74] sm:$0x1] %v317
      %v319 = vld [vmem:[%s235 + $0x80] sm:$0x1]
      %v320 = vsel %vm288, 0, %v319
      %321 = vst [vmem:[%s235 + $0x80] sm:$0x1] %v320
      %v322 = vld [vmem:[%s235 + $0x8c] sm:$0x1]
      %v323 = vsel %vm288, 0, %v322
      %324 = vst [vmem:[%s235 + $0x8c] sm:$0x1] %v323
      %v325 = vld [vmem:[%s235 + $0x98] sm:$0x1]
      %v326 = vsel %vm288, 0, %v325
      %327 = vst [vmem:[%s235 + $0x98] sm:$0x1] %v326
      %v328 = vld [vmem:[%s235 + $0xa4] sm:$0x1]
      %v329 = vsel %vm288, 0, %v328
      %330 = vst [vmem:[%s235 + $0xa4] sm:$0x1] %v329
      %v331 = vld [vmem:[%s235 + $0xb0] sm:$0x1]
      %v332 = vsel %vm288, 0, %v331
      %333 = vst [vmem:[%s235 + $0xb0] sm:$0x1] %v332
      %v334 = vld [vmem:[%s235 + $0xbc] sm:$0x1]
      %v335 = vsel %vm288, 0, %v334
      %336 = vst [vmem:[%s235 + $0xbc] sm:$0x1] %v335
      %vm337 = vcmask 60416
      %338 = vst.msk [vmem:[#allocation3] sm:$0xf] %vm337, 0
      %339 = vst.msk [vmem:[#allocation3 + $0x4] sm:$0xf] %vm337, 0
      %vm340 = vcmask 57344
      %341 = vst.msk [vmem:[#allocation3 + $0x8] sm:$0x1] %vm340, 0
      %s342 = scalar_lea.vmem [#allocation3], 204
      %343 = vst.msk [vmem:[%s342] sm:$0xf] %vm337, 0
      %344 = vst.msk [vmem:[%s342 + $0x4] sm:$0xf] %vm337, 0
      %345 = vst.msk [vmem:[%s342 + $0x8] sm:$0x1] %vm340, 0
      %s346 = scalar_lea.vmem [#allocation3], 12
      %vm347 = vcmask 57344
      %vm348 = vmand %vm347, %vm237
      %v349 = vld [vmem:[%s346] sm:$0x1]
      %v350 = vsel %vm348, 0, %v349
      %351 = vst [vmem:[%s346] sm:$0x1] %v350
      %v352 = vld [vmem:[%s346 + $0xc] sm:$0x1]
      %v353 = vsel %vm348, 0, %v352
      %354 = vst [vmem:[%s346 + $0xc] sm:$0x1] %v353
      %v355 = vld [vmem:[%s346 + $0x18] sm:$0x1]
      %v356 = vsel %vm348, 0, %v355
      %357 = vst [vmem:[%s346 + $0x18] sm:$0x1] %v356
      %v358 = vld [vmem:[%s346 + $0x24] sm:$0x1]
      %v359 = vsel %vm348, 0, %v358
      %360 = vst [vmem:[%s346 + $0x24] sm:$0x1] %v359
      %v361 = vld [vmem:[%s346 + $0x30] sm:$0x1]
      %v362 = vsel %vm348, 0, %v361
      %363 = vst [vmem:[%s346 + $0x30] sm:$0x1] %v362
      %v364 = vld [vmem:[%s346 + $0x3c] sm:$0x1]
      %v365 = vsel %vm348, 0, %v364
      %366 = vst [vmem:[%s346 + $0x3c] sm:$0x1] %v365
      %v367 = vld [vmem:[%s346 + $0x48] sm:$0x1]
      %v368 = vsel %vm348, 0, %v367
      %369 = vst [vmem:[%s346 + $0x48] sm:$0x1] %v368
      %v370 = vld [vmem:[%s346 + $0x54] sm:$0x1]
      %v371 = vsel %vm348, 0, %v370
      %372 = vst [vmem:[%s346 + $0x54] sm:$0x1] %v371
      %v373 = vld [vmem:[%s346 + $0x60] sm:$0x1]
      %v374 = vsel %vm348, 0, %v373
      %375 = vst [vmem:[%s346 + $0x60] sm:$0x1] %v374
      %v376 = vld [vmem:[%s346 + $0x6c] sm:$0x1]
      %v377 = vsel %vm348, 0, %v376
      %378 = vst [vmem:[%s346 + $0x6c] sm:$0x1] %v377
      %v379 = vld [vmem:[%s346 + $0x78] sm:$0x1]
      %v380 = vsel %vm348, 0, %v379
      %381 = vst [vmem:[%s346 + $0x78] sm:$0x1] %v380
      %v382 = vld [vmem:[%s346 + $0x84] sm:$0x1]
      %v383 = vsel %vm348, 0, %v382
      %384 = vst [vmem:[%s346 + $0x84] sm:$0x1] %v383
      %v385 = vld [vmem:[%s346 + $0x90] sm:$0x1]
      %v386 = vsel %vm348, 0, %v385
      %387 = vst [vmem:[%s346 + $0x90] sm:$0x1] %v386
      %v388 = vld [vmem:[%s346 + $0x9c] sm:$0x1]
      %v389 = vsel %vm348, 0, %v388
      %390 = vst [vmem:[%s346 + $0x9c] sm:$0x1] %v389
      %v391 = vld [vmem:[%s346 + $0xa8] sm:$0x1]
      %v392 = vsel %vm348, 0, %v391
      %393 = vst [vmem:[%s346 + $0xa8] sm:$0x1] %v392
      %v394 = vld [vmem:[%s346 + $0xb4] sm:$0x1]
      %v395 = vsel %vm348, 0, %v394
      %396 = vst [vmem:[%s346 + $0xb4] sm:$0x1] %v395
      %vm397 = vmand %vm347, %vm287
      %v398 = vld [vmem:[%s346 + $0x8] sm:$0x1]
      %v399 = vsel %vm397, 0, %v398
      %400 = vst [vmem:[%s346 + $0x8] sm:$0x1] %v399
      %v401 = vld [vmem:[%s346 + $0x14] sm:$0x1]
      %v402 = vsel %vm397, 0, %v401
      %403 = vst [vmem:[%s346 + $0x14] sm:$0x1] %v402
      %v404 = vld [vmem:[%s346 + $0x20] sm:$0x1]
      %v405 = vsel %vm397, 0, %v404
      %406 = vst [vmem:[%s346 + $0x20] sm:$0x1] %v405
      %v407 = vld [vmem:[%s346 + $0x2c] sm:$0x1]
      %v408 = vsel %vm397, 0, %v407
      %409 = vst [vmem:[%s346 + $0x2c] sm:$0x1] %v408
      %v410 = vld [vmem:[%s346 + $0x38] sm:$0x1]
      %v411 = vsel %vm397, 0, %v410
      %412 = vst [vmem:[%s346 + $0x38] sm:$0x1] %v411
      %v413 = vld [vmem:[%s346 + $0x44] sm:$0x1]
      %v414 = vsel %vm397, 0, %v413
      %415 = vst [vmem:[%s346 + $0x44] sm:$0x1] %v414
      %v416 = vld [vmem:[%s346 + $0x50] sm:$0x1]
      %v417 = vsel %vm397, 0, %v416
      %418 = vst [vmem:[%s346 + $0x50] sm:$0x1] %v417
      %v419 = vld [vmem:[%s346 + $0x5c] sm:$0x1]
      %v420 = vsel %vm397, 0, %v419
      %421 = vst [vmem:[%s346 + $0x5c] sm:$0x1] %v420
      %v422 = vld [vmem:[%s346 + $0x68] sm:$0x1]
      %v423 = vsel %vm397, 0, %v422
      %424 = vst [vmem:[%s346 + $0x68] sm:$0x1] %v423
      %v425 = vld [vmem:[%s346 + $0x74] sm:$0x1]
      %v426 = vsel %vm397, 0, %v425
      %427 = vst [vmem:[%s346 + $0x74] sm:$0x1] %v426
      %v428 = vld [vmem:[%s346 + $0x80] sm:$0x1]
      %v429 = vsel %vm397, 0, %v428
      %430 = vst [vmem:[%s346 + $0x80] sm:$0x1] %v429
      %v431 = vld [vmem:[%s346 + $0x8c] sm:$0x1]
      %v432 = vsel %vm397, 0, %v431
      %433 = vst [vmem:[%s346 + $0x8c] sm:$0x1] %v432
      %v434 = vld [vmem:[%s346 + $0x98] sm:$0x1]
      %v435 = vsel %vm397, 0, %v434
      %436 = vst [vmem:[%s346 + $0x98] sm:$0x1] %v435
      %v437 = vld [vmem:[%s346 + $0xa4] sm:$0x1]
      %v438 = vsel %vm397, 0, %v437
      %439 = vst [vmem:[%s346 + $0xa4] sm:$0x1] %v438
      %v440 = vld [vmem:[%s346 + $0xb0] sm:$0x1]
      %v441 = vsel %vm397, 0, %v440
      %442 = vst [vmem:[%s346 + $0xb0] sm:$0x1] %v441
      %v443 = vld [vmem:[%s346 + $0xbc] sm:$0x1]
      %v444 = vsel %vm397, 0, %v443
      %445 = vst [vmem:[%s346 + $0xbc] sm:$0x1] %v444
      %v446 = vld [vmem:[%s219] sm:$0xf]
      %v447 = vld [vmem:[%s219 + $0x4] sm:$0xf]
      %v448 = vld [vmem:[%s219 + $0x8] sm:$0xf]
      %v449 = vld [vmem:[%s219 + $0xc] sm:$0xf]
      %v450 = vld [vmem:[%s219 + $0x10] sm:$0xf]
      %v451 = vld [vmem:[%s219 + $0x14] sm:$0xf]
      %v452 = vld [vmem:[%s219 + $0x18] sm:$0xf]
      %v453 = vld [vmem:[%s219 + $0x1c] sm:$0xf]
      %v454 = vld [vmem:[%s219 + $0x20] sm:$0xf]
      %v455 = vld [vmem:[%s219 + $0x24] sm:$0xf]
      %v456 = vld [vmem:[%s219 + $0x28] sm:$0xf]
      %v457 = vld [vmem:[%s219 + $0x2c] sm:$0xf]
      %v458 = vld [vmem:[%s219 + $0x30] sm:$0xf]
      %v459 = vld [vmem:[%s219 + $0x34] sm:$0xf]
      %v460 = vld [vmem:[%s219 + $0x38] sm:$0xf]
      %v461 = vld [vmem:[%s219 + $0x3c] sm:$0xf]
      %v462 = vld [vmem:[%s219 + $0x40] sm:$0xf]
      %v463 = vld [vmem:[%s219 + $0x44] sm:$0xf]
      %v464 = vld [vmem:[%s219 + $0x48] sm:$0xf]
      %v465 = vld [vmem:[%s219 + $0x4c] sm:$0xf]
      %v466 = vld [vmem:[%s219 + $0x50] sm:$0xf]
      %v467 = vld [vmem:[%s219 + $0x54] sm:$0xf]
      %v468 = vld [vmem:[%s219 + $0x58] sm:$0xf]
      %v469 = vld [vmem:[%s219 + $0x5c] sm:$0xf]
      %v470 = vld [vmem:[%s219 + $0x60] sm:$0xf]
      %v471 = vld [vmem:[%s219 + $0x64] sm:$0xf]
      %v472 = vld [vmem:[%s219 + $0x68] sm:$0xf]
      %v473 = vld [vmem:[%s219 + $0x6c] sm:$0xf]
      %v474 = vld [vmem:[%s219 + $0x70] sm:$0xf]
      %v475 = vld [vmem:[%s219 + $0x74] sm:$0xf]
      %v476 = vld [vmem:[%s219 + $0x78] sm:$0xf]
      %v477 = vld [vmem:[%s219 + $0x7c] sm:$0xf]
      %vm478 = vsmask.f32 4368
      %vm479 = vmor %vm237, %vm478
      %v481 = vshrl.u32 %v446, 16
      %v483 = vrot.slane %v481, 7
      %v484 = vshll.u32 %v446, 16
      %v486 = vor.u32 %v483, %v484
      %v487 = vrot.slane %v483, 4
      %v489 = vshrl.u32 %v447, 16
      %v491 = vrot.slane %v489, 7
      %v492 = vshll.u32 %v447, 16
      %v494 = vor.u32 %v491, %v492
      %v495 = vsel %vm479, %v487, %v494
      %v496 = vrot.slane %v491, 4
      %v498 = vshrl.u32 %v448, 16
      %v500 = vrot.slane %v498, 7
      %v501 = vshll.u32 %v448, 16
      %v503 = vor.u32 %v500, %v501
      %v504 = vrot.slane %v500, 4
      %v506 = vshrl.u32 %v449, 16
      %v508 = vrot.slane %v506, 7
      %v509 = vshll.u32 %v449, 16
      %v511 = vor.u32 %v508, %v509
      %v512 = vsel %vm479, %v504, %v511
      %v513 = vrot.slane %v508, 4
      %v515 = vshrl.u32 %v450, 16
      %v517 = vrot.slane %v515, 7
      %v518 = vshll.u32 %v450, 16
      %v520 = vor.u32 %v517, %v518
      %v521 = vrot.slane %v517, 4
      %v523 = vshrl.u32 %v451, 16
      %v525 = vrot.slane %v523, 7
      %v526 = vshll.u32 %v451, 16
      %v528 = vor.u32 %v525, %v526
      %v529 = vsel %vm479, %v521, %v528
      %v530 = vrot.slane %v525, 4
      %v532 = vshrl.u32 %v452, 16
      %v534 = vrot.slane %v532, 7
      %v535 = vshll.u32 %v452, 16
      %v537 = vor.u32 %v534, %v535
      %v538 = vrot.slane %v534, 4
      %v540 = vshrl.u32 %v453, 16
      %v542 = vrot.slane %v540, 7
      %v543 = vshll.u32 %v453, 16
      %v545 = vor.u32 %v542, %v543
      %v546 = vsel %vm479, %v538, %v545
      %v547 = vrot.slane %v542, 4
      %v549 = vshrl.u32 %v454, 16
      %v551 = vrot.slane %v549, 7
      %v552 = vshll.u32 %v454, 16
      %v554 = vor.u32 %v551, %v552
      %v555 = vrot.slane %v551, 4
      %v557 = vshrl.u32 %v455, 16
      %v559 = vrot.slane %v557, 7
      %v560 = vshll.u32 %v455, 16
      %v562 = vor.u32 %v559, %v560
      %v563 = vsel %vm479, %v555, %v562
      %v564 = vrot.slane %v559, 4
      %v566 = vshrl.u32 %v456, 16
      %v568 = vrot.slane %v566, 7
      %v569 = vshll.u32 %v456, 16
      %v571 = vor.u32 %v568, %v569
      %v572 = vrot.slane %v568, 4
      %v574 = vshrl.u32 %v457, 16
      %v576 = vrot.slane %v574, 7
      %v577 = vshll.u32 %v457, 16
      %v579 = vor.u32 %v576, %v577
      %v580 = vsel %vm479, %v572, %v579
      %v581 = vrot.slane %v576, 4
      %v583 = vshrl.u32 %v458, 16
      %v585 = vrot.slane %v583, 7
      %v586 = vshll.u32 %v458, 16
      %v588 = vor.u32 %v585, %v586
      %v589 = vrot.slane %v585, 4
      %v591 = vshrl.u32 %v459, 16
      %v593 = vrot.slane %v591, 7
      %v594 = vshll.u32 %v459, 16
      %v596 = vor.u32 %v593, %v594
      %v597 = vsel %vm479, %v589, %v596
      %v598 = vrot.slane %v593, 4
      %v600 = vshrl.u32 %v460, 16
      %v602 = vrot.slane %v600, 7
      %v603 = vshll.u32 %v460, 16
      %v605 = vor.u32 %v602, %v603
      %v606 = vrot.slane %v602, 4
      %v608 = vshrl.u32 %v461, 16
      %v610 = vrot.slane %v608, 7
      %v611 = vshll.u32 %v461, 16
      %v613 = vor.u32 %v610, %v611
      %v614 = vsel %vm479, %v606, %v613
      %v615 = vrot.slane %v610, 4
      %v617 = vshrl.u32 %v462, 16
      %v619 = vrot.slane %v617, 7
      %v620 = vshll.u32 %v462, 16
      %v622 = vor.u32 %v619, %v620
      %v623 = vrot.slane %v619, 4
      %v625 = vshrl.u32 %v463, 16
      %v627 = vrot.slane %v625, 7
      %v628 = vshll.u32 %v463, 16
      %v630 = vor.u32 %v627, %v628
      %v631 = vsel %vm479, %v623, %v630
      %v632 = vrot.slane %v627, 4
      %v634 = vshrl.u32 %v464, 16
      %v636 = vrot.slane %v634, 7
      %v637 = vshll.u32 %v464, 16
      %v639 = vor.u32 %v636, %v637
      %v640 = vrot.slane %v636, 4
      %v642 = vshrl.u32 %v465, 16
      %v644 = vrot.slane %v642, 7
      %v645 = vshll.u32 %v465, 16
      %v647 = vor.u32 %v644, %v645
      %v648 = vsel %vm479, %v640, %v647
      %v649 = vrot.slane %v644, 4
      %v651 = vshrl.u32 %v466, 16
      %v653 = vrot.slane %v651, 7
      %v654 = vshll.u32 %v466, 16
      %v656 = vor.u32 %v653, %v654
      %v657 = vrot.slane %v653, 4
      %v659 = vshrl.u32 %v467, 16
      %v661 = vrot.slane %v659, 7
      %v662 = vshll.u32 %v467, 16
      %v664 = vor.u32 %v661, %v662
      %v665 = vsel %vm479, %v657, %v664
      %v666 = vrot.slane %v661, 4
      %v668 = vshrl.u32 %v468, 16
      %v670 = vrot.slane %v668, 7
      %v671 = vshll.u32 %v468, 16
      %v673 = vor.u32 %v670, %v671
      %v674 = vrot.slane %v670, 4
      %v676 = vshrl.u32 %v469, 16
      %v678 = vrot.slane %v676, 7
      %v679 = vshll.u32 %v469, 16
      %v681 = vor.u32 %v678, %v679
      %v682 = vsel %vm479, %v674, %v681
      %v683 = vrot.slane %v678, 4
      %v685 = vshrl.u32 %v470, 16
      %v687 = vrot.slane %v685, 7
      %v688 = vshll.u32 %v470, 16
      %v690 = vor.u32 %v687, %v688
      %v691 = vrot.slane %v687, 4
      %v693 = vshrl.u32 %v471, 16
      %v695 = vrot.slane %v693, 7
      %v696 = vshll.u32 %v471, 16
      %v698 = vor.u32 %v695, %v696
      %v699 = vsel %vm479, %v691, %v698
      %v700 = vrot.slane %v695, 4
      %v702 = vshrl.u32 %v472, 16
      %v704 = vrot.slane %v702, 7
      %v705 = vshll.u32 %v472, 16
      %v707 = vor.u32 %v704, %v705
      %v708 = vrot.slane %v704, 4
      %v710 = vshrl.u32 %v473, 16
      %v712 = vrot.slane %v710, 7
      %v713 = vshll.u32 %v473, 16
      %v715 = vor.u32 %v712, %v713
      %v716 = vsel %vm479, %v708, %v715
      %v717 = vrot.slane %v712, 4
      %v719 = vshrl.u32 %v474, 16
      %v721 = vrot.slane %v719, 7
      %v722 = vshll.u32 %v474, 16
      %v724 = vor.u32 %v721, %v722
      %v725 = vrot.slane %v721, 4
      %v727 = vshrl.u32 %v475, 16
      %v729 = vrot.slane %v727, 7
      %v730 = vshll.u32 %v475, 16
      %v732 = vor.u32 %v729, %v730
      %v733 = vsel %vm479, %v725, %v732
      %v734 = vrot.slane %v729, 4
      %v736 = vshrl.u32 %v476, 16
      %v738 = vrot.slane %v736, 7
      %v739 = vshll.u32 %v476, 16
      %v741 = vor.u32 %v738, %v739
      %v742 = vrot.slane %v738, 4
      %v744 = vshrl.u32 %v477, 16
      %v746 = vrot.slane %v744, 7
      %v747 = vshll.u32 %v477, 16
      %v749 = vor.u32 %v746, %v747
      %v750 = vsel %vm479, %v742, %v749
      %v751 = vrot.slane %v746, 4
      %vm800 = vcmask 27648
      %vm801 = vmand %vm800, %vm287
      %v802 = vld [vmem:[%s235] sm:$0xf]
      %v803 = vsel %vm801, %v486, %v802
      %804 = vst [vmem:[%s235] sm:$0xf] %v803
      %805 = vst.msk [vmem:[%s235 + $0x4] sm:$0xf] %vm226, %v495
      %v806 = vld [vmem:[%s235 + $0x8] sm:$0x1]
      %v807 = vsel %vm238, %v496, %v806
      %808 = vst [vmem:[%s235 + $0x8] sm:$0x1] %v807
      %v809 = vld [vmem:[%s235 + $0xc] sm:$0xf]
      %v810 = vsel %vm801, %v503, %v809
      %811 = vst [vmem:[%s235 + $0xc] sm:$0xf] %v810
      %812 = vst.msk [vmem:[%s235 + $0x10] sm:$0xf] %vm226, %v512
      %v813 = vld [vmem:[%s235 + $0x14] sm:$0x1]
      %v814 = vsel %vm238, %v513, %v813
      %815 = vst [vmem:[%s235 + $0x14] sm:$0x1] %v814
      %v816 = vld [vmem:[%s235 + $0x18] sm:$0xf]
      %v817 = vsel %vm801, %v520, %v816
      %818 = vst [vmem:[%s235 + $0x18] sm:$0xf] %v817
      %819 = vst.msk [vmem:[%s235 + $0x1c] sm:$0xf] %vm226, %v529
      %v820 = vld [vmem:[%s235 + $0x20] sm:$0x1]
      %v821 = vsel %vm238, %v530, %v820
      %822 = vst [vmem:[%s235 + $0x20] sm:$0x1] %v821
      %v823 = vld [vmem:[%s235 + $0x24] sm:$0xf]
      %v824 = vsel %vm801, %v537, %v823
      %825 = vst [vmem:[%s235 + $0x24] sm:$0xf] %v824
      %826 = vst.msk [vmem:[%s235 + $0x28] sm:$0xf] %vm226, %v546
      %v827 = vld [vmem:[%s235 + $0x2c] sm:$0x1]
      %v828 = vsel %vm238, %v547, %v827
      %829 = vst [vmem:[%s235 + $0x2c] sm:$0x1] %v828
      %v830 = vld [vmem:[%s235 + $0x30] sm:$0xf]
      %v831 = vsel %vm801, %v554, %v830
      %832 = vst [vmem:[%s235 + $0x30] sm:$0xf] %v831
      %833 = vst.msk [vmem:[%s235 + $0x34] sm:$0xf] %vm226, %v563
      %v834 = vld [vmem:[%s235 + $0x38] sm:$0x1]
      %v835 = vsel %vm238, %v564, %v834
      %836 = vst [vmem:[%s235 + $0x38] sm:$0x1] %v835
      %v837 = vld [vmem:[%s235 + $0x3c] sm:$0xf]
      %v838 = vsel %vm801, %v571, %v837
      %839 = vst [vmem:[%s235 + $0x3c] sm:$0xf] %v838
      %840 = vst.msk [vmem:[%s235 + $0x40] sm:$0xf] %vm226, %v580
      %v841 = vld [vmem:[%s235 + $0x44] sm:$0x1]
      %v842 = vsel %vm238, %v581, %v841
      %843 = vst [vmem:[%s235 + $0x44] sm:$0x1] %v842
      %v844 = vld [vmem:[%s235 + $0x48] sm:$0xf]
      %v845 = vsel %vm801, %v588, %v844
      %846 = vst [vmem:[%s235 + $0x48] sm:$0xf] %v845
      %847 = vst.msk [vmem:[%s235 + $0x4c] sm:$0xf] %vm226, %v597
      %v848 = vld [vmem:[%s235 + $0x50] sm:$0x1]
      %v849 = vsel %vm238, %v598, %v848
      %850 = vst [vmem:[%s235 + $0x50] sm:$0x1] %v849
      %v851 = vld [vmem:[%s235 + $0x54] sm:$0xf]
      %v852 = vsel %vm801, %v605, %v851
      %853 = vst [vmem:[%s235 + $0x54] sm:$0xf] %v852
      %854 = vst.msk [vmem:[%s235 + $0x58] sm:$0xf] %vm226, %v614
      %v855 = vld [vmem:[%s235 + $0x5c] sm:$0x1]
      %v856 = vsel %vm238, %v615, %v855
      %857 = vst [vmem:[%s235 + $0x5c] sm:$0x1] %v856
      %v858 = vld [vmem:[%s235 + $0x60] sm:$0xf]
      %v859 = vsel %vm801, %v622, %v858
      %860 = vst [vmem:[%s235 + $0x60] sm:$0xf] %v859
      %861 = vst.msk [vmem:[%s235 + $0x64] sm:$0xf] %vm226, %v631
      %v862 = vld [vmem:[%s235 + $0x68] sm:$0x1]
      %v863 = vsel %vm238, %v632, %v862
      %864 = vst [vmem:[%s235 + $0x68] sm:$0x1] %v863
      %v865 = vld [vmem:[%s235 + $0x6c] sm:$0xf]
      %v866 = vsel %vm801, %v639, %v865
      %867 = vst [vmem:[%s235 + $0x6c] sm:$0xf] %v866
      %868 = vst.msk [vmem:[%s235 + $0x70] sm:$0xf] %vm226, %v648
      %v869 = vld [vmem:[%s235 + $0x74] sm:$0x1]
      %v870 = vsel %vm238, %v649, %v869
      %871 = vst [vmem:[%s235 + $0x74] sm:$0x1] %v870
      %v872 = vld [vmem:[%s235 + $0x78] sm:$0xf]
      %v873 = vsel %vm801, %v656, %v872
      %874 = vst [vmem:[%s235 + $0x78] sm:$0xf] %v873
      %875 = vst.msk [vmem:[%s235 + $0x7c] sm:$0xf] %vm226, %v665
      %v876 = vld [vmem:[%s235 + $0x80] sm:$0x1]
      %v877 = vsel %vm238, %v666, %v876
      %878 = vst [vmem:[%s235 + $0x80] sm:$0x1] %v877
      %v879 = vld [vmem:[%s235 + $0x84] sm:$0xf]
      %v880 = vsel %vm801, %v673, %v879
      %881 = vst [vmem:[%s235 + $0x84] sm:$0xf] %v880
      %882 = vst.msk [vmem:[%s235 + $0x88] sm:$0xf] %vm226, %v682
      %v883 = vld [vmem:[%s235 + $0x8c] sm:$0x1]
      %v884 = vsel %vm238, %v683, %v883
      %885 = vst [vmem:[%s235 + $0x8c] sm:$0x1] %v884
      %v886 = vld [vmem:[%s235 + $0x90] sm:$0xf]
      %v887 = vsel %vm801, %v690, %v886
      %888 = vst [vmem:[%s235 + $0x90] sm:$0xf] %v887
      %889 = vst.msk [vmem:[%s235 + $0x94] sm:$0xf] %vm226, %v699
      %v890 = vld [vmem:[%s235 + $0x98] sm:$0x1]
      %v891 = vsel %vm238, %v700, %v890
      %892 = vst [vmem:[%s235 + $0x98] sm:$0x1] %v891
      %v893 = vld [vmem:[%s235 + $0x9c] sm:$0xf]
      %v894 = vsel %vm801, %v707, %v893
      %895 = vst [vmem:[%s235 + $0x9c] sm:$0xf] %v894
      %896 = vst.msk [vmem:[%s235 + $0xa0] sm:$0xf] %vm226, %v716
      %v897 = vld [vmem:[%s235 + $0xa4] sm:$0x1]
      %v898 = vsel %vm238, %v717, %v897
      %899 = vst [vmem:[%s235 + $0xa4] sm:$0x1] %v898
      %v900 = vld [vmem:[%s235 + $0xa8] sm:$0xf]
      %v901 = vsel %vm801, %v724, %v900
      %902 = vst [vmem:[%s235 + $0xa8] sm:$0xf] %v901
      %903 = vst.msk [vmem:[%s235 + $0xac] sm:$0xf] %vm226, %v733
      %v904 = vld [vmem:[%s235 + $0xb0] sm:$0x1]
      %v905 = vsel %vm238, %v734, %v904
      %906 = vst [vmem:[%s235 + $0xb0] sm:$0x1] %v905
      %v907 = vld [vmem:[%s235 + $0xb4] sm:$0xf]
      %v908 = vsel %vm801, %v741, %v907
      %909 = vst [vmem:[%s235 + $0xb4] sm:$0xf] %v908
      %910 = vst.msk [vmem:[%s235 + $0xb8] sm:$0xf] %vm226, %v750
      %v911 = vld [vmem:[%s235 + $0xbc] sm:$0x1]
      %v912 = vsel %vm238, %v751, %v911
      %913 = vst [vmem:[%s235 + $0xbc] sm:$0x1] %v912
      %v914 = vld [vmem:[#allocation2] sm:$0xf]
      %v915 = vld [vmem:[#allocation2 + $0x4] sm:$0xf]
      %v916 = vld [vmem:[#allocation2 + $0xc] sm:$0xf]
      %v917 = vld [vmem:[#allocation2 + $0x10] sm:$0xf]
      %v918 = vld [vmem:[#allocation2 + $0x18] sm:$0xf]
      %v919 = vld [vmem:[#allocation2 + $0x1c] sm:$0xf]
      %v920 = vld [vmem:[#allocation2 + $0x24] sm:$0xf]
      %v921 = vld [vmem:[#allocation2 + $0x28] sm:$0xf]
      %v922 = vld [vmem:[#allocation2 + $0x30] sm:$0xf]
      %v923 = vld [vmem:[#allocation2 + $0x34] sm:$0xf]
      %v924 = vld [vmem:[#allocation2 + $0x3c] sm:$0xf]
      %v925 = vld [vmem:[#allocation2 + $0x40] sm:$0xf]
      %v926 = vld [vmem:[#allocation2 + $0x48] sm:$0xf]
      %v927 = vld [vmem:[#allocation2 + $0x4c] sm:$0xf]
      %v928 = vld [vmem:[#allocation2 + $0x54] sm:$0xf]
      %v929 = vld [vmem:[#allocation2 + $0x58] sm:$0xf]
      %v930 = vld [vmem:[#allocation2 + $0x60] sm:$0xf]
      %v931 = vld [vmem:[#allocation2 + $0x64] sm:$0xf]
      %v932 = vld [vmem:[#allocation2 + $0x6c] sm:$0xf]
      %v933 = vld [vmem:[#allocation2 + $0x70] sm:$0xf]
      %v934 = vld [vmem:[#allocation2 + $0x78] sm:$0xf]
      %v935 = vld [vmem:[#allocation2 + $0x7c] sm:$0xf]
      %v936 = vld [vmem:[#allocation2 + $0x84] sm:$0xf]
      %v937 = vld [vmem:[#allocation2 + $0x88] sm:$0xf]
      %v938 = vld [vmem:[#allocation2 + $0x90] sm:$0xf]
      %v939 = vld [vmem:[#allocation2 + $0x94] sm:$0xf]
      %v940 = vld [vmem:[#allocation2 + $0x9c] sm:$0xf]
      %v941 = vld [vmem:[#allocation2 + $0xa0] sm:$0xf]
      %v942 = vld [vmem:[#allocation2 + $0xa8] sm:$0xf]
      %v943 = vld [vmem:[#allocation2 + $0xac] sm:$0xf]
      %v944 = vld [vmem:[#allocation2 + $0xb4] sm:$0xf]
      %v945 = vld [vmem:[#allocation2 + $0xb8] sm:$0xf]
      %v946 = vld [vmem:[#allocation2 + $0xc0] sm:$0xf]
      %v947 = vld [vmem:[#allocation2 + $0xc4] sm:$0xf]
      %v948 = vld [vmem:[#allocation2 + $0xcc] sm:$0xf]
      %v949 = vld [vmem:[#allocation2 + $0xd0] sm:$0xf]
      %v950 = vld [vmem:[%s1] sm:$0x3]
      %s951 = scalar_lea.vmem %s1, 2
      %v952 = vld [vmem:[%s951] sm:$0x3]
      %v985 = vunpack.c.l.b16 %v916
      %v986 = vunpack.c.l.b16 %v917
      %v987 = vunpack.c.l.b16 %v918
      %v988 = vunpack.c.l.b16 %v919
      %v989 = vunpack.c.l.b16 %v920
      %v990 = vunpack.c.l.b16 %v921
      %v991 = vunpack.c.l.b16 %v922
      %v992 = vunpack.c.l.b16 %v923
      %v993 = vunpack.c.l.b16 %v924
      %v994 = vunpack.c.l.b16 %v925
      %v995 = vunpack.c.l.b16 %v926
      %v996 = vunpack.c.l.b16 %v927
      %v997 = vunpack.c.l.b16 %v928
      %v998 = vunpack.c.l.b16 %v929
      %v999 = vunpack.c.l.b16 %v930
      %v1000 = vunpack.c.l.b16 %v931
      %v1001 = vunpack.c.l.b16 %v932
      %v1002 = vunpack.c.l.b16 %v933
      %v1003 = vunpack.c.l.b16 %v934
      %v1004 = vunpack.c.l.b16 %v935
      %v1005 = vunpack.c.l.b16 %v936
      %v1006 = vunpack.c.l.b16 %v937
      %v1007 = vunpack.c.l.b16 %v938
      %v1008 = vunpack.c.l.b16 %v939
      %v1009 = vunpack.c.l.b16 %v940
      %v1010 = vunpack.c.l.b16 %v941
      %v1011 = vunpack.c.l.b16 %v942
      %v1012 = vunpack.c.l.b16 %v943
      %v1013 = vunpack.c.l.b16 %v944
      %v1014 = vunpack.c.l.b16 %v945
      %v1015 = vunpack.c.l.b16 %v946
      %v1016 = vunpack.c.l.b16 %v947
      %v1017 = vpack.c.b16 %v986, %v985
      %v1018 = vpack.c.b16 %v988, %v987
      %v1019 = vpack.c.b16 %v990, %v989
      %v1020 = vpack.c.b16 %v992, %v991
      %v1021 = vpack.c.b16 %v994, %v993
      %v1022 = vpack.c.b16 %v996, %v995
      %v1023 = vpack.c.b16 %v998, %v997
      %v1024 = vpack.c.b16 %v1000, %v999
      %v1025 = vpack.c.b16 %v1002, %v1001
      %v1026 = vpack.c.b16 %v1004, %v1003
      %v1027 = vpack.c.b16 %v1006, %v1005
      %v1028 = vpack.c.b16 %v1008, %v1007
      %v1029 = vpack.c.b16 %v1010, %v1009
      %v1030 = vpack.c.b16 %v1012, %v1011
      %v1031 = vpack.c.b16 %v1014, %v1013
      %v1032 = vpack.c.b16 %v1016, %v1015
      %vm1033 = vcmask 31744
      %v1035 = vsel %vm1033, %v1017, 0
      %v1038 = vsel %vm1033, %v1018, 0
      %v1041 = vsel %vm1033, %v1019, 0
      %v1044 = vsel %vm1033, %v1020, 0
      %v1047 = vsel %vm1033, %v1021, 0
      %v1050 = vsel %vm1033, %v1022, 0
      %v1053 = vsel %vm1033, %v1023, 0
      %v1056 = vsel %vm1033, %v1024, 0
      %v1059 = vsel %vm1033, %v1025, 0
      %v1062 = vsel %vm1033, %v1026, 0
      %v1065 = vsel %vm1033, %v1027, 0
      %v1068 = vsel %vm1033, %v1028, 0
      %v1071 = vsel %vm1033, %v1029, 0
      %v1074 = vsel %vm1033, %v1030, 0
      %v1077 = vsel %vm1033, %v1031, 0
      %v1080 = vsel %vm1033, %v1032, 0
      %vm1082 = vcmask 1041408
      %v1084 = vsel %vm1082, %v952, 0
      %1086 = vmatprep.subr.bf16.mxu0 0
      %1087 = vmatpush1.bf16.msra.mxu0 %v1084
      %1088 = vmatprep.subr.bf16.mxu0 0
      %1089 = vmatpush1.bf16.msra.mxu0 0
      %1090 = vmatprep.subr.bf16.mxu0 0
      %1091 = vmatpush1.bf16.msra.mxu0 0
      %1092 = vmatprep.subr.bf16.mxu0 0
      %1093 = vmatpush1.bf16.msra.mxu0 0
      %1094 = vmatprep.subr.bf16.mxu0 0
      %1095 = vmatpush1.bf16.msra.mxu0 0
      %1096 = vmatprep.subr.bf16.mxu0 0
      %1097 = vmatpush1.bf16.msra.mxu0 0
      %1098 = vmatprep.subr.bf16.mxu0 0
      %1099 = vmatpush1.bf16.msra.mxu0 0
      %1100 = vmatprep.subr.bf16.mxu0 0
      %1101 = vmatpush1.bf16.msra.mxu0 0
      %1102 = vmatprep.subr.bf16.mxu0 0
      %1103 = vmatpush1.bf16.msra.mxu0 0
      %1104 = vmatprep.subr.bf16.mxu0 0
      %1105 = vmatpush1.bf16.msra.mxu0 0
      %1106 = vmatprep.subr.bf16.mxu0 0
      %1107 = vmatpush1.bf16.msra.mxu0 0
      %1108 = vmatprep.subr.bf16.mxu0 0
      %1109 = vmatpush1.bf16.msra.mxu0 0
      %1110 = vmatprep.subr.bf16.mxu0 0
      %1111 = vmatpush1.bf16.msra.mxu0 0
      %1112 = vmatprep.subr.bf16.mxu0 0
      %1113 = vmatpush1.bf16.msra.mxu0 0
      %1114 = vmatprep.subr.bf16.mxu0 0
      %1115 = vmatpush1.bf16.msra.mxu0 0
      %1116 = vmatprep.subr.bf16.mxu0 0
      %1117 = vmatpush1.bf16.msra.mxu0 0
      %1118 = vmatprep.mubr.bf16.mxu0 0
      %1119 = vmatmul.mubr.bf16.gmra.mrb[0].mxu0 %v1035
      %v1120 = vpop.f32.mrb[0].mxu0
      %v1121 = vadd.f32 0.0, %v1120
      %v1122 = vpop.f32.mrb[0].mxu0
      %v1123 = vpop.f32.mrb[0].mxu0
      %v1124 = vadd.f32 0.0, %v1123
      %v1125 = vpop.f32.mrb[0].mxu0
      %1126 = vmatprep.mubr.bf16.mxu0 0
      %1127 = vmatmul.mubr.bf16.gmra.mrb[0].mxu0 %v1038
      %v1128 = vpop.f32.mrb[0].mxu0
      %v1129 = vadd.f32 0.0, %v1128
      %v1130 = vpop.f32.mrb[0].mxu0
      %v1131 = vpop.f32.mrb[0].mxu0
      %v1132 = vadd.f32 0.0, %v1131
      %v1133 = vpop.f32.mrb[0].mxu0
      %1134 = vmatprep.mubr.bf16.mxu0 0
      %1135 = vmatmul.mubr.bf16.gmra.mrb[0].mxu0 %v1041
      %v1136 = vpop.f32.mrb[0].mxu0
      %v1137 = vadd.f32 0.0, %v1136
      %v1138 = vpop.f32.mrb[0].mxu0
      %v1139 = vpop.f32.mrb[0].mxu0
      %v1140 = vadd.f32 0.0, %v1139
      %v1141 = vpop.f32.mrb[0].mxu0
      %1142 = vmatprep.mubr.bf16.mxu0 0
      %1143 = vmatmul.mubr.bf16.gmra.mrb[0].mxu0 %v1044
      %v1144 = vpop.f32.mrb[0].mxu0
      %v1145 = vadd.f32 0.0, %v1144
      %v1146 = vpop.f32.mrb[0].mxu0
      %v1147 = vpop.f32.mrb[0].mxu0
      %v1148 = vadd.f32 0.0, %v1147
      %v1149 = vpop.f32.mrb[0].mxu0
      %1150 = vmatprep.mubr.bf16.mxu0 0
      %1151 = vmatmul.mubr.bf16.gmra.mrb[0].mxu0 %v1047
      %v1152 = vpop.f32.mrb[0].mxu0
      %v1153 = vadd.f32 0.0, %v1152
      %v1154 = vpop.f32.mrb[0].mxu0
      %v1155 = vpop.f32.mrb[0].mxu0
      %v1156 = vadd.f32 0.0, %v1155
      %v1157 = vpop.f32.mrb[0].mxu0
      %1158 = vmatprep.mubr.bf16.mxu0 0
      %1159 = vmatmul.mubr.bf16.gmra.mrb[0].mxu0 %v1050
      %v1160 = vpop.f32.mrb[0].mxu0
      %v1161 = vadd.f32 0.0, %v1160
      %v1162 = vpop.f32.mrb[0].mxu0
      %v1163 = vpop.f32.mrb[0].mxu0
      %v1164 = vadd.f32 0.0, %v1163
      %v1165 = vpop.f32.mrb[0].mxu0
      %1166 = vmatprep.mubr.bf16.mxu0 0
      %1167 = vmatmul.mubr.bf16.gmra.mrb[0].mxu0 %v1053
      %v1168 = vpop.f32.mrb[0].mxu0
      %v1169 = vadd.f32 0.0, %v1168
      %v1170 = vpop.f32.mrb[0].mxu0
      %v1171 = vpop.f32.mrb[0].mxu0
      %v1172 = vadd.f32 0.0, %v1171
      %v1173 = vpop.f32.mrb[0].mxu0
      %1174 = vmatprep.mubr.bf16.mxu0 0
      %1175 = vmatmul.mubr.bf16.gmra.mrb[0].mxu0 %v1056
      %v1176 = vpop.f32.mrb[0].mxu0
      %v1177 = vadd.f32 0.0, %v1176
      %v1178 = vpop.f32.mrb[0].mxu0
      %v1179 = vpop.f32.mrb[0].mxu0
      %v1180 = vadd.f32 0.0, %v1179
      %v1181 = vpop.f32.mrb[0].mxu0
      %1182 = vmatprep.mubr.bf16.mxu0 0
      %1183 = vmatmul.mubr.bf16.gmra.mrb[0].mxu0 %v1059
      %v1184 = vpop.f32.mrb[0].mxu0
      %v1185 = vadd.f32 0.0, %v1184
      %v1186 = vpop.f32.mrb[0].mxu0
      %v1187 = vpop.f32.mrb[0].mxu0
      %v1188 = vadd.f32 0.0, %v1187
      %v1189 = vpop.f32.mrb[0].mxu0
      %1190 = vmatprep.mubr.bf16.mxu0 0
      %1191 = vmatmul.mubr.bf16.gmra.mrb[0].mxu0 %v1062
      %v1192 = vpop.f32.mrb[0].mxu0
      %v1193 = vadd.f32 0.0, %v1192
      %v1194 = vpop.f32.mrb[0].mxu0
      %v1195 = vpop.f32.mrb[0].mxu0
      %v1196 = vadd.f32 0.0, %v1195
      %v1197 = vpop.f32.mrb[0].mxu0
      %1198 = vmatprep.mubr.bf16.mxu0 0
      %1199 = vmatmul.mubr.bf16.gmra.mrb[0].mxu0 %v1065
      %v1200 = vpop.f32.mrb[0].mxu0
      %v1201 = vadd.f32 0.0, %v1200
      %v1202 = vpop.f32.mrb[0].mxu0
      %v1203 = vpop.f32.mrb[0].mxu0
      %v1204 = vadd.f32 0.0, %v1203
      %v1205 = vpop.f32.mrb[0].mxu0
      %1206 = vmatprep.mubr.bf16.mxu0 0
      %1207 = vmatmul.mubr.bf16.gmra.mrb[0].mxu0 %v1068
      %v1208 = vpop.f32.mrb[0].mxu0
      %v1209 = vadd.f32 0.0, %v1208
      %v1210 = vpop.f32.mrb[0].mxu0
      %v1211 = vpop.f32.mrb[0].mxu0
      %v1212 = vadd.f32 0.0, %v1211
      %v1213 = vpop.f32.mrb[0].mxu0
      %1214 = vmatprep.mubr.bf16.mxu0 0
      %1215 = vmatmul.mubr.bf16.gmra.mrb[0].mxu0 %v1071
      %v1216 = vpop.f32.mrb[0].mxu0
      %v1217 = vadd.f32 0.0, %v1216
      %v1218 = vpop.f32.mrb[0].mxu0
      %v1219 = vpop.f32.mrb[0].mxu0
      %v1220 = vadd.f32 0.0, %v1219
      %v1221 = vpop.f32.mrb[0].mxu0
      %1222 = vmatprep.mubr.bf16.mxu0 0
      %1223 = vmatmul.mubr.bf16.gmra.mrb[0].mxu0 %v1074
      %v1224 = vpop.f32.mrb[0].mxu0
      %v1225 = vadd.f32 0.0, %v1224
      %v1226 = vpop.f32.mrb[0].mxu0
      %v1227 = vpop.f32.mrb[0].mxu0
      %v1228 = vadd.f32 0.0, %v1227
      %v1229 = vpop.f32.mrb[0].mxu0
      %1230 = vmatprep.mubr.bf16.mxu0 0
      %1231 = vmatmul.mubr.bf16.gmra.mrb[0].mxu0 %v1077
      %v1232 = vpop.f32.mrb[0].mxu0
      %v1233 = vadd.f32 0.0, %v1232
      %v1234 = vpop.f32.mrb[0].mxu0
      %v1235 = vpop.f32.mrb[0].mxu0
      %v1236 = vadd.f32 0.0, %v1235
      %v1237 = vpop.f32.mrb[0].mxu0
      %1238 = vmatprep.mubr.bf16.mxu0 0
      %1239 = vmatmul.mubr.bf16.gmra.mrb[0].mxu0 %v1080
      %v1240 = vpop.f32.mrb[0].mxu0
      %v1241 = vadd.f32 0.0, %v1240
      %v1242 = vpop.f32.mrb[0].mxu0
      %v1243 = vpop.f32.mrb[0].mxu0
      %v1244 = vadd.f32 0.0, %v1243
      %v1245 = vpop.f32.mrb[0].mxu0
      %1246 = vdwg.mxu0
      %v1249 = vunpack.c.l.b16 %v914
      %v1250 = vunpack.c.l.b16 %v915
      %v1251 = vpack.c.b16 %v1250, %v1249
      %v1253 = vsel %vm1033, %v1251, 0
      %v1256 = vsel %vm1082, %v950, 0
      %1258 = vmatprep.subr.bf16.mxu0 0
      %1259 = vmatpush1.bf16.msra.mxu0 %v1256
      %1260 = vmatprep.subr.bf16.mxu0 0
      %1261 = vmatpush1.bf16.msra.mxu0 0
      %1262 = vmatprep.subr.bf16.mxu0 0
      %1263 = vmatpush1.bf16.msra.mxu0 0
      %1264 = vmatprep.subr.bf16.mxu0 0
      %1265 = vmatpush1.bf16.msra.mxu0 0
      %1266 = vmatprep.subr.bf16.mxu0 0
      %1267 = vmatpush1.bf16.msra.mxu0 0
      %1268 = vmatprep.subr.bf16.mxu0 0
      %1269 = vmatpush1.bf16.msra.mxu0 0
      %1270 = vmatprep.subr.bf16.mxu0 0
      %1271 = vmatpush1.bf16.msra.mxu0 0
      %1272 = vmatprep.subr.bf16.mxu0 0
      %1273 = vmatpush1.bf16.msra.mxu0 0
      %1274 = vmatprep.subr.bf16.mxu0 0
      %1275 = vmatpush1.bf16.msra.mxu0 0
      %1276 = vmatprep.subr.bf16.mxu0 0
      %1277 = vmatpush1.bf16.msra.mxu0 0
      %1278 = vmatprep.subr.bf16.mxu0 0
      %1279 = vmatpush1.bf16.msra.mxu0 0
      %1280 = vmatprep.subr.bf16.mxu0 0
      %1281 = vmatpush1.bf16.msra.mxu0 0
      %1282 = vmatprep.subr.bf16.mxu0 0
      %1283 = vmatpush1.bf16.msra.mxu0 0
      %1284 = vmatprep.subr.bf16.mxu0 0
      %1285 = vmatpush1.bf16.msra.mxu0 0
      %1286 = vmatprep.subr.bf16.mxu0 0
      %1287 = vmatpush1.bf16.msra.mxu0 0
      %1288 = vmatprep.subr.bf16.mxu0 0
      %1289 = vmatpush1.bf16.msra.mxu0 0
      %1290 = vmatprep.mubr.bf16.mxu0 0
      %1291 = vmatmul.mubr.bf16.gmra.mrb[0].mxu0 %v1253
      %v1292 = vpop.f32.mrb[0].mxu0
      %v1293 = vadd.f32 %v1121, %v1292
      %v1294 = vpop.f32.mrb[0].mxu0
      %v1295 = vpop.f32.mrb[0].mxu0
      %v1296 = vadd.f32 %v1124, %v1295
      %v1297 = vpop.f32.mrb[0].mxu0
      %1298 = vmatprep.mubr.bf16.mxu0 0
      %1299 = vmatmul.mubr.bf16.gmra.mrb[0].mxu0 %v1035
      %v1300 = vpop.f32.mrb[0].mxu0
      %v1301 = vadd.f32 %v1129, %v1300
      %v1302 = vpop.f32.mrb[0].mxu0
      %v1303 = vpop.f32.mrb[0].mxu0
      %v1304 = vadd.f32 %v1132, %v1303
      %v1305 = vpop.f32.mrb[0].mxu0
      %1306 = vmatprep.mubr.bf16.mxu0 0
      %1307 = vmatmul.mubr.bf16.gmra.mrb[0].mxu0 %v1038
      %v1308 = vpop.f32.mrb[0].mxu0
      %v1309 = vadd.f32 %v1137, %v1308
      %v1310 = vpop.f32.mrb[0].mxu0
      %v1311 = vpop.f32.mrb[0].mxu0
      %v1312 = vadd.f32 %v1140, %v1311
      %v1313 = vpop.f32.mrb[0].mxu0
      %1314 = vmatprep.mubr.bf16.mxu0 0
      %1315 = vmatmul.mubr.bf16.gmra.mrb[0].mxu0 %v1041
      %v1316 = vpop.f32.mrb[0].mxu0
      %v1317 = vadd.f32 %v1145, %v1316
      %v1318 = vpop.f32.mrb[0].mxu0
      %v1319 = vpop.f32.mrb[0].mxu0
      %v1320 = vadd.f32 %v1148, %v1319
      %v1321 = vpop.f32.mrb[0].mxu0
      %1322 = vmatprep.mubr.bf16.mxu0 0
      %1323 = vmatmul.mubr.bf16.gmra.mrb[0].mxu0 %v1044
      %v1324 = vpop.f32.mrb[0].mxu0
      %v1325 = vadd.f32 %v1153, %v1324
      %v1326 = vpop.f32.mrb[0].mxu0
      %v1327 = vpop.f32.mrb[0].mxu0
      %v1328 = vadd.f32 %v1156, %v1327
      %v1329 = vpop.f32.mrb[0].mxu0
      %1330 = vmatprep.mubr.bf16.mxu0 0
      %1331 = vmatmul.mubr.bf16.gmra.mrb[0].mxu0 %v1047
      %v1332 = vpop.f32.mrb[0].mxu0
      %v1333 = vadd.f32 %v1161, %v1332
      %v1334 = vpop.f32.mrb[0].mxu0
      %v1335 = vpop.f32.mrb[0].mxu0
      %v1336 = vadd.f32 %v1164, %v1335
      %v1337 = vpop.f32.mrb[0].mxu0
      %1338 = vmatprep.mubr.bf16.mxu0 0
      %1339 = vmatmul.mubr.bf16.gmra.mrb[0].mxu0 %v1050
      %v1340 = vpop.f32.mrb[0].mxu0
      %v1341 = vadd.f32 %v1169, %v1340
      %v1342 = vpop.f32.mrb[0].mxu0
      %v1343 = vpop.f32.mrb[0].mxu0
      %v1344 = vadd.f32 %v1172, %v1343
      %v1345 = vpop.f32.mrb[0].mxu0
      %1346 = vmatprep.mubr.bf16.mxu0 0
      %1347 = vmatmul.mubr.bf16.gmra.mrb[0].mxu0 %v1053
      %v1348 = vpop.f32.mrb[0].mxu0
      %v1349 = vadd.f32 %v1177, %v1348
      %v1350 = vpop.f32.mrb[0].mxu0
      %v1351 = vpop.f32.mrb[0].mxu0
      %v1352 = vadd.f32 %v1180, %v1351
      %v1353 = vpop.f32.mrb[0].mxu0
      %1354 = vmatprep.mubr.bf16.mxu0 0
      %1355 = vmatmul.mubr.bf16.gmra.mrb[0].mxu0 %v1056
      %v1356 = vpop.f32.mrb[0].mxu0
      %v1357 = vadd.f32 %v1185, %v1356
      %v1358 = vpop.f32.mrb[0].mxu0
      %v1359 = vpop.f32.mrb[0].mxu0
      %v1360 = vadd.f32 %v1188, %v1359
      %v1361 = vpop.f32.mrb[0].mxu0
      %1362 = vmatprep.mubr.bf16.mxu0 0
      %1363 = vmatmul.mubr.bf16.gmra.mrb[0].mxu0 %v1059
      %v1364 = vpop.f32.mrb[0].mxu0
      %v1365 = vadd.f32 %v1193, %v1364
      %v1366 = vpop.f32.mrb[0].mxu0
      %v1367 = vpop.f32.mrb[0].mxu0
      %v1368 = vadd.f32 %v1196, %v1367
      %v1369 = vpop.f32.mrb[0].mxu0
      %1370 = vmatprep.mubr.bf16.mxu0 0
      %1371 = vmatmul.mubr.bf16.gmra.mrb[0].mxu0 %v1062
      %v1372 = vpop.f32.mrb[0].mxu0
      %v1373 = vadd.f32 %v1201, %v1372
      %v1374 = vpop.f32.mrb[0].mxu0
      %v1375 = vpop.f32.mrb[0].mxu0
      %v1376 = vadd.f32 %v1204, %v1375
      %v1377 = vpop.f32.mrb[0].mxu0
      %1378 = vmatprep.mubr.bf16.mxu0 0
      %1379 = vmatmul.mubr.bf16.gmra.mrb[0].mxu0 %v1065
      %v1380 = vpop.f32.mrb[0].mxu0
      %v1381 = vadd.f32 %v1209, %v1380
      %v1382 = vpop.f32.mrb[0].mxu0
      %v1383 = vpop.f32.mrb[0].mxu0
      %v1384 = vadd.f32 %v1212, %v1383
      %v1385 = vpop.f32.mrb[0].mxu0
      %1386 = vmatprep.mubr.bf16.mxu0 0
      %1387 = vmatmul.mubr.bf16.gmra.mrb[0].mxu0 %v1068
      %v1388 = vpop.f32.mrb[0].mxu0
      %v1389 = vadd.f32 %v1217, %v1388
      %v1390 = vpop.f32.mrb[0].mxu0
      %v1391 = vpop.f32.mrb[0].mxu0
      %v1392 = vadd.f32 %v1220, %v1391
      %v1393 = vpop.f32.mrb[0].mxu0
      %1394 = vmatprep.mubr.bf16.mxu0 0
      %1395 = vmatmul.mubr.bf16.gmra.mrb[0].mxu0 %v1071
      %v1396 = vpop.f32.mrb[0].mxu0
      %v1397 = vadd.f32 %v1225, %v1396
      %v1398 = vpop.f32.mrb[0].mxu0
      %v1399 = vpop.f32.mrb[0].mxu0
      %v1400 = vadd.f32 %v1228, %v1399
      %v1401 = vpop.f32.mrb[0].mxu0
      %1402 = vmatprep.mubr.bf16.mxu0 0
      %1403 = vmatmul.mubr.bf16.gmra.mrb[0].mxu0 %v1074
      %v1404 = vpop.f32.mrb[0].mxu0
      %v1405 = vadd.f32 %v1233, %v1404
      %v1406 = vpop.f32.mrb[0].mxu0
      %v1407 = vpop.f32.mrb[0].mxu0
      %v1408 = vadd.f32 %v1236, %v1407
      %v1409 = vpop.f32.mrb[0].mxu0
      %1410 = vmatprep.mubr.bf16.mxu0 0
      %1411 = vmatmul.mubr.bf16.gmra.mrb[0].mxu0 %v1077
      %v1412 = vpop.f32.mrb[0].mxu0
      %v1413 = vadd.f32 %v1241, %v1412
      %v1414 = vpop.f32.mrb[0].mxu0
      %v1415 = vpop.f32.mrb[0].mxu0
      %v1416 = vadd.f32 %v1244, %v1415
      %v1417 = vpop.f32.mrb[0].mxu0
      %1418 = vdwg.mxu0
      %s1419 = scalar_lea.vmem %s1, 4
      %v1420 = vld [vmem:[%s1419] sm:$0x3]
      %v1423 = vunpack.c.l.b16 %v948
      %v1424 = vunpack.c.l.b16 %v949
      %v1425 = vpack.c.b16 %v1424, %v1423
      %v1427 = vsel %vm1033, %v1425, 0
      %v1430 = vsel %vm1082, %v1420, 0
      %1432 = vmatprep.subr.bf16.mxu0 0
      %1433 = vmatpush1.bf16.msra.mxu0 %v1430
      %1434 = vmatprep.subr.bf16.mxu0 0
      %1435 = vmatpush1.bf16.msra.mxu0 0
      %1436 = vmatprep.subr.bf16.mxu0 0
      %1437 = vmatpush1.bf16.msra.mxu0 0
      %1438 = vmatprep.subr.bf16.mxu0 0
      %1439 = vmatpush1.bf16.msra.mxu0 0
      %1440 = vmatprep.subr.bf16.mxu0 0
      %1441 = vmatpush1.bf16.msra.mxu0 0
      %1442 = vmatprep.subr.bf16.mxu0 0
      %1443 = vmatpush1.bf16.msra.mxu0 0
      %1444 = vmatprep.subr.bf16.mxu0 0
      %1445 = vmatpush1.bf16.msra.mxu0 0
      %1446 = vmatprep.subr.bf16.mxu0 0
      %1447 = vmatpush1.bf16.msra.mxu0 0
      %1448 = vmatprep.subr.bf16.mxu0 0
      %1449 = vmatpush1.bf16.msra.mxu0 0
      %1450 = vmatprep.subr.bf16.mxu0 0
      %1451 = vmatpush1.bf16.msra.mxu0 0
      %1452 = vmatprep.subr.bf16.mxu0 0
      %1453 = vmatpush1.bf16.msra.mxu0 0
      %1454 = vmatprep.subr.bf16.mxu0 0
      %1455 = vmatpush1.bf16.msra.mxu0 0
      %1456 = vmatprep.subr.bf16.mxu0 0
      %1457 = vmatpush1.bf16.msra.mxu0 0
      %1458 = vmatprep.subr.bf16.mxu0 0
      %1459 = vmatpush1.bf16.msra.mxu0 0
      %1460 = vmatprep.subr.bf16.mxu0 0
      %1461 = vmatpush1.bf16.msra.mxu0 0
      %1462 = vmatprep.subr.bf16.mxu0 0
      %1463 = vmatpush1.bf16.msra.mxu0 0
      %1464 = vmatprep.mubr.bf16.mxu0 0
      %1465 = vmatmul.mubr.bf16.gmra.mrb[0].mxu0 %v1038
      %v1466 = vpop.f32.mrb[0].mxu0
      %v1467 = vadd.f32 0.0, %v1466
      %v1468 = vpop.f32.mrb[0].mxu0
      %v1469 = vpop.f32.mrb[0].mxu0
      %v1470 = vadd.f32 0.0, %v1469
      %v1471 = vpop.f32.mrb[0].mxu0
      %1472 = vmatprep.mubr.bf16.mxu0 0
      %1473 = vmatmul.mubr.bf16.gmra.mrb[0].mxu0 %v1041
      %v1474 = vpop.f32.mrb[0].mxu0
      %v1475 = vadd.f32 0.0, %v1474
      %v1476 = vpop.f32.mrb[0].mxu0
      %v1477 = vpop.f32.mrb[0].mxu0
      %v1478 = vadd.f32 0.0, %v1477
      %v1479 = vpop.f32.mrb[0].mxu0
      %1480 = vmatprep.mubr.bf16.mxu0 0
      %1481 = vmatmul.mubr.bf16.gmra.mrb[0].mxu0 %v1044
      %v1482 = vpop.f32.mrb[0].mxu0
      %v1483 = vadd.f32 0.0, %v1482
      %v1484 = vpop.f32.mrb[0].mxu0
      %v1485 = vpop.f32.mrb[0].mxu0
      %v1486 = vadd.f32 0.0, %v1485
      %v1487 = vpop.f32.mrb[0].mxu0
      %1488 = vmatprep.mubr.bf16.mxu0 0
      %1489 = vmatmul.mubr.bf16.gmra.mrb[0].mxu0 %v1047
      %v1490 = vpop.f32.mrb[0].mxu0
      %v1491 = vadd.f32 0.0, %v1490
      %v1492 = vpop.f32.mrb[0].mxu0
      %v1493 = vpop.f32.mrb[0].mxu0
      %v1494 = vadd.f32 0.0, %v1493
      %v1495 = vpop.f32.mrb[0].mxu0
      %1496 = vmatprep.mubr.bf16.mxu0 0
      %1497 = vmatmul.mubr.bf16.gmra.mrb[0].mxu0 %v1050
      %v1498 = vpop.f32.mrb[0].mxu0
      %v1499 = vadd.f32 0.0, %v1498
      %v1500 = vpop.f32.mrb[0].mxu0
      %v1501 = vpop.f32.mrb[0].mxu0
      %v1502 = vadd.f32 0.0, %v1501
      %v1503 = vpop.f32.mrb[0].mxu0
      %1504 = vmatprep.mubr.bf16.mxu0 0
      %1505 = vmatmul.mubr.bf16.gmra.mrb[0].mxu0 %v1053
      %v1506 = vpop.f32.mrb[0].mxu0
      %v1507 = vadd.f32 0.0, %v1506
      %v1508 = vpop.f32.mrb[0].mxu0
      %v1509 = vpop.f32.mrb[0].mxu0
      %v1510 = vadd.f32 0.0, %v1509
      %v1511 = vpop.f32.mrb[0].mxu0
      %1512 = vmatprep.mubr.bf16.mxu0 0
      %1513 = vmatmul.mubr.bf16.gmra.mrb[0].mxu0 %v1056
      %v1514 = vpop.f32.mrb[0].mxu0
      %v1515 = vadd.f32 0.0, %v1514
      %v1516 = vpop.f32.mrb[0].mxu0
      %v1517 = vpop.f32.mrb[0].mxu0
      %v1518 = vadd.f32 0.0, %v1517
      %v1519 = vpop.f32.mrb[0].mxu0
      %1520 = vmatprep.mubr.bf16.mxu0 0
      %1521 = vmatmul.mubr.bf16.gmra.mrb[0].mxu0 %v1059
      %v1522 = vpop.f32.mrb[0].mxu0
      %v1523 = vadd.f32 0.0, %v1522
      %v1524 = vpop.f32.mrb[0].mxu0
      %v1525 = vpop.f32.mrb[0].mxu0
      %v1526 = vadd.f32 0.0, %v1525
      %v1527 = vpop.f32.mrb[0].mxu0
      %1528 = vmatprep.mubr.bf16.mxu0 0
      %1529 = vmatmul.mubr.bf16.gmra.mrb[0].mxu0 %v1062
      %v1530 = vpop.f32.mrb[0].mxu0
      %v1531 = vadd.f32 0.0, %v1530
      %v1532 = vpop.f32.mrb[0].mxu0
      %v1533 = vpop.f32.mrb[0].mxu0
      %v1534 = vadd.f32 0.0, %v1533
      %v1535 = vpop.f32.mrb[0].mxu0
      %1536 = vmatprep.mubr.bf16.mxu0 0
      %1537 = vmatmul.mubr.bf16.gmra.mrb[0].mxu0 %v1065
      %v1538 = vpop.f32.mrb[0].mxu0
      %v1539 = vadd.f32 0.0, %v1538
      %v1540 = vpop.f32.mrb[0].mxu0
      %v1541 = vpop.f32.mrb[0].mxu0
      %v1542 = vadd.f32 0.0, %v1541
      %v1543 = vpop.f32.mrb[0].mxu0
      %1544 = vmatprep.mubr.bf16.mxu0 0
      %1545 = vmatmul.mubr.bf16.gmra.mrb[0].mxu0 %v1068
      %v1546 = vpop.f32.mrb[0].mxu0
      %v1547 = vadd.f32 0.0, %v1546
      %v1548 = vpop.f32.mrb[0].mxu0
      %v1549 = vpop.f32.mrb[0].mxu0
      %v1550 = vadd.f32 0.0, %v1549
      %v1551 = vpop.f32.mrb[0].mxu0
      %1552 = vmatprep.mubr.bf16.mxu0 0
      %1553 = vmatmul.mubr.bf16.gmra.mrb[0].mxu0 %v1071
      %v1554 = vpop.f32.mrb[0].mxu0
      %v1555 = vadd.f32 0.0, %v1554
      %v1556 = vpop.f32.mrb[0].mxu0
      %v1557 = vpop.f32.mrb[0].mxu0
      %v1558 = vadd.f32 0.0, %v1557
      %v1559 = vpop.f32.mrb[0].mxu0
      %1560 = vmatprep.mubr.bf16.mxu0 0
      %1561 = vmatmul.mubr.bf16.gmra.mrb[0].mxu0 %v1074
      %v1562 = vpop.f32.mrb[0].mxu0
      %v1563 = vadd.f32 0.0, %v1562
      %v1564 = vpop.f32.mrb[0].mxu0
      %v1565 = vpop.f32.mrb[0].mxu0
      %v1566 = vadd.f32 0.0, %v1565
      %v1567 = vpop.f32.mrb[0].mxu0
      %1568 = vmatprep.mubr.bf16.mxu0 0
      %1569 = vmatmul.mubr.bf16.gmra.mrb[0].mxu0 %v1077
      %v1570 = vpop.f32.mrb[0].mxu0
      %v1571 = vadd.f32 0.0, %v1570
      %v1572 = vpop.f32.mrb[0].mxu0
      %v1573 = vpop.f32.mrb[0].mxu0
      %v1574 = vadd.f32 0.0, %v1573
      %v1575 = vpop.f32.mrb[0].mxu0
      %1576 = vmatprep.mubr.bf16.mxu0 0
      %1577 = vmatmul.mubr.bf16.gmra.mrb[0].mxu0 %v1080
      %v1578 = vpop.f32.mrb[0].mxu0
      %v1579 = vadd.f32 0.0, %v1578
      %v1580 = vpop.f32.mrb[0].mxu0
      %v1581 = vpop.f32.mrb[0].mxu0
      %v1582 = vadd.f32 0.0, %v1581
      %v1583 = vpop.f32.mrb[0].mxu0
      %1584 = vmatprep.mubr.bf16.mxu0 0
      %1585 = vmatmul.mubr.bf16.gmra.mrb[0].mxu0 %v1427
      %v1586 = vpop.f32.mrb[0].mxu0
      %v1587 = vadd.f32 0.0, %v1586
      %v1588 = vpop.f32.mrb[0].mxu0
      %v1589 = vpop.f32.mrb[0].mxu0
      %v1590 = vadd.f32 0.0, %v1589
      %v1591 = vpop.f32.mrb[0].mxu0
      %1592 = vdwg.mxu0
      %v1593 = vadd.f32 %v1293, %v1467
      %v1594 = vadd.f32 %v1296, %v1470
      %v1595 = vadd.f32 %v1301, %v1475
      %v1596 = vadd.f32 %v1304, %v1478
      %v1597 = vadd.f32 %v1309, %v1483
      %v1598 = vadd.f32 %v1312, %v1486
      %v1599 = vadd.f32 %v1317, %v1491
      %v1600 = vadd.f32 %v1320, %v1494
      %v1601 = vadd.f32 %v1325, %v1499
      %v1602 = vadd.f32 %v1328, %v1502
      %v1603 = vadd.f32 %v1333, %v1507
      %v1604 = vadd.f32 %v1336, %v1510
      %v1605 = vadd.f32 %v1341, %v1515
      %v1606 = vadd.f32 %v1344, %v1518
      %v1607 = vadd.f32 %v1349, %v1523
      %v1608 = vadd.f32 %v1352, %v1526
      %v1609 = vadd.f32 %v1357, %v1531
      %v1610 = vadd.f32 %v1360, %v1534
      %v1611 = vadd.f32 %v1365, %v1539
      %v1612 = vadd.f32 %v1368, %v1542
      %v1613 = vadd.f32 %v1373, %v1547
      %v1614 = vadd.f32 %v1376, %v1550
      %v1615 = vadd.f32 %v1381, %v1555
      %v1616 = vadd.f32 %v1384, %v1558
      %v1617 = vadd.f32 %v1389, %v1563
      %v1618 = vadd.f32 %v1392, %v1566
      %v1619 = vadd.f32 %v1397, %v1571
      %v1620 = vadd.f32 %v1400, %v1574
      %v1621 = vadd.f32 %v1405, %v1579
      %v1622 = vadd.f32 %v1408, %v1582
      %v1623 = vadd.f32 %v1413, %v1587
      %v1624 = vadd.f32 %v1416, %v1590
      %v1625 = vld [vmem:[#allocation2] sm:$0xf]
      %v1626 = vld [vmem:[#allocation2 + $0x4] sm:$0xf]
      %v1627 = vld [vmem:[#allocation2 + $0x8] sm:$0x1]
      %v1628 = vld [vmem:[#allocation2 + $0xc] sm:$0xf]
      %v1629 = vld [vmem:[#allocation2 + $0x10] sm:$0xf]
      %v1630 = vld [vmem:[#allocation2 + $0x14] sm:$0x1]
      %v1631 = vld [vmem:[#allocation2 + $0x18] sm:$0xf]
      %v1632 = vld [vmem:[#allocation2 + $0x1c] sm:$0xf]
      %v1633 = vld [vmem:[#allocation2 + $0x20] sm:$0x1]
      %v1634 = vld [vmem:[#allocation2 + $0x24] sm:$0xf]
      %v1635 = vld [vmem:[#allocation2 + $0x28] sm:$0xf]
      %v1636 = vld [vmem:[#allocation2 + $0x2c] sm:$0x1]
      %v1637 = vld [vmem:[#allocation2 + $0x30] sm:$0xf]
      %v1638 = vld [vmem:[#allocation2 + $0x34] sm:$0xf]
      %v1639 = vld [vmem:[#allocation2 + $0x38] sm:$0x1]
      %v1640 = vld [vmem:[#allocation2 + $0x3c] sm:$0xf]
      %v1641 = vld [vmem:[#allocation2 + $0x40] sm:$0xf]
      %v1642 = vld [vmem:[#allocation2 + $0x44] sm:$0x1]
      %v1643 = vld [vmem:[#allocation2 + $0x48] sm:$0xf]
      %v1644 = vld [vmem:[#allocation2 + $0x4c] sm:$0xf]
      %v1645 = vld [vmem:[#allocation2 + $0x50] sm:$0x1]
      %v1646 = vld [vmem:[#allocation2 + $0x54] sm:$0xf]
      %v1647 = vld [vmem:[#allocation2 + $0x58] sm:$0xf]
      %v1648 = vld [vmem:[#allocation2 + $0x5c] sm:$0x1]
      %v1649 = vld [vmem:[#allocation2 + $0x60] sm:$0xf]
      %v1650 = vld [vmem:[#allocation2 + $0x64] sm:$0xf]
      %v1651 = vld [vmem:[#allocation2 + $0x68] sm:$0x1]
      %v1652 = vld [vmem:[#allocation2 + $0x6c] sm:$0xf]
      %v1653 = vld [vmem:[#allocation2 + $0x70] sm:$0xf]
      %v1654 = vld [vmem:[#allocation2 + $0x74] sm:$0x1]
      %v1655 = vld [vmem:[#allocation2 + $0x78] sm:$0xf]
      %v1656 = vld [vmem:[#allocation2 + $0x7c] sm:$0xf]
      %v1657 = vld [vmem:[#allocation2 + $0x80] sm:$0x1]
      %v1658 = vld [vmem:[#allocation2 + $0x84] sm:$0xf]
      %v1659 = vld [vmem:[#allocation2 + $0x88] sm:$0xf]
      %v1660 = vld [vmem:[#allocation2 + $0x8c] sm:$0x1]
      %v1661 = vld [vmem:[#allocation2 + $0x90] sm:$0xf]
      %v1662 = vld [vmem:[#allocation2 + $0x94] sm:$0xf]
      %v1663 = vld [vmem:[#allocation2 + $0x98] sm:$0x1]
      %v1664 = vld [vmem:[#allocation2 + $0x9c] sm:$0xf]
      %v1665 = vld [vmem:[#allocation2 + $0xa0] sm:$0xf]
      %v1666 = vld [vmem:[#allocation2 + $0xa4] sm:$0x1]
      %v1667 = vld [vmem:[#allocation2 + $0xa8] sm:$0xf]
      %v1668 = vld [vmem:[#allocation2 + $0xac] sm:$0xf]
      %v1669 = vld [vmem:[#allocation2 + $0xb0] sm:$0x1]
      %v1670 = vld [vmem:[#allocation2 + $0xb4] sm:$0xf]
      %v1671 = vld [vmem:[#allocation2 + $0xb8] sm:$0xf]
      %v1672 = vld [vmem:[#allocation2 + $0xbc] sm:$0x1]
      %v1673 = vld [vmem:[#allocation2 + $0xc0] sm:$0xf]
      %v1674 = vld [vmem:[#allocation2 + $0xc4] sm:$0xf]
      %v1675 = vld [vmem:[#allocation2 + $0xc8] sm:$0x1]
      %v1676 = vld [vmem:[#allocation2 + $0xcc] sm:$0xf]
      %v1677 = vld [vmem:[#allocation2 + $0xd0] sm:$0xf]
      %v1678 = vld [vmem:[#allocation2 + $0xd4] sm:$0x1]
      %vm1679 = vsmask.f32 3328
      %vm1680 = vsmask.f32 7440
      %vm1681 = vmor %vm1679, %vm1680
      %v1683 = vshrl.u32 %v1625, 16
      %v1685 = vrot.slane %v1683, 4
      %v1686 = vshll.u32 %v1625, 16
      %v1688 = vrot.slane %v1686, 5
      %v1689 = vor.u32 %v1685, %v1688
      %v1690 = vrot.slane %v1689, 4
      %v1692 = vshll.u32 %v1626, 16
      %v1694 = vrot.slane %v1692, 5
      %v1695 = vsel %vm1681, %v1690, %v1694
      %v1696 = vshrl.u32 %v1626, 16
      %v1698 = vrot.slane %v1696, 4
      %v1699 = vor.u32 %v1698, %v1694
      %v1700 = vrot.slane %v1699, 4
      %v1702 = vshll.u32 %v1627, 16
      %v1704 = vrot.slane %v1702, 5
      %v1705 = vsel %vm1681, %v1700, %v1704
      %v1707 = vshrl.u32 %v1628, 16
      %v1709 = vrot.slane %v1707, 4
      %v1710 = vshll.u32 %v1628, 16
      %v1712 = vrot.slane %v1710, 5
      %v1713 = vor.u32 %v1709, %v1712
      %v1714 = vrot.slane %v1713, 4
      %v1716 = vshll.u32 %v1629, 16
      %v1718 = vrot.slane %v1716, 5
      %v1719 = vsel %vm1681, %v1714, %v1718
      %v1720 = vshrl.u32 %v1629, 16
      %v1722 = vrot.slane %v1720, 4
      %v1723 = vor.u32 %v1722, %v1718
      %v1724 = vrot.slane %v1723, 4
      %v1726 = vshll.u32 %v1630, 16
      %v1728 = vrot.slane %v1726, 5
      %v1729 = vsel %vm1681, %v1724, %v1728
      %v1731 = vshrl.u32 %v1631, 16
      %v1733 = vrot.slane %v1731, 4
      %v1734 = vshll.u32 %v1631, 16
      %v1736 = vrot.slane %v1734, 5
      %v1737 = vor.u32 %v1733, %v1736
      %v1738 = vrot.slane %v1737, 4
      %v1740 = vshll.u32 %v1632, 16
      %v1742 = vrot.slane %v1740, 5
      %v1743 = vsel %vm1681, %v1738, %v1742
      %v1744 = vshrl.u32 %v1632, 16
      %v1746 = vrot.slane %v1744, 4
      %v1747 = vor.u32 %v1746, %v1742
      %v1748 = vrot.slane %v1747, 4
      %v1750 = vshll.u32 %v1633, 16
      %v1752 = vrot.slane %v1750, 5
      %v1753 = vsel %vm1681, %v1748, %v1752
      %v1755 = vshrl.u32 %v1634, 16
      %v1757 = vrot.slane %v1755, 4
      %v1758 = vshll.u32 %v1634, 16
      %v1760 = vrot.slane %v1758, 5
      %v1761 = vor.u32 %v1757, %v1760
      %v1762 = vrot.slane %v1761, 4
      %v1764 = vshll.u32 %v1635, 16
      %v1766 = vrot.slane %v1764, 5
      %v1767 = vsel %vm1681, %v1762, %v1766
      %v1768 = vshrl.u32 %v1635, 16
      %v1770 = vrot.slane %v1768, 4
      %v1771 = vor.u32 %v1770, %v1766
      %v1772 = vrot.slane %v1771, 4
      %v1774 = vshll.u32 %v1636, 16
      %v1776 = vrot.slane %v1774, 5
      %v1777 = vsel %vm1681, %v1772, %v1776
      %v1779 = vshrl.u32 %v1637, 16
      %v1781 = vrot.slane %v1779, 4
      %v1782 = vshll.u32 %v1637, 16
      %v1784 = vrot.slane %v1782, 5
      %v1785 = vor.u32 %v1781, %v1784
      %v1786 = vrot.slane %v1785, 4
      %v1788 = vshll.u32 %v1638, 16
      %v1790 = vrot.slane %v1788, 5
      %v1791 = vsel %vm1681, %v1786, %v1790
      %v1792 = vshrl.u32 %v1638, 16
      %v1794 = vrot.slane %v1792, 4
      %v1795 = vor.u32 %v1794, %v1790
      %v1796 = vrot.slane %v1795, 4
      %v1798 = vshll.u32 %v1639, 16
      %v1800 = vrot.slane %v1798, 5
      %v1801 = vsel %vm1681, %v1796, %v1800
      %v1803 = vshrl.u32 %v1640, 16
      %v1805 = vrot.slane %v1803, 4
      %v1806 = vshll.u32 %v1640, 16
      %v1808 = vrot.slane %v1806, 5
      %v1809 = vor.u32 %v1805, %v1808
      %v1810 = vrot.slane %v1809, 4
      %v1812 = vshll.u32 %v1641, 16
      %v1814 = vrot.slane %v1812, 5
      %v1815 = vsel %vm1681, %v1810, %v1814
      %v1816 = vshrl.u32 %v1641, 16
      %v1818 = vrot.slane %v1816, 4
      %v1819 = vor.u32 %v1818, %v1814
      %v1820 = vrot.slane %v1819, 4
      %v1822 = vshll.u32 %v1642, 16
      %v1824 = vrot.slane %v1822, 5
      %v1825 = vsel %vm1681, %v1820, %v1824
      %v1827 = vshrl.u32 %v1643, 16
      %v1829 = vrot.slane %v1827, 4
      %v1830 = vshll.u32 %v1643, 16
      %v1832 = vrot.slane %v1830, 5
      %v1833 = vor.u32 %v1829, %v1832
      %v1834 = vrot.slane %v1833, 4
      %v1836 = vshll.u32 %v1644, 16
      %v1838 = vrot.slane %v1836, 5
      %v1839 = vsel %vm1681, %v1834, %v1838
      %v1840 = vshrl.u32 %v1644, 16
      %v1842 = vrot.slane %v1840, 4
      %v1843 = vor.u32 %v1842, %v1838
      %v1844 = vrot.slane %v1843, 4
      %v1846 = vshll.u32 %v1645, 16
      %v1848 = vrot.slane %v1846, 5
      %v1849 = vsel %vm1681, %v1844, %v1848
      %v1851 = vshrl.u32 %v1646, 16
      %v1853 = vrot.slane %v1851, 4
      %v1854 = vshll.u32 %v1646, 16
      %v1856 = vrot.slane %v1854, 5
      %v1857 = vor.u32 %v1853, %v1856
      %v1858 = vrot.slane %v1857, 4
      %v1860 = vshll.u32 %v1647, 16
      %v1862 = vrot.slane %v1860, 5
      %v1863 = vsel %vm1681, %v1858, %v1862
      %v1864 = vshrl.u32 %v1647, 16
      %v1866 = vrot.slane %v1864, 4
      %v1867 = vor.u32 %v1866, %v1862
      %v1868 = vrot.slane %v1867, 4
      %v1870 = vshll.u32 %v1648, 16
      %v1872 = vrot.slane %v1870, 5
      %v1873 = vsel %vm1681, %v1868, %v1872
      %v1875 = vshrl.u32 %v1649, 16
      %v1877 = vrot.slane %v1875, 4
      %v1878 = vshll.u32 %v1649, 16
      %v1880 = vrot.slane %v1878, 5
      %v1881 = vor.u32 %v1877, %v1880
      %v1882 = vrot.slane %v1881, 4
      %v1884 = vshll.u32 %v1650, 16
      %v1886 = vrot.slane %v1884, 5
      %v1887 = vsel %vm1681, %v1882, %v1886
      %v1888 = vshrl.u32 %v1650, 16
      %v1890 = vrot.slane %v1888, 4
      %v1891 = vor.u32 %v1890, %v1886
      %v1892 = vrot.slane %v1891, 4
      %v1894 = vshll.u32 %v1651, 16
      %v1896 = vrot.slane %v1894, 5
      %v1897 = vsel %vm1681, %v1892, %v1896
      %v1899 = vshrl.u32 %v1652, 16
      %v1901 = vrot.slane %v1899, 4
      %v1902 = vshll.u32 %v1652, 16
      %v1904 = vrot.slane %v1902, 5
      %v1905 = vor.u32 %v1901, %v1904
      %v1906 = vrot.slane %v1905, 4
      %v1908 = vshll.u32 %v1653, 16
      %v1910 = vrot.slane %v1908, 5
      %v1911 = vsel %vm1681, %v1906, %v1910
      %v1912 = vshrl.u32 %v1653, 16
      %v1914 = vrot.slane %v1912, 4
      %v1915 = vor.u32 %v1914, %v1910
      %v1916 = vrot.slane %v1915, 4
      %v1918 = vshll.u32 %v1654, 16
      %v1920 = vrot.slane %v1918, 5
      %v1921 = vsel %vm1681, %v1916, %v1920
      %v1923 = vshrl.u32 %v1655, 16
      %v1925 = vrot.slane %v1923, 4
      %v1926 = vshll.u32 %v1655, 16
      %v1928 = vrot.slane %v1926, 5
      %v1929 = vor.u32 %v1925, %v1928
      %v1930 = vrot.slane %v1929, 4
      %v1932 = vshll.u32 %v1656, 16
      %v1934 = vrot.slane %v1932, 5
      %v1935 = vsel %vm1681, %v1930, %v1934
      %v1936 = vshrl.u32 %v1656, 16
      %v1938 = vrot.slane %v1936, 4
      %v1939 = vor.u32 %v1938, %v1934
      %v1940 = vrot.slane %v1939, 4
      %v1942 = vshll.u32 %v1657, 16
      %v1944 = vrot.slane %v1942, 5
      %v1945 = vsel %vm1681, %v1940, %v1944
      %v1947 = vshrl.u32 %v1658, 16
      %v1949 = vrot.slane %v1947, 4
      %v1950 = vshll.u32 %v1658, 16
      %v1952 = vrot.slane %v1950, 5
      %v1953 = vor.u32 %v1949, %v1952
      %v1954 = vrot.slane %v1953, 4
      %v1956 = vshll.u32 %v1659, 16
      %v1958 = vrot.slane %v1956, 5
      %v1959 = vsel %vm1681, %v1954, %v1958
      %v1960 = vshrl.u32 %v1659, 16
      %v1962 = vrot.slane %v1960, 4
      %v1963 = vor.u32 %v1962, %v1958
      %v1964 = vrot.slane %v1963, 4
      %v1966 = vshll.u32 %v1660, 16
      %v1968 = vrot.slane %v1966, 5
      %v1969 = vsel %vm1681, %v1964, %v1968
      %v1971 = vshrl.u32 %v1661, 16
      %v1973 = vrot.slane %v1971, 4
      %v1974 = vshll.u32 %v1661, 16
      %v1976 = vrot.slane %v1974, 5
      %v1977 = vor.u32 %v1973, %v1976
      %v1978 = vrot.slane %v1977, 4
      %v1980 = vshll.u32 %v1662, 16
      %v1982 = vrot.slane %v1980, 5
      %v1983 = vsel %vm1681, %v1978, %v1982
      %v1984 = vshrl.u32 %v1662, 16
      %v1986 = vrot.slane %v1984, 4
      %v1987 = vor.u32 %v1986, %v1982
      %v1988 = vrot.slane %v1987, 4
      %v1990 = vshll.u32 %v1663, 16
      %v1992 = vrot.slane %v1990, 5
      %v1993 = vsel %vm1681, %v1988, %v1992
      %v1995 = vshrl.u32 %v1664, 16
      %v1997 = vrot.slane %v1995, 4
      %v1998 = vshll.u32 %v1664, 16
      %v2000 = vrot.slane %v1998, 5
      %v2001 = vor.u32 %v1997, %v2000
      %v2002 = vrot.slane %v2001, 4
      %v2004 = vshll.u32 %v1665, 16
      %v2006 = vrot.slane %v2004, 5
      %v2007 = vsel %vm1681, %v2002, %v2006
      %v2008 = vshrl.u32 %v1665, 16
      %v2010 = vrot.slane %v2008, 4
      %v2011 = vor.u32 %v2010, %v2006
      %v2012 = vrot.slane %v2011, 4
      %v2014 = vshll.u32 %v1666, 16
      %v2016 = vrot.slane %v2014, 5
      %v2017 = vsel %vm1681, %v2012, %v2016
      %v2019 = vshrl.u32 %v1667, 16
      %v2021 = vrot.slane %v2019, 4
      %v2022 = vshll.u32 %v1667, 16
      %v2024 = vrot.slane %v2022, 5
      %v2025 = vor.u32 %v2021, %v2024
      %v2026 = vrot.slane %v2025, 4
      %v2028 = vshll.u32 %v1668, 16
      %v2030 = vrot.slane %v2028, 5
      %v2031 = vsel %vm1681, %v2026, %v2030
      %v2032 = vshrl.u32 %v1668, 16
      %v2034 = vrot.slane %v2032, 4
      %v2035 = vor.u32 %v2034, %v2030
      %v2036 = vrot.slane %v2035, 4
      %v2038 = vshll.u32 %v1669, 16
      %v2040 = vrot.slane %v2038, 5
      %v2041 = vsel %vm1681, %v2036, %v2040
      %v2043 = vshrl.u32 %v1670, 16
      %v2045 = vrot.slane %v2043, 4
      %v2046 = vshll.u32 %v1670, 16
      %v2048 = vrot.slane %v2046, 5
      %v2049 = vor.u32 %v2045, %v2048
      %v2050 = vrot.slane %v2049, 4
      %v2052 = vshll.u32 %v1671, 16
      %v2054 = vrot.slane %v2052, 5
      %v2055 = vsel %vm1681, %v2050, %v2054
      %v2056 = vshrl.u32 %v1671, 16
      %v2058 = vrot.slane %v2056, 4
      %v2059 = vor.u32 %v2058, %v2054
      %v2060 = vrot.slane %v2059, 4
      %v2062 = vshll.u32 %v1672, 16
      %v2064 = vrot.slane %v2062, 5
      %v2065 = vsel %vm1681, %v2060, %v2064
      %v2067 = vshrl.u32 %v1673, 16
      %v2069 = vrot.slane %v2067, 4
      %v2070 = vshll.u32 %v1673, 16
      %v2072 = vrot.slane %v2070, 5
      %v2073 = vor.u32 %v2069, %v2072
      %v2074 = vrot.slane %v2073, 4
      %v2076 = vshll.u32 %v1674, 16
      %v2078 = vrot.slane %v2076, 5
      %v2079 = vsel %vm1681, %v2074, %v2078
      %v2080 = vshrl.u32 %v1674, 16
      %v2082 = vrot.slane %v2080, 4
      %v2083 = vor.u32 %v2082, %v2078
      %v2084 = vrot.slane %v2083, 4
      %v2086 = vshll.u32 %v1675, 16
      %v2088 = vrot.slane %v2086, 5
      %v2089 = vsel %vm1681, %v2084, %v2088
      %v2091 = vshrl.u32 %v1676, 16
      %v2093 = vrot.slane %v2091, 4
      %v2094 = vshll.u32 %v1676, 16
      %v2096 = vrot.slane %v2094, 5
      %v2097 = vor.u32 %v2093, %v2096
      %v2098 = vrot.slane %v2097, 4
      %v2100 = vshll.u32 %v1677, 16
      %v2102 = vrot.slane %v2100, 5
      %v2103 = vsel %vm1681, %v2098, %v2102
      %v2104 = vshrl.u32 %v1677, 16
      %v2106 = vrot.slane %v2104, 4
      %v2107 = vor.u32 %v2106, %v2102
      %v2108 = vrot.slane %v2107, 4
      %v2110 = vshll.u32 %v1678, 16
      %v2112 = vrot.slane %v2110, 5
      %v2113 = vsel %vm1681, %v2108, %v2112
      %s2114 = scalar_lea.vmem %s1, 6
      %v2115 = vld [vmem:[%s2114] sm:$0x3]
      %v2116 = vunpack.c.l.b16 %v1695
      %v2117 = vunpack.c.l.b16 %v1705
      %v2118 = vunpack.c.l.b16 %v1719
      %v2119 = vunpack.c.l.b16 %v1729
      %v2120 = vunpack.c.l.b16 %v1743
      %v2121 = vunpack.c.l.b16 %v1753
      %v2122 = vunpack.c.l.b16 %v1767
      %v2123 = vunpack.c.l.b16 %v1777
      %v2124 = vunpack.c.l.b16 %v1791
      %v2125 = vunpack.c.l.b16 %v1801
      %v2126 = vunpack.c.l.b16 %v1815
      %v2127 = vunpack.c.l.b16 %v1825
      %v2128 = vunpack.c.l.b16 %v1839
      %v2129 = vunpack.c.l.b16 %v1849
      %v2130 = vunpack.c.l.b16 %v1863
      %v2131 = vunpack.c.l.b16 %v1873
      %v2132 = vunpack.c.l.b16 %v1887
      %v2133 = vunpack.c.l.b16 %v1897
      %v2134 = vunpack.c.l.b16 %v1911
      %v2135 = vunpack.c.l.b16 %v1921
      %v2136 = vunpack.c.l.b16 %v1935
      %v2137 = vunpack.c.l.b16 %v1945
      %v2138 = vunpack.c.l.b16 %v1959
      %v2139 = vunpack.c.l.b16 %v1969
      %v2140 = vunpack.c.l.b16 %v1983
      %v2141 = vunpack.c.l.b16 %v1993
      %v2142 = vunpack.c.l.b16 %v2007
      %v2143 = vunpack.c.l.b16 %v2017
      %v2144 = vunpack.c.l.b16 %v2031
      %v2145 = vunpack.c.l.b16 %v2041
      %v2146 = vunpack.c.l.b16 %v2055
      %v2147 = vunpack.c.l.b16 %v2065
      %v2148 = vpack.c.b16 %v2117, %v2116
      %v2149 = vpack.c.b16 %v2119, %v2118
      %v2150 = vpack.c.b16 %v2121, %v2120
      %v2151 = vpack.c.b16 %v2123, %v2122
      %v2152 = vpack.c.b16 %v2125, %v2124
      %v2153 = vpack.c.b16 %v2127, %v2126
      %v2154 = vpack.c.b16 %v2129, %v2128
      %v2155 = vpack.c.b16 %v2131, %v2130
      %v2156 = vpack.c.b16 %v2133, %v2132
      %v2157 = vpack.c.b16 %v2135, %v2134
      %v2158 = vpack.c.b16 %v2137, %v2136
      %v2159 = vpack.c.b16 %v2139, %v2138
      %v2160 = vpack.c.b16 %v2141, %v2140
      %v2161 = vpack.c.b16 %v2143, %v2142
      %v2162 = vpack.c.b16 %v2145, %v2144
      %v2163 = vpack.c.b16 %v2147, %v2146
      %v2165 = vsel %vm1033, %v2148, 0
      %v2168 = vsel %vm1033, %v2149, 0
      %v2171 = vsel %vm1033, %v2150, 0
      %v2174 = vsel %vm1033, %v2151, 0
      %v2177 = vsel %vm1033, %v2152, 0
      %v2180 = vsel %vm1033, %v2153, 0
      %v2183 = vsel %vm1033, %v2154, 0
      %v2186 = vsel %vm1033, %v2155, 0
      %v2189 = vsel %vm1033, %v2156, 0
      %v2192 = vsel %vm1033, %v2157, 0
      %v2195 = vsel %vm1033, %v2158, 0
      %v2198 = vsel %vm1033, %v2159, 0
      %v2201 = vsel %vm1033, %v2160, 0
      %v2204 = vsel %vm1033, %v2161, 0
      %v2207 = vsel %vm1033, %v2162, 0
      %v2210 = vsel %vm1033, %v2163, 0
      %v2213 = vsel %vm1082, %v2115, 0
      %2215 = vmatprep.subr.bf16.mxu0 0
      %2216 = vmatpush1.bf16.msra.mxu0 %v2213
      %2217 = vmatprep.subr.bf16.mxu0 0
      %2218 = vmatpush1.bf16.msra.mxu0 0
      %2219 = vmatprep.subr.bf16.mxu0 0
      %2220 = vmatpush1.bf16.msra.mxu0 0
      %2221 = vmatprep.subr.bf16.mxu0 0
      %2222 = vmatpush1.bf16.msra.mxu0 0
      %2223 = vmatprep.subr.bf16.mxu0 0
      %2224 = vmatpush1.bf16.msra.mxu0 0
      %2225 = vmatprep.subr.bf16.mxu0 0
      %2226 = vmatpush1.bf16.msra.mxu0 0
      %2227 = vmatprep.subr.bf16.mxu0 0
      %2228 = vmatpush1.bf16.msra.mxu0 0
      %2229 = vmatprep.subr.bf16.mxu0 0
      %2230 = vmatpush1.bf16.msra.mxu0 0
      %2231 = vmatprep.subr.bf16.mxu0 0
      %2232 = vmatpush1.bf16.msra.mxu0 0
      %2233 = vmatprep.subr.bf16.mxu0 0
      %2234 = vmatpush1.bf16.msra.mxu0 0
      %2235 = vmatprep.subr.bf16.mxu0 0
      %2236 = vmatpush1.bf16.msra.mxu0 0
      %2237 = vmatprep.subr.bf16.mxu0 0
      %2238 = vmatpush1.bf16.msra.mxu0 0
      %2239 = vmatprep.subr.bf16.mxu0 0
      %2240 = vmatpush1.bf16.msra.mxu0 0
      %2241 = vmatprep.subr.bf16.mxu0 0
      %2242 = vmatpush1.bf16.msra.mxu0 0
      %2243 = vmatprep.subr.bf16.mxu0 0
      %2244 = vmatpush1.bf16.msra.mxu0 0
      %2245 = vmatprep.subr.bf16.mxu0 0
      %2246 = vmatpush1.bf16.msra.mxu0 0
      %2247 = vmatprep.mubr.bf16.mxu0 0
      %2248 = vmatmul.mubr.bf16.gmra.mrb[0].mxu0 %v2165
      %v2249 = vpop.f32.mrb[0].mxu0
      %v2250 = vadd.f32 0.0, %v2249
      %v2251 = vpop.f32.mrb[0].mxu0
      %v2252 = vpop.f32.mrb[0].mxu0
      %v2253 = vadd.f32 0.0, %v2252
      %v2254 = vpop.f32.mrb[0].mxu0
      %2255 = vmatprep.mubr.bf16.mxu0 0
      %2256 = vmatmul.mubr.bf16.gmra.mrb[0].mxu0 %v2168
      %v2257 = vpop.f32.mrb[0].mxu0
      %v2258 = vadd.f32 0.0, %v2257
      %v2259 = vpop.f32.mrb[0].mxu0
      %v2260 = vpop.f32.mrb[0].mxu0
      %v2261 = vadd.f32 0.0, %v2260
      %v2262 = vpop.f32.mrb[0].mxu0
      %2263 = vmatprep.mubr.bf16.mxu0 0
      %2264 = vmatmul.mubr.bf16.gmra.mrb[0].mxu0 %v2171
      %v2265 = vpop.f32.mrb[0].mxu0
      %v2266 = vadd.f32 0.0, %v2265
      %v2267 = vpop.f32.mrb[0].mxu0
      %v2268 = vpop.f32.mrb[0].mxu0
      %v2269 = vadd.f32 0.0, %v2268
      %v2270 = vpop.f32.mrb[0].mxu0
      %2271 = vmatprep.mubr.bf16.mxu0 0
      %2272 = vmatmul.mubr.bf16.gmra.mrb[0].mxu0 %v2174
      %v2273 = vpop.f32.mrb[0].mxu0
      %v2274 = vadd.f32 0.0, %v2273
      %v2275 = vpop.f32.mrb[0].mxu0
      %v2276 = vpop.f32.mrb[0].mxu0
      %v2277 = vadd.f32 0.0, %v2276
      %v2278 = vpop.f32.mrb[0].mxu0
      %2279 = vmatprep.mubr.bf16.mxu0 0
      %2280 = vmatmul.mubr.bf16.gmra.mrb[0].mxu0 %v2177
      %v2281 = vpop.f32.mrb[0].mxu0
      %v2282 = vadd.f32 0.0, %v2281
      %v2283 = vpop.f32.mrb[0].mxu0
      %v2284 = vpop.f32.mrb[0].mxu0
      %v2285 = vadd.f32 0.0, %v2284
      %v2286 = vpop.f32.mrb[0].mxu0
      %2287 = vmatprep.mubr.bf16.mxu0 0
      %2288 = vmatmul.mubr.bf16.gmra.mrb[0].mxu0 %v2180
      %v2289 = vpop.f32.mrb[0].mxu0
      %v2290 = vadd.f32 0.0, %v2289
      %v2291 = vpop.f32.mrb[0].mxu0
      %v2292 = vpop.f32.mrb[0].mxu0
      %v2293 = vadd.f32 0.0, %v2292
      %v2294 = vpop.f32.mrb[0].mxu0
      %2295 = vmatprep.mubr.bf16.mxu0 0
      %2296 = vmatmul.mubr.bf16.gmra.mrb[0].mxu0 %v2183
      %v2297 = vpop.f32.mrb[0].mxu0
      %v2298 = vadd.f32 0.0, %v2297
      %v2299 = vpop.f32.mrb[0].mxu0
      %v2300 = vpop.f32.mrb[0].mxu0
      %v2301 = vadd.f32 0.0, %v2300
      %v2302 = vpop.f32.mrb[0].mxu0
      %2303 = vmatprep.mubr.bf16.mxu0 0
      %2304 = vmatmul.mubr.bf16.gmra.mrb[0].mxu0 %v2186
      %v2305 = vpop.f32.mrb[0].mxu0
      %v2306 = vadd.f32 0.0, %v2305
      %v2307 = vpop.f32.mrb[0].mxu0
      %v2308 = vpop.f32.mrb[0].mxu0
      %v2309 = vadd.f32 0.0, %v2308
      %v2310 = vpop.f32.mrb[0].mxu0
      %2311 = vmatprep.mubr.bf16.mxu0 0
      %2312 = vmatmul.mubr.bf16.gmra.mrb[0].mxu0 %v2189
      %v2313 = vpop.f32.mrb[0].mxu0
      %v2314 = vadd.f32 0.0, %v2313
      %v2315 = vpop.f32.mrb[0].mxu0
      %v2316 = vpop.f32.mrb[0].mxu0
      %v2317 = vadd.f32 0.0, %v2316
      %v2318 = vpop.f32.mrb[0].mxu0
      %2319 = vmatprep.mubr.bf16.mxu0 0
      %2320 = vmatmul.mubr.bf16.gmra.mrb[0].mxu0 %v2192
      %v2321 = vpop.f32.mrb[0].mxu0
      %v2322 = vadd.f32 0.0, %v2321
      %v2323 = vpop.f32.mrb[0].mxu0
      %v2324 = vpop.f32.mrb[0].mxu0
      %v2325 = vadd.f32 0.0, %v2324
      %v2326 = vpop.f32.mrb[0].mxu0
      %2327 = vmatprep.mubr.bf16.mxu0 0
      %2328 = vmatmul.mubr.bf16.gmra.mrb[0].mxu0 %v2195
      %v2329 = vpop.f32.mrb[0].mxu0
      %v2330 = vadd.f32 0.0, %v2329
      %v2331 = vpop.f32.mrb[0].mxu0
      %v2332 = vpop.f32.mrb[0].mxu0
      %v2333 = vadd.f32 0.0, %v2332
      %v2334 = vpop.f32.mrb[0].mxu0
      %2335 = vmatprep.mubr.bf16.mxu0 0
      %2336 = vmatmul.mubr.bf16.gmra.mrb[0].mxu0 %v2198
      %v2337 = vpop.f32.mrb[0].mxu0
      %v2338 = vadd.f32 0.0, %v2337
      %v2339 = vpop.f32.mrb[0].mxu0
      %v2340 = vpop.f32.mrb[0].mxu0
      %v2341 = vadd.f32 0.0, %v2340
      %v2342 = vpop.f32.mrb[0].mxu0
      %2343 = vmatprep.mubr.bf16.mxu0 0
      %2344 = vmatmul.mubr.bf16.gmra.mrb[0].mxu0 %v2201
      %v2345 = vpop.f32.mrb[0].mxu0
      %v2346 = vadd.f32 0.0, %v2345
      %v2347 = vpop.f32.mrb[0].mxu0
      %v2348 = vpop.f32.mrb[0].mxu0
      %v2349 = vadd.f32 0.0, %v2348
      %v2350 = vpop.f32.mrb[0].mxu0
      %2351 = vmatprep.mubr.bf16.mxu0 0
      %2352 = vmatmul.mubr.bf16.gmra.mrb[0].mxu0 %v2204
      %v2353 = vpop.f32.mrb[0].mxu0
      %v2354 = vadd.f32 0.0, %v2353
      %v2355 = vpop.f32.mrb[0].mxu0
      %v2356 = vpop.f32.mrb[0].mxu0
      %v2357 = vadd.f32 0.0, %v2356
      %v2358 = vpop.f32.mrb[0].mxu0
      %2359 = vmatprep.mubr.bf16.mxu0 0
      %2360 = vmatmul.mubr.bf16.gmra.mrb[0].mxu0 %v2207
      %v2361 = vpop.f32.mrb[0].mxu0
      %v2362 = vadd.f32 0.0, %v2361
      %v2363 = vpop.f32.mrb[0].mxu0
      %v2364 = vpop.f32.mrb[0].mxu0
      %v2365 = vadd.f32 0.0, %v2364
      %v2366 = vpop.f32.mrb[0].mxu0
      %2367 = vmatprep.mubr.bf16.mxu0 0
      %2368 = vmatmul.mubr.bf16.gmra.mrb[0].mxu0 %v2210
      %v2369 = vpop.f32.mrb[0].mxu0
      %v2370 = vadd.f32 0.0, %v2369
      %v2371 = vpop.f32.mrb[0].mxu0
      %v2372 = vpop.f32.mrb[0].mxu0
      %v2373 = vadd.f32 0.0, %v2372
      %v2374 = vpop.f32.mrb[0].mxu0
      %2375 = vdwg.mxu0
      %v2376 = vadd.f32 %v1593, %v2250
      %v2377 = vadd.f32 %v1594, %v2253
      %v2378 = vadd.f32 %v1595, %v2258
      %v2379 = vadd.f32 %v1596, %v2261
      %v2380 = vadd.f32 %v1597, %v2266
      %v2381 = vadd.f32 %v1598, %v2269
      %v2382 = vadd.f32 %v1599, %v2274
      %v2383 = vadd.f32 %v1600, %v2277
      %v2384 = vadd.f32 %v1601, %v2282
      %v2385 = vadd.f32 %v1602, %v2285
      %v2386 = vadd.f32 %v1603, %v2290
      %v2387 = vadd.f32 %v1604, %v2293
      %v2388 = vadd.f32 %v1605, %v2298
      %v2389 = vadd.f32 %v1606, %v2301
      %v2390 = vadd.f32 %v1607, %v2306
      %v2391 = vadd.f32 %v1608, %v2309
      %v2392 = vadd.f32 %v1609, %v2314
      %v2393 = vadd.f32 %v1610, %v2317
      %v2394 = vadd.f32 %v1611, %v2322
      %v2395 = vadd.f32 %v1612, %v2325
      %v2396 = vadd.f32 %v1613, %v2330
      %v2397 = vadd.f32 %v1614, %v2333
      %v2398 = vadd.f32 %v1615, %v2338
      %v2399 = vadd.f32 %v1616, %v2341
      %v2400 = vadd.f32 %v1617, %v2346
      %v2401 = vadd.f32 %v1618, %v2349
      %v2402 = vadd.f32 %v1619, %v2354
      %v2403 = vadd.f32 %v1620, %v2357
      %v2404 = vadd.f32 %v1621, %v2362
      %v2405 = vadd.f32 %v1622, %v2365
      %v2406 = vadd.f32 %v1623, %v2370
      %v2407 = vadd.f32 %v1624, %v2373
      %s2408 = scalar_lea.vmem %s1, 8
      %v2409 = vld [vmem:[%s2408] sm:$0x3]
      %v2410 = vunpack.c.l.b16 %v2079
      %v2411 = vunpack.c.l.b16 %v2089
      %v2412 = vpack.c.b16 %v2411, %v2410
      %v2414 = vsel %vm1033, %v2412, 0
      %v2417 = vsel %vm1082, %v2409, 0
      %2419 = vmatprep.subr.bf16.mxu0 0
      %2420 = vmatpush1.bf16.msra.mxu0 %v2417
      %2421 = vmatprep.subr.bf16.mxu0 0
      %2422 = vmatpush1.bf16.msra.mxu0 0
      %2423 = vmatprep.subr.bf16.mxu0 0
      %2424 = vmatpush1.bf16.msra.mxu0 0
      %2425 = vmatprep.subr.bf16.mxu0 0
      %2426 = vmatpush1.bf16.msra.mxu0 0
      %2427 = vmatprep.subr.bf16.mxu0 0
      %2428 = vmatpush1.bf16.msra.mxu0 0
      %2429 = vmatprep.subr.bf16.mxu0 0
      %2430 = vmatpush1.bf16.msra.mxu0 0
      %2431 = vmatprep.subr.bf16.mxu0 0
      %2432 = vmatpush1.bf16.msra.mxu0 0
      %2433 = vmatprep.subr.bf16.mxu0 0
      %2434 = vmatpush1.bf16.msra.mxu0 0
      %2435 = vmatprep.subr.bf16.mxu0 0
      %2436 = vmatpush1.bf16.msra.mxu0 0
      %2437 = vmatprep.subr.bf16.mxu0 0
      %2438 = vmatpush1.bf16.msra.mxu0 0
      %2439 = vmatprep.subr.bf16.mxu0 0
      %2440 = vmatpush1.bf16.msra.mxu0 0
      %2441 = vmatprep.subr.bf16.mxu0 0
      %2442 = vmatpush1.bf16.msra.mxu0 0
      %2443 = vmatprep.subr.bf16.mxu0 0
      %2444 = vmatpush1.bf16.msra.mxu0 0
      %2445 = vmatprep.subr.bf16.mxu0 0
      %2446 = vmatpush1.bf16.msra.mxu0 0
      %2447 = vmatprep.subr.bf16.mxu0 0
      %2448 = vmatpush1.bf16.msra.mxu0 0
      %2449 = vmatprep.subr.bf16.mxu0 0
      %2450 = vmatpush1.bf16.msra.mxu0 0
      %2451 = vmatprep.mubr.bf16.mxu0 0
      %2452 = vmatmul.mubr.bf16.gmra.mrb[0].mxu0 %v2168
      %v2453 = vpop.f32.mrb[0].mxu0
      %v2454 = vadd.f32 0.0, %v2453
      %v2455 = vpop.f32.mrb[0].mxu0
      %v2456 = vpop.f32.mrb[0].mxu0
      %v2457 = vadd.f32 0.0, %v2456
      %v2458 = vpop.f32.mrb[0].mxu0
      %2459 = vmatprep.mubr.bf16.mxu0 0
      %2460 = vmatmul.mubr.bf16.gmra.mrb[0].mxu0 %v2171
      %v2461 = vpop.f32.mrb[0].mxu0
      %v2462 = vadd.f32 0.0, %v2461
      %v2463 = vpop.f32.mrb[0].mxu0
      %v2464 = vpop.f32.mrb[0].mxu0
      %v2465 = vadd.f32 0.0, %v2464
      %v2466 = vpop.f32.mrb[0].mxu0
      %2467 = vmatprep.mubr.bf16.mxu0 0
      %2468 = vmatmul.mubr.bf16.gmra.mrb[0].mxu0 %v2174
      %v2469 = vpop.f32.mrb[0].mxu0
      %v2470 = vadd.f32 0.0, %v2469
      %v2471 = vpop.f32.mrb[0].mxu0
      %v2472 = vpop.f32.mrb[0].mxu0
      %v2473 = vadd.f32 0.0, %v2472
      %v2474 = vpop.f32.mrb[0].mxu0
      %2475 = vmatprep.mubr.bf16.mxu0 0
      %2476 = vmatmul.mubr.bf16.gmra.mrb[0].mxu0 %v2177
      %v2477 = vpop.f32.mrb[0].mxu0
      %v2478 = vadd.f32 0.0, %v2477
      %v2479 = vpop.f32.mrb[0].mxu0
      %v2480 = vpop.f32.mrb[0].mxu0
      %v2481 = vadd.f32 0.0, %v2480
      %v2482 = vpop.f32.mrb[0].mxu0
      %2483 = vmatprep.mubr.bf16.mxu0 0
      %2484 = vmatmul.mubr.bf16.gmra.mrb[0].mxu0 %v2180
      %v2485 = vpop.f32.mrb[0].mxu0
      %v2486 = vadd.f32 0.0, %v2485
      %v2487 = vpop.f32.mrb[0].mxu0
      %v2488 = vpop.f32.mrb[0].mxu0
      %v2489 = vadd.f32 0.0, %v2488
      %v2490 = vpop.f32.mrb[0].mxu0
      %2491 = vmatprep.mubr.bf16.mxu0 0
      %2492 = vmatmul.mubr.bf16.gmra.mrb[0].mxu0 %v2183
      %v2493 = vpop.f32.mrb[0].mxu0
      %v2494 = vadd.f32 0.0, %v2493
      %v2495 = vpop.f32.mrb[0].mxu0
      %v2496 = vpop.f32.mrb[0].mxu0
      %v2497 = vadd.f32 0.0, %v2496
      %v2498 = vpop.f32.mrb[0].mxu0
      %2499 = vmatprep.mubr.bf16.mxu0 0
      %2500 = vmatmul.mubr.bf16.gmra.mrb[0].mxu0 %v2186
      %v2501 = vpop.f32.mrb[0].mxu0
      %v2502 = vadd.f32 0.0, %v2501
      %v2503 = vpop.f32.mrb[0].mxu0
      %v2504 = vpop.f32.mrb[0].mxu0
      %v2505 = vadd.f32 0.0, %v2504
      %v2506 = vpop.f32.mrb[0].mxu0
      %2507 = vmatprep.mubr.bf16.mxu0 0
      %2508 = vmatmul.mubr.bf16.gmra.mrb[0].mxu0 %v2189
      %v2509 = vpop.f32.mrb[0].mxu0
      %v2510 = vadd.f32 0.0, %v2509
      %v2511 = vpop.f32.mrb[0].mxu0
      %v2512 = vpop.f32.mrb[0].mxu0
      %v2513 = vadd.f32 0.0, %v2512
      %v2514 = vpop.f32.mrb[0].mxu0
      %2515 = vmatprep.mubr.bf16.mxu0 0
      %2516 = vmatmul.mubr.bf16.gmra.mrb[0].mxu0 %v2192
      %v2517 = vpop.f32.mrb[0].mxu0
      %v2518 = vadd.f32 0.0, %v2517
      %v2519 = vpop.f32.mrb[0].mxu0
      %v2520 = vpop.f32.mrb[0].mxu0
      %v2521 = vadd.f32 0.0, %v2520
      %v2522 = vpop.f32.mrb[0].mxu0
      %2523 = vmatprep.mubr.bf16.mxu0 0
      %2524 = vmatmul.mubr.bf16.gmra.mrb[0].mxu0 %v2195
      %v2525 = vpop.f32.mrb[0].mxu0
      %v2526 = vadd.f32 0.0, %v2525
      %v2527 = vpop.f32.mrb[0].mxu0
      %v2528 = vpop.f32.mrb[0].mxu0
      %v2529 = vadd.f32 0.0, %v2528
      %v2530 = vpop.f32.mrb[0].mxu0
      %2531 = vmatprep.mubr.bf16.mxu0 0
      %2532 = vmatmul.mubr.bf16.gmra.mrb[0].mxu0 %v2198
      %v2533 = vpop.f32.mrb[0].mxu0
      %v2534 = vadd.f32 0.0, %v2533
      %v2535 = vpop.f32.mrb[0].mxu0
      %v2536 = vpop.f32.mrb[0].mxu0
      %v2537 = vadd.f32 0.0, %v2536
      %v2538 = vpop.f32.mrb[0].mxu0
      %2539 = vmatprep.mubr.bf16.mxu0 0
      %2540 = vmatmul.mubr.bf16.gmra.mrb[0].mxu0 %v2201
      %v2541 = vpop.f32.mrb[0].mxu0
      %v2542 = vadd.f32 0.0, %v2541
      %v2543 = vpop.f32.mrb[0].mxu0
      %v2544 = vpop.f32.mrb[0].mxu0
      %v2545 = vadd.f32 0.0, %v2544
      %v2546 = vpop.f32.mrb[0].mxu0
      %2547 = vmatprep.mubr.bf16.mxu0 0
      %2548 = vmatmul.mubr.bf16.gmra.mrb[0].mxu0 %v2204
      %v2549 = vpop.f32.mrb[0].mxu0
      %v2550 = vadd.f32 0.0, %v2549
      %v2551 = vpop.f32.mrb[0].mxu0
      %v2552 = vpop.f32.mrb[0].mxu0
      %v2553 = vadd.f32 0.0, %v2552
      %v2554 = vpop.f32.mrb[0].mxu0
      %2555 = vmatprep.mubr.bf16.mxu0 0
      %2556 = vmatmul.mubr.bf16.gmra.mrb[0].mxu0 %v2207
      %v2557 = vpop.f32.mrb[0].mxu0
      %v2558 = vadd.f32 0.0, %v2557
      %v2559 = vpop.f32.mrb[0].mxu0
      %v2560 = vpop.f32.mrb[0].mxu0
      %v2561 = vadd.f32 0.0, %v2560
      %v2562 = vpop.f32.mrb[0].mxu0
      %2563 = vmatprep.mubr.bf16.mxu0 0
      %2564 = vmatmul.mubr.bf16.gmra.mrb[0].mxu0 %v2210
      %v2565 = vpop.f32.mrb[0].mxu0
      %v2566 = vadd.f32 0.0, %v2565
      %v2567 = vpop.f32.mrb[0].mxu0
      %v2568 = vpop.f32.mrb[0].mxu0
      %v2569 = vadd.f32 0.0, %v2568
      %v2570 = vpop.f32.mrb[0].mxu0
      %2571 = vmatprep.mubr.bf16.mxu0 0
      %2572 = vmatmul.mubr.bf16.gmra.mrb[0].mxu0 %v2414
      %v2573 = vpop.f32.mrb[0].mxu0
      %v2574 = vadd.f32 0.0, %v2573
      %v2575 = vpop.f32.mrb[0].mxu0
      %v2576 = vpop.f32.mrb[0].mxu0
      %v2577 = vadd.f32 0.0, %v2576
      %v2578 = vpop.f32.mrb[0].mxu0
      %2579 = vdwg.mxu0
      %v2580 = vadd.f32 %v2376, %v2454
      %v2581 = vadd.f32 %v2377, %v2457
      %v2582 = vadd.f32 %v2378, %v2462
      %v2583 = vadd.f32 %v2379, %v2465
      %v2584 = vadd.f32 %v2380, %v2470
      %v2585 = vadd.f32 %v2381, %v2473
      %v2586 = vadd.f32 %v2382, %v2478
      %v2587 = vadd.f32 %v2383, %v2481
      %v2588 = vadd.f32 %v2384, %v2486
      %v2589 = vadd.f32 %v2385, %v2489
      %v2590 = vadd.f32 %v2386, %v2494
      %v2591 = vadd.f32 %v2387, %v2497
      %v2592 = vadd.f32 %v2388, %v2502
      %v2593 = vadd.f32 %v2389, %v2505
      %v2594 = vadd.f32 %v2390, %v2510
      %v2595 = vadd.f32 %v2391, %v2513
      %v2596 = vadd.f32 %v2392, %v2518
      %v2597 = vadd.f32 %v2393, %v2521
      %v2598 = vadd.f32 %v2394, %v2526
      %v2599 = vadd.f32 %v2395, %v2529
      %v2600 = vadd.f32 %v2396, %v2534
      %v2601 = vadd.f32 %v2397, %v2537
      %v2602 = vadd.f32 %v2398, %v2542
      %v2603 = vadd.f32 %v2399, %v2545
      %v2604 = vadd.f32 %v2400, %v2550
      %v2605 = vadd.f32 %v2401, %v2553
      %v2606 = vadd.f32 %v2402, %v2558
      %v2607 = vadd.f32 %v2403, %v2561
      %v2608 = vadd.f32 %v2404, %v2566
      %v2609 = vadd.f32 %v2405, %v2569
      %v2610 = vadd.f32 %v2406, %v2574
      %v2611 = vadd.f32 %v2407, %v2577
      %s2612 = scalar_lea.vmem %s1, 10
      %v2613 = vld [vmem:[%s2612] sm:$0x3]
      %v2614 = vunpack.c.l.b16 %v2103
      %v2615 = vunpack.c.l.b16 %v2113
      %v2616 = vpack.c.b16 %v2615, %v2614
      %v2618 = vsel %vm1033, %v2616, 0
      %v2621 = vsel %vm1082, %v2613, 0
      %2623 = vmatprep.subr.bf16.mxu0 0
      %2624 = vmatpush1.bf16.msra.mxu0 %v2621
      %2625 = vmatprep.subr.bf16.mxu0 0
      %2626 = vmatpush1.bf16.msra.mxu0 0
      %2627 = vmatprep.subr.bf16.mxu0 0
      %2628 = vmatpush1.bf16.msra.mxu0 0
      %2629 = vmatprep.subr.bf16.mxu0 0
      %2630 = vmatpush1.bf16.msra.mxu0 0
      %2631 = vmatprep.subr.bf16.mxu0 0
      %2632 = vmatpush1.bf16.msra.mxu0 0
      %2633 = vmatprep.subr.bf16.mxu0 0
      %2634 = vmatpush1.bf16.msra.mxu0 0
      %2635 = vmatprep.subr.bf16.mxu0 0
      %2636 = vmatpush1.bf16.msra.mxu0 0
      %2637 = vmatprep.subr.bf16.mxu0 0
      %2638 = vmatpush1.bf16.msra.mxu0 0
      %2639 = vmatprep.subr.bf16.mxu0 0
      %2640 = vmatpush1.bf16.msra.mxu0 0
      %2641 = vmatprep.subr.bf16.mxu0 0
      %2642 = vmatpush1.bf16.msra.mxu0 0
      %2643 = vmatprep.subr.bf16.mxu0 0
      %2644 = vmatpush1.bf16.msra.mxu0 0
      %2645 = vmatprep.subr.bf16.mxu0 0
      %2646 = vmatpush1.bf16.msra.mxu0 0
      %2647 = vmatprep.subr.bf16.mxu0 0
      %2648 = vmatpush1.bf16.msra.mxu0 0
      %2649 = vmatprep.subr.bf16.mxu0 0
      %2650 = vmatpush1.bf16.msra.mxu0 0
      %2651 = vmatprep.subr.bf16.mxu0 0
      %2652 = vmatpush1.bf16.msra.mxu0 0
      %2653 = vmatprep.subr.bf16.mxu0 0
      %2654 = vmatpush1.bf16.msra.mxu0 0
      %2655 = vmatprep.mubr.bf16.mxu0 0
      %2656 = vmatmul.mubr.bf16.gmra.mrb[0].mxu0 %v2171
      %v2657 = vpop.f32.mrb[0].mxu0
      %v2658 = vadd.f32 0.0, %v2657
      %v2659 = vpop.f32.mrb[0].mxu0
      %v2660 = vpop.f32.mrb[0].mxu0
      %v2661 = vadd.f32 0.0, %v2660
      %v2662 = vpop.f32.mrb[0].mxu0
      %2663 = vmatprep.mubr.bf16.mxu0 0
      %2664 = vmatmul.mubr.bf16.gmra.mrb[0].mxu0 %v2174
      %v2665 = vpop.f32.mrb[0].mxu0
      %v2666 = vadd.f32 0.0, %v2665
      %v2667 = vpop.f32.mrb[0].mxu0
      %v2668 = vpop.f32.mrb[0].mxu0
      %v2669 = vadd.f32 0.0, %v2668
      %v2670 = vpop.f32.mrb[0].mxu0
      %2671 = vmatprep.mubr.bf16.mxu0 0
      %2672 = vmatmul.mubr.bf16.gmra.mrb[0].mxu0 %v2177
      %v2673 = vpop.f32.mrb[0].mxu0
      %v2674 = vadd.f32 0.0, %v2673
      %v2675 = vpop.f32.mrb[0].mxu0
      %v2676 = vpop.f32.mrb[0].mxu0
      %v2677 = vadd.f32 0.0, %v2676
      %v2678 = vpop.f32.mrb[0].mxu0
      %2679 = vmatprep.mubr.bf16.mxu0 0
      %2680 = vmatmul.mubr.bf16.gmra.mrb[0].mxu0 %v2180
      %v2681 = vpop.f32.mrb[0].mxu0
      %v2682 = vadd.f32 0.0, %v2681
      %v2683 = vpop.f32.mrb[0].mxu0
      %v2684 = vpop.f32.mrb[0].mxu0
      %v2685 = vadd.f32 0.0, %v2684
      %v2686 = vpop.f32.mrb[0].mxu0
      %2687 = vmatprep.mubr.bf16.mxu0 0
      %2688 = vmatmul.mubr.bf16.gmra.mrb[0].mxu0 %v2183
      %v2689 = vpop.f32.mrb[0].mxu0
      %v2690 = vadd.f32 0.0, %v2689
      %v2691 = vpop.f32.mrb[0].mxu0
      %v2692 = vpop.f32.mrb[0].mxu0
      %v2693 = vadd.f32 0.0, %v2692
      %v2694 = vpop.f32.mrb[0].mxu0
      %2695 = vmatprep.mubr.bf16.mxu0 0
      %2696 = vmatmul.mubr.bf16.gmra.mrb[0].mxu0 %v2186
      %v2697 = vpop.f32.mrb[0].mxu0
      %v2698 = vadd.f32 0.0, %v2697
      %v2699 = vpop.f32.mrb[0].mxu0
      %v2700 = vpop.f32.mrb[0].mxu0
      %v2701 = vadd.f32 0.0, %v2700
      %v2702 = vpop.f32.mrb[0].mxu0
      %2703 = vmatprep.mubr.bf16.mxu0 0
      %2704 = vmatmul.mubr.bf16.gmra.mrb[0].mxu0 %v2189
      %v2705 = vpop.f32.mrb[0].mxu0
      %v2706 = vadd.f32 0.0, %v2705
      %v2707 = vpop.f32.mrb[0].mxu0
      %v2708 = vpop.f32.mrb[0].mxu0
      %v2709 = vadd.f32 0.0, %v2708
      %v2710 = vpop.f32.mrb[0].mxu0
      %2711 = vmatprep.mubr.bf16.mxu0 0
      %2712 = vmatmul.mubr.bf16.gmra.mrb[0].mxu0 %v2192
      %v2713 = vpop.f32.mrb[0].mxu0
      %v2714 = vadd.f32 0.0, %v2713
      %v2715 = vpop.f32.mrb[0].mxu0
      %v2716 = vpop.f32.mrb[0].mxu0
      %v2717 = vadd.f32 0.0, %v2716
      %v2718 = vpop.f32.mrb[0].mxu0
      %2719 = vmatprep.mubr.bf16.mxu0 0
      %2720 = vmatmul.mubr.bf16.gmra.mrb[0].mxu0 %v2195
      %v2721 = vpop.f32.mrb[0].mxu0
      %v2722 = vadd.f32 0.0, %v2721
      %v2723 = vpop.f32.mrb[0].mxu0
      %v2724 = vpop.f32.mrb[0].mxu0
      %v2725 = vadd.f32 0.0, %v2724
      %v2726 = vpop.f32.mrb[0].mxu0
      %2727 = vmatprep.mubr.bf16.mxu0 0
      %2728 = vmatmul.mubr.bf16.gmra.mrb[0].mxu0 %v2198
      %v2729 = vpop.f32.mrb[0].mxu0
      %v2730 = vadd.f32 0.0, %v2729
      %v2731 = vpop.f32.mrb[0].mxu0
      %v2732 = vpop.f32.mrb[0].mxu0
      %v2733 = vadd.f32 0.0, %v2732
      %v2734 = vpop.f32.mrb[0].mxu0
      %2735 = vmatprep.mubr.bf16.mxu0 0
      %2736 = vmatmul.mubr.bf16.gmra.mrb[0].mxu0 %v2201
      %v2737 = vpop.f32.mrb[0].mxu0
      %v2738 = vadd.f32 0.0, %v2737
      %v2739 = vpop.f32.mrb[0].mxu0
      %v2740 = vpop.f32.mrb[0].mxu0
      %v2741 = vadd.f32 0.0, %v2740
      %v2742 = vpop.f32.mrb[0].mxu0
      %2743 = vmatprep.mubr.bf16.mxu0 0
      %2744 = vmatmul.mubr.bf16.gmra.mrb[0].mxu0 %v2204
      %v2745 = vpop.f32.mrb[0].mxu0
      %v2746 = vadd.f32 0.0, %v2745
      %v2747 = vpop.f32.mrb[0].mxu0
      %v2748 = vpop.f32.mrb[0].mxu0
      %v2749 = vadd.f32 0.0, %v2748
      %v2750 = vpop.f32.mrb[0].mxu0
      %2751 = vmatprep.mubr.bf16.mxu0 0
      %2752 = vmatmul.mubr.bf16.gmra.mrb[0].mxu0 %v2207
      %v2753 = vpop.f32.mrb[0].mxu0
      %v2754 = vadd.f32 0.0, %v2753
      %v2755 = vpop.f32.mrb[0].mxu0
      %v2756 = vpop.f32.mrb[0].mxu0
      %v2757 = vadd.f32 0.0, %v2756
      %v2758 = vpop.f32.mrb[0].mxu0
      %2759 = vmatprep.mubr.bf16.mxu0 0
      %2760 = vmatmul.mubr.bf16.gmra.mrb[0].mxu0 %v2210
      %v2761 = vpop.f32.mrb[0].mxu0
      %v2762 = vadd.f32 0.0, %v2761
      %v2763 = vpop.f32.mrb[0].mxu0
      %v2764 = vpop.f32.mrb[0].mxu0
      %v2765 = vadd.f32 0.0, %v2764
      %v2766 = vpop.f32.mrb[0].mxu0
      %2767 = vmatprep.mubr.bf16.mxu0 0
      %2768 = vmatmul.mubr.bf16.gmra.mrb[0].mxu0 %v2414
      %v2769 = vpop.f32.mrb[0].mxu0
      %v2770 = vadd.f32 0.0, %v2769
      %v2771 = vpop.f32.mrb[0].mxu0
      %v2772 = vpop.f32.mrb[0].mxu0
      %v2773 = vadd.f32 0.0, %v2772
      %v2774 = vpop.f32.mrb[0].mxu0
      %2775 = vmatprep.mubr.bf16.mxu0 0
      %2776 = vmatmul.mubr.bf16.gmra.mrb[0].mxu0 %v2618
      %v2777 = vpop.f32.mrb[0].mxu0
      %v2778 = vadd.f32 0.0, %v2777
      %v2779 = vpop.f32.mrb[0].mxu0
      %v2780 = vpop.f32.mrb[0].mxu0
      %v2781 = vadd.f32 0.0, %v2780
      %v2782 = vpop.f32.mrb[0].mxu0
      %2783 = vdwg.mxu0
      %v2784 = vadd.f32 %v2580, %v2658
      %v2785 = vadd.f32 %v2581, %v2661
      %v2786 = vadd.f32 %v2582, %v2666
      %v2787 = vadd.f32 %v2583, %v2669
      %v2788 = vadd.f32 %v2584, %v2674
      %v2789 = vadd.f32 %v2585, %v2677
      %v2790 = vadd.f32 %v2586, %v2682
      %v2791 = vadd.f32 %v2587, %v2685
      %v2792 = vadd.f32 %v2588, %v2690
      %v2793 = vadd.f32 %v2589, %v2693
      %v2794 = vadd.f32 %v2590, %v2698
      %v2795 = vadd.f32 %v2591, %v2701
      %v2796 = vadd.f32 %v2592, %v2706
      %v2797 = vadd.f32 %v2593, %v2709
      %v2798 = vadd.f32 %v2594, %v2714
      %v2799 = vadd.f32 %v2595, %v2717
      %v2800 = vadd.f32 %v2596, %v2722
      %v2801 = vadd.f32 %v2597, %v2725
      %v2802 = vadd.f32 %v2598, %v2730
      %v2803 = vadd.f32 %v2599, %v2733
      %v2804 = vadd.f32 %v2600, %v2738
      %v2805 = vadd.f32 %v2601, %v2741
      %v2806 = vadd.f32 %v2602, %v2746
      %v2807 = vadd.f32 %v2603, %v2749
      %v2808 = vadd.f32 %v2604, %v2754
      %v2809 = vadd.f32 %v2605, %v2757
      %v2810 = vadd.f32 %v2606, %v2762
      %v2811 = vadd.f32 %v2607, %v2765
      %v2812 = vadd.f32 %v2608, %v2770
      %v2813 = vadd.f32 %v2609, %v2773
      %v2814 = vadd.f32 %v2610, %v2778
      %v2815 = vadd.f32 %v2611, %v2781
      %v2816 = vld [vmem:[#allocation2] sm:$0xe]
      %v2817 = vld [vmem:[#allocation2 + $0xc] sm:$0xe]
      %v2818 = vld [vmem:[#allocation2 + $0x18] sm:$0xe]
      %v2819 = vld [vmem:[#allocation2 + $0x24] sm:$0xe]
      %v2820 = vld [vmem:[#allocation2 + $0x30] sm:$0xe]
      %v2821 = vld [vmem:[#allocation2 + $0x3c] sm:$0xe]
      %v2822 = vld [vmem:[#allocation2 + $0x48] sm:$0xe]
      %v2823 = vld [vmem:[#allocation2 + $0x54] sm:$0xe]
      %v2824 = vld [vmem:[#allocation2 + $0x60] sm:$0xe]
      %v2825 = vld [vmem:[#allocation2 + $0x6c] sm:$0xe]
      %v2826 = vld [vmem:[#allocation2 + $0x78] sm:$0xe]
      %v2827 = vld [vmem:[#allocation2 + $0x84] sm:$0xe]
      %v2828 = vld [vmem:[#allocation2 + $0x90] sm:$0xe]
      %v2829 = vld [vmem:[#allocation2 + $0x9c] sm:$0xe]
      %v2830 = vld [vmem:[#allocation2 + $0xa8] sm:$0xe]
      %v2831 = vld [vmem:[#allocation2 + $0xb4] sm:$0xe]
      %v2832 = vld [vmem:[#allocation2 + $0xc0] sm:$0xe]
      %v2833 = vld [vmem:[#allocation2 + $0xcc] sm:$0xe]
      %vm2882 = vcmask 1042432
      %vm2883 = vcmask 1046532
      %vm2884 = vmor %vm2882, %vm2883
      %v2885 = vrot.slane %v2816, 5
      %v2886 = vrot.slane %v2885, 4
      %v2887 = vrot.slane %v1626, 5
      %v2888 = vsel %vm2884, %v2886, %v2887
      %v2889 = vrot.slane %v2887, 4
      %v2890 = vrot.slane %v1627, 5
      %v2891 = vsel %vm2884, %v2889, %v2890
      %v2892 = vrot.slane %v2817, 5
      %v2893 = vrot.slane %v2892, 4
      %v2894 = vrot.slane %v1629, 5
      %v2895 = vsel %vm2884, %v2893, %v2894
      %v2896 = vrot.slane %v2894, 4
      %v2897 = vrot.slane %v1630, 5
      %v2898 = vsel %vm2884, %v2896, %v2897
      %v2899 = vrot.slane %v2818, 5
      %v2900 = vrot.slane %v2899, 4
      %v2901 = vrot.slane %v1632, 5
      %v2902 = vsel %vm2884, %v2900, %v2901
      %v2903 = vrot.slane %v2901, 4
      %v2904 = vrot.slane %v1633, 5
      %v2905 = vsel %vm2884, %v2903, %v2904
      %v2906 = vrot.slane %v2819, 5
      %v2907 = vrot.slane %v2906, 4
      %v2908 = vrot.slane %v1635, 5
      %v2909 = vsel %vm2884, %v2907, %v2908
      %v2910 = vrot.slane %v2908, 4
      %v2911 = vrot.slane %v1636, 5
      %v2912 = vsel %vm2884, %v2910, %v2911
      %v2913 = vrot.slane %v2820, 5
      %v2914 = vrot.slane %v2913, 4
      %v2915 = vrot.slane %v1638, 5
      %v2916 = vsel %vm2884, %v2914, %v2915
      %v2917 = vrot.slane %v2915, 4
      %v2918 = vrot.slane %v1639, 5
      %v2919 = vsel %vm2884, %v2917, %v2918
      %v2920 = vrot.slane %v2821, 5
      %v2921 = vrot.slane %v2920, 4
      %v2922 = vrot.slane %v1641, 5
      %v2923 = vsel %vm2884, %v2921, %v2922
      %v2924 = vrot.slane %v2922, 4
      %v2925 = vrot.slane %v1642, 5
      %v2926 = vsel %vm2884, %v2924, %v2925
      %v2927 = vrot.slane %v2822, 5
      %v2928 = vrot.slane %v2927, 4
      %v2929 = vrot.slane %v1644, 5
      %v2930 = vsel %vm2884, %v2928, %v2929
      %v2931 = vrot.slane %v2929, 4
      %v2932 = vrot.slane %v1645, 5
      %v2933 = vsel %vm2884, %v2931, %v2932
      %v2934 = vrot.slane %v2823, 5
      %v2935 = vrot.slane %v2934, 4
      %v2936 = vrot.slane %v1647, 5
      %v2937 = vsel %vm2884, %v2935, %v2936
      %v2938 = vrot.slane %v2936, 4
      %v2939 = vrot.slane %v1648, 5
      %v2940 = vsel %vm2884, %v2938, %v2939
      %v2941 = vrot.slane %v2824, 5
      %v2942 = vrot.slane %v2941, 4
      %v2943 = vrot.slane %v1650, 5
      %v2944 = vsel %vm2884, %v2942, %v2943
      %v2945 = vrot.slane %v2943, 4
      %v2946 = vrot.slane %v1651, 5
      %v2947 = vsel %vm2884, %v2945, %v2946
      %v2948 = vrot.slane %v2825, 5
      %v2949 = vrot.slane %v2948, 4
      %v2950 = vrot.slane %v1653, 5
      %v2951 = vsel %vm2884, %v2949, %v2950
      %v2952 = vrot.slane %v2950, 4
      %v2953 = vrot.slane %v1654, 5
      %v2954 = vsel %vm2884, %v2952, %v2953
      %v2955 = vrot.slane %v2826, 5
      %v2956 = vrot.slane %v2955, 4
      %v2957 = vrot.slane %v1656, 5
      %v2958 = vsel %vm2884, %v2956, %v2957
      %v2959 = vrot.slane %v2957, 4
      %v2960 = vrot.slane %v1657, 5
      %v2961 = vsel %vm2884, %v2959, %v2960
      %v2962 = vrot.slane %v2827, 5
      %v2963 = vrot.slane %v2962, 4
      %v2964 = vrot.slane %v1659, 5
      %v2965 = vsel %vm2884, %v2963, %v2964
      %v2966 = vrot.slane %v2964, 4
      %v2967 = vrot.slane %v1660, 5
      %v2968 = vsel %vm2884, %v2966, %v2967
      %v2969 = vrot.slane %v2828, 5
      %v2970 = vrot.slane %v2969, 4
      %v2971 = vrot.slane %v1662, 5
      %v2972 = vsel %vm2884, %v2970, %v2971
      %v2973 = vrot.slane %v2971, 4
      %v2974 = vrot.slane %v1663, 5
      %v2975 = vsel %vm2884, %v2973, %v2974
      %v2976 = vrot.slane %v2829, 5
      %v2977 = vrot.slane %v2976, 4
      %v2978 = vrot.slane %v1665, 5
      %v2979 = vsel %vm2884, %v2977, %v2978
      %v2980 = vrot.slane %v2978, 4
      %v2981 = vrot.slane %v1666, 5
      %v2982 = vsel %vm2884, %v2980, %v2981
      %v2983 = vrot.slane %v2830, 5
      %v2984 = vrot.slane %v2983, 4
      %v2985 = vrot.slane %v1668, 5
      %v2986 = vsel %vm2884, %v2984, %v2985
      %v2987 = vrot.slane %v2985, 4
      %v2988 = vrot.slane %v1669, 5
      %v2989 = vsel %vm2884, %v2987, %v2988
      %v2990 = vrot.slane %v2831, 5
      %v2991 = vrot.slane %v2990, 4
      %v2992 = vrot.slane %v1671, 5
      %v2993 = vsel %vm2884, %v2991, %v2992
      %v2994 = vrot.slane %v2992, 4
      %v2995 = vrot.slane %v1672, 5
      %v2996 = vsel %vm2884, %v2994, %v2995
      %v3000 = vrot.slane %v2832, 5
      %v3001 = vrot.slane %v3000, 4
      %v3002 = vrot.slane %v1674, 5
      %v3003 = vsel %vm2884, %v3001, %v3002
      %v3004 = vrot.slane %v3002, 4
      %v3005 = vrot.slane %v1675, 5
      %v3006 = vsel %vm2884, %v3004, %v3005
      %v3010 = vrot.slane %v2833, 5
      %v3011 = vrot.slane %v3010, 4
      %v3012 = vrot.slane %v1677, 5
      %v3013 = vsel %vm2884, %v3011, %v3012
      %v3014 = vrot.slane %v3012, 4
      %v3015 = vrot.slane %v1678, 5
      %v3016 = vsel %vm2884, %v3014, %v3015
      %s3017 = scalar_lea.vmem %s1, 12
      %v3018 = vld [vmem:[%s3017] sm:$0x3]
      %v3019 = vunpack.c.l.b16 %v2888
      %v3020 = vunpack.c.l.b16 %v2891
      %v3021 = vunpack.c.l.b16 %v2895
      %v3022 = vunpack.c.l.b16 %v2898
      %v3023 = vunpack.c.l.b16 %v2902
      %v3024 = vunpack.c.l.b16 %v2905
      %v3025 = vunpack.c.l.b16 %v2909
      %v3026 = vunpack.c.l.b16 %v2912
      %v3027 = vunpack.c.l.b16 %v2916
      %v3028 = vunpack.c.l.b16 %v2919
      %v3029 = vunpack.c.l.b16 %v2923
      %v3030 = vunpack.c.l.b16 %v2926
      %v3031 = vunpack.c.l.b16 %v2930
      %v3032 = vunpack.c.l.b16 %v2933
      %v3033 = vunpack.c.l.b16 %v2937
      %v3034 = vunpack.c.l.b16 %v2940
      %v3035 = vunpack.c.l.b16 %v2944
      %v3036 = vunpack.c.l.b16 %v2947
      %v3037 = vunpack.c.l.b16 %v2951
      %v3038 = vunpack.c.l.b16 %v2954
      %v3039 = vunpack.c.l.b16 %v2958
      %v3040 = vunpack.c.l.b16 %v2961
      %v3041 = vunpack.c.l.b16 %v2965
      %v3042 = vunpack.c.l.b16 %v2968
      %v3043 = vunpack.c.l.b16 %v2972
      %v3044 = vunpack.c.l.b16 %v2975
      %v3045 = vunpack.c.l.b16 %v2979
      %v3046 = vunpack.c.l.b16 %v2982
      %v3047 = vunpack.c.l.b16 %v2986
      %v3048 = vunpack.c.l.b16 %v2989
      %v3049 = vunpack.c.l.b16 %v2993
      %v3050 = vunpack.c.l.b16 %v2996
      %v3051 = vpack.c.b16 %v3020, %v3019
      %v3052 = vpack.c.b16 %v3022, %v3021
      %v3053 = vpack.c.b16 %v3024, %v3023
      %v3054 = vpack.c.b16 %v3026, %v3025
      %v3055 = vpack.c.b16 %v3028, %v3027
      %v3056 = vpack.c.b16 %v3030, %v3029
      %v3057 = vpack.c.b16 %v3032, %v3031
      %v3058 = vpack.c.b16 %v3034, %v3033
      %v3059 = vpack.c.b16 %v3036, %v3035
      %v3060 = vpack.c.b16 %v3038, %v3037
      %v3061 = vpack.c.b16 %v3040, %v3039
      %v3062 = vpack.c.b16 %v3042, %v3041
      %v3063 = vpack.c.b16 %v3044, %v3043
      %v3064 = vpack.c.b16 %v3046, %v3045
      %v3065 = vpack.c.b16 %v3048, %v3047
      %v3066 = vpack.c.b16 %v3050, %v3049
      %v3068 = vsel %vm1033, %v3051, 0
      %v3071 = vsel %vm1033, %v3052, 0
      %v3074 = vsel %vm1033, %v3053, 0
      %v3077 = vsel %vm1033, %v3054, 0
      %v3080 = vsel %vm1033, %v3055, 0
      %v3083 = vsel %vm1033, %v3056, 0
      %v3086 = vsel %vm1033, %v3057, 0
      %v3089 = vsel %vm1033, %v3058, 0
      %v3092 = vsel %vm1033, %v3059, 0
      %v3095 = vsel %vm1033, %v3060, 0
      %v3098 = vsel %vm1033, %v3061, 0
      %v3101 = vsel %vm1033, %v3062, 0
      %v3104 = vsel %vm1033, %v3063, 0
      %v3107 = vsel %vm1033, %v3064, 0
      %v3110 = vsel %vm1033, %v3065, 0
      %v3113 = vsel %vm1033, %v3066, 0
      %v3116 = vsel %vm1082, %v3018, 0
      %3118 = vmatprep.subr.bf16.mxu0 0
      %3119 = vmatpush1.bf16.msra.mxu0 %v3116
      %3120 = vmatprep.subr.bf16.mxu0 0
      %3121 = vmatpush1.bf16.msra.mxu0 0
      %3122 = vmatprep.subr.bf16.mxu0 0
      %3123 = vmatpush1.bf16.msra.mxu0 0
      %3124 = vmatprep.subr.bf16.mxu0 0
      %3125 = vmatpush1.bf16.msra.mxu0 0
      %3126 = vmatprep.subr.bf16.mxu0 0
      %3127 = vmatpush1.bf16.msra.mxu0 0
      %3128 = vmatprep.subr.bf16.mxu0 0
      %3129 = vmatpush1.bf16.msra.mxu0 0
      %3130 = vmatprep.subr.bf16.mxu0 0
      %3131 = vmatpush1.bf16.msra.mxu0 0
      %3132 = vmatprep.subr.bf16.mxu0 0
      %3133 = vmatpush1.bf16.msra.mxu0 0
      %3134 = vmatprep.subr.bf16.mxu0 0
      %3135 = vmatpush1.bf16.msra.mxu0 0
      %3136 = vmatprep.subr.bf16.mxu0 0
      %3137 = vmatpush1.bf16.msra.mxu0 0
      %3138 = vmatprep.subr.bf16.mxu0 0
      %3139 = vmatpush1.bf16.msra.mxu0 0
      %3140 = vmatprep.subr.bf16.mxu0 0
      %3141 = vmatpush1.bf16.msra.mxu0 0
      %3142 = vmatprep.subr.bf16.mxu0 0
      %3143 = vmatpush1.bf16.msra.mxu0 0
      %3144 = vmatprep.subr.bf16.mxu0 0
      %3145 = vmatpush1.bf16.msra.mxu0 0
      %3146 = vmatprep.subr.bf16.mxu0 0
      %3147 = vmatpush1.bf16.msra.mxu0 0
      %3148 = vmatprep.subr.bf16.mxu0 0
      %3149 = vmatpush1.bf16.msra.mxu0 0
      %3150 = vmatprep.mubr.bf16.mxu0 0
      %3151 = vmatmul.mubr.bf16.gmra.mrb[0].mxu0 %v3068
      %v3152 = vpop.f32.mrb[0].mxu0
      %v3153 = vadd.f32 0.0, %v3152
      %v3154 = vpop.f32.mrb[0].mxu0
      %v3155 = vpop.f32.mrb[0].mxu0
      %v3156 = vadd.f32 0.0, %v3155
      %v3157 = vpop.f32.mrb[0].mxu0
      %3158 = vmatprep.mubr.bf16.mxu0 0
      %3159 = vmatmul.mubr.bf16.gmra.mrb[0].mxu0 %v3071
      %v3160 = vpop.f32.mrb[0].mxu0
      %v3161 = vadd.f32 0.0, %v3160
      %v3162 = vpop.f32.mrb[0].mxu0
      %v3163 = vpop.f32.mrb[0].mxu0
      %v3164 = vadd.f32 0.0, %v3163
      %v3165 = vpop.f32.mrb[0].mxu0
      %3166 = vmatprep.mubr.bf16.mxu0 0
      %3167 = vmatmul.mubr.bf16.gmra.mrb[0].mxu0 %v3074
      %v3168 = vpop.f32.mrb[0].mxu0
      %v3169 = vadd.f32 0.0, %v3168
      %v3170 = vpop.f32.mrb[0].mxu0
      %v3171 = vpop.f32.mrb[0].mxu0
      %v3172 = vadd.f32 0.0, %v3171
      %v3173 = vpop.f32.mrb[0].mxu0
      %3174 = vmatprep.mubr.bf16.mxu0 0
      %3175 = vmatmul.mubr.bf16.gmra.mrb[0].mxu0 %v3077
      %v3176 = vpop.f32.mrb[0].mxu0
      %v3177 = vadd.f32 0.0, %v3176
      %v3178 = vpop.f32.mrb[0].mxu0
      %v3179 = vpop.f32.mrb[0].mxu0
      %v3180 = vadd.f32 0.0, %v3179
      %v3181 = vpop.f32.mrb[0].mxu0
      %3182 = vmatprep.mubr.bf16.mxu0 0
      %3183 = vmatmul.mubr.bf16.gmra.mrb[0].mxu0 %v3080
      %v3184 = vpop.f32.mrb[0].mxu0
      %v3185 = vadd.f32 0.0, %v3184
      %v3186 = vpop.f32.mrb[0].mxu0
      %v3187 = vpop.f32.mrb[0].mxu0
      %v3188 = vadd.f32 0.0, %v3187
      %v3189 = vpop.f32.mrb[0].mxu0
      %3190 = vmatprep.mubr.bf16.mxu0 0
      %3191 = vmatmul.mubr.bf16.gmra.mrb[0].mxu0 %v3083
      %v3192 = vpop.f32.mrb[0].mxu0
      %v3193 = vadd.f32 0.0, %v3192
      %v3194 = vpop.f32.mrb[0].mxu0
      %v3195 = vpop.f32.mrb[0].mxu0
      %v3196 = vadd.f32 0.0, %v3195
      %v3197 = vpop.f32.mrb[0].mxu0
      %3198 = vmatprep.mubr.bf16.mxu0 0
      %3199 = vmatmul.mubr.bf16.gmra.mrb[0].mxu0 %v3086
      %v3200 = vpop.f32.mrb[0].mxu0
      %v3201 = vadd.f32 0.0, %v3200
      %v3202 = vpop.f32.mrb[0].mxu0
      %v3203 = vpop.f32.mrb[0].mxu0
      %v3204 = vadd.f32 0.0, %v3203
      %v3205 = vpop.f32.mrb[0].mxu0
      %3206 = vmatprep.mubr.bf16.mxu0 0
      %3207 = vmatmul.mubr.bf16.gmra.mrb[0].mxu0 %v3089
      %v3208 = vpop.f32.mrb[0].mxu0
      %v3209 = vadd.f32 0.0, %v3208
      %v3210 = vpop.f32.mrb[0].mxu0
      %v3211 = vpop.f32.mrb[0].mxu0
      %v3212 = vadd.f32 0.0, %v3211
      %v3213 = vpop.f32.mrb[0].mxu0
      %3214 = vmatprep.mubr.bf16.mxu0 0
      %3215 = vmatmul.mubr.bf16.gmra.mrb[0].mxu0 %v3092
      %v3216 = vpop.f32.mrb[0].mxu0
      %v3217 = vadd.f32 0.0, %v3216
      %v3218 = vpop.f32.mrb[0].mxu0
      %v3219 = vpop.f32.mrb[0].mxu0
      %v3220 = vadd.f32 0.0, %v3219
      %v3221 = vpop.f32.mrb[0].mxu0
      %3222 = vmatprep.mubr.bf16.mxu0 0
      %3223 = vmatmul.mubr.bf16.gmra.mrb[0].mxu0 %v3095
      %v3224 = vpop.f32.mrb[0].mxu0
      %v3225 = vadd.f32 0.0, %v3224
      %v3226 = vpop.f32.mrb[0].mxu0
      %v3227 = vpop.f32.mrb[0].mxu0
      %v3228 = vadd.f32 0.0, %v3227
      %v3229 = vpop.f32.mrb[0].mxu0
      %3230 = vmatprep.mubr.bf16.mxu0 0
      %3231 = vmatmul.mubr.bf16.gmra.mrb[0].mxu0 %v3098
      %v3232 = vpop.f32.mrb[0].mxu0
      %v3233 = vadd.f32 0.0, %v3232
      %v3234 = vpop.f32.mrb[0].mxu0
      %v3235 = vpop.f32.mrb[0].mxu0
      %v3236 = vadd.f32 0.0, %v3235
      %v3237 = vpop.f32.mrb[0].mxu0
      %3238 = vmatprep.mubr.bf16.mxu0 0
      %3239 = vmatmul.mubr.bf16.gmra.mrb[0].mxu0 %v3101
      %v3240 = vpop.f32.mrb[0].mxu0
      %v3241 = vadd.f32 0.0, %v3240
      %v3242 = vpop.f32.mrb[0].mxu0
      %v3243 = vpop.f32.mrb[0].mxu0
      %v3244 = vadd.f32 0.0, %v3243
      %v3245 = vpop.f32.mrb[0].mxu0
      %3246 = vmatprep.mubr.bf16.mxu0 0
      %3247 = vmatmul.mubr.bf16.gmra.mrb[0].mxu0 %v3104
      %v3248 = vpop.f32.mrb[0].mxu0
      %v3249 = vadd.f32 0.0, %v3248
      %v3250 = vpop.f32.mrb[0].mxu0
      %v3251 = vpop.f32.mrb[0].mxu0
      %v3252 = vadd.f32 0.0, %v3251
      %v3253 = vpop.f32.mrb[0].mxu0
      %3254 = vmatprep.mubr.bf16.mxu0 0
      %3255 = vmatmul.mubr.bf16.gmra.mrb[0].mxu0 %v3107
      %v3256 = vpop.f32.mrb[0].mxu0
      %v3257 = vadd.f32 0.0, %v3256
      %v3258 = vpop.f32.mrb[0].mxu0
      %v3259 = vpop.f32.mrb[0].mxu0
      %v3260 = vadd.f32 0.0, %v3259
      %v3261 = vpop.f32.mrb[0].mxu0
      %3262 = vmatprep.mubr.bf16.mxu0 0
      %3263 = vmatmul.mubr.bf16.gmra.mrb[0].mxu0 %v3110
      %v3264 = vpop.f32.mrb[0].mxu0
      %v3265 = vadd.f32 0.0, %v3264
      %v3266 = vpop.f32.mrb[0].mxu0
      %v3267 = vpop.f32.mrb[0].mxu0
      %v3268 = vadd.f32 0.0, %v3267
      %v3269 = vpop.f32.mrb[0].mxu0
      %3270 = vmatprep.mubr.bf16.mxu0 0
      %3271 = vmatmul.mubr.bf16.gmra.mrb[0].mxu0 %v3113
      %v3272 = vpop.f32.mrb[0].mxu0
      %v3273 = vadd.f32 0.0, %v3272
      %v3274 = vpop.f32.mrb[0].mxu0
      %v3275 = vpop.f32.mrb[0].mxu0
      %v3276 = vadd.f32 0.0, %v3275
      %v3277 = vpop.f32.mrb[0].mxu0
      %3278 = vdwg.mxu0
      %v3279 = vadd.f32 %v2784, %v3153
      %v3280 = vadd.f32 %v2785, %v3156
      %v3281 = vadd.f32 %v2786, %v3161
      %v3282 = vadd.f32 %v2787, %v3164
      %v3283 = vadd.f32 %v2788, %v3169
      %v3284 = vadd.f32 %v2789, %v3172
      %v3285 = vadd.f32 %v2790, %v3177
      %v3286 = vadd.f32 %v2791, %v3180
      %v3287 = vadd.f32 %v2792, %v3185
      %v3288 = vadd.f32 %v2793, %v3188
      %v3289 = vadd.f32 %v2794, %v3193
      %v3290 = vadd.f32 %v2795, %v3196
      %v3291 = vadd.f32 %v2796, %v3201
      %v3292 = vadd.f32 %v2797, %v3204
      %v3293 = vadd.f32 %v2798, %v3209
      %v3294 = vadd.f32 %v2799, %v3212
      %v3295 = vadd.f32 %v2800, %v3217
      %v3296 = vadd.f32 %v2801, %v3220
      %v3297 = vadd.f32 %v2802, %v3225
      %v3298 = vadd.f32 %v2803, %v3228
      %v3299 = vadd.f32 %v2804, %v3233
      %v3300 = vadd.f32 %v2805, %v3236
      %v3301 = vadd.f32 %v2806, %v3241
      %v3302 = vadd.f32 %v2807, %v3244
      %v3303 = vadd.f32 %v2808, %v3249
      %v3304 = vadd.f32 %v2809, %v3252
      %v3305 = vadd.f32 %v2810, %v3257
      %v3306 = vadd.f32 %v2811, %v3260
      %v3307 = vadd.f32 %v2812, %v3265
      %v3308 = vadd.f32 %v2813, %v3268
      %v3309 = vadd.f32 %v2814, %v3273
      %v3310 = vadd.f32 %v2815, %v3276
      %s3311 = scalar_lea.vmem %s1, 14
      %v3312 = vld [vmem:[%s3311] sm:$0x3]
      %v3313 = vunpack.c.l.b16 %v3003
      %v3314 = vunpack.c.l.b16 %v3006
      %v3315 = vpack.c.b16 %v3314, %v3313
      %v3317 = vsel %vm1033, %v3315, 0
      %v3320 = vsel %vm1082, %v3312, 0
      %3322 = vmatprep.subr.bf16.mxu0 0
      %3323 = vmatpush1.bf16.msra.mxu0 %v3320
      %3324 = vmatprep.subr.bf16.mxu0 0
      %3325 = vmatpush1.bf16.msra.mxu0 0
      %3326 = vmatprep.subr.bf16.mxu0 0
      %3327 = vmatpush1.bf16.msra.mxu0 0
      %3328 = vmatprep.subr.bf16.mxu0 0
      %3329 = vmatpush1.bf16.msra.mxu0 0
      %3330 = vmatprep.subr.bf16.mxu0 0
      %3331 = vmatpush1.bf16.msra.mxu0 0
      %3332 = vmatprep.subr.bf16.mxu0 0
      %3333 = vmatpush1.bf16.msra.mxu0 0
      %3334 = vmatprep.subr.bf16.mxu0 0
      %3335 = vmatpush1.bf16.msra.mxu0 0
      %3336 = vmatprep.subr.bf16.mxu0 0
      %3337 = vmatpush1.bf16.msra.mxu0 0
      %3338 = vmatprep.subr.bf16.mxu0 0
      %3339 = vmatpush1.bf16.msra.mxu0 0
      %3340 = vmatprep.subr.bf16.mxu0 0
      %3341 = vmatpush1.bf16.msra.mxu0 0
      %3342 = vmatprep.subr.bf16.mxu0 0
      %3343 = vmatpush1.bf16.msra.mxu0 0
      %3344 = vmatprep.subr.bf16.mxu0 0
      %3345 = vmatpush1.bf16.msra.mxu0 0
      %3346 = vmatprep.subr.bf16.mxu0 0
      %3347 = vmatpush1.bf16.msra.mxu0 0
      %3348 = vmatprep.subr.bf16.mxu0 0
      %3349 = vmatpush1.bf16.msra.mxu0 0
      %3350 = vmatprep.subr.bf16.mxu0 0
      %3351 = vmatpush1.bf16.msra.mxu0 0
      %3352 = vmatprep.subr.bf16.mxu0 0
      %3353 = vmatpush1.bf16.msra.mxu0 0
      %3354 = vmatprep.mubr.bf16.mxu0 0
      %3355 = vmatmul.mubr.bf16.gmra.mrb[0].mxu0 %v3071
      %v3356 = vpop.f32.mrb[0].mxu0
      %v3357 = vadd.f32 0.0, %v3356
      %v3358 = vpop.f32.mrb[0].mxu0
      %v3359 = vpop.f32.mrb[0].mxu0
      %v3360 = vadd.f32 0.0, %v3359
      %v3361 = vpop.f32.mrb[0].mxu0
      %3362 = vmatprep.mubr.bf16.mxu0 0
      %3363 = vmatmul.mubr.bf16.gmra.mrb[0].mxu0 %v3074
      %v3364 = vpop.f32.mrb[0].mxu0
      %v3365 = vadd.f32 0.0, %v3364
      %v3366 = vpop.f32.mrb[0].mxu0
      %v3367 = vpop.f32.mrb[0].mxu0
      %v3368 = vadd.f32 0.0, %v3367
      %v3369 = vpop.f32.mrb[0].mxu0
      %3370 = vmatprep.mubr.bf16.mxu0 0
      %3371 = vmatmul.mubr.bf16.gmra.mrb[0].mxu0 %v3077
      %v3372 = vpop.f32.mrb[0].mxu0
      %v3373 = vadd.f32 0.0, %v3372
      %v3374 = vpop.f32.mrb[0].mxu0
      %v3375 = vpop.f32.mrb[0].mxu0
      %v3376 = vadd.f32 0.0, %v3375
      %v3377 = vpop.f32.mrb[0].mxu0
      %3378 = vmatprep.mubr.bf16.mxu0 0
      %3379 = vmatmul.mubr.bf16.gmra.mrb[0].mxu0 %v3080
      %v3380 = vpop.f32.mrb[0].mxu0
      %v3381 = vadd.f32 0.0, %v3380
      %v3382 = vpop.f32.mrb[0].mxu0
      %v3383 = vpop.f32.mrb[0].mxu0
      %v3384 = vadd.f32 0.0, %v3383
      %v3385 = vpop.f32.mrb[0].mxu0
      %3386 = vmatprep.mubr.bf16.mxu0 0
      %3387 = vmatmul.mubr.bf16.gmra.mrb[0].mxu0 %v3083
      %v3388 = vpop.f32.mrb[0].mxu0
      %v3389 = vadd.f32 0.0, %v3388
      %v3390 = vpop.f32.mrb[0].mxu0
      %v3391 = vpop.f32.mrb[0].mxu0
      %v3392 = vadd.f32 0.0, %v3391
      %v3393 = vpop.f32.mrb[0].mxu0
      %3394 = vmatprep.mubr.bf16.mxu0 0
      %3395 = vmatmul.mubr.bf16.gmra.mrb[0].mxu0 %v3086
      %v3396 = vpop.f32.mrb[0].mxu0
      %v3397 = vadd.f32 0.0, %v3396
      %v3398 = vpop.f32.mrb[0].mxu0
      %v3399 = vpop.f32.mrb[0].mxu0
      %v3400 = vadd.f32 0.0, %v3399
      %v3401 = vpop.f32.mrb[0].mxu0
      %3402 = vmatprep.mubr.bf16.mxu0 0
      %3403 = vmatmul.mubr.bf16.gmra.mrb[0].mxu0 %v3089
      %v3404 = vpop.f32.mrb[0].mxu0
      %v3405 = vadd.f32 0.0, %v3404
      %v3406 = vpop.f32.mrb[0].mxu0
      %v3407 = vpop.f32.mrb[0].mxu0
      %v3408 = vadd.f32 0.0, %v3407
      %v3409 = vpop.f32.mrb[0].mxu0
      %3410 = vmatprep.mubr.bf16.mxu0 0
      %3411 = vmatmul.mubr.bf16.gmra.mrb[0].mxu0 %v3092
      %v3412 = vpop.f32.mrb[0].mxu0
      %v3413 = vadd.f32 0.0, %v3412
      %v3414 = vpop.f32.mrb[0].mxu0
      %v3415 = vpop.f32.mrb[0].mxu0
      %v3416 = vadd.f32 0.0, %v3415
      %v3417 = vpop.f32.mrb[0].mxu0
      %3418 = vmatprep.mubr.bf16.mxu0 0
      %3419 = vmatmul.mubr.bf16.gmra.mrb[0].mxu0 %v3095
      %v3420 = vpop.f32.mrb[0].mxu0
      %v3421 = vadd.f32 0.0, %v3420
      %v3422 = vpop.f32.mrb[0].mxu0
      %v3423 = vpop.f32.mrb[0].mxu0
      %v3424 = vadd.f32 0.0, %v3423
      %v3425 = vpop.f32.mrb[0].mxu0
      %3426 = vmatprep.mubr.bf16.mxu0 0
      %3427 = vmatmul.mubr.bf16.gmra.mrb[0].mxu0 %v3098
      %v3428 = vpop.f32.mrb[0].mxu0
      %v3429 = vadd.f32 0.0, %v3428
      %v3430 = vpop.f32.mrb[0].mxu0
      %v3431 = vpop.f32.mrb[0].mxu0
      %v3432 = vadd.f32 0.0, %v3431
      %v3433 = vpop.f32.mrb[0].mxu0
      %3434 = vmatprep.mubr.bf16.mxu0 0
      %3435 = vmatmul.mubr.bf16.gmra.mrb[0].mxu0 %v3101
      %v3436 = vpop.f32.mrb[0].mxu0
      %v3437 = vadd.f32 0.0, %v3436
      %v3438 = vpop.f32.mrb[0].mxu0
      %v3439 = vpop.f32.mrb[0].mxu0
      %v3440 = vadd.f32 0.0, %v3439
      %v3441 = vpop.f32.mrb[0].mxu0
      %3442 = vmatprep.mubr.bf16.mxu0 0
      %3443 = vmatmul.mubr.bf16.gmra.mrb[0].mxu0 %v3104
      %v3444 = vpop.f32.mrb[0].mxu0
      %v3445 = vadd.f32 0.0, %v3444
      %v3446 = vpop.f32.mrb[0].mxu0
      %v3447 = vpop.f32.mrb[0].mxu0
      %v3448 = vadd.f32 0.0, %v3447
      %v3449 = vpop.f32.mrb[0].mxu0
      %3450 = vmatprep.mubr.bf16.mxu0 0
      %3451 = vmatmul.mubr.bf16.gmra.mrb[0].mxu0 %v3107
      %v3452 = vpop.f32.mrb[0].mxu0
      %v3453 = vadd.f32 0.0, %v3452
      %v3454 = vpop.f32.mrb[0].mxu0
      %v3455 = vpop.f32.mrb[0].mxu0
      %v3456 = vadd.f32 0.0, %v3455
      %v3457 = vpop.f32.mrb[0].mxu0
      %3458 = vmatprep.mubr.bf16.mxu0 0
      %3459 = vmatmul.mubr.bf16.gmra.mrb[0].mxu0 %v3110
      %v3460 = vpop.f32.mrb[0].mxu0
      %v3461 = vadd.f32 0.0, %v3460
      %v3462 = vpop.f32.mrb[0].mxu0
      %v3463 = vpop.f32.mrb[0].mxu0
      %v3464 = vadd.f32 0.0, %v3463
      %v3465 = vpop.f32.mrb[0].mxu0
      %3466 = vmatprep.mubr.bf16.mxu0 0
      %3467 = vmatmul.mubr.bf16.gmra.mrb[0].mxu0 %v3113
      %v3468 = vpop.f32.mrb[0].mxu0
      %v3469 = vadd.f32 0.0, %v3468
      %v3470 = vpop.f32.mrb[0].mxu0
      %v3471 = vpop.f32.mrb[0].mxu0
      %v3472 = vadd.f32 0.0, %v3471
      %v3473 = vpop.f32.mrb[0].mxu0
      %3474 = vmatprep.mubr.bf16.mxu0 0
      %3475 = vmatmul.mubr.bf16.gmra.mrb[0].mxu0 %v3317
      %v3476 = vpop.f32.mrb[0].mxu0
      %v3477 = vadd.f32 0.0, %v3476
      %v3478 = vpop.f32.mrb[0].mxu0
      %v3479 = vpop.f32.mrb[0].mxu0
      %v3480 = vadd.f32 0.0, %v3479
      %v3481 = vpop.f32.mrb[0].mxu0
      %3482 = vdwg.mxu0
      %v3483 = vadd.f32 %v3279, %v3357
      %v3484 = vadd.f32 %v3280, %v3360
      %v3485 = vadd.f32 %v3281, %v3365
      %v3486 = vadd.f32 %v3282, %v3368
      %v3487 = vadd.f32 %v3283, %v3373
      %v3488 = vadd.f32 %v3284, %v3376
      %v3489 = vadd.f32 %v3285, %v3381
      %v3490 = vadd.f32 %v3286, %v3384
      %v3491 = vadd.f32 %v3287, %v3389
      %v3492 = vadd.f32 %v3288, %v3392
      %v3493 = vadd.f32 %v3289, %v3397
      %v3494 = vadd.f32 %v3290, %v3400
      %v3495 = vadd.f32 %v3291, %v3405
      %v3496 = vadd.f32 %v3292, %v3408
      %v3497 = vadd.f32 %v3293, %v3413
      %v3498 = vadd.f32 %v3294, %v3416
      %v3499 = vadd.f32 %v3295, %v3421
      %v3500 = vadd.f32 %v3296, %v3424
      %v3501 = vadd.f32 %v3297, %v3429
      %v3502 = vadd.f32 %v3298, %v3432
      %v3503 = vadd.f32 %v3299, %v3437
      %v3504 = vadd.f32 %v3300, %v3440
      %v3505 = vadd.f32 %v3301, %v3445
      %v3506 = vadd.f32 %v3302, %v3448
      %v3507 = vadd.f32 %v3303, %v3453
      %v3508 = vadd.f32 %v3304, %v3456
      %v3509 = vadd.f32 %v3305, %v3461
      %v3510 = vadd.f32 %v3306, %v3464
      %v3511 = vadd.f32 %v3307, %v3469
      %v3512 = vadd.f32 %v3308, %v3472
      %v3513 = vadd.f32 %v3309, %v3477
      %v3514 = vadd.f32 %v3310, %v3480
      %s3515 = scalar_lea.vmem %s1, 16
      %v3516 = vld [vmem:[%s3515] sm:$0x3]
      %v3517 = vunpack.c.l.b16 %v3013
      %v3518 = vunpack.c.l.b16 %v3016
      %v3519 = vpack.c.b16 %v3518, %v3517
      %v3521 = vsel %vm1033, %v3519, 0
      %v3524 = vsel %vm1082, %v3516, 0
      %3526 = vmatprep.subr.bf16.mxu0 0
      %3527 = vmatpush1.bf16.msra.mxu0 %v3524
      %3528 = vmatprep.subr.bf16.mxu0 0
      %3529 = vmatpush1.bf16.msra.mxu0 0
      %3530 = vmatprep.subr.bf16.mxu0 0
      %3531 = vmatpush1.bf16.msra.mxu0 0
      %3532 = vmatprep.subr.bf16.mxu0 0
      %3533 = vmatpush1.bf16.msra.mxu0 0
      %3534 = vmatprep.subr.bf16.mxu0 0
      %3535 = vmatpush1.bf16.msra.mxu0 0
      %3536 = vmatprep.subr.bf16.mxu0 0
      %3537 = vmatpush1.bf16.msra.mxu0 0
      %3538 = vmatprep.subr.bf16.mxu0 0
      %3539 = vmatpush1.bf16.msra.mxu0 0
      %3540 = vmatprep.subr.bf16.mxu0 0
      %3541 = vmatpush1.bf16.msra.mxu0 0
      %3542 = vmatprep.subr.bf16.mxu0 0
      %3543 = vmatpush1.bf16.msra.mxu0 0
      %3544 = vmatprep.subr.bf16.mxu0 0
      %3545 = vmatpush1.bf16.msra.mxu0 0
      %3546 = vmatprep.subr.bf16.mxu0 0
      %3547 = vmatpush1.bf16.msra.mxu0 0
      %3548 = vmatprep.subr.bf16.mxu0 0
      %3549 = vmatpush1.bf16.msra.mxu0 0
      %3550 = vmatprep.subr.bf16.mxu0 0
      %3551 = vmatpush1.bf16.msra.mxu0 0
      %3552 = vmatprep.subr.bf16.mxu0 0
      %3553 = vmatpush1.bf16.msra.mxu0 0
      %3554 = vmatprep.subr.bf16.mxu0 0
      %3555 = vmatpush1.bf16.msra.mxu0 0
      %3556 = vmatprep.subr.bf16.mxu0 0
      %3557 = vmatpush1.bf16.msra.mxu0 0
      %3558 = vmatprep.mubr.bf16.mxu0 0
      %3559 = vmatmul.mubr.bf16.gmra.mrb[0].mxu0 %v3074
      %v3560 = vpop.f32.mrb[0].mxu0
      %v3561 = vadd.f32 0.0, %v3560
      %v3562 = vpop.f32.mrb[0].mxu0
      %v3563 = vpop.f32.mrb[0].mxu0
      %v3564 = vadd.f32 0.0, %v3563
      %v3565 = vpop.f32.mrb[0].mxu0
      %3566 = vmatprep.mubr.bf16.mxu0 0
      %3567 = vmatmul.mubr.bf16.gmra.mrb[0].mxu0 %v3077
      %v3568 = vpop.f32.mrb[0].mxu0
      %v3569 = vadd.f32 0.0, %v3568
      %v3570 = vpop.f32.mrb[0].mxu0
      %v3571 = vpop.f32.mrb[0].mxu0
      %v3572 = vadd.f32 0.0, %v3571
      %v3573 = vpop.f32.mrb[0].mxu0
      %3574 = vmatprep.mubr.bf16.mxu0 0
      %3575 = vmatmul.mubr.bf16.gmra.mrb[0].mxu0 %v3080
      %v3576 = vpop.f32.mrb[0].mxu0
      %v3577 = vadd.f32 0.0, %v3576
      %v3578 = vpop.f32.mrb[0].mxu0
      %v3579 = vpop.f32.mrb[0].mxu0
      %v3580 = vadd.f32 0.0, %v3579
      %v3581 = vpop.f32.mrb[0].mxu0
      %3582 = vmatprep.mubr.bf16.mxu0 0
      %3583 = vmatmul.mubr.bf16.gmra.mrb[0].mxu0 %v3083
      %v3584 = vpop.f32.mrb[0].mxu0
      %v3585 = vadd.f32 0.0, %v3584
      %v3586 = vpop.f32.mrb[0].mxu0
      %v3587 = vpop.f32.mrb[0].mxu0
      %v3588 = vadd.f32 0.0, %v3587
      %v3589 = vpop.f32.mrb[0].mxu0
      %3590 = vmatprep.mubr.bf16.mxu0 0
      %3591 = vmatmul.mubr.bf16.gmra.mrb[0].mxu0 %v3086
      %v3592 = vpop.f32.mrb[0].mxu0
      %v3593 = vadd.f32 0.0, %v3592
      %v3594 = vpop.f32.mrb[0].mxu0
      %v3595 = vpop.f32.mrb[0].mxu0
      %v3596 = vadd.f32 0.0, %v3595
      %v3597 = vpop.f32.mrb[0].mxu0
      %3598 = vmatprep.mubr.bf16.mxu0 0
      %3599 = vmatmul.mubr.bf16.gmra.mrb[0].mxu0 %v3089
      %v3600 = vpop.f32.mrb[0].mxu0
      %v3601 = vadd.f32 0.0, %v3600
      %v3602 = vpop.f32.mrb[0].mxu0
      %v3603 = vpop.f32.mrb[0].mxu0
      %v3604 = vadd.f32 0.0, %v3603
      %v3605 = vpop.f32.mrb[0].mxu0
      %3606 = vmatprep.mubr.bf16.mxu0 0
      %3607 = vmatmul.mubr.bf16.gmra.mrb[0].mxu0 %v3092
      %v3608 = vpop.f32.mrb[0].mxu0
      %v3609 = vadd.f32 0.0, %v3608
      %v3610 = vpop.f32.mrb[0].mxu0
      %v3611 = vpop.f32.mrb[0].mxu0
      %v3612 = vadd.f32 0.0, %v3611
      %v3613 = vpop.f32.mrb[0].mxu0
      %3614 = vmatprep.mubr.bf16.mxu0 0
      %3615 = vmatmul.mubr.bf16.gmra.mrb[0].mxu0 %v3095
      %v3616 = vpop.f32.mrb[0].mxu0
      %v3617 = vadd.f32 0.0, %v3616
      %v3618 = vpop.f32.mrb[0].mxu0
      %v3619 = vpop.f32.mrb[0].mxu0
      %v3620 = vadd.f32 0.0, %v3619
      %v3621 = vpop.f32.mrb[0].mxu0
      %3622 = vmatprep.mubr.bf16.mxu0 0
      %3623 = vmatmul.mubr.bf16.gmra.mrb[0].mxu0 %v3098
      %v3624 = vpop.f32.mrb[0].mxu0
      %v3625 = vadd.f32 0.0, %v3624
      %v3626 = vpop.f32.mrb[0].mxu0
      %v3627 = vpop.f32.mrb[0].mxu0
      %v3628 = vadd.f32 0.0, %v3627
      %v3629 = vpop.f32.mrb[0].mxu0
      %3630 = vmatprep.mubr.bf16.mxu0 0
      %3631 = vmatmul.mubr.bf16.gmra.mrb[0].mxu0 %v3101
      %v3632 = vpop.f32.mrb[0].mxu0
      %v3633 = vadd.f32 0.0, %v3632
      %v3634 = vpop.f32.mrb[0].mxu0
      %v3635 = vpop.f32.mrb[0].mxu0
      %v3636 = vadd.f32 0.0, %v3635
      %v3637 = vpop.f32.mrb[0].mxu0
      %3638 = vmatprep.mubr.bf16.mxu0 0
      %3639 = vmatmul.mubr.bf16.gmra.mrb[0].mxu0 %v3104
      %v3640 = vpop.f32.mrb[0].mxu0
      %v3641 = vadd.f32 0.0, %v3640
      %v3642 = vpop.f32.mrb[0].mxu0
      %v3643 = vpop.f32.mrb[0].mxu0
      %v3644 = vadd.f32 0.0, %v3643
      %v3645 = vpop.f32.mrb[0].mxu0
      %3646 = vmatprep.mubr.bf16.mxu0 0
      %3647 = vmatmul.mubr.bf16.gmra.mrb[0].mxu0 %v3107
      %v3648 = vpop.f32.mrb[0].mxu0
      %v3649 = vadd.f32 0.0, %v3648
      %v3650 = vpop.f32.mrb[0].mxu0
      %v3651 = vpop.f32.mrb[0].mxu0
      %v3652 = vadd.f32 0.0, %v3651
      %v3653 = vpop.f32.mrb[0].mxu0
      %3654 = vmatprep.mubr.bf16.mxu0 0
      %3655 = vmatmul.mubr.bf16.gmra.mrb[0].mxu0 %v3110
      %v3656 = vpop.f32.mrb[0].mxu0
      %v3657 = vadd.f32 0.0, %v3656
      %v3658 = vpop.f32.mrb[0].mxu0
      %v3659 = vpop.f32.mrb[0].mxu0
      %v3660 = vadd.f32 0.0, %v3659
      %v3661 = vpop.f32.mrb[0].mxu0
      %3662 = vmatprep.mubr.bf16.mxu0 0
      %3663 = vmatmul.mubr.bf16.gmra.mrb[0].mxu0 %v3113
      %v3664 = vpop.f32.mrb[0].mxu0
      %v3665 = vadd.f32 0.0, %v3664
      %v3666 = vpop.f32.mrb[0].mxu0
      %v3667 = vpop.f32.mrb[0].mxu0
      %v3668 = vadd.f32 0.0, %v3667
      %v3669 = vpop.f32.mrb[0].mxu0
      %3670 = vmatprep.mubr.bf16.mxu0 0
      %3671 = vmatmul.mubr.bf16.gmra.mrb[0].mxu0 %v3317
      %v3672 = vpop.f32.mrb[0].mxu0
      %v3673 = vadd.f32 0.0, %v3672
      %v3674 = vpop.f32.mrb[0].mxu0
      %v3675 = vpop.f32.mrb[0].mxu0
      %v3676 = vadd.f32 0.0, %v3675
      %v3677 = vpop.f32.mrb[0].mxu0
      %3678 = vmatprep.mubr.bf16.mxu0 0
      %3679 = vmatmul.mubr.bf16.gmra.mrb[0].mxu0 %v3521
      %v3680 = vpop.f32.mrb[0].mxu0
      %v3681 = vadd.f32 0.0, %v3680
      %v3682 = vpop.f32.mrb[0].mxu0
      %v3683 = vpop.f32.mrb[0].mxu0
      %v3684 = vadd.f32 0.0, %v3683
      %v3685 = vpop.f32.mrb[0].mxu0
      %3686 = vdwg.mxu0
      %v3687 = vadd.f32 %v3483, %v3561
      %v3688 = vadd.f32 %v3484, %v3564
      %v3689 = vadd.f32 %v3485, %v3569
      %v3690 = vadd.f32 %v3486, %v3572
      %v3691 = vadd.f32 %v3487, %v3577
      %v3692 = vadd.f32 %v3488, %v3580
      %v3693 = vadd.f32 %v3489, %v3585
      %v3694 = vadd.f32 %v3490, %v3588
      %v3695 = vadd.f32 %v3491, %v3593
      %v3696 = vadd.f32 %v3492, %v3596
      %v3697 = vadd.f32 %v3493, %v3601
      %v3698 = vadd.f32 %v3494, %v3604
      %v3699 = vadd.f32 %v3495, %v3609
      %v3700 = vadd.f32 %v3496, %v3612
      %v3701 = vadd.f32 %v3497, %v3617
      %v3702 = vadd.f32 %v3498, %v3620
      %v3703 = vadd.f32 %v3499, %v3625
      %v3704 = vadd.f32 %v3500, %v3628
      %v3705 = vadd.f32 %v3501, %v3633
      %v3706 = vadd.f32 %v3502, %v3636
      %v3707 = vadd.f32 %v3503, %v3641
      %v3708 = vadd.f32 %v3504, %v3644
      %v3709 = vadd.f32 %v3505, %v3649
      %v3710 = vadd.f32 %v3506, %v3652
      %v3711 = vadd.f32 %v3507, %v3657
      %v3712 = vadd.f32 %v3508, %v3660
      %v3713 = vadd.f32 %v3509, %v3665
      %v3714 = vadd.f32 %v3510, %v3668
      %v3715 = vadd.f32 %v3511, %v3673
      %v3716 = vadd.f32 %v3512, %v3676
      %v3717 = vadd.f32 %v3513, %v3681
      %v3718 = vadd.f32 %v3514, %v3684
      %v3719 = vld [vmem:[%s2] sm:$0x1]
      %v3721 = vlaneseq
      %v3722 = vshrl.u32 %v3721, 7
      %v3723 = vsub.s32 0, %v3722
      %v3724 = vrot.slane %v3719, %v3723
      %v3726 = vadd.f32 %v3687, %v3724
      %v3727 = vadd.f32 %v3688, %v3724
      %v3728 = vadd.f32 %v3689, %v3724
      %v3729 = vadd.f32 %v3690, %v3724
      %v3730 = vadd.f32 %v3691, %v3724
      %v3731 = vadd.f32 %v3692, %v3724
      %v3732 = vadd.f32 %v3693, %v3724
      %v3733 = vadd.f32 %v3694, %v3724
      %v3734 = vadd.f32 %v3695, %v3724
      %v3735 = vadd.f32 %v3696, %v3724
      %v3736 = vadd.f32 %v3697, %v3724
      %v3737 = vadd.f32 %v3698, %v3724
      %v3738 = vadd.f32 %v3699, %v3724
      %v3739 = vadd.f32 %v3700, %v3724
      %v3740 = vadd.f32 %v3701, %v3724
      %v3741 = vadd.f32 %v3702, %v3724
      %v3742 = vadd.f32 %v3703, %v3724
      %v3743 = vadd.f32 %v3704, %v3724
      %v3744 = vadd.f32 %v3705, %v3724
      %v3745 = vadd.f32 %v3706, %v3724
      %v3746 = vadd.f32 %v3707, %v3724
      %v3747 = vadd.f32 %v3708, %v3724
      %v3748 = vadd.f32 %v3709, %v3724
      %v3749 = vadd.f32 %v3710, %v3724
      %v3750 = vadd.f32 %v3711, %v3724
      %v3751 = vadd.f32 %v3712, %v3724
      %v3752 = vadd.f32 %v3713, %v3724
      %v3753 = vadd.f32 %v3714, %v3724
      %v3754 = vadd.f32 %v3715, %v3724
      %v3755 = vadd.f32 %v3716, %v3724
      %v3756 = vadd.f32 %v3717, %v3724
      %v3757 = vadd.f32 %v3718, %v3724
      %v3758 = vmax.f32 %v3726, 0.0
      %v3759 = vmax.f32 %v3727, 0.0
      %v3760 = vmax.f32 %v3728, 0.0
      %v3761 = vmax.f32 %v3729, 0.0
      %v3762 = vmax.f32 %v3730, 0.0
      %v3763 = vmax.f32 %v3731, 0.0
      %v3764 = vmax.f32 %v3732, 0.0
      %v3765 = vmax.f32 %v3733, 0.0
      %v3766 = vmax.f32 %v3734, 0.0
      %v3767 = vmax.f32 %v3735, 0.0
      %v3768 = vmax.f32 %v3736, 0.0
      %v3769 = vmax.f32 %v3737, 0.0
      %v3770 = vmax.f32 %v3738, 0.0
      %v3771 = vmax.f32 %v3739, 0.0
      %v3772 = vmax.f32 %v3740, 0.0
      %v3773 = vmax.f32 %v3741, 0.0
      %v3774 = vmax.f32 %v3742, 0.0
      %v3775 = vmax.f32 %v3743, 0.0
      %v3776 = vmax.f32 %v3744, 0.0
      %v3777 = vmax.f32 %v3745, 0.0
      %v3778 = vmax.f32 %v3746, 0.0
      %v3779 = vmax.f32 %v3747, 0.0
      %v3780 = vmax.f32 %v3748, 0.0
      %v3781 = vmax.f32 %v3749, 0.0
      %v3782 = vmax.f32 %v3750, 0.0
      %v3783 = vmax.f32 %v3751, 0.0
      %v3784 = vmax.f32 %v3752, 0.0
      %v3785 = vmax.f32 %v3753, 0.0
      %v3786 = vmax.f32 %v3754, 0.0
      %v3787 = vmax.f32 %v3755, 0.0
      %v3788 = vmax.f32 %v3756, 0.0
      %v3789 = vmax.f32 %v3757, 0.0
      %v3790 = vpack.c.bf16 %v3759, %v3758
      %v3791 = vpack.c.bf16 %v3761, %v3760
      %v3792 = vpack.c.bf16 %v3763, %v3762
      %v3793 = vpack.c.bf16 %v3765, %v3764
      %v3794 = vpack.c.bf16 %v3767, %v3766
      %v3795 = vpack.c.bf16 %v3769, %v3768
      %v3796 = vpack.c.bf16 %v3771, %v3770
      %v3797 = vpack.c.bf16 %v3773, %v3772
      %v3798 = vpack.c.bf16 %v3775, %v3774
      %v3799 = vpack.c.bf16 %v3777, %v3776
      %v3800 = vpack.c.bf16 %v3779, %v3778
      %v3801 = vpack.c.bf16 %v3781, %v3780
      %v3802 = vpack.c.bf16 %v3783, %v3782
      %v3803 = vpack.c.bf16 %v3785, %v3784
      %v3804 = vpack.c.bf16 %v3787, %v3786
      %v3805 = vpack.c.bf16 %v3789, %v3788
      %v3822 = vunpack.c.l.b16 %v3790
      %v3823 = vunpack.c.h.b16 %v3790
      %v3824 = vunpack.c.l.b16 %v3791
      %v3825 = vunpack.c.h.b16 %v3791
      %v3826 = vunpack.c.l.b16 %v3792
      %v3827 = vunpack.c.h.b16 %v3792
      %v3828 = vunpack.c.l.b16 %v3793
      %v3829 = vunpack.c.h.b16 %v3793
      %v3830 = vunpack.c.l.b16 %v3794
      %v3831 = vunpack.c.h.b16 %v3794
      %v3832 = vunpack.c.l.b16 %v3795
      %v3833 = vunpack.c.h.b16 %v3795
      %v3834 = vunpack.c.l.b16 %v3796
      %v3835 = vunpack.c.h.b16 %v3796
      %v3836 = vunpack.c.l.b16 %v3797
      %v3837 = vunpack.c.h.b16 %v3797
      %v3838 = vunpack.c.l.b16 %v3798
      %v3839 = vunpack.c.h.b16 %v3798
      %v3840 = vunpack.c.l.b16 %v3799
      %v3841 = vunpack.c.h.b16 %v3799
      %v3842 = vunpack.c.l.b16 %v3800
      %v3843 = vunpack.c.h.b16 %v3800
      %v3844 = vunpack.c.l.b16 %v3801
      %v3845 = vunpack.c.h.b16 %v3801
      %v3846 = vunpack.c.l.b16 %v3802
      %v3847 = vunpack.c.h.b16 %v3802
      %v3848 = vunpack.c.l.b16 %v3803
      %v3849 = vunpack.c.h.b16 %v3803
      %v3850 = vunpack.c.l.b16 %v3804
      %v3851 = vunpack.c.h.b16 %v3804
      %v3852 = vunpack.c.l.b16 %v3805
      %v3853 = vunpack.c.h.b16 %v3805
      %v3854 = vpack.c.b16 %v3822, %v3822
      %v3855 = vpack.c.b16 %v3823, %v3823
      %v3856 = vpack.c.b16 %v3824, %v3824
      %v3857 = vpack.c.b16 %v3825, %v3825
      %v3858 = vpack.c.b16 %v3826, %v3826
      %v3859 = vpack.c.b16 %v3827, %v3827
      %v3860 = vpack.c.b16 %v3828, %v3828
      %v3861 = vpack.c.b16 %v3829, %v3829
      %v3862 = vpack.c.b16 %v3830, %v3830
      %v3863 = vpack.c.b16 %v3831, %v3831
      %v3864 = vpack.c.b16 %v3832, %v3832
      %v3865 = vpack.c.b16 %v3833, %v3833
      %v3866 = vpack.c.b16 %v3834, %v3834
      %v3867 = vpack.c.b16 %v3835, %v3835
      %v3868 = vpack.c.b16 %v3836, %v3836
      %v3869 = vpack.c.b16 %v3837, %v3837
      %v3870 = vpack.c.b16 %v3838, %v3838
      %v3871 = vpack.c.b16 %v3839, %v3839
      %v3872 = vpack.c.b16 %v3840, %v3840
      %v3873 = vpack.c.b16 %v3841, %v3841
      %v3874 = vpack.c.b16 %v3842, %v3842
      %v3875 = vpack.c.b16 %v3843, %v3843
      %v3876 = vpack.c.b16 %v3844, %v3844
      %v3877 = vpack.c.b16 %v3845, %v3845
      %v3878 = vpack.c.b16 %v3846, %v3846
      %v3879 = vpack.c.b16 %v3847, %v3847
      %v3880 = vpack.c.b16 %v3848, %v3848
      %v3881 = vpack.c.b16 %v3849, %v3849
      %v3882 = vpack.c.b16 %v3850, %v3850
      %v3883 = vpack.c.b16 %v3851, %v3851
      %v3884 = vpack.c.b16 %v3852, %v3852
      %v3885 = vpack.c.b16 %v3853, %v3853
      %v3887 = vshrl.u32 %v3854, 16
      %v3889 = vrot.slane %v3887, 7
      %v3890 = vshll.u32 %v3854, 16
      %v3892 = vor.u32 %v3889, %v3890
      %v3893 = vrot.slane %v3889, 4
      %v3895 = vshrl.u32 %v3855, 16
      %v3897 = vrot.slane %v3895, 7
      %v3898 = vshll.u32 %v3855, 16
      %v3900 = vor.u32 %v3897, %v3898
      %v3901 = vsel %vm479, %v3893, %v3900
      %v3902 = vrot.slane %v3897, 4
      %v3904 = vshrl.u32 %v3856, 16
      %v3906 = vrot.slane %v3904, 7
      %v3907 = vshll.u32 %v3856, 16
      %v3909 = vor.u32 %v3906, %v3907
      %v3910 = vrot.slane %v3906, 4
      %v3912 = vshrl.u32 %v3857, 16
      %v3914 = vrot.slane %v3912, 7
      %v3915 = vshll.u32 %v3857, 16
      %v3917 = vor.u32 %v3914, %v3915
      %v3918 = vsel %vm479, %v3910, %v3917
      %v3919 = vrot.slane %v3914, 4
      %v3921 = vshrl.u32 %v3858, 16
      %v3923 = vrot.slane %v3921, 7
      %v3924 = vshll.u32 %v3858, 16
      %v3926 = vor.u32 %v3923, %v3924
      %v3927 = vrot.slane %v3923, 4
      %v3929 = vshrl.u32 %v3859, 16
      %v3931 = vrot.slane %v3929, 7
      %v3932 = vshll.u32 %v3859, 16
      %v3934 = vor.u32 %v3931, %v3932
      %v3935 = vsel %vm479, %v3927, %v3934
      %v3936 = vrot.slane %v3931, 4
      %v3938 = vshrl.u32 %v3860, 16
      %v3940 = vrot.slane %v3938, 7
      %v3941 = vshll.u32 %v3860, 16
      %v3943 = vor.u32 %v3940, %v3941
      %v3944 = vrot.slane %v3940, 4
      %v3946 = vshrl.u32 %v3861, 16
      %v3948 = vrot.slane %v3946, 7
      %v3949 = vshll.u32 %v3861, 16
      %v3951 = vor.u32 %v3948, %v3949
      %v3952 = vsel %vm479, %v3944, %v3951
      %v3953 = vrot.slane %v3948, 4
      %v3955 = vshrl.u32 %v3862, 16
      %v3957 = vrot.slane %v3955, 7
      %v3958 = vshll.u32 %v3862, 16
      %v3960 = vor.u32 %v3957, %v3958
      %v3961 = vrot.slane %v3957, 4
      %v3963 = vshrl.u32 %v3863, 16
      %v3965 = vrot.slane %v3963, 7
      %v3966 = vshll.u32 %v3863, 16
      %v3968 = vor.u32 %v3965, %v3966
      %v3969 = vsel %vm479, %v3961, %v3968
      %v3970 = vrot.slane %v3965, 4
      %v3972 = vshrl.u32 %v3864, 16
      %v3974 = vrot.slane %v3972, 7
      %v3975 = vshll.u32 %v3864, 16
      %v3977 = vor.u32 %v3974, %v3975
      %v3978 = vrot.slane %v3974, 4
      %v3980 = vshrl.u32 %v3865, 16
      %v3982 = vrot.slane %v3980, 7
      %v3983 = vshll.u32 %v3865, 16
      %v3985 = vor.u32 %v3982, %v3983
      %v3986 = vsel %vm479, %v3978, %v3985
      %v3987 = vrot.slane %v3982, 4
      %v3989 = vshrl.u32 %v3866, 16
      %v3991 = vrot.slane %v3989, 7
      %v3992 = vshll.u32 %v3866, 16
      %v3994 = vor.u32 %v3991, %v3992
      %v3995 = vrot.slane %v3991, 4
      %v3997 = vshrl.u32 %v3867, 16
      %v3999 = vrot.slane %v3997, 7
      %v4000 = vshll.u32 %v3867, 16
      %v4002 = vor.u32 %v3999, %v4000
      %v4003 = vsel %vm479, %v3995, %v4002
      %v4004 = vrot.slane %v3999, 4
      %v4006 = vshrl.u32 %v3868, 16
      %v4008 = vrot.slane %v4006, 7
      %v4009 = vshll.u32 %v3868, 16
      %v4011 = vor.u32 %v4008, %v4009
      %v4012 = vrot.slane %v4008, 4
      %v4014 = vshrl.u32 %v3869, 16
      %v4016 = vrot.slane %v4014, 7
      %v4017 = vshll.u32 %v3869, 16
      %v4019 = vor.u32 %v4016, %v4017
      %v4020 = vsel %vm479, %v4012, %v4019
      %v4021 = vrot.slane %v4016, 4
      %v4023 = vshrl.u32 %v3870, 16
      %v4025 = vrot.slane %v4023, 7
      %v4026 = vshll.u32 %v3870, 16
      %v4028 = vor.u32 %v4025, %v4026
      %v4029 = vrot.slane %v4025, 4
      %v4031 = vshrl.u32 %v3871, 16
      %v4033 = vrot.slane %v4031, 7
      %v4034 = vshll.u32 %v3871, 16
      %v4036 = vor.u32 %v4033, %v4034
      %v4037 = vsel %vm479, %v4029, %v4036
      %v4038 = vrot.slane %v4033, 4
      %v4040 = vshrl.u32 %v3872, 16
      %v4042 = vrot.slane %v4040, 7
      %v4043 = vshll.u32 %v3872, 16
      %v4045 = vor.u32 %v4042, %v4043
      %v4046 = vrot.slane %v4042, 4
      %v4048 = vshrl.u32 %v3873, 16
      %v4050 = vrot.slane %v4048, 7
      %v4051 = vshll.u32 %v3873, 16
      %v4053 = vor.u32 %v4050, %v4051
      %v4054 = vsel %vm479, %v4046, %v4053
      %v4055 = vrot.slane %v4050, 4
      %v4057 = vshrl.u32 %v3874, 16
      %v4059 = vrot.slane %v4057, 7
      %v4060 = vshll.u32 %v3874, 16
      %v4062 = vor.u32 %v4059, %v4060
      %v4063 = vrot.slane %v4059, 4
      %v4065 = vshrl.u32 %v3875, 16
      %v4067 = vrot.slane %v4065, 7
      %v4068 = vshll.u32 %v3875, 16
      %v4070 = vor.u32 %v4067, %v4068
      %v4071 = vsel %vm479, %v4063, %v4070
      %v4072 = vrot.slane %v4067, 4
      %v4074 = vshrl.u32 %v3876, 16
      %v4076 = vrot.slane %v4074, 7
      %v4077 = vshll.u32 %v3876, 16
      %v4079 = vor.u32 %v4076, %v4077
      %v4080 = vrot.slane %v4076, 4
      %v4082 = vshrl.u32 %v3877, 16
      %v4084 = vrot.slane %v4082, 7
      %v4085 = vshll.u32 %v3877, 16
      %v4087 = vor.u32 %v4084, %v4085
      %v4088 = vsel %vm479, %v4080, %v4087
      %v4089 = vrot.slane %v4084, 4
      %v4091 = vshrl.u32 %v3878, 16
      %v4093 = vrot.slane %v4091, 7
      %v4094 = vshll.u32 %v3878, 16
      %v4096 = vor.u32 %v4093, %v4094
      %v4097 = vrot.slane %v4093, 4
      %v4099 = vshrl.u32 %v3879, 16
      %v4101 = vrot.slane %v4099, 7
      %v4102 = vshll.u32 %v3879, 16
      %v4104 = vor.u32 %v4101, %v4102
      %v4105 = vsel %vm479, %v4097, %v4104
      %v4106 = vrot.slane %v4101, 4
      %v4108 = vshrl.u32 %v3880, 16
      %v4110 = vrot.slane %v4108, 7
      %v4111 = vshll.u32 %v3880, 16
      %v4113 = vor.u32 %v4110, %v4111
      %v4114 = vrot.slane %v4110, 4
      %v4116 = vshrl.u32 %v3881, 16
      %v4118 = vrot.slane %v4116, 7
      %v4119 = vshll.u32 %v3881, 16
      %v4121 = vor.u32 %v4118, %v4119
      %v4122 = vsel %vm479, %v4114, %v4121
      %v4123 = vrot.slane %v4118, 4
      %v4125 = vshrl.u32 %v3882, 16
      %v4127 = vrot.slane %v4125, 7
      %v4128 = vshll.u32 %v3882, 16
      %v4130 = vor.u32 %v4127, %v4128
      %v4131 = vrot.slane %v4127, 4
      %v4133 = vshrl.u32 %v3883, 16
      %v4135 = vrot.slane %v4133, 7
      %v4136 = vshll.u32 %v3883, 16
      %v4138 = vor.u32 %v4135, %v4136
      %v4139 = vsel %vm479, %v4131, %v4138
      %v4140 = vrot.slane %v4135, 4
      %v4142 = vshrl.u32 %v3884, 16
      %v4144 = vrot.slane %v4142, 7
      %v4145 = vshll.u32 %v3884, 16
      %v4147 = vor.u32 %v4144, %v4145
      %v4148 = vrot.slane %v4144, 4
      %v4150 = vshrl.u32 %v3885, 16
      %v4152 = vrot.slane %v4150, 7
      %v4153 = vshll.u32 %v3885, 16
      %v4155 = vor.u32 %v4152, %v4153
      %v4156 = vsel %vm479, %v4148, %v4155
      %v4157 = vrot.slane %v4152, 4
      %vm4206 = vcmask 60416
      %vm4207 = vmand %vm4206, %vm287
      %v4208 = vld [vmem:[%s346] sm:$0xf]
      %v4209 = vsel %vm4207, %v3892, %v4208
      %4210 = vst [vmem:[%s346] sm:$0xf] %v4209
      %4211 = vst.msk [vmem:[%s346 + $0x4] sm:$0xf] %vm337, %v3901
      %v4212 = vld [vmem:[%s346 + $0x8] sm:$0x1]
      %v4213 = vsel %vm348, %v3902, %v4212
      %4214 = vst [vmem:[%s346 + $0x8] sm:$0x1] %v4213
      %v4215 = vld [vmem:[%s346 + $0xc] sm:$0xf]
      %v4216 = vsel %vm4207, %v3909, %v4215
      %4217 = vst [vmem:[%s346 + $0xc] sm:$0xf] %v4216
      %4218 = vst.msk [vmem:[%s346 + $0x10] sm:$0xf] %vm337, %v3918
      %v4219 = vld [vmem:[%s346 + $0x14] sm:$0x1]
      %v4220 = vsel %vm348, %v3919, %v4219
      %4221 = vst [vmem:[%s346 + $0x14] sm:$0x1] %v4220
      %v4222 = vld [vmem:[%s346 + $0x18] sm:$0xf]
      %v4223 = vsel %vm4207, %v3926, %v4222
      %4224 = vst [vmem:[%s346 + $0x18] sm:$0xf] %v4223
      %4225 = vst.msk [vmem:[%s346 + $0x1c] sm:$0xf] %vm337, %v3935
      %v4226 = vld [vmem:[%s346 + $0x20] sm:$0x1]
      %v4227 = vsel %vm348, %v3936, %v4226
      %4228 = vst [vmem:[%s346 + $0x20] sm:$0x1] %v4227
      %v4229 = vld [vmem:[%s346 + $0x24] sm:$0xf]
      %v4230 = vsel %vm4207, %v3943, %v4229
      %4231 = vst [vmem:[%s346 + $0x24] sm:$0xf] %v4230
      %4232 = vst.msk [vmem:[%s346 + $0x28] sm:$0xf] %vm337, %v3952
      %v4233 = vld [vmem:[%s346 + $0x2c] sm:$0x1]
      %v4234 = vsel %vm348, %v3953, %v4233
      %4235 = vst [vmem:[%s346 + $0x2c] sm:$0x1] %v4234
      %v4236 = vld [vmem:[%s346 + $0x30] sm:$0xf]
      %v4237 = vsel %vm4207, %v3960, %v4236
      %4238 = vst [vmem:[%s346 + $0x30] sm:$0xf] %v4237
      %4239 = vst.msk [vmem:[%s346 + $0x34] sm:$0xf] %vm337, %v3969
      %v4240 = vld [vmem:[%s346 + $0x38] sm:$0x1]
      %v4241 = vsel %vm348, %v3970, %v4240
      %4242 = vst [vmem:[%s346 + $0x38] sm:$0x1] %v4241
      %v4243 = vld [vmem:[%s346 + $0x3c] sm:$0xf]
      %v4244 = vsel %vm4207, %v3977, %v4243
      %4245 = vst [vmem:[%s346 + $0x3c] sm:$0xf] %v4244
      %4246 = vst.msk [vmem:[%s346 + $0x40] sm:$0xf] %vm337, %v3986
      %v4247 = vld [vmem:[%s346 + $0x44] sm:$0x1]
      %v4248 = vsel %vm348, %v3987, %v4247
      %4249 = vst [vmem:[%s346 + $0x44] sm:$0x1] %v4248
      %v4250 = vld [vmem:[%s346 + $0x48] sm:$0xf]
      %v4251 = vsel %vm4207, %v3994, %v4250
      %4252 = vst [vmem:[%s346 + $0x48] sm:$0xf] %v4251
      %4253 = vst.msk [vmem:[%s346 + $0x4c] sm:$0xf] %vm337, %v4003
      %v4254 = vld [vmem:[%s346 + $0x50] sm:$0x1]
      %v4255 = vsel %vm348, %v4004, %v4254
      %4256 = vst [vmem:[%s346 + $0x50] sm:$0x1] %v4255
      %v4257 = vld [vmem:[%s346 + $0x54] sm:$0xf]
      %v4258 = vsel %vm4207, %v4011, %v4257
      %4259 = vst [vmem:[%s346 + $0x54] sm:$0xf] %v4258
      %4260 = vst.msk [vmem:[%s346 + $0x58] sm:$0xf] %vm337, %v4020
      %v4261 = vld [vmem:[%s346 + $0x5c] sm:$0x1]
      %v4262 = vsel %vm348, %v4021, %v4261
      %4263 = vst [vmem:[%s346 + $0x5c] sm:$0x1] %v4262
      %v4264 = vld [vmem:[%s346 + $0x60] sm:$0xf]
      %v4265 = vsel %vm4207, %v4028, %v4264
      %4266 = vst [vmem:[%s346 + $0x60] sm:$0xf] %v4265
      %4267 = vst.msk [vmem:[%s346 + $0x64] sm:$0xf] %vm337, %v4037
      %v4268 = vld [vmem:[%s346 + $0x68] sm:$0x1]
      %v4269 = vsel %vm348, %v4038, %v4268
      %4270 = vst [vmem:[%s346 + $0x68] sm:$0x1] %v4269
      %v4271 = vld [vmem:[%s346 + $0x6c] sm:$0xf]
      %v4272 = vsel %vm4207, %v4045, %v4271
      %4273 = vst [vmem:[%s346 + $0x6c] sm:$0xf] %v4272
      %4274 = vst.msk [vmem:[%s346 + $0x70] sm:$0xf] %vm337, %v4054
      %v4275 = vld [vmem:[%s346 + $0x74] sm:$0x1]
      %v4276 = vsel %vm348, %v4055, %v4275
      %4277 = vst [vmem:[%s346 + $0x74] sm:$0x1] %v4276
      %v4278 = vld [vmem:[%s346 + $0x78] sm:$0xf]
      %v4279 = vsel %vm4207, %v4062, %v4278
      %4280 = vst [vmem:[%s346 + $0x78] sm:$0xf] %v4279
      %4281 = vst.msk [vmem:[%s346 + $0x7c] sm:$0xf] %vm337, %v4071
      %v4282 = vld [vmem:[%s346 + $0x80] sm:$0x1]
      %v4283 = vsel %vm348, %v4072, %v4282
      %4284 = vst [vmem:[%s346 + $0x80] sm:$0x1] %v4283
      %v4285 = vld [vmem:[%s346 + $0x84] sm:$0xf]
      %v4286 = vsel %vm4207, %v4079, %v4285
      %4287 = vst [vmem:[%s346 + $0x84] sm:$0xf] %v4286
      %4288 = vst.msk [vmem:[%s346 + $0x88] sm:$0xf] %vm337, %v4088
      %v4289 = vld [vmem:[%s346 + $0x8c] sm:$0x1]
      %v4290 = vsel %vm348, %v4089, %v4289
      %4291 = vst [vmem:[%s346 + $0x8c] sm:$0x1] %v4290
      %v4292 = vld [vmem:[%s346 + $0x90] sm:$0xf]
      %v4293 = vsel %vm4207, %v4096, %v4292
      %4294 = vst [vmem:[%s346 + $0x90] sm:$0xf] %v4293
      %4295 = vst.msk [vmem:[%s346 + $0x94] sm:$0xf] %vm337, %v4105
      %v4296 = vld [vmem:[%s346 + $0x98] sm:$0x1]
      %v4297 = vsel %vm348, %v4106, %v4296
      %4298 = vst [vmem:[%s346 + $0x98] sm:$0x1] %v4297
      %v4299 = vld [vmem:[%s346 + $0x9c] sm:$0xf]
      %v4300 = vsel %vm4207, %v4113, %v4299
      %4301 = vst [vmem:[%s346 + $0x9c] sm:$0xf] %v4300
      %4302 = vst.msk [vmem:[%s346 + $0xa0] sm:$0xf] %vm337, %v4122
      %v4303 = vld [vmem:[%s346 + $0xa4] sm:$0x1]
      %v4304 = vsel %vm348, %v4123, %v4303
      %4305 = vst [vmem:[%s346 + $0xa4] sm:$0x1] %v4304
      %v4306 = vld [vmem:[%s346 + $0xa8] sm:$0xf]
      %v4307 = vsel %vm4207, %v4130, %v4306
      %4308 = vst [vmem:[%s346 + $0xa8] sm:$0xf] %v4307
      %4309 = vst.msk [vmem:[%s346 + $0xac] sm:$0xf] %vm337, %v4139
      %v4310 = vld [vmem:[%s346 + $0xb0] sm:$0x1]
      %v4311 = vsel %vm348, %v4140, %v4310
      %4312 = vst [vmem:[%s346 + $0xb0] sm:$0x1] %v4311
      %v4313 = vld [vmem:[%s346 + $0xb4] sm:$0xf]
      %v4314 = vsel %vm4207, %v4147, %v4313
      %4315 = vst [vmem:[%s346 + $0xb4] sm:$0xf] %v4314
      %4316 = vst.msk [vmem:[%s346 + $0xb8] sm:$0xf] %vm337, %v4156
      %v4317 = vld [vmem:[%s346 + $0xbc] sm:$0x1]
      %v4318 = vsel %vm348, %v4157, %v4317
      %4319 = vst [vmem:[%s346 + $0xbc] sm:$0x1] %v4318
      %v4320 = vld [vmem:[#allocation3] sm:$0xf]
      %v4321 = vld [vmem:[#allocation3 + $0x4] sm:$0xf]
      %v4322 = vld [vmem:[#allocation3 + $0xc] sm:$0xf]
      %v4323 = vld [vmem:[#allocation3 + $0x10] sm:$0xf]
      %v4324 = vld [vmem:[#allocation3 + $0x18] sm:$0xf]
      %v4325 = vld [vmem:[#allocation3 + $0x1c] sm:$0xf]
      %v4326 = vld [vmem:[#allocation3 + $0x24] sm:$0xf]
      %v4327 = vld [vmem:[#allocation3 + $0x28] sm:$0xf]
      %v4328 = vld [vmem:[#allocation3 + $0x30] sm:$0xf]
      %v4329 = vld [vmem:[#allocation3 + $0x34] sm:$0xf]
      %v4330 = vld [vmem:[#allocation3 + $0x3c] sm:$0xf]
      %v4331 = vld [vmem:[#allocation3 + $0x40] sm:$0xf]
      %v4332 = vld [vmem:[#allocation3 + $0x48] sm:$0xf]
      %v4333 = vld [vmem:[#allocation3 + $0x4c] sm:$0xf]
      %v4334 = vld [vmem:[#allocation3 + $0x54] sm:$0xf]
      %v4335 = vld [vmem:[#allocation3 + $0x58] sm:$0xf]
      %v4336 = vld [vmem:[#allocation3 + $0x60] sm:$0xf]
      %v4337 = vld [vmem:[#allocation3 + $0x64] sm:$0xf]
      %v4338 = vld [vmem:[#allocation3 + $0x6c] sm:$0xf]
      %v4339 = vld [vmem:[#allocation3 + $0x70] sm:$0xf]
      %v4340 = vld [vmem:[#allocation3 + $0x78] sm:$0xf]
      %v4341 = vld [vmem:[#allocation3 + $0x7c] sm:$0xf]
      %v4342 = vld [vmem:[#allocation3 + $0x84] sm:$0xf]
      %v4343 = vld [vmem:[#allocation3 + $0x88] sm:$0xf]
      %v4344 = vld [vmem:[#allocation3 + $0x90] sm:$0xf]
      %v4345 = vld [vmem:[#allocation3 + $0x94] sm:$0xf]
      %v4346 = vld [vmem:[#allocation3 + $0x9c] sm:$0xf]
      %v4347 = vld [vmem:[#allocation3 + $0xa0] sm:$0xf]
      %v4348 = vld [vmem:[#allocation3 + $0xa8] sm:$0xf]
      %v4349 = vld [vmem:[#allocation3 + $0xac] sm:$0xf]
      %v4350 = vld [vmem:[#allocation3 + $0xb4] sm:$0xf]
      %v4351 = vld [vmem:[#allocation3 + $0xb8] sm:$0xf]
      %v4352 = vld [vmem:[#allocation3 + $0xc0] sm:$0xf]
      %v4353 = vld [vmem:[#allocation3 + $0xc4] sm:$0xf]
      %v4354 = vld [vmem:[#allocation3 + $0xcc] sm:$0xf]
      %v4355 = vld [vmem:[#allocation3 + $0xd0] sm:$0xf]
      %v4356 = vld [vmem:[%s3] sm:$0xf]
      %s4357 = scalar_lea.vmem %s3, 4
      %v4358 = vld [vmem:[%s4357] sm:$0xf]
      %v4391 = vunpack.c.l.b16 %v4322
      %v4392 = vunpack.c.l.b16 %v4323
      %v4393 = vunpack.c.l.b16 %v4324
      %v4394 = vunpack.c.l.b16 %v4325
      %v4395 = vunpack.c.l.b16 %v4326
      %v4396 = vunpack.c.l.b16 %v4327
      %v4397 = vunpack.c.l.b16 %v4328
      %v4398 = vunpack.c.l.b16 %v4329
      %v4399 = vunpack.c.l.b16 %v4330
      %v4400 = vunpack.c.l.b16 %v4331
      %v4401 = vunpack.c.l.b16 %v4332
      %v4402 = vunpack.c.l.b16 %v4333
      %v4403 = vunpack.c.l.b16 %v4334
      %v4404 = vunpack.c.l.b16 %v4335
      %v4405 = vunpack.c.l.b16 %v4336
      %v4406 = vunpack.c.l.b16 %v4337
      %v4407 = vunpack.c.l.b16 %v4338
      %v4408 = vunpack.c.l.b16 %v4339
      %v4409 = vunpack.c.l.b16 %v4340
      %v4410 = vunpack.c.l.b16 %v4341
      %v4411 = vunpack.c.l.b16 %v4342
      %v4412 = vunpack.c.l.b16 %v4343
      %v4413 = vunpack.c.l.b16 %v4344
      %v4414 = vunpack.c.l.b16 %v4345
      %v4415 = vunpack.c.l.b16 %v4346
      %v4416 = vunpack.c.l.b16 %v4347
      %v4417 = vunpack.c.l.b16 %v4348
      %v4418 = vunpack.c.l.b16 %v4349
      %v4419 = vunpack.c.l.b16 %v4350
      %v4420 = vunpack.c.l.b16 %v4351
      %v4421 = vunpack.c.l.b16 %v4352
      %v4422 = vunpack.c.l.b16 %v4353
      %v4423 = vpack.c.b16 %v4392, %v4391
      %v4424 = vpack.c.b16 %v4394, %v4393
      %v4425 = vpack.c.b16 %v4396, %v4395
      %v4426 = vpack.c.b16 %v4398, %v4397
      %v4427 = vpack.c.b16 %v4400, %v4399
      %v4428 = vpack.c.b16 %v4402, %v4401
      %v4429 = vpack.c.b16 %v4404, %v4403
      %v4430 = vpack.c.b16 %v4406, %v4405
      %v4431 = vpack.c.b16 %v4408, %v4407
      %v4432 = vpack.c.b16 %v4410, %v4409
      %v4433 = vpack.c.b16 %v4412, %v4411
      %v4434 = vpack.c.b16 %v4414, %v4413
      %v4435 = vpack.c.b16 %v4416, %v4415
      %v4436 = vpack.c.b16 %v4418, %v4417
      %v4437 = vpack.c.b16 %v4420, %v4419
      %v4438 = vpack.c.b16 %v4422, %v4421
      %vm4439 = vcmask 64512
      %v4441 = vsel %vm4439, %v4423, 0
      %v4444 = vsel %vm4439, %v4424, 0
      %v4447 = vsel %vm4439, %v4425, 0
      %v4450 = vsel %vm4439, %v4426, 0
      %v4453 = vsel %vm4439, %v4427, 0
      %v4456 = vsel %vm4439, %v4428, 0
      %v4459 = vsel %vm4439, %v4429, 0
      %v4462 = vsel %vm4439, %v4430, 0
      %v4465 = vsel %vm4439, %v4431, 0
      %v4468 = vsel %vm4439, %v4432, 0
      %v4471 = vsel %vm4439, %v4433, 0
      %v4474 = vsel %vm4439, %v4434, 0
      %v4477 = vsel %vm4439, %v4435, 0
      %v4480 = vsel %vm4439, %v4436, 0
      %v4483 = vsel %vm4439, %v4437, 0
      %v4486 = vsel %vm4439, %v4438, 0
      %vm4488 = vcmask 1043456
      %v4490 = vsel %vm4488, %v4358, 0
      %4492 = vmatprep.subr.bf16.mxu0 0
      %4493 = vmatpush1.bf16.msra.mxu0 %v4490
      %4494 = vmatprep.subr.bf16.mxu0 0
      %4495 = vmatpush1.bf16.msra.mxu0 0
      %4496 = vmatprep.subr.bf16.mxu0 0
      %4497 = vmatpush1.bf16.msra.mxu0 0
      %4498 = vmatprep.subr.bf16.mxu0 0
      %4499 = vmatpush1.bf16.msra.mxu0 0
      %4500 = vmatprep.subr.bf16.mxu0 0
      %4501 = vmatpush1.bf16.msra.mxu0 0
      %4502 = vmatprep.subr.bf16.mxu0 0
      %4503 = vmatpush1.bf16.msra.mxu0 0
      %4504 = vmatprep.subr.bf16.mxu0 0
      %4505 = vmatpush1.bf16.msra.mxu0 0
      %4506 = vmatprep.subr.bf16.mxu0 0
      %4507 = vmatpush1.bf16.msra.mxu0 0
      %4508 = vmatprep.subr.bf16.mxu0 0
      %4509 = vmatpush1.bf16.msra.mxu0 0
      %4510 = vmatprep.subr.bf16.mxu0 0
      %4511 = vmatpush1.bf16.msra.mxu0 0
      %4512 = vmatprep.subr.bf16.mxu0 0
      %4513 = vmatpush1.bf16.msra.mxu0 0
      %4514 = vmatprep.subr.bf16.mxu0 0
      %4515 = vmatpush1.bf16.msra.mxu0 0
      %4516 = vmatprep.subr.bf16.mxu0 0
      %4517 = vmatpush1.bf16.msra.mxu0 0
      %4518 = vmatprep.subr.bf16.mxu0 0
      %4519 = vmatpush1.bf16.msra.mxu0 0
      %4520 = vmatprep.subr.bf16.mxu0 0
      %4521 = vmatpush1.bf16.msra.mxu0 0
      %4522 = vmatprep.subr.bf16.mxu0 0
      %4523 = vmatpush1.bf16.msra.mxu0 0
      %4524 = vmatprep.mubr.bf16.mxu0 0
      %4525 = vmatmul.mubr.bf16.gmra.mrb[0].mxu0 %v4441
      %v4526 = vpop.f32.mrb[0].mxu0
      %v4527 = vadd.f32 0.0, %v4526
      %v4528 = vpop.f32.mrb[0].mxu0
      %v4529 = vpop.f32.mrb[0].mxu0
      %v4530 = vadd.f32 0.0, %v4529
      %v4531 = vpop.f32.mrb[0].mxu0
      %4532 = vmatprep.mubr.bf16.mxu0 0
      %4533 = vmatmul.mubr.bf16.gmra.mrb[0].mxu0 %v4444
      %v4534 = vpop.f32.mrb[0].mxu0
      %v4535 = vadd.f32 0.0, %v4534
      %v4536 = vpop.f32.mrb[0].mxu0
      %v4537 = vpop.f32.mrb[0].mxu0
      %v4538 = vadd.f32 0.0, %v4537
      %v4539 = vpop.f32.mrb[0].mxu0
      %4540 = vmatprep.mubr.bf16.mxu0 0
      %4541 = vmatmul.mubr.bf16.gmra.mrb[0].mxu0 %v4447
      %v4542 = vpop.f32.mrb[0].mxu0
      %v4543 = vadd.f32 0.0, %v4542
      %v4544 = vpop.f32.mrb[0].mxu0
      %v4545 = vpop.f32.mrb[0].mxu0
      %v4546 = vadd.f32 0.0, %v4545
      %v4547 = vpop.f32.mrb[0].mxu0
      %4548 = vmatprep.mubr.bf16.mxu0 0
      %4549 = vmatmul.mubr.bf16.gmra.mrb[0].mxu0 %v4450
      %v4550 = vpop.f32.mrb[0].mxu0
      %v4551 = vadd.f32 0.0, %v4550
      %v4552 = vpop.f32.mrb[0].mxu0
      %v4553 = vpop.f32.mrb[0].mxu0
      %v4554 = vadd.f32 0.0, %v4553
      %v4555 = vpop.f32.mrb[0].mxu0
      %4556 = vmatprep.mubr.bf16.mxu0 0
      %4557 = vmatmul.mubr.bf16.gmra.mrb[0].mxu0 %v4453
      %v4558 = vpop.f32.mrb[0].mxu0
      %v4559 = vadd.f32 0.0, %v4558
      %v4560 = vpop.f32.mrb[0].mxu0
      %v4561 = vpop.f32.mrb[0].mxu0
      %v4562 = vadd.f32 0.0, %v4561
      %v4563 = vpop.f32.mrb[0].mxu0
      %4564 = vmatprep.mubr.bf16.mxu0 0
      %4565 = vmatmul.mubr.bf16.gmra.mrb[0].mxu0 %v4456
      %v4566 = vpop.f32.mrb[0].mxu0
      %v4567 = vadd.f32 0.0, %v4566
      %v4568 = vpop.f32.mrb[0].mxu0
      %v4569 = vpop.f32.mrb[0].mxu0
      %v4570 = vadd.f32 0.0, %v4569
      %v4571 = vpop.f32.mrb[0].mxu0
      %4572 = vmatprep.mubr.bf16.mxu0 0
      %4573 = vmatmul.mubr.bf16.gmra.mrb[0].mxu0 %v4459
      %v4574 = vpop.f32.mrb[0].mxu0
      %v4575 = vadd.f32 0.0, %v4574
      %v4576 = vpop.f32.mrb[0].mxu0
      %v4577 = vpop.f32.mrb[0].mxu0
      %v4578 = vadd.f32 0.0, %v4577
      %v4579 = vpop.f32.mrb[0].mxu0
      %4580 = vmatprep.mubr.bf16.mxu0 0
      %4581 = vmatmul.mubr.bf16.gmra.mrb[0].mxu0 %v4462
      %v4582 = vpop.f32.mrb[0].mxu0
      %v4583 = vadd.f32 0.0, %v4582
      %v4584 = vpop.f32.mrb[0].mxu0
      %v4585 = vpop.f32.mrb[0].mxu0
      %v4586 = vadd.f32 0.0, %v4585
      %v4587 = vpop.f32.mrb[0].mxu0
      %4588 = vmatprep.mubr.bf16.mxu0 0
      %4589 = vmatmul.mubr.bf16.gmra.mrb[0].mxu0 %v4465
      %v4590 = vpop.f32.mrb[0].mxu0
      %v4591 = vadd.f32 0.0, %v4590
      %v4592 = vpop.f32.mrb[0].mxu0
      %v4593 = vpop.f32.mrb[0].mxu0
      %v4594 = vadd.f32 0.0, %v4593
      %v4595 = vpop.f32.mrb[0].mxu0
      %4596 = vmatprep.mubr.bf16.mxu0 0
      %4597 = vmatmul.mubr.bf16.gmra.mrb[0].mxu0 %v4468
      %v4598 = vpop.f32.mrb[0].mxu0
      %v4599 = vadd.f32 0.0, %v4598
      %v4600 = vpop.f32.mrb[0].mxu0
      %v4601 = vpop.f32.mrb[0].mxu0
      %v4602 = vadd.f32 0.0, %v4601
      %v4603 = vpop.f32.mrb[0].mxu0
      %4604 = vmatprep.mubr.bf16.mxu0 0
      %4605 = vmatmul.mubr.bf16.gmra.mrb[0].mxu0 %v4471
      %v4606 = vpop.f32.mrb[0].mxu0
      %v4607 = vadd.f32 0.0, %v4606
      %v4608 = vpop.f32.mrb[0].mxu0
      %v4609 = vpop.f32.mrb[0].mxu0
      %v4610 = vadd.f32 0.0, %v4609
      %v4611 = vpop.f32.mrb[0].mxu0
      %4612 = vmatprep.mubr.bf16.mxu0 0
      %4613 = vmatmul.mubr.bf16.gmra.mrb[0].mxu0 %v4474
      %v4614 = vpop.f32.mrb[0].mxu0
      %v4615 = vadd.f32 0.0, %v4614
      %v4616 = vpop.f32.mrb[0].mxu0
      %v4617 = vpop.f32.mrb[0].mxu0
      %v4618 = vadd.f32 0.0, %v4617
      %v4619 = vpop.f32.mrb[0].mxu0
      %4620 = vmatprep.mubr.bf16.mxu0 0
      %4621 = vmatmul.mubr.bf16.gmra.mrb[0].mxu0 %v4477
      %v4622 = vpop.f32.mrb[0].mxu0
      %v4623 = vadd.f32 0.0, %v4622
      %v4624 = vpop.f32.mrb[0].mxu0
      %v4625 = vpop.f32.mrb[0].mxu0
      %v4626 = vadd.f32 0.0, %v4625
      %v4627 = vpop.f32.mrb[0].mxu0
      %4628 = vmatprep.mubr.bf16.mxu0 0
      %4629 = vmatmul.mubr.bf16.gmra.mrb[0].mxu0 %v4480
      %v4630 = vpop.f32.mrb[0].mxu0
      %v4631 = vadd.f32 0.0, %v4630
      %v4632 = vpop.f32.mrb[0].mxu0
      %v4633 = vpop.f32.mrb[0].mxu0
      %v4634 = vadd.f32 0.0, %v4633
      %v4635 = vpop.f32.mrb[0].mxu0
      %4636 = vmatprep.mubr.bf16.mxu0 0
      %4637 = vmatmul.mubr.bf16.gmra.mrb[0].mxu0 %v4483
      %v4638 = vpop.f32.mrb[0].mxu0
      %v4639 = vadd.f32 0.0, %v4638
      %v4640 = vpop.f32.mrb[0].mxu0
      %v4641 = vpop.f32.mrb[0].mxu0
      %v4642 = vadd.f32 0.0, %v4641
      %v4643 = vpop.f32.mrb[0].mxu0
      %4644 = vmatprep.mubr.bf16.mxu0 0
      %4645 = vmatmul.mubr.bf16.gmra.mrb[0].mxu0 %v4486
      %v4646 = vpop.f32.mrb[0].mxu0
      %v4647 = vadd.f32 0.0, %v4646
      %v4648 = vpop.f32.mrb[0].mxu0
      %v4649 = vpop.f32.mrb[0].mxu0
      %v4650 = vadd.f32 0.0, %v4649
      %v4651 = vpop.f32.mrb[0].mxu0
      %4652 = vdwg.mxu0
      %v4655 = vunpack.c.l.b16 %v4320
      %v4656 = vunpack.c.l.b16 %v4321
      %v4657 = vpack.c.b16 %v4656, %v4655
      %v4659 = vsel %vm4439, %v4657, 0
      %v4662 = vsel %vm4488, %v4356, 0
      %4664 = vmatprep.subr.bf16.mxu0 0
      %4665 = vmatpush1.bf16.msra.mxu0 %v4662
      %4666 = vmatprep.subr.bf16.mxu0 0
      %4667 = vmatpush1.bf16.msra.mxu0 0
      %4668 = vmatprep.subr.bf16.mxu0 0
      %4669 = vmatpush1.bf16.msra.mxu0 0
      %4670 = vmatprep.subr.bf16.mxu0 0
      %4671 = vmatpush1.bf16.msra.mxu0 0
      %4672 = vmatprep.subr.bf16.mxu0 0
      %4673 = vmatpush1.bf16.msra.mxu0 0
      %4674 = vmatprep.subr.bf16.mxu0 0
      %4675 = vmatpush1.bf16.msra.mxu0 0
      %4676 = vmatprep.subr.bf16.mxu0 0
      %4677 = vmatpush1.bf16.msra.mxu0 0
      %4678 = vmatprep.subr.bf16.mxu0 0
      %4679 = vmatpush1.bf16.msra.mxu0 0
      %4680 = vmatprep.subr.bf16.mxu0 0
      %4681 = vmatpush1.bf16.msra.mxu0 0
      %4682 = vmatprep.subr.bf16.mxu0 0
      %4683 = vmatpush1.bf16.msra.mxu0 0
      %4684 = vmatprep.subr.bf16.mxu0 0
      %4685 = vmatpush1.bf16.msra.mxu0 0
      %4686 = vmatprep.subr.bf16.mxu0 0
      %4687 = vmatpush1.bf16.msra.mxu0 0
      %4688 = vmatprep.subr.bf16.mxu0 0
      %4689 = vmatpush1.bf16.msra.mxu0 0
      %4690 = vmatprep.subr.bf16.mxu0 0
      %4691 = vmatpush1.bf16.msra.mxu0 0
      %4692 = vmatprep.subr.bf16.mxu0 0
      %4693 = vmatpush1.bf16.msra.mxu0 0
      %4694 = vmatprep.subr.bf16.mxu0 0
      %4695 = vmatpush1.bf16.msra.mxu0 0
      %4696 = vmatprep.mubr.bf16.mxu0 0
      %4697 = vmatmul.mubr.bf16.gmra.mrb[0].mxu0 %v4659
      %v4698 = vpop.f32.mrb[0].mxu0
      %v4699 = vadd.f32 %v4527, %v4698
      %v4700 = vpop.f32.mrb[0].mxu0
      %v4701 = vpop.f32.mrb[0].mxu0
      %v4702 = vadd.f32 %v4530, %v4701
      %v4703 = vpop.f32.mrb[0].mxu0
      %4704 = vmatprep.mubr.bf16.mxu0 0
      %4705 = vmatmul.mubr.bf16.gmra.mrb[0].mxu0 %v4441
      %v4706 = vpop.f32.mrb[0].mxu0
      %v4707 = vadd.f32 %v4535, %v4706
      %v4708 = vpop.f32.mrb[0].mxu0
      %v4709 = vpop.f32.mrb[0].mxu0
      %v4710 = vadd.f32 %v4538, %v4709
      %v4711 = vpop.f32.mrb[0].mxu0
      %4712 = vmatprep.mubr.bf16.mxu0 0
      %4713 = vmatmul.mubr.bf16.gmra.mrb[0].mxu0 %v4444
      %v4714 = vpop.f32.mrb[0].mxu0
      %v4715 = vadd.f32 %v4543, %v4714
      %v4716 = vpop.f32.mrb[0].mxu0
      %v4717 = vpop.f32.mrb[0].mxu0
      %v4718 = vadd.f32 %v4546, %v4717
      %v4719 = vpop.f32.mrb[0].mxu0
      %4720 = vmatprep.mubr.bf16.mxu0 0
      %4721 = vmatmul.mubr.bf16.gmra.mrb[0].mxu0 %v4447
      %v4722 = vpop.f32.mrb[0].mxu0
      %v4723 = vadd.f32 %v4551, %v4722
      %v4724 = vpop.f32.mrb[0].mxu0
      %v4725 = vpop.f32.mrb[0].mxu0
      %v4726 = vadd.f32 %v4554, %v4725
      %v4727 = vpop.f32.mrb[0].mxu0
      %4728 = vmatprep.mubr.bf16.mxu0 0
      %4729 = vmatmul.mubr.bf16.gmra.mrb[0].mxu0 %v4450
      %v4730 = vpop.f32.mrb[0].mxu0
      %v4731 = vadd.f32 %v4559, %v4730
      %v4732 = vpop.f32.mrb[0].mxu0
      %v4733 = vpop.f32.mrb[0].mxu0
      %v4734 = vadd.f32 %v4562, %v4733
      %v4735 = vpop.f32.mrb[0].mxu0
      %4736 = vmatprep.mubr.bf16.mxu0 0
      %4737 = vmatmul.mubr.bf16.gmra.mrb[0].mxu0 %v4453
      %v4738 = vpop.f32.mrb[0].mxu0
      %v4739 = vadd.f32 %v4567, %v4738
      %v4740 = vpop.f32.mrb[0].mxu0
      %v4741 = vpop.f32.mrb[0].mxu0
      %v4742 = vadd.f32 %v4570, %v4741
      %v4743 = vpop.f32.mrb[0].mxu0
      %4744 = vmatprep.mubr.bf16.mxu0 0
      %4745 = vmatmul.mubr.bf16.gmra.mrb[0].mxu0 %v4456
      %v4746 = vpop.f32.mrb[0].mxu0
      %v4747 = vadd.f32 %v4575, %v4746
      %v4748 = vpop.f32.mrb[0].mxu0
      %v4749 = vpop.f32.mrb[0].mxu0
      %v4750 = vadd.f32 %v4578, %v4749
      %v4751 = vpop.f32.mrb[0].mxu0
      %4752 = vmatprep.mubr.bf16.mxu0 0
      %4753 = vmatmul.mubr.bf16.gmra.mrb[0].mxu0 %v4459
      %v4754 = vpop.f32.mrb[0].mxu0
      %v4755 = vadd.f32 %v4583, %v4754
      %v4756 = vpop.f32.mrb[0].mxu0
      %v4757 = vpop.f32.mrb[0].mxu0
      %v4758 = vadd.f32 %v4586, %v4757
      %v4759 = vpop.f32.mrb[0].mxu0
      %4760 = vmatprep.mubr.bf16.mxu0 0
      %4761 = vmatmul.mubr.bf16.gmra.mrb[0].mxu0 %v4462
      %v4762 = vpop.f32.mrb[0].mxu0
      %v4763 = vadd.f32 %v4591, %v4762
      %v4764 = vpop.f32.mrb[0].mxu0
      %v4765 = vpop.f32.mrb[0].mxu0
      %v4766 = vadd.f32 %v4594, %v4765
      %v4767 = vpop.f32.mrb[0].mxu0
      %4768 = vmatprep.mubr.bf16.mxu0 0
      %4769 = vmatmul.mubr.bf16.gmra.mrb[0].mxu0 %v4465
      %v4770 = vpop.f32.mrb[0].mxu0
      %v4771 = vadd.f32 %v4599, %v4770
      %v4772 = vpop.f32.mrb[0].mxu0
      %v4773 = vpop.f32.mrb[0].mxu0
      %v4774 = vadd.f32 %v4602, %v4773
      %v4775 = vpop.f32.mrb[0].mxu0
      %4776 = vmatprep.mubr.bf16.mxu0 0
      %4777 = vmatmul.mubr.bf16.gmra.mrb[0].mxu0 %v4468
      %v4778 = vpop.f32.mrb[0].mxu0
      %v4779 = vadd.f32 %v4607, %v4778
      %v4780 = vpop.f32.mrb[0].mxu0
      %v4781 = vpop.f32.mrb[0].mxu0
      %v4782 = vadd.f32 %v4610, %v4781
      %v4783 = vpop.f32.mrb[0].mxu0
      %4784 = vmatprep.mubr.bf16.mxu0 0
      %4785 = vmatmul.mubr.bf16.gmra.mrb[0].mxu0 %v4471
      %v4786 = vpop.f32.mrb[0].mxu0
      %v4787 = vadd.f32 %v4615, %v4786
      %v4788 = vpop.f32.mrb[0].mxu0
      %v4789 = vpop.f32.mrb[0].mxu0
      %v4790 = vadd.f32 %v4618, %v4789
      %v4791 = vpop.f32.mrb[0].mxu0
      %4792 = vmatprep.mubr.bf16.mxu0 0
      %4793 = vmatmul.mubr.bf16.gmra.mrb[0].mxu0 %v4474
      %v4794 = vpop.f32.mrb[0].mxu0
      %v4795 = vadd.f32 %v4623, %v4794
      %v4796 = vpop.f32.mrb[0].mxu0
      %v4797 = vpop.f32.mrb[0].mxu0
      %v4798 = vadd.f32 %v4626, %v4797
      %v4799 = vpop.f32.mrb[0].mxu0
      %4800 = vmatprep.mubr.bf16.mxu0 0
      %4801 = vmatmul.mubr.bf16.gmra.mrb[0].mxu0 %v4477
      %v4802 = vpop.f32.mrb[0].mxu0
      %v4803 = vadd.f32 %v4631, %v4802
      %v4804 = vpop.f32.mrb[0].mxu0
      %v4805 = vpop.f32.mrb[0].mxu0
      %v4806 = vadd.f32 %v4634, %v4805
      %v4807 = vpop.f32.mrb[0].mxu0
      %4808 = vmatprep.mubr.bf16.mxu0 0
      %4809 = vmatmul.mubr.bf16.gmra.mrb[0].mxu0 %v4480
      %v4810 = vpop.f32.mrb[0].mxu0
      %v4811 = vadd.f32 %v4639, %v4810
      %v4812 = vpop.f32.mrb[0].mxu0
      %v4813 = vpop.f32.mrb[0].mxu0
      %v4814 = vadd.f32 %v4642, %v4813
      %v4815 = vpop.f32.mrb[0].mxu0
      %4816 = vmatprep.mubr.bf16.mxu0 0
      %4817 = vmatmul.mubr.bf16.gmra.mrb[0].mxu0 %v4483
      %v4818 = vpop.f32.mrb[0].mxu0
      %v4819 = vadd.f32 %v4647, %v4818
      %v4820 = vpop.f32.mrb[0].mxu0
      %v4821 = vpop.f32.mrb[0].mxu0
      %v4822 = vadd.f32 %v4650, %v4821
      %v4823 = vpop.f32.mrb[0].mxu0
      %4824 = vdwg.mxu0
      %s4825 = scalar_lea.vmem %s3, 8
      %v4826 = vld [vmem:[%s4825] sm:$0xf]
      %v4829 = vunpack.c.l.b16 %v4354
      %v4830 = vunpack.c.l.b16 %v4355
      %v4831 = vpack.c.b16 %v4830, %v4829
      %v4833 = vsel %vm4439, %v4831, 0
      %v4836 = vsel %vm4488, %v4826, 0
      %4838 = vmatprep.subr.bf16.mxu0 0
      %4839 = vmatpush1.bf16.msra.mxu0 %v4836
      %4840 = vmatprep.subr.bf16.mxu0 0
      %4841 = vmatpush1.bf16.msra.mxu0 0
      %4842 = vmatprep.subr.bf16.mxu0 0
      %4843 = vmatpush1.bf16.msra.mxu0 0
      %4844 = vmatprep.subr.bf16.mxu0 0
      %4845 = vmatpush1.bf16.msra.mxu0 0
      %4846 = vmatprep.subr.bf16.mxu0 0
      %4847 = vmatpush1.bf16.msra.mxu0 0
      %4848 = vmatprep.subr.bf16.mxu0 0
      %4849 = vmatpush1.bf16.msra.mxu0 0
      %4850 = vmatprep.subr.bf16.mxu0 0
      %4851 = vmatpush1.bf16.msra.mxu0 0
      %4852 = vmatprep.subr.bf16.mxu0 0
      %4853 = vmatpush1.bf16.msra.mxu0 0
      %4854 = vmatprep.subr.bf16.mxu0 0
      %4855 = vmatpush1.bf16.msra.mxu0 0
      %4856 = vmatprep.subr.bf16.mxu0 0
      %4857 = vmatpush1.bf16.msra.mxu0 0
      %4858 = vmatprep.subr.bf16.mxu0 0
      %4859 = vmatpush1.bf16.msra.mxu0 0
      %4860 = vmatprep.subr.bf16.mxu0 0
      %4861 = vmatpush1.bf16.msra.mxu0 0
      %4862 = vmatprep.subr.bf16.mxu0 0
      %4863 = vmatpush1.bf16.msra.mxu0 0
      %4864 = vmatprep.subr.bf16.mxu0 0
      %4865 = vmatpush1.bf16.msra.mxu0 0
      %4866 = vmatprep.subr.bf16.mxu0 0
      %4867 = vmatpush1.bf16.msra.mxu0 0
      %4868 = vmatprep.subr.bf16.mxu0 0
      %4869 = vmatpush1.bf16.msra.mxu0 0
      %4870 = vmatprep.mubr.bf16.mxu0 0
      %4871 = vmatmul.mubr.bf16.gmra.mrb[0].mxu0 %v4444
      %v4872 = vpop.f32.mrb[0].mxu0
      %v4873 = vadd.f32 0.0, %v4872
      %v4874 = vpop.f32.mrb[0].mxu0
      %v4875 = vpop.f32.mrb[0].mxu0
      %v4876 = vadd.f32 0.0, %v4875
      %v4877 = vpop.f32.mrb[0].mxu0
      %4878 = vmatprep.mubr.bf16.mxu0 0
      %4879 = vmatmul.mubr.bf16.gmra.mrb[0].mxu0 %v4447
      %v4880 = vpop.f32.mrb[0].mxu0
      %v4881 = vadd.f32 0.0, %v4880
      %v4882 = vpop.f32.mrb[0].mxu0
      %v4883 = vpop.f32.mrb[0].mxu0
      %v4884 = vadd.f32 0.0, %v4883
      %v4885 = vpop.f32.mrb[0].mxu0
      %4886 = vmatprep.mubr.bf16.mxu0 0
      %4887 = vmatmul.mubr.bf16.gmra.mrb[0].mxu0 %v4450
      %v4888 = vpop.f32.mrb[0].mxu0
      %v4889 = vadd.f32 0.0, %v4888
      %v4890 = vpop.f32.mrb[0].mxu0
      %v4891 = vpop.f32.mrb[0].mxu0
      %v4892 = vadd.f32 0.0, %v4891
      %v4893 = vpop.f32.mrb[0].mxu0
      %4894 = vmatprep.mubr.bf16.mxu0 0
      %4895 = vmatmul.mubr.bf16.gmra.mrb[0].mxu0 %v4453
      %v4896 = vpop.f32.mrb[0].mxu0
      %v4897 = vadd.f32 0.0, %v4896
      %v4898 = vpop.f32.mrb[0].mxu0
      %v4899 = vpop.f32.mrb[0].mxu0
      %v4900 = vadd.f32 0.0, %v4899
      %v4901 = vpop.f32.mrb[0].mxu0
      %4902 = vmatprep.mubr.bf16.mxu0 0
      %4903 = vmatmul.mubr.bf16.gmra.mrb[0].mxu0 %v4456
      %v4904 = vpop.f32.mrb[0].mxu0
      %v4905 = vadd.f32 0.0, %v4904
      %v4906 = vpop.f32.mrb[0].mxu0
      %v4907 = vpop.f32.mrb[0].mxu0
      %v4908 = vadd.f32 0.0, %v4907
      %v4909 = vpop.f32.mrb[0].mxu0
      %4910 = vmatprep.mubr.bf16.mxu0 0
      %4911 = vmatmul.mubr.bf16.gmra.mrb[0].mxu0 %v4459
      %v4912 = vpop.f32.mrb[0].mxu0
      %v4913 = vadd.f32 0.0, %v4912
      %v4914 = vpop.f32.mrb[0].mxu0
      %v4915 = vpop.f32.mrb[0].mxu0
      %v4916 = vadd.f32 0.0, %v4915
      %v4917 = vpop.f32.mrb[0].mxu0
      %4918 = vmatprep.mubr.bf16.mxu0 0
      %4919 = vmatmul.mubr.bf16.gmra.mrb[0].mxu0 %v4462
      %v4920 = vpop.f32.mrb[0].mxu0
      %v4921 = vadd.f32 0.0, %v4920
      %v4922 = vpop.f32.mrb[0].mxu0
      %v4923 = vpop.f32.mrb[0].mxu0
      %v4924 = vadd.f32 0.0, %v4923
      %v4925 = vpop.f32.mrb[0].mxu0
      %4926 = vmatprep.mubr.bf16.mxu0 0
      %4927 = vmatmul.mubr.bf16.gmra.mrb[0].mxu0 %v4465
      %v4928 = vpop.f32.mrb[0].mxu0
      %v4929 = vadd.f32 0.0, %v4928
      %v4930 = vpop.f32.mrb[0].mxu0
      %v4931 = vpop.f32.mrb[0].mxu0
      %v4932 = vadd.f32 0.0, %v4931
      %v4933 = vpop.f32.mrb[0].mxu0
      %4934 = vmatprep.mubr.bf16.mxu0 0
      %4935 = vmatmul.mubr.bf16.gmra.mrb[0].mxu0 %v4468
      %v4936 = vpop.f32.mrb[0].mxu0
      %v4937 = vadd.f32 0.0, %v4936
      %v4938 = vpop.f32.mrb[0].mxu0
      %v4939 = vpop.f32.mrb[0].mxu0
      %v4940 = vadd.f32 0.0, %v4939
      %v4941 = vpop.f32.mrb[0].mxu0
      %4942 = vmatprep.mubr.bf16.mxu0 0
      %4943 = vmatmul.mubr.bf16.gmra.mrb[0].mxu0 %v4471
      %v4944 = vpop.f32.mrb[0].mxu0
      %v4945 = vadd.f32 0.0, %v4944
      %v4946 = vpop.f32.mrb[0].mxu0
      %v4947 = vpop.f32.mrb[0].mxu0
      %v4948 = vadd.f32 0.0, %v4947
      %v4949 = vpop.f32.mrb[0].mxu0
      %4950 = vmatprep.mubr.bf16.mxu0 0
      %4951 = vmatmul.mubr.bf16.gmra.mrb[0].mxu0 %v4474
      %v4952 = vpop.f32.mrb[0].mxu0
      %v4953 = vadd.f32 0.0, %v4952
      %v4954 = vpop.f32.mrb[0].mxu0
      %v4955 = vpop.f32.mrb[0].mxu0
      %v4956 = vadd.f32 0.0, %v4955
      %v4957 = vpop.f32.mrb[0].mxu0
      %4958 = vmatprep.mubr.bf16.mxu0 0
      %4959 = vmatmul.mubr.bf16.gmra.mrb[0].mxu0 %v4477
      %v4960 = vpop.f32.mrb[0].mxu0
      %v4961 = vadd.f32 0.0, %v4960
      %v4962 = vpop.f32.mrb[0].mxu0
      %v4963 = vpop.f32.mrb[0].mxu0
      %v4964 = vadd.f32 0.0, %v4963
      %v4965 = vpop.f32.mrb[0].mxu0
      %4966 = vmatprep.mubr.bf16.mxu0 0
      %4967 = vmatmul.mubr.bf16.gmra.mrb[0].mxu0 %v4480
      %v4968 = vpop.f32.mrb[0].mxu0
      %v4969 = vadd.f32 0.0, %v4968
      %v4970 = vpop.f32.mrb[0].mxu0
      %v4971 = vpop.f32.mrb[0].mxu0
      %v4972 = vadd.f32 0.0, %v4971
      %v4973 = vpop.f32.mrb[0].mxu0
      %4974 = vmatprep.mubr.bf16.mxu0 0
      %4975 = vmatmul.mubr.bf16.gmra.mrb[0].mxu0 %v4483
      %v4976 = vpop.f32.mrb[0].mxu0
      %v4977 = vadd.f32 0.0, %v4976
      %v4978 = vpop.f32.mrb[0].mxu0
      %v4979 = vpop.f32.mrb[0].mxu0
      %v4980 = vadd.f32 0.0, %v4979
      %v4981 = vpop.f32.mrb[0].mxu0
      %4982 = vmatprep.mubr.bf16.mxu0 0
      %4983 = vmatmul.mubr.bf16.gmra.mrb[0].mxu0 %v4486
      %v4984 = vpop.f32.mrb[0].mxu0
      %v4985 = vadd.f32 0.0, %v4984
      %v4986 = vpop.f32.mrb[0].mxu0
      %v4987 = vpop.f32.mrb[0].mxu0
      %v4988 = vadd.f32 0.0, %v4987
      %v4989 = vpop.f32.mrb[0].mxu0
      %4990 = vmatprep.mubr.bf16.mxu0 0
      %4991 = vmatmul.mubr.bf16.gmra.mrb[0].mxu0 %v4833
      %v4992 = vpop.f32.mrb[0].mxu0
      %v4993 = vadd.f32 0.0, %v4992
      %v4994 = vpop.f32.mrb[0].mxu0
      %v4995 = vpop.f32.mrb[0].mxu0
      %v4996 = vadd.f32 0.0, %v4995
      %v4997 = vpop.f32.mrb[0].mxu0
      %4998 = vdwg.mxu0
      %v4999 = vadd.f32 %v4699, %v4873
      %v5000 = vadd.f32 %v4702, %v4876
      %v5001 = vadd.f32 %v4707, %v4881
      %v5002 = vadd.f32 %v4710, %v4884
      %v5003 = vadd.f32 %v4715, %v4889
      %v5004 = vadd.f32 %v4718, %v4892
      %v5005 = vadd.f32 %v4723, %v4897
      %v5006 = vadd.f32 %v4726, %v4900
      %v5007 = vadd.f32 %v4731, %v4905
      %v5008 = vadd.f32 %v4734, %v4908
      %v5009 = vadd.f32 %v4739, %v4913
      %v5010 = vadd.f32 %v4742, %v4916
      %v5011 = vadd.f32 %v4747, %v4921
      %v5012 = vadd.f32 %v4750, %v4924
      %v5013 = vadd.f32 %v4755, %v4929
      %v5014 = vadd.f32 %v4758, %v4932
      %v5015 = vadd.f32 %v4763, %v4937
      %v5016 = vadd.f32 %v4766, %v4940
      %v5017 = vadd.f32 %v4771, %v4945
      %v5018 = vadd.f32 %v4774, %v4948
      %v5019 = vadd.f32 %v4779, %v4953
      %v5020 = vadd.f32 %v4782, %v4956
      %v5021 = vadd.f32 %v4787, %v4961
      %v5022 = vadd.f32 %v4790, %v4964
      %v5023 = vadd.f32 %v4795, %v4969
      %v5024 = vadd.f32 %v4798, %v4972
      %v5025 = vadd.f32 %v4803, %v4977
      %v5026 = vadd.f32 %v4806, %v4980
      %v5027 = vadd.f32 %v4811, %v4985
      %v5028 = vadd.f32 %v4814, %v4988
      %v5029 = vadd.f32 %v4819, %v4993
      %v5030 = vadd.f32 %v4822, %v4996
      %v5031 = vld [vmem:[#allocation3] sm:$0xf]
      %v5032 = vld [vmem:[#allocation3 + $0x4] sm:$0xf]
      %v5033 = vld [vmem:[#allocation3 + $0x8] sm:$0x1]
      %v5034 = vld [vmem:[#allocation3 + $0xc] sm:$0xf]
      %v5035 = vld [vmem:[#allocation3 + $0x10] sm:$0xf]
      %v5036 = vld [vmem:[#allocation3 + $0x14] sm:$0x1]
      %v5037 = vld [vmem:[#allocation3 + $0x18] sm:$0xf]
      %v5038 = vld [vmem:[#allocation3 + $0x1c] sm:$0xf]
      %v5039 = vld [vmem:[#allocation3 + $0x20] sm:$0x1]
      %v5040 = vld [vmem:[#allocation3 + $0x24] sm:$0xf]
      %v5041 = vld [vmem:[#allocation3 + $0x28] sm:$0xf]
      %v5042 = vld [vmem:[#allocation3 + $0x2c] sm:$0x1]
      %v5043 = vld [vmem:[#allocation3 + $0x30] sm:$0xf]
      %v5044 = vld [vmem:[#allocation3 + $0x34] sm:$0xf]
      %v5045 = vld [vmem:[#allocation3 + $0x38] sm:$0x1]
      %v5046 = vld [vmem:[#allocation3 + $0x3c] sm:$0xf]
      %v5047 = vld [vmem:[#allocation3 + $0x40] sm:$0xf]
      %v5048 = vld [vmem:[#allocation3 + $0x44] sm:$0x1]
      %v5049 = vld [vmem:[#allocation3 + $0x48] sm:$0xf]
      %v5050 = vld [vmem:[#allocation3 + $0x4c] sm:$0xf]
      %v5051 = vld [vmem:[#allocation3 + $0x50] sm:$0x1]
      %v5052 = vld [vmem:[#allocation3 + $0x54] sm:$0xf]
      %v5053 = vld [vmem:[#allocation3 + $0x58] sm:$0xf]
      %v5054 = vld [vmem:[#allocation3 + $0x5c] sm:$0x1]
      %v5055 = vld [vmem:[#allocation3 + $0x60] sm:$0xf]
      %v5056 = vld [vmem:[#allocation3 + $0x64] sm:$0xf]
      %v5057 = vld [vmem:[#allocation3 + $0x68] sm:$0x1]
      %v5058 = vld [vmem:[#allocation3 + $0x6c] sm:$0xf]
      %v5059 = vld [vmem:[#allocation3 + $0x70] sm:$0xf]
      %v5060 = vld [vmem:[#allocation3 + $0x74] sm:$0x1]
      %v5061 = vld [vmem:[#allocation3 + $0x78] sm:$0xf]
      %v5062 = vld [vmem:[#allocation3 + $0x7c] sm:$0xf]
      %v5063 = vld [vmem:[#allocation3 + $0x80] sm:$0x1]
      %v5064 = vld [vmem:[#allocation3 + $0x84] sm:$0xf]
      %v5065 = vld [vmem:[#allocation3 + $0x88] sm:$0xf]
      %v5066 = vld [vmem:[#allocation3 + $0x8c] sm:$0x1]
      %v5067 = vld [vmem:[#allocation3 + $0x90] sm:$0xf]
      %v5068 = vld [vmem:[#allocation3 + $0x94] sm:$0xf]
      %v5069 = vld [vmem:[#allocation3 + $0x98] sm:$0x1]
      %v5070 = vld [vmem:[#allocation3 + $0x9c] sm:$0xf]
      %v5071 = vld [vmem:[#allocation3 + $0xa0] sm:$0xf]
      %v5072 = vld [vmem:[#allocation3 + $0xa4] sm:$0x1]
      %v5073 = vld [vmem:[#allocation3 + $0xa8] sm:$0xf]
      %v5074 = vld [vmem:[#allocation3 + $0xac] sm:$0xf]
      %v5075 = vld [vmem:[#allocation3 + $0xb0] sm:$0x1]
      %v5076 = vld [vmem:[#allocation3 + $0xb4] sm:$0xf]
      %v5077 = vld [vmem:[#allocation3 + $0xb8] sm:$0xf]
      %v5078 = vld [vmem:[#allocation3 + $0xbc] sm:$0x1]
      %v5079 = vld [vmem:[#allocation3 + $0xc0] sm:$0xf]
      %v5080 = vld [vmem:[#allocation3 + $0xc4] sm:$0xf]
      %v5081 = vld [vmem:[#allocation3 + $0xc8] sm:$0x1]
      %v5082 = vld [vmem:[#allocation3 + $0xcc] sm:$0xf]
      %v5083 = vld [vmem:[#allocation3 + $0xd0] sm:$0xf]
      %v5084 = vld [vmem:[#allocation3 + $0xd4] sm:$0x1]
      %v5086 = vshrl.u32 %v5031, 16
      %v5088 = vrot.slane %v5086, 4
      %v5089 = vshll.u32 %v5031, 16
      %v5091 = vrot.slane %v5089, 5
      %v5092 = vor.u32 %v5088, %v5091
      %v5093 = vrot.slane %v5092, 4
      %v5095 = vshll.u32 %v5032, 16
      %v5097 = vrot.slane %v5095, 5
      %v5098 = vsel %vm1681, %v5093, %v5097
      %v5099 = vshrl.u32 %v5032, 16
      %v5101 = vrot.slane %v5099, 4
      %v5102 = vor.u32 %v5101, %v5097
      %v5103 = vrot.slane %v5102, 4
      %v5105 = vshll.u32 %v5033, 16
      %v5107 = vrot.slane %v5105, 5
      %v5108 = vsel %vm1681, %v5103, %v5107
      %v5110 = vshrl.u32 %v5034, 16
      %v5112 = vrot.slane %v5110, 4
      %v5113 = vshll.u32 %v5034, 16
      %v5115 = vrot.slane %v5113, 5
      %v5116 = vor.u32 %v5112, %v5115
      %v5117 = vrot.slane %v5116, 4
      %v5119 = vshll.u32 %v5035, 16
      %v5121 = vrot.slane %v5119, 5
      %v5122 = vsel %vm1681, %v5117, %v5121
      %v5123 = vshrl.u32 %v5035, 16
      %v5125 = vrot.slane %v5123, 4
      %v5126 = vor.u32 %v5125, %v5121
      %v5127 = vrot.slane %v5126, 4
      %v5129 = vshll.u32 %v5036, 16
      %v5131 = vrot.slane %v5129, 5
      %v5132 = vsel %vm1681, %v5127, %v5131
      %v5134 = vshrl.u32 %v5037, 16
      %v5136 = vrot.slane %v5134, 4
      %v5137 = vshll.u32 %v5037, 16
      %v5139 = vrot.slane %v5137, 5
      %v5140 = vor.u32 %v5136, %v5139
      %v5141 = vrot.slane %v5140, 4
      %v5143 = vshll.u32 %v5038, 16
      %v5145 = vrot.slane %v5143, 5
      %v5146 = vsel %vm1681, %v5141, %v5145
      %v5147 = vshrl.u32 %v5038, 16
      %v5149 = vrot.slane %v5147, 4
      %v5150 = vor.u32 %v5149, %v5145
      %v5151 = vrot.slane %v5150, 4
      %v5153 = vshll.u32 %v5039, 16
      %v5155 = vrot.slane %v5153, 5
      %v5156 = vsel %vm1681, %v5151, %v5155
      %v5158 = vshrl.u32 %v5040, 16
      %v5160 = vrot.slane %v5158, 4
      %v5161 = vshll.u32 %v5040, 16
      %v5163 = vrot.slane %v5161, 5
      %v5164 = vor.u32 %v5160, %v5163
      %v5165 = vrot.slane %v5164, 4
      %v5167 = vshll.u32 %v5041, 16
      %v5169 = vrot.slane %v5167, 5
      %v5170 = vsel %vm1681, %v5165, %v5169
      %v5171 = vshrl.u32 %v5041, 16
      %v5173 = vrot.slane %v5171, 4
      %v5174 = vor.u32 %v5173, %v5169
      %v5175 = vrot.slane %v5174, 4
      %v5177 = vshll.u32 %v5042, 16
      %v5179 = vrot.slane %v5177, 5
      %v5180 = vsel %vm1681, %v5175, %v5179
      %v5182 = vshrl.u32 %v5043, 16
      %v5184 = vrot.slane %v5182, 4
      %v5185 = vshll.u32 %v5043, 16
      %v5187 = vrot.slane %v5185, 5
      %v5188 = vor.u32 %v5184, %v5187
      %v5189 = vrot.slane %v5188, 4
      %v5191 = vshll.u32 %v5044, 16
      %v5193 = vrot.slane %v5191, 5
      %v5194 = vsel %vm1681, %v5189, %v5193
      %v5195 = vshrl.u32 %v5044, 16
      %v5197 = vrot.slane %v5195, 4
      %v5198 = vor.u32 %v5197, %v5193
      %v5199 = vrot.slane %v5198, 4
      %v5201 = vshll.u32 %v5045, 16
      %v5203 = vrot.slane %v5201, 5
      %v5204 = vsel %vm1681, %v5199, %v5203
      %v5206 = vshrl.u32 %v5046, 16
      %v5208 = vrot.slane %v5206, 4
      %v5209 = vshll.u32 %v5046, 16
      %v5211 = vrot.slane %v5209, 5
      %v5212 = vor.u32 %v5208, %v5211
      %v5213 = vrot.slane %v5212, 4
      %v5215 = vshll.u32 %v5047, 16
      %v5217 = vrot.slane %v5215, 5
      %v5218 = vsel %vm1681, %v5213, %v5217
      %v5219 = vshrl.u32 %v5047, 16
      %v5221 = vrot.slane %v5219, 4
      %v5222 = vor.u32 %v5221, %v5217
      %v5223 = vrot.slane %v5222, 4
      %v5225 = vshll.u32 %v5048, 16
      %v5227 = vrot.slane %v5225, 5
      %v5228 = vsel %vm1681, %v5223, %v5227
      %v5230 = vshrl.u32 %v5049, 16
      %v5232 = vrot.slane %v5230, 4
      %v5233 = vshll.u32 %v5049, 16
      %v5235 = vrot.slane %v5233, 5
      %v5236 = vor.u32 %v5232, %v5235
      %v5237 = vrot.slane %v5236, 4
      %v5239 = vshll.u32 %v5050, 16
      %v5241 = vrot.slane %v5239, 5
      %v5242 = vsel %vm1681, %v5237, %v5241
      %v5243 = vshrl.u32 %v5050, 16
      %v5245 = vrot.slane %v5243, 4
      %v5246 = vor.u32 %v5245, %v5241
      %v5247 = vrot.slane %v5246, 4
      %v5249 = vshll.u32 %v5051, 16
      %v5251 = vrot.slane %v5249, 5
      %v5252 = vsel %vm1681, %v5247, %v5251
      %v5254 = vshrl.u32 %v5052, 16
      %v5256 = vrot.slane %v5254, 4
      %v5257 = vshll.u32 %v5052, 16
      %v5259 = vrot.slane %v5257, 5
      %v5260 = vor.u32 %v5256, %v5259
      %v5261 = vrot.slane %v5260, 4
      %v5263 = vshll.u32 %v5053, 16
      %v5265 = vrot.slane %v5263, 5
      %v5266 = vsel %vm1681, %v5261, %v5265
      %v5267 = vshrl.u32 %v5053, 16
      %v5269 = vrot.slane %v5267, 4
      %v5270 = vor.u32 %v5269, %v5265
      %v5271 = vrot.slane %v5270, 4
      %v5273 = vshll.u32 %v5054, 16
      %v5275 = vrot.slane %v5273, 5
      %v5276 = vsel %vm1681, %v5271, %v5275
      %v5278 = vshrl.u32 %v5055, 16
      %v5280 = vrot.slane %v5278, 4
      %v5281 = vshll.u32 %v5055, 16
      %v5283 = vrot.slane %v5281, 5
      %v5284 = vor.u32 %v5280, %v5283
      %v5285 = vrot.slane %v5284, 4
      %v5287 = vshll.u32 %v5056, 16
      %v5289 = vrot.slane %v5287, 5
      %v5290 = vsel %vm1681, %v5285, %v5289
      %v5291 = vshrl.u32 %v5056, 16
      %v5293 = vrot.slane %v5291, 4
      %v5294 = vor.u32 %v5293, %v5289
      %v5295 = vrot.slane %v5294, 4
      %v5297 = vshll.u32 %v5057, 16
      %v5299 = vrot.slane %v5297, 5
      %v5300 = vsel %vm1681, %v5295, %v5299
      %v5302 = vshrl.u32 %v5058, 16
      %v5304 = vrot.slane %v5302, 4
      %v5305 = vshll.u32 %v5058, 16
      %v5307 = vrot.slane %v5305, 5
      %v5308 = vor.u32 %v5304, %v5307
      %v5309 = vrot.slane %v5308, 4
      %v5311 = vshll.u32 %v5059, 16
      %v5313 = vrot.slane %v5311, 5
      %v5314 = vsel %vm1681, %v5309, %v5313
      %v5315 = vshrl.u32 %v5059, 16
      %v5317 = vrot.slane %v5315, 4
      %v5318 = vor.u32 %v5317, %v5313
      %v5319 = vrot.slane %v5318, 4
      %v5321 = vshll.u32 %v5060, 16
      %v5323 = vrot.slane %v5321, 5
      %v5324 = vsel %vm1681, %v5319, %v5323
      %v5326 = vshrl.u32 %v5061, 16
      %v5328 = vrot.slane %v5326, 4
      %v5329 = vshll.u32 %v5061, 16
      %v5331 = vrot.slane %v5329, 5
      %v5332 = vor.u32 %v5328, %v5331
      %v5333 = vrot.slane %v5332, 4
      %v5335 = vshll.u32 %v5062, 16
      %v5337 = vrot.slane %v5335, 5
      %v5338 = vsel %vm1681, %v5333, %v5337
      %v5339 = vshrl.u32 %v5062, 16
      %v5341 = vrot.slane %v5339, 4
      %v5342 = vor.u32 %v5341, %v5337
      %v5343 = vrot.slane %v5342, 4
      %v5345 = vshll.u32 %v5063, 16
      %v5347 = vrot.slane %v5345, 5
      %v5348 = vsel %vm1681, %v5343, %v5347
      %v5350 = vshrl.u32 %v5064, 16
      %v5352 = vrot.slane %v5350, 4
      %v5353 = vshll.u32 %v5064, 16
      %v5355 = vrot.slane %v5353, 5
      %v5356 = vor.u32 %v5352, %v5355
      %v5357 = vrot.slane %v5356, 4
      %v5359 = vshll.u32 %v5065, 16
      %v5361 = vrot.slane %v5359, 5
      %v5362 = vsel %vm1681, %v5357, %v5361
      %v5363 = vshrl.u32 %v5065, 16
      %v5365 = vrot.slane %v5363, 4
      %v5366 = vor.u32 %v5365, %v5361
      %v5367 = vrot.slane %v5366, 4
      %v5369 = vshll.u32 %v5066, 16
      %v5371 = vrot.slane %v5369, 5
      %v5372 = vsel %vm1681, %v5367, %v5371
      %v5374 = vshrl.u32 %v5067, 16
      %v5376 = vrot.slane %v5374, 4
      %v5377 = vshll.u32 %v5067, 16
      %v5379 = vrot.slane %v5377, 5
      %v5380 = vor.u32 %v5376, %v5379
      %v5381 = vrot.slane %v5380, 4
      %v5383 = vshll.u32 %v5068, 16
      %v5385 = vrot.slane %v5383, 5
      %v5386 = vsel %vm1681, %v5381, %v5385
      %v5387 = vshrl.u32 %v5068, 16
      %v5389 = vrot.slane %v5387, 4
      %v5390 = vor.u32 %v5389, %v5385
      %v5391 = vrot.slane %v5390, 4
      %v5393 = vshll.u32 %v5069, 16
      %v5395 = vrot.slane %v5393, 5
      %v5396 = vsel %vm1681, %v5391, %v5395
      %v5398 = vshrl.u32 %v5070, 16
      %v5400 = vrot.slane %v5398, 4
      %v5401 = vshll.u32 %v5070, 16
      %v5403 = vrot.slane %v5401, 5
      %v5404 = vor.u32 %v5400, %v5403
      %v5405 = vrot.slane %v5404, 4
      %v5407 = vshll.u32 %v5071, 16
      %v5409 = vrot.slane %v5407, 5
      %v5410 = vsel %vm1681, %v5405, %v5409
      %v5411 = vshrl.u32 %v5071, 16
      %v5413 = vrot.slane %v5411, 4
      %v5414 = vor.u32 %v5413, %v5409
      %v5415 = vrot.slane %v5414, 4
      %v5417 = vshll.u32 %v5072, 16
      %v5419 = vrot.slane %v5417, 5
      %v5420 = vsel %vm1681, %v5415, %v5419
      %v5422 = vshrl.u32 %v5073, 16
      %v5424 = vrot.slane %v5422, 4
      %v5425 = vshll.u32 %v5073, 16
      %v5427 = vrot.slane %v5425, 5
      %v5428 = vor.u32 %v5424, %v5427
      %v5429 = vrot.slane %v5428, 4
      %v5431 = vshll.u32 %v5074, 16
      %v5433 = vrot.slane %v5431, 5
      %v5434 = vsel %vm1681, %v5429, %v5433
      %v5435 = vshrl.u32 %v5074, 16
      %v5437 = vrot.slane %v5435, 4
      %v5438 = vor.u32 %v5437, %v5433
      %v5439 = vrot.slane %v5438, 4
      %v5441 = vshll.u32 %v5075, 16
      %v5443 = vrot.slane %v5441, 5
      %v5444 = vsel %vm1681, %v5439, %v5443
      %v5446 = vshrl.u32 %v5076, 16
      %v5448 = vrot.slane %v5446, 4
      %v5449 = vshll.u32 %v5076, 16
      %v5451 = vrot.slane %v5449, 5
      %v5452 = vor.u32 %v5448, %v5451
      %v5453 = vrot.slane %v5452, 4
      %v5455 = vshll.u32 %v5077, 16
      %v5457 = vrot.slane %v5455, 5
      %v5458 = vsel %vm1681, %v5453, %v5457
      %v5459 = vshrl.u32 %v5077, 16
      %v5461 = vrot.slane %v5459, 4
      %v5462 = vor.u32 %v5461, %v5457
      %v5463 = vrot.slane %v5462, 4
      %v5465 = vshll.u32 %v5078, 16
      %v5467 = vrot.slane %v5465, 5
      %v5468 = vsel %vm1681, %v5463, %v5467
      %v5470 = vshrl.u32 %v5079, 16
      %v5472 = vrot.slane %v5470, 4
      %v5473 = vshll.u32 %v5079, 16
      %v5475 = vrot.slane %v5473, 5
      %v5476 = vor.u32 %v5472, %v5475
      %v5477 = vrot.slane %v5476, 4
      %v5479 = vshll.u32 %v5080, 16
      %v5481 = vrot.slane %v5479, 5
      %v5482 = vsel %vm1681, %v5477, %v5481
      %v5483 = vshrl.u32 %v5080, 16
      %v5485 = vrot.slane %v5483, 4
      %v5486 = vor.u32 %v5485, %v5481
      %v5487 = vrot.slane %v5486, 4
      %v5489 = vshll.u32 %v5081, 16
      %v5491 = vrot.slane %v5489, 5
      %v5492 = vsel %vm1681, %v5487, %v5491
      %v5494 = vshrl.u32 %v5082, 16
      %v5496 = vrot.slane %v5494, 4
      %v5497 = vshll.u32 %v5082, 16
      %v5499 = vrot.slane %v5497, 5
      %v5500 = vor.u32 %v5496, %v5499
      %v5501 = vrot.slane %v5500, 4
      %v5503 = vshll.u32 %v5083, 16
      %v5505 = vrot.slane %v5503, 5
      %v5506 = vsel %vm1681, %v5501, %v5505
      %v5507 = vshrl.u32 %v5083, 16
      %v5509 = vrot.slane %v5507, 4
      %v5510 = vor.u32 %v5509, %v5505
      %v5511 = vrot.slane %v5510, 4
      %v5513 = vshll.u32 %v5084, 16
      %v5515 = vrot.slane %v5513, 5
      %v5516 = vsel %vm1681, %v5511, %v5515
      %s5517 = scalar_lea.vmem %s3, 12
      %v5518 = vld [vmem:[%s5517] sm:$0xf]
      %v5519 = vunpack.c.l.b16 %v5098
      %v5520 = vunpack.c.l.b16 %v5108
      %v5521 = vunpack.c.l.b16 %v5122
      %v5522 = vunpack.c.l.b16 %v5132
      %v5523 = vunpack.c.l.b16 %v5146
      %v5524 = vunpack.c.l.b16 %v5156
      %v5525 = vunpack.c.l.b16 %v5170
      %v5526 = vunpack.c.l.b16 %v5180
      %v5527 = vunpack.c.l.b16 %v5194
      %v5528 = vunpack.c.l.b16 %v5204
      %v5529 = vunpack.c.l.b16 %v5218
      %v5530 = vunpack.c.l.b16 %v5228
      %v5531 = vunpack.c.l.b16 %v5242
      %v5532 = vunpack.c.l.b16 %v5252
      %v5533 = vunpack.c.l.b16 %v5266
      %v5534 = vunpack.c.l.b16 %v5276
      %v5535 = vunpack.c.l.b16 %v5290
      %v5536 = vunpack.c.l.b16 %v5300
      %v5537 = vunpack.c.l.b16 %v5314
      %v5538 = vunpack.c.l.b16 %v5324
      %v5539 = vunpack.c.l.b16 %v5338
      %v5540 = vunpack.c.l.b16 %v5348
      %v5541 = vunpack.c.l.b16 %v5362
      %v5542 = vunpack.c.l.b16 %v5372
      %v5543 = vunpack.c.l.b16 %v5386
      %v5544 = vunpack.c.l.b16 %v5396
      %v5545 = vunpack.c.l.b16 %v5410
      %v5546 = vunpack.c.l.b16 %v5420
      %v5547 = vunpack.c.l.b16 %v5434
      %v5548 = vunpack.c.l.b16 %v5444
      %v5549 = vunpack.c.l.b16 %v5458
      %v5550 = vunpack.c.l.b16 %v5468
      %v5551 = vpack.c.b16 %v5520, %v5519
      %v5552 = vpack.c.b16 %v5522, %v5521
      %v5553 = vpack.c.b16 %v5524, %v5523
      %v5554 = vpack.c.b16 %v5526, %v5525
      %v5555 = vpack.c.b16 %v5528, %v5527
      %v5556 = vpack.c.b16 %v5530, %v5529
      %v5557 = vpack.c.b16 %v5532, %v5531
      %v5558 = vpack.c.b16 %v5534, %v5533
      %v5559 = vpack.c.b16 %v5536, %v5535
      %v5560 = vpack.c.b16 %v5538, %v5537
      %v5561 = vpack.c.b16 %v5540, %v5539
      %v5562 = vpack.c.b16 %v5542, %v5541
      %v5563 = vpack.c.b16 %v5544, %v5543
      %v5564 = vpack.c.b16 %v5546, %v5545
      %v5565 = vpack.c.b16 %v5548, %v5547
      %v5566 = vpack.c.b16 %v5550, %v5549
      %v5568 = vsel %vm4439, %v5551, 0
      %v5571 = vsel %vm4439, %v5552, 0
      %v5574 = vsel %vm4439, %v5553, 0
      %v5577 = vsel %vm4439, %v5554, 0
      %v5580 = vsel %vm4439, %v5555, 0
      %v5583 = vsel %vm4439, %v5556, 0
      %v5586 = vsel %vm4439, %v5557, 0
      %v5589 = vsel %vm4439, %v5558, 0
      %v5592 = vsel %vm4439, %v5559, 0
      %v5595 = vsel %vm4439, %v5560, 0
      %v5598 = vsel %vm4439, %v5561, 0
      %v5601 = vsel %vm4439, %v5562, 0
      %v5604 = vsel %vm4439, %v5563, 0
      %v5607 = vsel %vm4439, %v5564, 0
      %v5610 = vsel %vm4439, %v5565, 0
      %v5613 = vsel %vm4439, %v5566, 0
      %v5616 = vsel %vm4488, %v5518, 0
      %5618 = vmatprep.subr.bf16.mxu0 0
      %5619 = vmatpush1.bf16.msra.mxu0 %v5616
      %5620 = vmatprep.subr.bf16.mxu0 0
      %5621 = vmatpush1.bf16.msra.mxu0 0
      %5622 = vmatprep.subr.bf16.mxu0 0
      %5623 = vmatpush1.bf16.msra.mxu0 0
      %5624 = vmatprep.subr.bf16.mxu0 0
      %5625 = vmatpush1.bf16.msra.mxu0 0
      %5626 = vmatprep.subr.bf16.mxu0 0
      %5627 = vmatpush1.bf16.msra.mxu0 0
      %5628 = vmatprep.subr.bf16.mxu0 0
      %5629 = vmatpush1.bf16.msra.mxu0 0
      %5630 = vmatprep.subr.bf16.mxu0 0
      %5631 = vmatpush1.bf16.msra.mxu0 0
      %5632 = vmatprep.subr.bf16.mxu0 0
      %5633 = vmatpush1.bf16.msra.mxu0 0
      %5634 = vmatprep.subr.bf16.mxu0 0
      %5635 = vmatpush1.bf16.msra.mxu0 0
      %5636 = vmatprep.subr.bf16.mxu0 0
      %5637 = vmatpush1.bf16.msra.mxu0 0
      %5638 = vmatprep.subr.bf16.mxu0 0
      %5639 = vmatpush1.bf16.msra.mxu0 0
      %5640 = vmatprep.subr.bf16.mxu0 0
      %5641 = vmatpush1.bf16.msra.mxu0 0
      %5642 = vmatprep.subr.bf16.mxu0 0
      %5643 = vmatpush1.bf16.msra.mxu0 0
      %5644 = vmatprep.subr.bf16.mxu0 0
      %5645 = vmatpush1.bf16.msra.mxu0 0
      %5646 = vmatprep.subr.bf16.mxu0 0
      %5647 = vmatpush1.bf16.msra.mxu0 0
      %5648 = vmatprep.subr.bf16.mxu0 0
      %5649 = vmatpush1.bf16.msra.mxu0 0
      %5650 = vmatprep.mubr.bf16.mxu0 0
      %5651 = vmatmul.mubr.bf16.gmra.mrb[0].mxu0 %v5568
      %v5652 = vpop.f32.mrb[0].mxu0
      %v5653 = vadd.f32 0.0, %v5652
      %v5654 = vpop.f32.mrb[0].mxu0
      %v5655 = vpop.f32.mrb[0].mxu0
      %v5656 = vadd.f32 0.0, %v5655
      %v5657 = vpop.f32.mrb[0].mxu0
      %5658 = vmatprep.mubr.bf16.mxu0 0
      %5659 = vmatmul.mubr.bf16.gmra.mrb[0].mxu0 %v5571
      %v5660 = vpop.f32.mrb[0].mxu0
      %v5661 = vadd.f32 0.0, %v5660
      %v5662 = vpop.f32.mrb[0].mxu0
      %v5663 = vpop.f32.mrb[0].mxu0
      %v5664 = vadd.f32 0.0, %v5663
      %v5665 = vpop.f32.mrb[0].mxu0
      %5666 = vmatprep.mubr.bf16.mxu0 0
      %5667 = vmatmul.mubr.bf16.gmra.mrb[0].mxu0 %v5574
      %v5668 = vpop.f32.mrb[0].mxu0
      %v5669 = vadd.f32 0.0, %v5668
      %v5670 = vpop.f32.mrb[0].mxu0
      %v5671 = vpop.f32.mrb[0].mxu0
      %v5672 = vadd.f32 0.0, %v5671
      %v5673 = vpop.f32.mrb[0].mxu0
      %5674 = vmatprep.mubr.bf16.mxu0 0
      %5675 = vmatmul.mubr.bf16.gmra.mrb[0].mxu0 %v5577
      %v5676 = vpop.f32.mrb[0].mxu0
      %v5677 = vadd.f32 0.0, %v5676
      %v5678 = vpop.f32.mrb[0].mxu0
      %v5679 = vpop.f32.mrb[0].mxu0
      %v5680 = vadd.f32 0.0, %v5679
      %v5681 = vpop.f32.mrb[0].mxu0
      %5682 = vmatprep.mubr.bf16.mxu0 0
      %5683 = vmatmul.mubr.bf16.gmra.mrb[0].mxu0 %v5580
      %v5684 = vpop.f32.mrb[0].mxu0
      %v5685 = vadd.f32 0.0, %v5684
      %v5686 = vpop.f32.mrb[0].mxu0
      %v5687 = vpop.f32.mrb[0].mxu0
      %v5688 = vadd.f32 0.0, %v5687
      %v5689 = vpop.f32.mrb[0].mxu0
      %5690 = vmatprep.mubr.bf16.mxu0 0
      %5691 = vmatmul.mubr.bf16.gmra.mrb[0].mxu0 %v5583
      %v5692 = vpop.f32.mrb[0].mxu0
      %v5693 = vadd.f32 0.0, %v5692
      %v5694 = vpop.f32.mrb[0].mxu0
      %v5695 = vpop.f32.mrb[0].mxu0
      %v5696 = vadd.f32 0.0, %v5695
      %v5697 = vpop.f32.mrb[0].mxu0
      %5698 = vmatprep.mubr.bf16.mxu0 0
      %5699 = vmatmul.mubr.bf16.gmra.mrb[0].mxu0 %v5586
      %v5700 = vpop.f32.mrb[0].mxu0
      %v5701 = vadd.f32 0.0, %v5700
      %v5702 = vpop.f32.mrb[0].mxu0
      %v5703 = vpop.f32.mrb[0].mxu0
      %v5704 = vadd.f32 0.0, %v5703
      %v5705 = vpop.f32.mrb[0].mxu0
      %5706 = vmatprep.mubr.bf16.mxu0 0
      %5707 = vmatmul.mubr.bf16.gmra.mrb[0].mxu0 %v5589
      %v5708 = vpop.f32.mrb[0].mxu0
      %v5709 = vadd.f32 0.0, %v5708
      %v5710 = vpop.f32.mrb[0].mxu0
      %v5711 = vpop.f32.mrb[0].mxu0
      %v5712 = vadd.f32 0.0, %v5711
      %v5713 = vpop.f32.mrb[0].mxu0
      %5714 = vmatprep.mubr.bf16.mxu0 0
      %5715 = vmatmul.mubr.bf16.gmra.mrb[0].mxu0 %v5592
      %v5716 = vpop.f32.mrb[0].mxu0
      %v5717 = vadd.f32 0.0, %v5716
      %v5718 = vpop.f32.mrb[0].mxu0
      %v5719 = vpop.f32.mrb[0].mxu0
      %v5720 = vadd.f32 0.0, %v5719
      %v5721 = vpop.f32.mrb[0].mxu0
      %5722 = vmatprep.mubr.bf16.mxu0 0
      %5723 = vmatmul.mubr.bf16.gmra.mrb[0].mxu0 %v5595
      %v5724 = vpop.f32.mrb[0].mxu0
      %v5725 = vadd.f32 0.0, %v5724
      %v5726 = vpop.f32.mrb[0].mxu0
      %v5727 = vpop.f32.mrb[0].mxu0
      %v5728 = vadd.f32 0.0, %v5727
      %v5729 = vpop.f32.mrb[0].mxu0
      %5730 = vmatprep.mubr.bf16.mxu0 0
      %5731 = vmatmul.mubr.bf16.gmra.mrb[0].mxu0 %v5598
      %v5732 = vpop.f32.mrb[0].mxu0
      %v5733 = vadd.f32 0.0, %v5732
      %v5734 = vpop.f32.mrb[0].mxu0
      %v5735 = vpop.f32.mrb[0].mxu0
      %v5736 = vadd.f32 0.0, %v5735
      %v5737 = vpop.f32.mrb[0].mxu0
      %5738 = vmatprep.mubr.bf16.mxu0 0
      %5739 = vmatmul.mubr.bf16.gmra.mrb[0].mxu0 %v5601
      %v5740 = vpop.f32.mrb[0].mxu0
      %v5741 = vadd.f32 0.0, %v5740
      %v5742 = vpop.f32.mrb[0].mxu0
      %v5743 = vpop.f32.mrb[0].mxu0
      %v5744 = vadd.f32 0.0, %v5743
      %v5745 = vpop.f32.mrb[0].mxu0
      %5746 = vmatprep.mubr.bf16.mxu0 0
      %5747 = vmatmul.mubr.bf16.gmra.mrb[0].mxu0 %v5604
      %v5748 = vpop.f32.mrb[0].mxu0
      %v5749 = vadd.f32 0.0, %v5748
      %v5750 = vpop.f32.mrb[0].mxu0
      %v5751 = vpop.f32.mrb[0].mxu0
      %v5752 = vadd.f32 0.0, %v5751
      %v5753 = vpop.f32.mrb[0].mxu0
      %5754 = vmatprep.mubr.bf16.mxu0 0
      %5755 = vmatmul.mubr.bf16.gmra.mrb[0].mxu0 %v5607
      %v5756 = vpop.f32.mrb[0].mxu0
      %v5757 = vadd.f32 0.0, %v5756
      %v5758 = vpop.f32.mrb[0].mxu0
      %v5759 = vpop.f32.mrb[0].mxu0
      %v5760 = vadd.f32 0.0, %v5759
      %v5761 = vpop.f32.mrb[0].mxu0
      %5762 = vmatprep.mubr.bf16.mxu0 0
      %5763 = vmatmul.mubr.bf16.gmra.mrb[0].mxu0 %v5610
      %v5764 = vpop.f32.mrb[0].mxu0
      %v5765 = vadd.f32 0.0, %v5764
      %v5766 = vpop.f32.mrb[0].mxu0
      %v5767 = vpop.f32.mrb[0].mxu0
      %v5768 = vadd.f32 0.0, %v5767
      %v5769 = vpop.f32.mrb[0].mxu0
      %5770 = vmatprep.mubr.bf16.mxu0 0
      %5771 = vmatmul.mubr.bf16.gmra.mrb[0].mxu0 %v5613
      %v5772 = vpop.f32.mrb[0].mxu0
      %v5773 = vadd.f32 0.0, %v5772
      %v5774 = vpop.f32.mrb[0].mxu0
      %v5775 = vpop.f32.mrb[0].mxu0
      %v5776 = vadd.f32 0.0, %v5775
      %v5777 = vpop.f32.mrb[0].mxu0
      %5778 = vdwg.mxu0
      %v5779 = vadd.f32 %v4999, %v5653
      %v5780 = vadd.f32 %v5000, %v5656
      %v5781 = vadd.f32 %v5001, %v5661
      %v5782 = vadd.f32 %v5002, %v5664
      %v5783 = vadd.f32 %v5003, %v5669
      %v5784 = vadd.f32 %v5004, %v5672
      %v5785 = vadd.f32 %v5005, %v5677
      %v5786 = vadd.f32 %v5006, %v5680
      %v5787 = vadd.f32 %v5007, %v5685
      %v5788 = vadd.f32 %v5008, %v5688
      %v5789 = vadd.f32 %v5009, %v5693
      %v5790 = vadd.f32 %v5010, %v5696
      %v5791 = vadd.f32 %v5011, %v5701
      %v5792 = vadd.f32 %v5012, %v5704
      %v5793 = vadd.f32 %v5013, %v5709
      %v5794 = vadd.f32 %v5014, %v5712
      %v5795 = vadd.f32 %v5015, %v5717
      %v5796 = vadd.f32 %v5016, %v5720
      %v5797 = vadd.f32 %v5017, %v5725
      %v5798 = vadd.f32 %v5018, %v5728
      %v5799 = vadd.f32 %v5019, %v5733
      %v5800 = vadd.f32 %v5020, %v5736
      %v5801 = vadd.f32 %v5021, %v5741
      %v5802 = vadd.f32 %v5022, %v5744
      %v5803 = vadd.f32 %v5023, %v5749
      %v5804 = vadd.f32 %v5024, %v5752
      %v5805 = vadd.f32 %v5025, %v5757
      %v5806 = vadd.f32 %v5026, %v5760
      %v5807 = vadd.f32 %v5027, %v5765
      %v5808 = vadd.f32 %v5028, %v5768
      %v5809 = vadd.f32 %v5029, %v5773
      %v5810 = vadd.f32 %v5030, %v5776
      %s5811 = scalar_lea.vmem %s3, 16
      %v5812 = vld [vmem:[%s5811] sm:$0xf]
      %v5813 = vunpack.c.l.b16 %v5482
      %v5814 = vunpack.c.l.b16 %v5492
      %v5815 = vpack.c.b16 %v5814, %v5813
      %v5817 = vsel %vm4439, %v5815, 0
      %v5820 = vsel %vm4488, %v5812, 0
      %5822 = vmatprep.subr.bf16.mxu0 0
      %5823 = vmatpush1.bf16.msra.mxu0 %v5820
      %5824 = vmatprep.subr.bf16.mxu0 0
      %5825 = vmatpush1.bf16.msra.mxu0 0
      %5826 = vmatprep.subr.bf16.mxu0 0
      %5827 = vmatpush1.bf16.msra.mxu0 0
      %5828 = vmatprep.subr.bf16.mxu0 0
      %5829 = vmatpush1.bf16.msra.mxu0 0
      %5830 = vmatprep.subr.bf16.mxu0 0
      %5831 = vmatpush1.bf16.msra.mxu0 0
      %5832 = vmatprep.subr.bf16.mxu0 0
      %5833 = vmatpush1.bf16.msra.mxu0 0
      %5834 = vmatprep.subr.bf16.mxu0 0
      %5835 = vmatpush1.bf16.msra.mxu0 0
      %5836 = vmatprep.subr.bf16.mxu0 0
      %5837 = vmatpush1.bf16.msra.mxu0 0
      %5838 = vmatprep.subr.bf16.mxu0 0
      %5839 = vmatpush1.bf16.msra.mxu0 0
      %5840 = vmatprep.subr.bf16.mxu0 0
      %5841 = vmatpush1.bf16.msra.mxu0 0
      %5842 = vmatprep.subr.bf16.mxu0 0
      %5843 = vmatpush1.bf16.msra.mxu0 0
      %5844 = vmatprep.subr.bf16.mxu0 0
      %5845 = vmatpush1.bf16.msra.mxu0 0
      %5846 = vmatprep.subr.bf16.mxu0 0
      %5847 = vmatpush1.bf16.msra.mxu0 0
      %5848 = vmatprep.subr.bf16.mxu0 0
      %5849 = vmatpush1.bf16.msra.mxu0 0
      %5850 = vmatprep.subr.bf16.mxu0 0
      %5851 = vmatpush1.bf16.msra.mxu0 0
      %5852 = vmatprep.subr.bf16.mxu0 0
      %5853 = vmatpush1.bf16.msra.mxu0 0
      %5854 = vmatprep.mubr.bf16.mxu0 0
      %5855 = vmatmul.mubr.bf16.gmra.mrb[0].mxu0 %v5571
      %v5856 = vpop.f32.mrb[0].mxu0
      %v5857 = vadd.f32 0.0, %v5856
      %v5858 = vpop.f32.mrb[0].mxu0
      %v5859 = vpop.f32.mrb[0].mxu0
      %v5860 = vadd.f32 0.0, %v5859
      %v5861 = vpop.f32.mrb[0].mxu0
      %5862 = vmatprep.mubr.bf16.mxu0 0
      %5863 = vmatmul.mubr.bf16.gmra.mrb[0].mxu0 %v5574
      %v5864 = vpop.f32.mrb[0].mxu0
      %v5865 = vadd.f32 0.0, %v5864
      %v5866 = vpop.f32.mrb[0].mxu0
      %v5867 = vpop.f32.mrb[0].mxu0
      %v5868 = vadd.f32 0.0, %v5867
      %v5869 = vpop.f32.mrb[0].mxu0
      %5870 = vmatprep.mubr.bf16.mxu0 0
      %5871 = vmatmul.mubr.bf16.gmra.mrb[0].mxu0 %v5577
      %v5872 = vpop.f32.mrb[0].mxu0
      %v5873 = vadd.f32 0.0, %v5872
      %v5874 = vpop.f32.mrb[0].mxu0
      %v5875 = vpop.f32.mrb[0].mxu0
      %v5876 = vadd.f32 0.0, %v5875
      %v5877 = vpop.f32.mrb[0].mxu0
      %5878 = vmatprep.mubr.bf16.mxu0 0
      %5879 = vmatmul.mubr.bf16.gmra.mrb[0].mxu0 %v5580
      %v5880 = vpop.f32.mrb[0].mxu0
      %v5881 = vadd.f32 0.0, %v5880
      %v5882 = vpop.f32.mrb[0].mxu0
      %v5883 = vpop.f32.mrb[0].mxu0
      %v5884 = vadd.f32 0.0, %v5883
      %v5885 = vpop.f32.mrb[0].mxu0
      %5886 = vmatprep.mubr.bf16.mxu0 0
      %5887 = vmatmul.mubr.bf16.gmra.mrb[0].mxu0 %v5583
      %v5888 = vpop.f32.mrb[0].mxu0
      %v5889 = vadd.f32 0.0, %v5888
      %v5890 = vpop.f32.mrb[0].mxu0
      %v5891 = vpop.f32.mrb[0].mxu0
      %v5892 = vadd.f32 0.0, %v5891
      %v5893 = vpop.f32.mrb[0].mxu0
      %5894 = vmatprep.mubr.bf16.mxu0 0
      %5895 = vmatmul.mubr.bf16.gmra.mrb[0].mxu0 %v5586
      %v5896 = vpop.f32.mrb[0].mxu0
      %v5897 = vadd.f32 0.0, %v5896
      %v5898 = vpop.f32.mrb[0].mxu0
      %v5899 = vpop.f32.mrb[0].mxu0
      %v5900 = vadd.f32 0.0, %v5899
      %v5901 = vpop.f32.mrb[0].mxu0
      %5902 = vmatprep.mubr.bf16.mxu0 0
      %5903 = vmatmul.mubr.bf16.gmra.mrb[0].mxu0 %v5589
      %v5904 = vpop.f32.mrb[0].mxu0
      %v5905 = vadd.f32 0.0, %v5904
      %v5906 = vpop.f32.mrb[0].mxu0
      %v5907 = vpop.f32.mrb[0].mxu0
      %v5908 = vadd.f32 0.0, %v5907
      %v5909 = vpop.f32.mrb[0].mxu0
      %5910 = vmatprep.mubr.bf16.mxu0 0
      %5911 = vmatmul.mubr.bf16.gmra.mrb[0].mxu0 %v5592
      %v5912 = vpop.f32.mrb[0].mxu0
      %v5913 = vadd.f32 0.0, %v5912
      %v5914 = vpop.f32.mrb[0].mxu0
      %v5915 = vpop.f32.mrb[0].mxu0
      %v5916 = vadd.f32 0.0, %v5915
      %v5917 = vpop.f32.mrb[0].mxu0
      %5918 = vmatprep.mubr.bf16.mxu0 0
      %5919 = vmatmul.mubr.bf16.gmra.mrb[0].mxu0 %v5595
      %v5920 = vpop.f32.mrb[0].mxu0
      %v5921 = vadd.f32 0.0, %v5920
      %v5922 = vpop.f32.mrb[0].mxu0
      %v5923 = vpop.f32.mrb[0].mxu0
      %v5924 = vadd.f32 0.0, %v5923
      %v5925 = vpop.f32.mrb[0].mxu0
      %5926 = vmatprep.mubr.bf16.mxu0 0
      %5927 = vmatmul.mubr.bf16.gmra.mrb[0].mxu0 %v5598
      %v5928 = vpop.f32.mrb[0].mxu0
      %v5929 = vadd.f32 0.0, %v5928
      %v5930 = vpop.f32.mrb[0].mxu0
      %v5931 = vpop.f32.mrb[0].mxu0
      %v5932 = vadd.f32 0.0, %v5931
      %v5933 = vpop.f32.mrb[0].mxu0
      %5934 = vmatprep.mubr.bf16.mxu0 0
      %5935 = vmatmul.mubr.bf16.gmra.mrb[0].mxu0 %v5601
      %v5936 = vpop.f32.mrb[0].mxu0
      %v5937 = vadd.f32 0.0, %v5936
      %v5938 = vpop.f32.mrb[0].mxu0
      %v5939 = vpop.f32.mrb[0].mxu0
      %v5940 = vadd.f32 0.0, %v5939
      %v5941 = vpop.f32.mrb[0].mxu0
      %5942 = vmatprep.mubr.bf16.mxu0 0
      %5943 = vmatmul.mubr.bf16.gmra.mrb[0].mxu0 %v5604
      %v5944 = vpop.f32.mrb[0].mxu0
      %v5945 = vadd.f32 0.0, %v5944
      %v5946 = vpop.f32.mrb[0].mxu0
      %v5947 = vpop.f32.mrb[0].mxu0
      %v5948 = vadd.f32 0.0, %v5947
      %v5949 = vpop.f32.mrb[0].mxu0
      %5950 = vmatprep.mubr.bf16.mxu0 0
      %5951 = vmatmul.mubr.bf16.gmra.mrb[0].mxu0 %v5607
      %v5952 = vpop.f32.mrb[0].mxu0
      %v5953 = vadd.f32 0.0, %v5952
      %v5954 = vpop.f32.mrb[0].mxu0
      %v5955 = vpop.f32.mrb[0].mxu0
      %v5956 = vadd.f32 0.0, %v5955
      %v5957 = vpop.f32.mrb[0].mxu0
      %5958 = vmatprep.mubr.bf16.mxu0 0
      %5959 = vmatmul.mubr.bf16.gmra.mrb[0].mxu0 %v5610
      %v5960 = vpop.f32.mrb[0].mxu0
      %v5961 = vadd.f32 0.0, %v5960
      %v5962 = vpop.f32.mrb[0].mxu0
      %v5963 = vpop.f32.mrb[0].mxu0
      %v5964 = vadd.f32 0.0, %v5963
      %v5965 = vpop.f32.mrb[0].mxu0
      %5966 = vmatprep.mubr.bf16.mxu0 0
      %5967 = vmatmul.mubr.bf16.gmra.mrb[0].mxu0 %v5613
      %v5968 = vpop.f32.mrb[0].mxu0
      %v5969 = vadd.f32 0.0, %v5968
      %v5970 = vpop.f32.mrb[0].mxu0
      %v5971 = vpop.f32.mrb[0].mxu0
      %v5972 = vadd.f32 0.0, %v5971
      %v5973 = vpop.f32.mrb[0].mxu0
      %5974 = vmatprep.mubr.bf16.mxu0 0
      %5975 = vmatmul.mubr.bf16.gmra.mrb[0].mxu0 %v5817
      %v5976 = vpop.f32.mrb[0].mxu0
      %v5977 = vadd.f32 0.0, %v5976
      %v5978 = vpop.f32.mrb[0].mxu0
      %v5979 = vpop.f32.mrb[0].mxu0
      %v5980 = vadd.f32 0.0, %v5979
      %v5981 = vpop.f32.mrb[0].mxu0
      %5982 = vdwg.mxu0
      %v5983 = vadd.f32 %v5779, %v5857
      %v5984 = vadd.f32 %v5780, %v5860
      %v5985 = vadd.f32 %v5781, %v5865
      %v5986 = vadd.f32 %v5782, %v5868
      %v5987 = vadd.f32 %v5783, %v5873
      %v5988 = vadd.f32 %v5784, %v5876
      %v5989 = vadd.f32 %v5785, %v5881
      %v5990 = vadd.f32 %v5786, %v5884
      %v5991 = vadd.f32 %v5787, %v5889
      %v5992 = vadd.f32 %v5788, %v5892
      %v5993 = vadd.f32 %v5789, %v5897
      %v5994 = vadd.f32 %v5790, %v5900
      %v5995 = vadd.f32 %v5791, %v5905
      %v5996 = vadd.f32 %v5792, %v5908
      %v5997 = vadd.f32 %v5793, %v5913
      %v5998 = vadd.f32 %v5794, %v5916
      %v5999 = vadd.f32 %v5795, %v5921
      %v6000 = vadd.f32 %v5796, %v5924
      %v6001 = vadd.f32 %v5797, %v5929
      %v6002 = vadd.f32 %v5798, %v5932
      %v6003 = vadd.f32 %v5799, %v5937
      %v6004 = vadd.f32 %v5800, %v5940
      %v6005 = vadd.f32 %v5801, %v5945
      %v6006 = vadd.f32 %v5802, %v5948
      %v6007 = vadd.f32 %v5803, %v5953
      %v6008 = vadd.f32 %v5804, %v5956
      %v6009 = vadd.f32 %v5805, %v5961
      %v6010 = vadd.f32 %v5806, %v5964
      %v6011 = vadd.f32 %v5807, %v5969
      %v6012 = vadd.f32 %v5808, %v5972
      %v6013 = vadd.f32 %v5809, %v5977
      %v6014 = vadd.f32 %v5810, %v5980
      %s6015 = scalar_lea.vmem %s3, 20
      %v6016 = vld [vmem:[%s6015] sm:$0xf]
      %v6017 = vunpack.c.l.b16 %v5506
      %v6018 = vunpack.c.l.b16 %v5516
      %v6019 = vpack.c.b16 %v6018, %v6017
      %v6021 = vsel %vm4439, %v6019, 0
      %v6024 = vsel %vm4488, %v6016, 0
      %6026 = vmatprep.subr.bf16.mxu0 0
      %6027 = vmatpush1.bf16.msra.mxu0 %v6024
      %6028 = vmatprep.subr.bf16.mxu0 0
      %6029 = vmatpush1.bf16.msra.mxu0 0
      %6030 = vmatprep.subr.bf16.mxu0 0
      %6031 = vmatpush1.bf16.msra.mxu0 0
      %6032 = vmatprep.subr.bf16.mxu0 0
      %6033 = vmatpush1.bf16.msra.mxu0 0
      %6034 = vmatprep.subr.bf16.mxu0 0
      %6035 = vmatpush1.bf16.msra.mxu0 0
      %6036 = vmatprep.subr.bf16.mxu0 0
      %6037 = vmatpush1.bf16.msra.mxu0 0
      %6038 = vmatprep.subr.bf16.mxu0 0
      %6039 = vmatpush1.bf16.msra.mxu0 0
      %6040 = vmatprep.subr.bf16.mxu0 0
      %6041 = vmatpush1.bf16.msra.mxu0 0
      %6042 = vmatprep.subr.bf16.mxu0 0
      %6043 = vmatpush1.bf16.msra.mxu0 0
      %6044 = vmatprep.subr.bf16.mxu0 0
      %6045 = vmatpush1.bf16.msra.mxu0 0
      %6046 = vmatprep.subr.bf16.mxu0 0
      %6047 = vmatpush1.bf16.msra.mxu0 0
      %6048 = vmatprep.subr.bf16.mxu0 0
      %6049 = vmatpush1.bf16.msra.mxu0 0
      %6050 = vmatprep.subr.bf16.mxu0 0
      %6051 = vmatpush1.bf16.msra.mxu0 0
      %6052 = vmatprep.subr.bf16.mxu0 0
      %6053 = vmatpush1.bf16.msra.mxu0 0
      %6054 = vmatprep.subr.bf16.mxu0 0
      %6055 = vmatpush1.bf16.msra.mxu0 0
      %6056 = vmatprep.subr.bf16.mxu0 0
      %6057 = vmatpush1.bf16.msra.mxu0 0
      %6058 = vmatprep.mubr.bf16.mxu0 0
      %6059 = vmatmul.mubr.bf16.gmra.mrb[0].mxu0 %v5574
      %v6060 = vpop.f32.mrb[0].mxu0
      %v6061 = vadd.f32 0.0, %v6060
      %v6062 = vpop.f32.mrb[0].mxu0
      %v6063 = vpop.f32.mrb[0].mxu0
      %v6064 = vadd.f32 0.0, %v6063
      %v6065 = vpop.f32.mrb[0].mxu0
      %6066 = vmatprep.mubr.bf16.mxu0 0
      %6067 = vmatmul.mubr.bf16.gmra.mrb[0].mxu0 %v5577
      %v6068 = vpop.f32.mrb[0].mxu0
      %v6069 = vadd.f32 0.0, %v6068
      %v6070 = vpop.f32.mrb[0].mxu0
      %v6071 = vpop.f32.mrb[0].mxu0
      %v6072 = vadd.f32 0.0, %v6071
      %v6073 = vpop.f32.mrb[0].mxu0
      %6074 = vmatprep.mubr.bf16.mxu0 0
      %6075 = vmatmul.mubr.bf16.gmra.mrb[0].mxu0 %v5580
      %v6076 = vpop.f32.mrb[0].mxu0
      %v6077 = vadd.f32 0.0, %v6076
      %v6078 = vpop.f32.mrb[0].mxu0
      %v6079 = vpop.f32.mrb[0].mxu0
      %v6080 = vadd.f32 0.0, %v6079
      %v6081 = vpop.f32.mrb[0].mxu0
      %6082 = vmatprep.mubr.bf16.mxu0 0
      %6083 = vmatmul.mubr.bf16.gmra.mrb[0].mxu0 %v5583
      %v6084 = vpop.f32.mrb[0].mxu0
      %v6085 = vadd.f32 0.0, %v6084
      %v6086 = vpop.f32.mrb[0].mxu0
      %v6087 = vpop.f32.mrb[0].mxu0
      %v6088 = vadd.f32 0.0, %v6087
      %v6089 = vpop.f32.mrb[0].mxu0
      %6090 = vmatprep.mubr.bf16.mxu0 0
      %6091 = vmatmul.mubr.bf16.gmra.mrb[0].mxu0 %v5586
      %v6092 = vpop.f32.mrb[0].mxu0
      %v6093 = vadd.f32 0.0, %v6092
      %v6094 = vpop.f32.mrb[0].mxu0
      %v6095 = vpop.f32.mrb[0].mxu0
      %v6096 = vadd.f32 0.0, %v6095
      %v6097 = vpop.f32.mrb[0].mxu0
      %6098 = vmatprep.mubr.bf16.mxu0 0
      %6099 = vmatmul.mubr.bf16.gmra.mrb[0].mxu0 %v5589
      %v6100 = vpop.f32.mrb[0].mxu0
      %v6101 = vadd.f32 0.0, %v6100
      %v6102 = vpop.f32.mrb[0].mxu0
      %v6103 = vpop.f32.mrb[0].mxu0
      %v6104 = vadd.f32 0.0, %v6103
      %v6105 = vpop.f32.mrb[0].mxu0
      %6106 = vmatprep.mubr.bf16.mxu0 0
      %6107 = vmatmul.mubr.bf16.gmra.mrb[0].mxu0 %v5592
      %v6108 = vpop.f32.mrb[0].mxu0
      %v6109 = vadd.f32 0.0, %v6108
      %v6110 = vpop.f32.mrb[0].mxu0
      %v6111 = vpop.f32.mrb[0].mxu0
      %v6112 = vadd.f32 0.0, %v6111
      %v6113 = vpop.f32.mrb[0].mxu0
      %6114 = vmatprep.mubr.bf16.mxu0 0
      %6115 = vmatmul.mubr.bf16.gmra.mrb[0].mxu0 %v5595
      %v6116 = vpop.f32.mrb[0].mxu0
      %v6117 = vadd.f32 0.0, %v6116
      %v6118 = vpop.f32.mrb[0].mxu0
      %v6119 = vpop.f32.mrb[0].mxu0
      %v6120 = vadd.f32 0.0, %v6119
      %v6121 = vpop.f32.mrb[0].mxu0
      %6122 = vmatprep.mubr.bf16.mxu0 0
      %6123 = vmatmul.mubr.bf16.gmra.mrb[0].mxu0 %v5598
      %v6124 = vpop.f32.mrb[0].mxu0
      %v6125 = vadd.f32 0.0, %v6124
      %v6126 = vpop.f32.mrb[0].mxu0
      %v6127 = vpop.f32.mrb[0].mxu0
      %v6128 = vadd.f32 0.0, %v6127
      %v6129 = vpop.f32.mrb[0].mxu0
      %6130 = vmatprep.mubr.bf16.mxu0 0
      %6131 = vmatmul.mubr.bf16.gmra.mrb[0].mxu0 %v5601
      %v6132 = vpop.f32.mrb[0].mxu0
      %v6133 = vadd.f32 0.0, %v6132
      %v6134 = vpop.f32.mrb[0].mxu0
      %v6135 = vpop.f32.mrb[0].mxu0
      %v6136 = vadd.f32 0.0, %v6135
      %v6137 = vpop.f32.mrb[0].mxu0
      %6138 = vmatprep.mubr.bf16.mxu0 0
      %6139 = vmatmul.mubr.bf16.gmra.mrb[0].mxu0 %v5604
      %v6140 = vpop.f32.mrb[0].mxu0
      %v6141 = vadd.f32 0.0, %v6140
      %v6142 = vpop.f32.mrb[0].mxu0
      %v6143 = vpop.f32.mrb[0].mxu0
      %v6144 = vadd.f32 0.0, %v6143
      %v6145 = vpop.f32.mrb[0].mxu0
      %6146 = vmatprep.mubr.bf16.mxu0 0
      %6147 = vmatmul.mubr.bf16.gmra.mrb[0].mxu0 %v5607
      %v6148 = vpop.f32.mrb[0].mxu0
      %v6149 = vadd.f32 0.0, %v6148
      %v6150 = vpop.f32.mrb[0].mxu0
      %v6151 = vpop.f32.mrb[0].mxu0
      %v6152 = vadd.f32 0.0, %v6151
      %v6153 = vpop.f32.mrb[0].mxu0
      %6154 = vmatprep.mubr.bf16.mxu0 0
      %6155 = vmatmul.mubr.bf16.gmra.mrb[0].mxu0 %v5610
      %v6156 = vpop.f32.mrb[0].mxu0
      %v6157 = vadd.f32 0.0, %v6156
      %v6158 = vpop.f32.mrb[0].mxu0
      %v6159 = vpop.f32.mrb[0].mxu0
      %v6160 = vadd.f32 0.0, %v6159
      %v6161 = vpop.f32.mrb[0].mxu0
      %6162 = vmatprep.mubr.bf16.mxu0 0
      %6163 = vmatmul.mubr.bf16.gmra.mrb[0].mxu0 %v5613
      %v6164 = vpop.f32.mrb[0].mxu0
      %v6165 = vadd.f32 0.0, %v6164
      %v6166 = vpop.f32.mrb[0].mxu0
      %v6167 = vpop.f32.mrb[0].mxu0
      %v6168 = vadd.f32 0.0, %v6167
      %v6169 = vpop.f32.mrb[0].mxu0
      %6170 = vmatprep.mubr.bf16.mxu0 0
      %6171 = vmatmul.mubr.bf16.gmra.mrb[0].mxu0 %v5817
      %v6172 = vpop.f32.mrb[0].mxu0
      %v6173 = vadd.f32 0.0, %v6172
      %v6174 = vpop.f32.mrb[0].mxu0
      %v6175 = vpop.f32.mrb[0].mxu0
      %v6176 = vadd.f32 0.0, %v6175
      %v6177 = vpop.f32.mrb[0].mxu0
      %6178 = vmatprep.mubr.bf16.mxu0 0
      %6179 = vmatmul.mubr.bf16.gmra.mrb[0].mxu0 %v6021
      %v6180 = vpop.f32.mrb[0].mxu0
      %v6181 = vadd.f32 0.0, %v6180
      %v6182 = vpop.f32.mrb[0].mxu0
      %v6183 = vpop.f32.mrb[0].mxu0
      %v6184 = vadd.f32 0.0, %v6183
      %v6185 = vpop.f32.mrb[0].mxu0
      %6186 = vdwg.mxu0
      %v6187 = vadd.f32 %v5983, %v6061
      %v6188 = vadd.f32 %v5984, %v6064
      %v6189 = vadd.f32 %v5985, %v6069
      %v6190 = vadd.f32 %v5986, %v6072
      %v6191 = vadd.f32 %v5987, %v6077
      %v6192 = vadd.f32 %v5988, %v6080
      %v6193 = vadd.f32 %v5989, %v6085
      %v6194 = vadd.f32 %v5990, %v6088
      %v6195 = vadd.f32 %v5991, %v6093
      %v6196 = vadd.f32 %v5992, %v6096
      %v6197 = vadd.f32 %v5993, %v6101
      %v6198 = vadd.f32 %v5994, %v6104
      %v6199 = vadd.f32 %v5995, %v6109
      %v6200 = vadd.f32 %v5996, %v6112
      %v6201 = vadd.f32 %v5997, %v6117
      %v6202 = vadd.f32 %v5998, %v6120
      %v6203 = vadd.f32 %v5999, %v6125
      %v6204 = vadd.f32 %v6000, %v6128
      %v6205 = vadd.f32 %v6001, %v6133
      %v6206 = vadd.f32 %v6002, %v6136
      %v6207 = vadd.f32 %v6003, %v6141
      %v6208 = vadd.f32 %v6004, %v6144
      %v6209 = vadd.f32 %v6005, %v6149
      %v6210 = vadd.f32 %v6006, %v6152
      %v6211 = vadd.f32 %v6007, %v6157
      %v6212 = vadd.f32 %v6008, %v6160
      %v6213 = vadd.f32 %v6009, %v6165
      %v6214 = vadd.f32 %v6010, %v6168
      %v6215 = vadd.f32 %v6011, %v6173
      %v6216 = vadd.f32 %v6012, %v6176
      %v6217 = vadd.f32 %v6013, %v6181
      %v6218 = vadd.f32 %v6014, %v6184
      %v6219 = vld [vmem:[#allocation3] sm:$0xe]
      %v6220 = vld [vmem:[#allocation3 + $0xc] sm:$0xe]
      %v6221 = vld [vmem:[#allocation3 + $0x18] sm:$0xe]
      %v6222 = vld [vmem:[#allocation3 + $0x24] sm:$0xe]
      %v6223 = vld [vmem:[#allocation3 + $0x30] sm:$0xe]
      %v6224 = vld [vmem:[#allocation3 + $0x3c] sm:$0xe]
      %v6225 = vld [vmem:[#allocation3 + $0x48] sm:$0xe]
      %v6226 = vld [vmem:[#allocation3 + $0x54] sm:$0xe]
      %v6227 = vld [vmem:[#allocation3 + $0x60] sm:$0xe]
      %v6228 = vld [vmem:[#allocation3 + $0x6c] sm:$0xe]
      %v6229 = vld [vmem:[#allocation3 + $0x78] sm:$0xe]
      %v6230 = vld [vmem:[#allocation3 + $0x84] sm:$0xe]
      %v6231 = vld [vmem:[#allocation3 + $0x90] sm:$0xe]
      %v6232 = vld [vmem:[#allocation3 + $0x9c] sm:$0xe]
      %v6233 = vld [vmem:[#allocation3 + $0xa8] sm:$0xe]
      %v6234 = vld [vmem:[#allocation3 + $0xb4] sm:$0xe]
      %v6235 = vld [vmem:[#allocation3 + $0xc0] sm:$0xe]
      %v6236 = vld [vmem:[#allocation3 + $0xcc] sm:$0xe]
      %v6285 = vrot.slane %v6219, 5
      %v6286 = vrot.slane %v6285, 4
      %v6287 = vrot.slane %v5032, 5
      %v6288 = vsel %vm2884, %v6286, %v6287
      %v6289 = vrot.slane %v6287, 4
      %v6290 = vrot.slane %v5033, 5
      %v6291 = vsel %vm2884, %v6289, %v6290
      %v6292 = vrot.slane %v6220, 5
      %v6293 = vrot.slane %v6292, 4
      %v6294 = vrot.slane %v5035, 5
      %v6295 = vsel %vm2884, %v6293, %v6294
      %v6296 = vrot.slane %v6294, 4
      %v6297 = vrot.slane %v5036, 5
      %v6298 = vsel %vm2884, %v6296, %v6297
      %v6299 = vrot.slane %v6221, 5
      %v6300 = vrot.slane %v6299, 4
      %v6301 = vrot.slane %v5038, 5
      %v6302 = vsel %vm2884, %v6300, %v6301
      %v6303 = vrot.slane %v6301, 4
      %v6304 = vrot.slane %v5039, 5
      %v6305 = vsel %vm2884, %v6303, %v6304
      %v6306 = vrot.slane %v6222, 5
      %v6307 = vrot.slane %v6306, 4
      %v6308 = vrot.slane %v5041, 5
      %v6309 = vsel %vm2884, %v6307, %v6308
      %v6310 = vrot.slane %v6308, 4
      %v6311 = vrot.slane %v5042, 5
      %v6312 = vsel %vm2884, %v6310, %v6311
      %v6313 = vrot.slane %v6223, 5
      %v6314 = vrot.slane %v6313, 4
      %v6315 = vrot.slane %v5044, 5
      %v6316 = vsel %vm2884, %v6314, %v6315
      %v6317 = vrot.slane %v6315, 4
      %v6318 = vrot.slane %v5045, 5
      %v6319 = vsel %vm2884, %v6317, %v6318
      %v6320 = vrot.slane %v6224, 5
      %v6321 = vrot.slane %v6320, 4
      %v6322 = vrot.slane %v5047, 5
      %v6323 = vsel %vm2884, %v6321, %v6322
      %v6324 = vrot.slane %v6322, 4
      %v6325 = vrot.slane %v5048, 5
      %v6326 = vsel %vm2884, %v6324, %v6325
      %v6327 = vrot.slane %v6225, 5
      %v6328 = vrot.slane %v6327, 4
      %v6329 = vrot.slane %v5050, 5
      %v6330 = vsel %vm2884, %v6328, %v6329
      %v6331 = vrot.slane %v6329, 4
      %v6332 = vrot.slane %v5051, 5
      %v6333 = vsel %vm2884, %v6331, %v6332
      %v6334 = vrot.slane %v6226, 5
      %v6335 = vrot.slane %v6334, 4
      %v6336 = vrot.slane %v5053, 5
      %v6337 = vsel %vm2884, %v6335, %v6336
      %v6338 = vrot.slane %v6336, 4
      %v6339 = vrot.slane %v5054, 5
      %v6340 = vsel %vm2884, %v6338, %v6339
      %v6341 = vrot.slane %v6227, 5
      %v6342 = vrot.slane %v6341, 4
      %v6343 = vrot.slane %v5056, 5
      %v6344 = vsel %vm2884, %v6342, %v6343
      %v6345 = vrot.slane %v6343, 4
      %v6346 = vrot.slane %v5057, 5
      %v6347 = vsel %vm2884, %v6345, %v6346
      %v6348 = vrot.slane %v6228, 5
      %v6349 = vrot.slane %v6348, 4
      %v6350 = vrot.slane %v5059, 5
      %v6351 = vsel %vm2884, %v6349, %v6350
      %v6352 = vrot.slane %v6350, 4
      %v6353 = vrot.slane %v5060, 5
      %v6354 = vsel %vm2884, %v6352, %v6353
      %v6355 = vrot.slane %v6229, 5
      %v6356 = vrot.slane %v6355, 4
      %v6357 = vrot.slane %v5062, 5
      %v6358 = vsel %vm2884, %v6356, %v6357
      %v6359 = vrot.slane %v6357, 4
      %v6360 = vrot.slane %v5063, 5
      %v6361 = vsel %vm2884, %v6359, %v6360
      %v6362 = vrot.slane %v6230, 5
      %v6363 = vrot.slane %v6362, 4
      %v6364 = vrot.slane %v5065, 5
      %v6365 = vsel %vm2884, %v6363, %v6364
      %v6366 = vrot.slane %v6364, 4
      %v6367 = vrot.slane %v5066, 5
      %v6368 = vsel %vm2884, %v6366, %v6367
      %v6369 = vrot.slane %v6231, 5
      %v6370 = vrot.slane %v6369, 4
      %v6371 = vrot.slane %v5068, 5
      %v6372 = vsel %vm2884, %v6370, %v6371
      %v6373 = vrot.slane %v6371, 4
      %v6374 = vrot.slane %v5069, 5
      %v6375 = vsel %vm2884, %v6373, %v6374
      %v6376 = vrot.slane %v6232, 5
      %v6377 = vrot.slane %v6376, 4
      %v6378 = vrot.slane %v5071, 5
      %v6379 = vsel %vm2884, %v6377, %v6378
      %v6380 = vrot.slane %v6378, 4
      %v6381 = vrot.slane %v5072, 5
      %v6382 = vsel %vm2884, %v6380, %v6381
      %v6383 = vrot.slane %v6233, 5
      %v6384 = vrot.slane %v6383, 4
      %v6385 = vrot.slane %v5074, 5
      %v6386 = vsel %vm2884, %v6384, %v6385
      %v6387 = vrot.slane %v6385, 4
      %v6388 = vrot.slane %v5075, 5
      %v6389 = vsel %vm2884, %v6387, %v6388
      %v6390 = vrot.slane %v6234, 5
      %v6391 = vrot.slane %v6390, 4
      %v6392 = vrot.slane %v5077, 5
      %v6393 = vsel %vm2884, %v6391, %v6392
      %v6394 = vrot.slane %v6392, 4
      %v6395 = vrot.slane %v5078, 5
      %v6396 = vsel %vm2884, %v6394, %v6395
      %v6400 = vrot.slane %v6235, 5
      %v6401 = vrot.slane %v6400, 4
      %v6402 = vrot.slane %v5080, 5
      %v6403 = vsel %vm2884, %v6401, %v6402
      %v6404 = vrot.slane %v6402, 4
      %v6405 = vrot.slane %v5081, 5
      %v6406 = vsel %vm2884, %v6404, %v6405
      %v6410 = vrot.slane %v6236, 5
      %v6411 = vrot.slane %v6410, 4
      %v6412 = vrot.slane %v5083, 5
      %v6413 = vsel %vm2884, %v6411, %v6412
      %v6414 = vrot.slane %v6412, 4
      %v6415 = vrot.slane %v5084, 5
      %v6416 = vsel %vm2884, %v6414, %v6415
      %s6417 = scalar_lea.vmem %s3, 24
      %v6418 = vld [vmem:[%s6417] sm:$0xf]
      %v6419 = vunpack.c.l.b16 %v6288
      %v6420 = vunpack.c.l.b16 %v6291
      %v6421 = vunpack.c.l.b16 %v6295
      %v6422 = vunpack.c.l.b16 %v6298
      %v6423 = vunpack.c.l.b16 %v6302
      %v6424 = vunpack.c.l.b16 %v6305
      %v6425 = vunpack.c.l.b16 %v6309
      %v6426 = vunpack.c.l.b16 %v6312
      %v6427 = vunpack.c.l.b16 %v6316
      %v6428 = vunpack.c.l.b16 %v6319
      %v6429 = vunpack.c.l.b16 %v6323
      %v6430 = vunpack.c.l.b16 %v6326
      %v6431 = vunpack.c.l.b16 %v6330
      %v6432 = vunpack.c.l.b16 %v6333
      %v6433 = vunpack.c.l.b16 %v6337
      %v6434 = vunpack.c.l.b16 %v6340
      %v6435 = vunpack.c.l.b16 %v6344
      %v6436 = vunpack.c.l.b16 %v6347
      %v6437 = vunpack.c.l.b16 %v6351
      %v6438 = vunpack.c.l.b16 %v6354
      %v6439 = vunpack.c.l.b16 %v6358
      %v6440 = vunpack.c.l.b16 %v6361
      %v6441 = vunpack.c.l.b16 %v6365
      %v6442 = vunpack.c.l.b16 %v6368
      %v6443 = vunpack.c.l.b16 %v6372
      %v6444 = vunpack.c.l.b16 %v6375
      %v6445 = vunpack.c.l.b16 %v6379
      %v6446 = vunpack.c.l.b16 %v6382
      %v6447 = vunpack.c.l.b16 %v6386
      %v6448 = vunpack.c.l.b16 %v6389
      %v6449 = vunpack.c.l.b16 %v6393
      %v6450 = vunpack.c.l.b16 %v6396
      %v6451 = vpack.c.b16 %v6420, %v6419
      %v6452 = vpack.c.b16 %v6422, %v6421
      %v6453 = vpack.c.b16 %v6424, %v6423
      %v6454 = vpack.c.b16 %v6426, %v6425
      %v6455 = vpack.c.b16 %v6428, %v6427
      %v6456 = vpack.c.b16 %v6430, %v6429
      %v6457 = vpack.c.b16 %v6432, %v6431
      %v6458 = vpack.c.b16 %v6434, %v6433
      %v6459 = vpack.c.b16 %v6436, %v6435
      %v6460 = vpack.c.b16 %v6438, %v6437
      %v6461 = vpack.c.b16 %v6440, %v6439
      %v6462 = vpack.c.b16 %v6442, %v6441
      %v6463 = vpack.c.b16 %v6444, %v6443
      %v6464 = vpack.c.b16 %v6446, %v6445
      %v6465 = vpack.c.b16 %v6448, %v6447
      %v6466 = vpack.c.b16 %v6450, %v6449
      %v6468 = vsel %vm4439, %v6451, 0
      %v6471 = vsel %vm4439, %v6452, 0
      %v6474 = vsel %vm4439, %v6453, 0
      %v6477 = vsel %vm4439, %v6454, 0
      %v6480 = vsel %vm4439, %v6455, 0
      %v6483 = vsel %vm4439, %v6456, 0
      %v6486 = vsel %vm4439, %v6457, 0
      %v6489 = vsel %vm4439, %v6458, 0
      %v6492 = vsel %vm4439, %v6459, 0
      %v6495 = vsel %vm4439, %v6460, 0
      %v6498 = vsel %vm4439, %v6461, 0
      %v6501 = vsel %vm4439, %v6462, 0
      %v6504 = vsel %vm4439, %v6463, 0
      %v6507 = vsel %vm4439, %v6464, 0
      %v6510 = vsel %vm4439, %v6465, 0
      %v6513 = vsel %vm4439, %v6466, 0
      %v6516 = vsel %vm4488, %v6418, 0
      %6518 = vmatprep.subr.bf16.mxu0 0
      %6519 = vmatpush1.bf16.msra.mxu0 %v6516
      %6520 = vmatprep.subr.bf16.mxu0 0
      %6521 = vmatpush1.bf16.msra.mxu0 0
      %6522 = vmatprep.subr.bf16.mxu0 0
      %6523 = vmatpush1.bf16.msra.mxu0 0
      %6524 = vmatprep.subr.bf16.mxu0 0
      %6525 = vmatpush1.bf16.msra.mxu0 0
      %6526 = vmatprep.subr.bf16.mxu0 0
      %6527 = vmatpush1.bf16.msra.mxu0 0
      %6528 = vmatprep.subr.bf16.mxu0 0
      %6529 = vmatpush1.bf16.msra.mxu0 0
      %6530 = vmatprep.subr.bf16.mxu0 0
      %6531 = vmatpush1.bf16.msra.mxu0 0
      %6532 = vmatprep.subr.bf16.mxu0 0
      %6533 = vmatpush1.bf16.msra.mxu0 0
      %6534 = vmatprep.subr.bf16.mxu0 0
      %6535 = vmatpush1.bf16.msra.mxu0 0
      %6536 = vmatprep.subr.bf16.mxu0 0
      %6537 = vmatpush1.bf16.msra.mxu0 0
      %6538 = vmatprep.subr.bf16.mxu0 0
      %6539 = vmatpush1.bf16.msra.mxu0 0
      %6540 = vmatprep.subr.bf16.mxu0 0
      %6541 = vmatpush1.bf16.msra.mxu0 0
      %6542 = vmatprep.subr.bf16.mxu0 0
      %6543 = vmatpush1.bf16.msra.mxu0 0
      %6544 = vmatprep.subr.bf16.mxu0 0
      %6545 = vmatpush1.bf16.msra.mxu0 0
      %6546 = vmatprep.subr.bf16.mxu0 0
      %6547 = vmatpush1.bf16.msra.mxu0 0
      %6548 = vmatprep.subr.bf16.mxu0 0
      %6549 = vmatpush1.bf16.msra.mxu0 0
      %6550 = vmatprep.mubr.bf16.mxu0 0
      %6551 = vmatmul.mubr.bf16.gmra.mrb[0].mxu0 %v6468
      %v6552 = vpop.f32.mrb[0].mxu0
      %v6553 = vadd.f32 0.0, %v6552
      %v6554 = vpop.f32.mrb[0].mxu0
      %v6555 = vpop.f32.mrb[0].mxu0
      %v6556 = vadd.f32 0.0, %v6555
      %v6557 = vpop.f32.mrb[0].mxu0
      %6558 = vmatprep.mubr.bf16.mxu0 0
      %6559 = vmatmul.mubr.bf16.gmra.mrb[0].mxu0 %v6471
      %v6560 = vpop.f32.mrb[0].mxu0
      %v6561 = vadd.f32 0.0, %v6560
      %v6562 = vpop.f32.mrb[0].mxu0
      %v6563 = vpop.f32.mrb[0].mxu0
      %v6564 = vadd.f32 0.0, %v6563
      %v6565 = vpop.f32.mrb[0].mxu0
      %6566 = vmatprep.mubr.bf16.mxu0 0
      %6567 = vmatmul.mubr.bf16.gmra.mrb[0].mxu0 %v6474
      %v6568 = vpop.f32.mrb[0].mxu0
      %v6569 = vadd.f32 0.0, %v6568
      %v6570 = vpop.f32.mrb[0].mxu0
      %v6571 = vpop.f32.mrb[0].mxu0
      %v6572 = vadd.f32 0.0, %v6571
      %v6573 = vpop.f32.mrb[0].mxu0
      %6574 = vmatprep.mubr.bf16.mxu0 0
      %6575 = vmatmul.mubr.bf16.gmra.mrb[0].mxu0 %v6477
      %v6576 = vpop.f32.mrb[0].mxu0
      %v6577 = vadd.f32 0.0, %v6576
      %v6578 = vpop.f32.mrb[0].mxu0
      %v6579 = vpop.f32.mrb[0].mxu0
      %v6580 = vadd.f32 0.0, %v6579
      %v6581 = vpop.f32.mrb[0].mxu0
      %6582 = vmatprep.mubr.bf16.mxu0 0
      %6583 = vmatmul.mubr.bf16.gmra.mrb[0].mxu0 %v6480
      %v6584 = vpop.f32.mrb[0].mxu0
      %v6585 = vadd.f32 0.0, %v6584
      %v6586 = vpop.f32.mrb[0].mxu0
      %v6587 = vpop.f32.mrb[0].mxu0
      %v6588 = vadd.f32 0.0, %v6587
      %v6589 = vpop.f32.mrb[0].mxu0
      %6590 = vmatprep.mubr.bf16.mxu0 0
      %6591 = vmatmul.mubr.bf16.gmra.mrb[0].mxu0 %v6483
      %v6592 = vpop.f32.mrb[0].mxu0
      %v6593 = vadd.f32 0.0, %v6592
      %v6594 = vpop.f32.mrb[0].mxu0
      %v6595 = vpop.f32.mrb[0].mxu0
      %v6596 = vadd.f32 0.0, %v6595
      %v6597 = vpop.f32.mrb[0].mxu0
      %6598 = vmatprep.mubr.bf16.mxu0 0
      %6599 = vmatmul.mubr.bf16.gmra.mrb[0].mxu0 %v6486
      %v6600 = vpop.f32.mrb[0].mxu0
      %v6601 = vadd.f32 0.0, %v6600
      %v6602 = vpop.f32.mrb[0].mxu0
      %v6603 = vpop.f32.mrb[0].mxu0
      %v6604 = vadd.f32 0.0, %v6603
      %v6605 = vpop.f32.mrb[0].mxu0
      %6606 = vmatprep.mubr.bf16.mxu0 0
      %6607 = vmatmul.mubr.bf16.gmra.mrb[0].mxu0 %v6489
      %v6608 = vpop.f32.mrb[0].mxu0
      %v6609 = vadd.f32 0.0, %v6608
      %v6610 = vpop.f32.mrb[0].mxu0
      %v6611 = vpop.f32.mrb[0].mxu0
      %v6612 = vadd.f32 0.0, %v6611
      %v6613 = vpop.f32.mrb[0].mxu0
      %6614 = vmatprep.mubr.bf16.mxu0 0
      %6615 = vmatmul.mubr.bf16.gmra.mrb[0].mxu0 %v6492
      %v6616 = vpop.f32.mrb[0].mxu0
      %v6617 = vadd.f32 0.0, %v6616
      %v6618 = vpop.f32.mrb[0].mxu0
      %v6619 = vpop.f32.mrb[0].mxu0
      %v6620 = vadd.f32 0.0, %v6619
      %v6621 = vpop.f32.mrb[0].mxu0
      %6622 = vmatprep.mubr.bf16.mxu0 0
      %6623 = vmatmul.mubr.bf16.gmra.mrb[0].mxu0 %v6495
      %v6624 = vpop.f32.mrb[0].mxu0
      %v6625 = vadd.f32 0.0, %v6624
      %v6626 = vpop.f32.mrb[0].mxu0
      %v6627 = vpop.f32.mrb[0].mxu0
      %v6628 = vadd.f32 0.0, %v6627
      %v6629 = vpop.f32.mrb[0].mxu0
      %6630 = vmatprep.mubr.bf16.mxu0 0
      %6631 = vmatmul.mubr.bf16.gmra.mrb[0].mxu0 %v6498
      %v6632 = vpop.f32.mrb[0].mxu0
      %v6633 = vadd.f32 0.0, %v6632
      %v6634 = vpop.f32.mrb[0].mxu0
      %v6635 = vpop.f32.mrb[0].mxu0
      %v6636 = vadd.f32 0.0, %v6635
      %v6637 = vpop.f32.mrb[0].mxu0
      %6638 = vmatprep.mubr.bf16.mxu0 0
      %6639 = vmatmul.mubr.bf16.gmra.mrb[0].mxu0 %v6501
      %v6640 = vpop.f32.mrb[0].mxu0
      %v6641 = vadd.f32 0.0, %v6640
      %v6642 = vpop.f32.mrb[0].mxu0
      %v6643 = vpop.f32.mrb[0].mxu0
      %v6644 = vadd.f32 0.0, %v6643
      %v6645 = vpop.f32.mrb[0].mxu0
      %6646 = vmatprep.mubr.bf16.mxu0 0
      %6647 = vmatmul.mubr.bf16.gmra.mrb[0].mxu0 %v6504
      %v6648 = vpop.f32.mrb[0].mxu0
      %v6649 = vadd.f32 0.0, %v6648
      %v6650 = vpop.f32.mrb[0].mxu0
      %v6651 = vpop.f32.mrb[0].mxu0
      %v6652 = vadd.f32 0.0, %v6651
      %v6653 = vpop.f32.mrb[0].mxu0
      %6654 = vmatprep.mubr.bf16.mxu0 0
      %6655 = vmatmul.mubr.bf16.gmra.mrb[0].mxu0 %v6507
      %v6656 = vpop.f32.mrb[0].mxu0
      %v6657 = vadd.f32 0.0, %v6656
      %v6658 = vpop.f32.mrb[0].mxu0
      %v6659 = vpop.f32.mrb[0].mxu0
      %v6660 = vadd.f32 0.0, %v6659
      %v6661 = vpop.f32.mrb[0].mxu0
      %6662 = vmatprep.mubr.bf16.mxu0 0
      %6663 = vmatmul.mubr.bf16.gmra.mrb[0].mxu0 %v6510
      %v6664 = vpop.f32.mrb[0].mxu0
      %v6665 = vadd.f32 0.0, %v6664
      %v6666 = vpop.f32.mrb[0].mxu0
      %v6667 = vpop.f32.mrb[0].mxu0
      %v6668 = vadd.f32 0.0, %v6667
      %v6669 = vpop.f32.mrb[0].mxu0
      %6670 = vmatprep.mubr.bf16.mxu0 0
      %6671 = vmatmul.mubr.bf16.gmra.mrb[0].mxu0 %v6513
      %v6672 = vpop.f32.mrb[0].mxu0
      %v6673 = vadd.f32 0.0, %v6672
      %v6674 = vpop.f32.mrb[0].mxu0
      %v6675 = vpop.f32.mrb[0].mxu0
      %v6676 = vadd.f32 0.0, %v6675
      %v6677 = vpop.f32.mrb[0].mxu0
      %6678 = vdwg.mxu0
      %v6679 = vadd.f32 %v6187, %v6553
      %v6680 = vadd.f32 %v6188, %v6556
      %v6681 = vadd.f32 %v6189, %v6561
      %v6682 = vadd.f32 %v6190, %v6564
      %v6683 = vadd.f32 %v6191, %v6569
      %v6684 = vadd.f32 %v6192, %v6572
      %v6685 = vadd.f32 %v6193, %v6577
      %v6686 = vadd.f32 %v6194, %v6580
      %v6687 = vadd.f32 %v6195, %v6585
      %v6688 = vadd.f32 %v6196, %v6588
      %v6689 = vadd.f32 %v6197, %v6593
      %v6690 = vadd.f32 %v6198, %v6596
      %v6691 = vadd.f32 %v6199, %v6601
      %v6692 = vadd.f32 %v6200, %v6604
      %v6693 = vadd.f32 %v6201, %v6609
      %v6694 = vadd.f32 %v6202, %v6612
      %v6695 = vadd.f32 %v6203, %v6617
      %v6696 = vadd.f32 %v6204, %v6620
      %v6697 = vadd.f32 %v6205, %v6625
      %v6698 = vadd.f32 %v6206, %v6628
      %v6699 = vadd.f32 %v6207, %v6633
      %v6700 = vadd.f32 %v6208, %v6636
      %v6701 = vadd.f32 %v6209, %v6641
      %v6702 = vadd.f32 %v6210, %v6644
      %v6703 = vadd.f32 %v6211, %v6649
      %v6704 = vadd.f32 %v6212, %v6652
      %v6705 = vadd.f32 %v6213, %v6657
      %v6706 = vadd.f32 %v6214, %v6660
      %v6707 = vadd.f32 %v6215, %v6665
      %v6708 = vadd.f32 %v6216, %v6668
      %v6709 = vadd.f32 %v6217, %v6673
      %v6710 = vadd.f32 %v6218, %v6676
      %s6711 = scalar_lea.vmem %s3, 28
      %v6712 = vld [vmem:[%s6711] sm:$0xf]
      %v6713 = vunpack.c.l.b16 %v6403
      %v6714 = vunpack.c.l.b16 %v6406
      %v6715 = vpack.c.b16 %v6714, %v6713
      %v6717 = vsel %vm4439, %v6715, 0
      %v6720 = vsel %vm4488, %v6712, 0
      %6722 = vmatprep.subr.bf16.mxu0 0
      %6723 = vmatpush1.bf16.msra.mxu0 %v6720
      %6724 = vmatprep.subr.bf16.mxu0 0
      %6725 = vmatpush1.bf16.msra.mxu0 0
      %6726 = vmatprep.subr.bf16.mxu0 0
      %6727 = vmatpush1.bf16.msra.mxu0 0
      %6728 = vmatprep.subr.bf16.mxu0 0
      %6729 = vmatpush1.bf16.msra.mxu0 0
      %6730 = vmatprep.subr.bf16.mxu0 0
      %6731 = vmatpush1.bf16.msra.mxu0 0
      %6732 = vmatprep.subr.bf16.mxu0 0
      %6733 = vmatpush1.bf16.msra.mxu0 0
      %6734 = vmatprep.subr.bf16.mxu0 0
      %6735 = vmatpush1.bf16.msra.mxu0 0
      %6736 = vmatprep.subr.bf16.mxu0 0
      %6737 = vmatpush1.bf16.msra.mxu0 0
      %6738 = vmatprep.subr.bf16.mxu0 0
      %6739 = vmatpush1.bf16.msra.mxu0 0
      %6740 = vmatprep.subr.bf16.mxu0 0
      %6741 = vmatpush1.bf16.msra.mxu0 0
      %6742 = vmatprep.subr.bf16.mxu0 0
      %6743 = vmatpush1.bf16.msra.mxu0 0
      %6744 = vmatprep.subr.bf16.mxu0 0
      %6745 = vmatpush1.bf16.msra.mxu0 0
      %6746 = vmatprep.subr.bf16.mxu0 0
      %6747 = vmatpush1.bf16.msra.mxu0 0
      %6748 = vmatprep.subr.bf16.mxu0 0
      %6749 = vmatpush1.bf16.msra.mxu0 0
      %6750 = vmatprep.subr.bf16.mxu0 0
      %6751 = vmatpush1.bf16.msra.mxu0 0
      %6752 = vmatprep.subr.bf16.mxu0 0
      %6753 = vmatpush1.bf16.msra.mxu0 0
      %6754 = vmatprep.mubr.bf16.mxu0 0
      %6755 = vmatmul.mubr.bf16.gmra.mrb[0].mxu0 %v6471
      %v6756 = vpop.f32.mrb[0].mxu0
      %v6757 = vadd.f32 0.0, %v6756
      %v6758 = vpop.f32.mrb[0].mxu0
      %v6759 = vpop.f32.mrb[0].mxu0
      %v6760 = vadd.f32 0.0, %v6759
      %v6761 = vpop.f32.mrb[0].mxu0
      %6762 = vmatprep.mubr.bf16.mxu0 0
      %6763 = vmatmul.mubr.bf16.gmra.mrb[0].mxu0 %v6474
      %v6764 = vpop.f32.mrb[0].mxu0
      %v6765 = vadd.f32 0.0, %v6764
      %v6766 = vpop.f32.mrb[0].mxu0
      %v6767 = vpop.f32.mrb[0].mxu0
      %v6768 = vadd.f32 0.0, %v6767
      %v6769 = vpop.f32.mrb[0].mxu0
      %6770 = vmatprep.mubr.bf16.mxu0 0
      %6771 = vmatmul.mubr.bf16.gmra.mrb[0].mxu0 %v6477
      %v6772 = vpop.f32.mrb[0].mxu0
      %v6773 = vadd.f32 0.0, %v6772
      %v6774 = vpop.f32.mrb[0].mxu0
      %v6775 = vpop.f32.mrb[0].mxu0
      %v6776 = vadd.f32 0.0, %v6775
      %v6777 = vpop.f32.mrb[0].mxu0
      %6778 = vmatprep.mubr.bf16.mxu0 0
      %6779 = vmatmul.mubr.bf16.gmra.mrb[0].mxu0 %v6480
      %v6780 = vpop.f32.mrb[0].mxu0
      %v6781 = vadd.f32 0.0, %v6780
      %v6782 = vpop.f32.mrb[0].mxu0
      %v6783 = vpop.f32.mrb[0].mxu0
      %v6784 = vadd.f32 0.0, %v6783
      %v6785 = vpop.f32.mrb[0].mxu0
      %6786 = vmatprep.mubr.bf16.mxu0 0
      %6787 = vmatmul.mubr.bf16.gmra.mrb[0].mxu0 %v6483
      %v6788 = vpop.f32.mrb[0].mxu0
      %v6789 = vadd.f32 0.0, %v6788
      %v6790 = vpop.f32.mrb[0].mxu0
      %v6791 = vpop.f32.mrb[0].mxu0
      %v6792 = vadd.f32 0.0, %v6791
      %v6793 = vpop.f32.mrb[0].mxu0
      %6794 = vmatprep.mubr.bf16.mxu0 0
      %6795 = vmatmul.mubr.bf16.gmra.mrb[0].mxu0 %v6486
      %v6796 = vpop.f32.mrb[0].mxu0
      %v6797 = vadd.f32 0.0, %v6796
      %v6798 = vpop.f32.mrb[0].mxu0
      %v6799 = vpop.f32.mrb[0].mxu0
      %v6800 = vadd.f32 0.0, %v6799
      %v6801 = vpop.f32.mrb[0].mxu0
      %6802 = vmatprep.mubr.bf16.mxu0 0
      %6803 = vmatmul.mubr.bf16.gmra.mrb[0].mxu0 %v6489
      %v6804 = vpop.f32.mrb[0].mxu0
      %v6805 = vadd.f32 0.0, %v6804
      %v6806 = vpop.f32.mrb[0].mxu0
      %v6807 = vpop.f32.mrb[0].mxu0
      %v6808 = vadd.f32 0.0, %v6807
      %v6809 = vpop.f32.mrb[0].mxu0
      %6810 = vmatprep.mubr.bf16.mxu0 0
      %6811 = vmatmul.mubr.bf16.gmra.mrb[0].mxu0 %v6492
      %v6812 = vpop.f32.mrb[0].mxu0
      %v6813 = vadd.f32 0.0, %v6812
      %v6814 = vpop.f32.mrb[0].mxu0
      %v6815 = vpop.f32.mrb[0].mxu0
      %v6816 = vadd.f32 0.0, %v6815
      %v6817 = vpop.f32.mrb[0].mxu0
      %6818 = vmatprep.mubr.bf16.mxu0 0
      %6819 = vmatmul.mubr.bf16.gmra.mrb[0].mxu0 %v6495
      %v6820 = vpop.f32.mrb[0].mxu0
      %v6821 = vadd.f32 0.0, %v6820
      %v6822 = vpop.f32.mrb[0].mxu0
      %v6823 = vpop.f32.mrb[0].mxu0
      %v6824 = vadd.f32 0.0, %v6823
      %v6825 = vpop.f32.mrb[0].mxu0
      %6826 = vmatprep.mubr.bf16.mxu0 0
      %6827 = vmatmul.mubr.bf16.gmra.mrb[0].mxu0 %v6498
      %v6828 = vpop.f32.mrb[0].mxu0
      %v6829 = vadd.f32 0.0, %v6828
      %v6830 = vpop.f32.mrb[0].mxu0
      %v6831 = vpop.f32.mrb[0].mxu0
      %v6832 = vadd.f32 0.0, %v6831
      %v6833 = vpop.f32.mrb[0].mxu0
      %6834 = vmatprep.mubr.bf16.mxu0 0
      %6835 = vmatmul.mubr.bf16.gmra.mrb[0].mxu0 %v6501
      %v6836 = vpop.f32.mrb[0].mxu0
      %v6837 = vadd.f32 0.0, %v6836
      %v6838 = vpop.f32.mrb[0].mxu0
      %v6839 = vpop.f32.mrb[0].mxu0
      %v6840 = vadd.f32 0.0, %v6839
      %v6841 = vpop.f32.mrb[0].mxu0
      %6842 = vmatprep.mubr.bf16.mxu0 0
      %6843 = vmatmul.mubr.bf16.gmra.mrb[0].mxu0 %v6504
      %v6844 = vpop.f32.mrb[0].mxu0
      %v6845 = vadd.f32 0.0, %v6844
      %v6846 = vpop.f32.mrb[0].mxu0
      %v6847 = vpop.f32.mrb[0].mxu0
      %v6848 = vadd.f32 0.0, %v6847
      %v6849 = vpop.f32.mrb[0].mxu0
      %6850 = vmatprep.mubr.bf16.mxu0 0
      %6851 = vmatmul.mubr.bf16.gmra.mrb[0].mxu0 %v6507
      %v6852 = vpop.f32.mrb[0].mxu0
      %v6853 = vadd.f32 0.0, %v6852
      %v6854 = vpop.f32.mrb[0].mxu0
      %v6855 = vpop.f32.mrb[0].mxu0
      %v6856 = vadd.f32 0.0, %v6855
      %v6857 = vpop.f32.mrb[0].mxu0
      %6858 = vmatprep.mubr.bf16.mxu0 0
      %6859 = vmatmul.mubr.bf16.gmra.mrb[0].mxu0 %v6510
      %v6860 = vpop.f32.mrb[0].mxu0
      %v6861 = vadd.f32 0.0, %v6860
      %v6862 = vpop.f32.mrb[0].mxu0
      %v6863 = vpop.f32.mrb[0].mxu0
      %v6864 = vadd.f32 0.0, %v6863
      %v6865 = vpop.f32.mrb[0].mxu0
      %6866 = vmatprep.mubr.bf16.mxu0 0
      %6867 = vmatmul.mubr.bf16.gmra.mrb[0].mxu0 %v6513
      %v6868 = vpop.f32.mrb[0].mxu0
      %v6869 = vadd.f32 0.0, %v6868
      %v6870 = vpop.f32.mrb[0].mxu0
      %v6871 = vpop.f32.mrb[0].mxu0
      %v6872 = vadd.f32 0.0, %v6871
      %v6873 = vpop.f32.mrb[0].mxu0
      %6874 = vmatprep.mubr.bf16.mxu0 0
      %6875 = vmatmul.mubr.bf16.gmra.mrb[0].mxu0 %v6717
      %v6876 = vpop.f32.mrb[0].mxu0
      %v6877 = vadd.f32 0.0, %v6876
      %v6878 = vpop.f32.mrb[0].mxu0
      %v6879 = vpop.f32.mrb[0].mxu0
      %v6880 = vadd.f32 0.0, %v6879
      %v6881 = vpop.f32.mrb[0].mxu0
      %6882 = vdwg.mxu0
      %v6883 = vadd.f32 %v6679, %v6757
      %v6884 = vadd.f32 %v6680, %v6760
      %v6885 = vadd.f32 %v6681, %v6765
      %v6886 = vadd.f32 %v6682, %v6768
      %v6887 = vadd.f32 %v6683, %v6773
      %v6888 = vadd.f32 %v6684, %v6776
      %v6889 = vadd.f32 %v6685, %v6781
      %v6890 = vadd.f32 %v6686, %v6784
      %v6891 = vadd.f32 %v6687, %v6789
      %v6892 = vadd.f32 %v6688, %v6792
      %v6893 = vadd.f32 %v6689, %v6797
      %v6894 = vadd.f32 %v6690, %v6800
      %v6895 = vadd.f32 %v6691, %v6805
      %v6896 = vadd.f32 %v6692, %v6808
      %v6897 = vadd.f32 %v6693, %v6813
      %v6898 = vadd.f32 %v6694, %v6816
      %v6899 = vadd.f32 %v6695, %v6821
      %v6900 = vadd.f32 %v6696, %v6824
      %v6901 = vadd.f32 %v6697, %v6829
      %v6902 = vadd.f32 %v6698, %v6832
      %v6903 = vadd.f32 %v6699, %v6837
      %v6904 = vadd.f32 %v6700, %v6840
      %v6905 = vadd.f32 %v6701, %v6845
      %v6906 = vadd.f32 %v6702, %v6848
      %v6907 = vadd.f32 %v6703, %v6853
      %v6908 = vadd.f32 %v6704, %v6856
      %v6909 = vadd.f32 %v6705, %v6861
      %v6910 = vadd.f32 %v6706, %v6864
      %v6911 = vadd.f32 %v6707, %v6869
      %v6912 = vadd.f32 %v6708, %v6872
      %v6913 = vadd.f32 %v6709, %v6877
      %v6914 = vadd.f32 %v6710, %v6880
      %s6915 = scalar_lea.vmem %s3, 32
      %v6916 = vld [vmem:[%s6915] sm:$0xf]
      %v6917 = vunpack.c.l.b16 %v6413
      %v6918 = vunpack.c.l.b16 %v6416
      %v6919 = vpack.c.b16 %v6918, %v6917
      %v6921 = vsel %vm4439, %v6919, 0
      %v6924 = vsel %vm4488, %v6916, 0
      %6926 = vmatprep.subr.bf16.mxu0 0
      %6927 = vmatpush1.bf16.msra.mxu0 %v6924
      %6928 = vmatprep.subr.bf16.mxu0 0
      %6929 = vmatpush1.bf16.msra.mxu0 0
      %6930 = vmatprep.subr.bf16.mxu0 0
      %6931 = vmatpush1.bf16.msra.mxu0 0
      %6932 = vmatprep.subr.bf16.mxu0 0
      %6933 = vmatpush1.bf16.msra.mxu0 0
      %6934 = vmatprep.subr.bf16.mxu0 0
      %6935 = vmatpush1.bf16.msra.mxu0 0
      %6936 = vmatprep.subr.bf16.mxu0 0
      %6937 = vmatpush1.bf16.msra.mxu0 0
      %6938 = vmatprep.subr.bf16.mxu0 0
      %6939 = vmatpush1.bf16.msra.mxu0 0
      %6940 = vmatprep.subr.bf16.mxu0 0
      %6941 = vmatpush1.bf16.msra.mxu0 0
      %6942 = vmatprep.subr.bf16.mxu0 0
      %6943 = vmatpush1.bf16.msra.mxu0 0
      %6944 = vmatprep.subr.bf16.mxu0 0
      %6945 = vmatpush1.bf16.msra.mxu0 0
      %6946 = vmatprep.subr.bf16.mxu0 0
      %6947 = vmatpush1.bf16.msra.mxu0 0
      %6948 = vmatprep.subr.bf16.mxu0 0
      %6949 = vmatpush1.bf16.msra.mxu0 0
      %6950 = vmatprep.subr.bf16.mxu0 0
      %6951 = vmatpush1.bf16.msra.mxu0 0
      %6952 = vmatprep.subr.bf16.mxu0 0
      %6953 = vmatpush1.bf16.msra.mxu0 0
      %6954 = vmatprep.subr.bf16.mxu0 0
      %6955 = vmatpush1.bf16.msra.mxu0 0
      %6956 = vmatprep.subr.bf16.mxu0 0
      %6957 = vmatpush1.bf16.msra.mxu0 0
      %6958 = vmatprep.mubr.bf16.mxu0 0
      %6959 = vmatmul.mubr.bf16.gmra.mrb[0].mxu0 %v6474
      %v6960 = vpop.f32.mrb[0].mxu0
      %v6961 = vadd.f32 0.0, %v6960
      %v6962 = vpop.f32.mrb[0].mxu0
      %v6963 = vpop.f32.mrb[0].mxu0
      %v6964 = vadd.f32 0.0, %v6963
      %v6965 = vpop.f32.mrb[0].mxu0
      %6966 = vmatprep.mubr.bf16.mxu0 0
      %6967 = vmatmul.mubr.bf16.gmra.mrb[0].mxu0 %v6477
      %v6968 = vpop.f32.mrb[0].mxu0
      %v6969 = vadd.f32 0.0, %v6968
      %v6970 = vpop.f32.mrb[0].mxu0
      %v6971 = vpop.f32.mrb[0].mxu0
      %v6972 = vadd.f32 0.0, %v6971
      %v6973 = vpop.f32.mrb[0].mxu0
      %6974 = vmatprep.mubr.bf16.mxu0 0
      %6975 = vmatmul.mubr.bf16.gmra.mrb[0].mxu0 %v6480
      %v6976 = vpop.f32.mrb[0].mxu0
      %v6977 = vadd.f32 0.0, %v6976
      %v6978 = vpop.f32.mrb[0].mxu0
      %v6979 = vpop.f32.mrb[0].mxu0
      %v6980 = vadd.f32 0.0, %v6979
      %v6981 = vpop.f32.mrb[0].mxu0
      %6982 = vmatprep.mubr.bf16.mxu0 0
      %6983 = vmatmul.mubr.bf16.gmra.mrb[0].mxu0 %v6483
      %v6984 = vpop.f32.mrb[0].mxu0
      %v6985 = vadd.f32 0.0, %v6984
      %v6986 = vpop.f32.mrb[0].mxu0
      %v6987 = vpop.f32.mrb[0].mxu0
      %v6988 = vadd.f32 0.0, %v6987
      %v6989 = vpop.f32.mrb[0].mxu0
      %6990 = vmatprep.mubr.bf16.mxu0 0
      %6991 = vmatmul.mubr.bf16.gmra.mrb[0].mxu0 %v6486
      %v6992 = vpop.f32.mrb[0].mxu0
      %v6993 = vadd.f32 0.0, %v6992
      %v6994 = vpop.f32.mrb[0].mxu0
      %v6995 = vpop.f32.mrb[0].mxu0
      %v6996 = vadd.f32 0.0, %v6995
      %v6997 = vpop.f32.mrb[0].mxu0
      %6998 = vmatprep.mubr.bf16.mxu0 0
      %6999 = vmatmul.mubr.bf16.gmra.mrb[0].mxu0 %v6489
      %v7000 = vpop.f32.mrb[0].mxu0
      %v7001 = vadd.f32 0.0, %v7000
      %v7002 = vpop.f32.mrb[0].mxu0
      %v7003 = vpop.f32.mrb[0].mxu0
      %v7004 = vadd.f32 0.0, %v7003
      %v7005 = vpop.f32.mrb[0].mxu0
      %7006 = vmatprep.mubr.bf16.mxu0 0
      %7007 = vmatmul.mubr.bf16.gmra.mrb[0].mxu0 %v6492
      %v7008 = vpop.f32.mrb[0].mxu0
      %v7009 = vadd.f32 0.0, %v7008
      %v7010 = vpop.f32.mrb[0].mxu0
      %v7011 = vpop.f32.mrb[0].mxu0
      %v7012 = vadd.f32 0.0, %v7011
      %v7013 = vpop.f32.mrb[0].mxu0
      %7014 = vmatprep.mubr.bf16.mxu0 0
      %7015 = vmatmul.mubr.bf16.gmra.mrb[0].mxu0 %v6495
      %v7016 = vpop.f32.mrb[0].mxu0
      %v7017 = vadd.f32 0.0, %v7016
      %v7018 = vpop.f32.mrb[0].mxu0
      %v7019 = vpop.f32.mrb[0].mxu0
      %v7020 = vadd.f32 0.0, %v7019
      %v7021 = vpop.f32.mrb[0].mxu0
      %7022 = vmatprep.mubr.bf16.mxu0 0
      %7023 = vmatmul.mubr.bf16.gmra.mrb[0].mxu0 %v6498
      %v7024 = vpop.f32.mrb[0].mxu0
      %v7025 = vadd.f32 0.0, %v7024
      %v7026 = vpop.f32.mrb[0].mxu0
      %v7027 = vpop.f32.mrb[0].mxu0
      %v7028 = vadd.f32 0.0, %v7027
      %v7029 = vpop.f32.mrb[0].mxu0
      %7030 = vmatprep.mubr.bf16.mxu0 0
      %7031 = vmatmul.mubr.bf16.gmra.mrb[0].mxu0 %v6501
      %v7032 = vpop.f32.mrb[0].mxu0
      %v7033 = vadd.f32 0.0, %v7032
      %v7034 = vpop.f32.mrb[0].mxu0
      %v7035 = vpop.f32.mrb[0].mxu0
      %v7036 = vadd.f32 0.0, %v7035
      %v7037 = vpop.f32.mrb[0].mxu0
      %7038 = vmatprep.mubr.bf16.mxu0 0
      %7039 = vmatmul.mubr.bf16.gmra.mrb[0].mxu0 %v6504
      %v7040 = vpop.f32.mrb[0].mxu0
      %v7041 = vadd.f32 0.0, %v7040
      %v7042 = vpop.f32.mrb[0].mxu0
      %v7043 = vpop.f32.mrb[0].mxu0
      %v7044 = vadd.f32 0.0, %v7043
      %v7045 = vpop.f32.mrb[0].mxu0
      %7046 = vmatprep.mubr.bf16.mxu0 0
      %7047 = vmatmul.mubr.bf16.gmra.mrb[0].mxu0 %v6507
      %v7048 = vpop.f32.mrb[0].mxu0
      %v7049 = vadd.f32 0.0, %v7048
      %v7050 = vpop.f32.mrb[0].mxu0
      %v7051 = vpop.f32.mrb[0].mxu0
      %v7052 = vadd.f32 0.0, %v7051
      %v7053 = vpop.f32.mrb[0].mxu0
      %7054 = vmatprep.mubr.bf16.mxu0 0
      %7055 = vmatmul.mubr.bf16.gmra.mrb[0].mxu0 %v6510
      %v7056 = vpop.f32.mrb[0].mxu0
      %v7057 = vadd.f32 0.0, %v7056
      %v7058 = vpop.f32.mrb[0].mxu0
      %v7059 = vpop.f32.mrb[0].mxu0
      %v7060 = vadd.f32 0.0, %v7059
      %v7061 = vpop.f32.mrb[0].mxu0
      %7062 = vmatprep.mubr.bf16.mxu0 0
      %7063 = vmatmul.mubr.bf16.gmra.mrb[0].mxu0 %v6513
      %v7064 = vpop.f32.mrb[0].mxu0
      %v7065 = vadd.f32 0.0, %v7064
      %v7066 = vpop.f32.mrb[0].mxu0
      %v7067 = vpop.f32.mrb[0].mxu0
      %v7068 = vadd.f32 0.0, %v7067
      %v7069 = vpop.f32.mrb[0].mxu0
      %7070 = vmatprep.mubr.bf16.mxu0 0
      %7071 = vmatmul.mubr.bf16.gmra.mrb[0].mxu0 %v6717
      %v7072 = vpop.f32.mrb[0].mxu0
      %v7073 = vadd.f32 0.0, %v7072
      %v7074 = vpop.f32.mrb[0].mxu0
      %v7075 = vpop.f32.mrb[0].mxu0
      %v7076 = vadd.f32 0.0, %v7075
      %v7077 = vpop.f32.mrb[0].mxu0
      %7078 = vmatprep.mubr.bf16.mxu0 0
      %7079 = vmatmul.mubr.bf16.gmra.mrb[0].mxu0 %v6921
      %v7080 = vpop.f32.mrb[0].mxu0
      %v7081 = vadd.f32 0.0, %v7080
      %v7082 = vpop.f32.mrb[0].mxu0
      %v7083 = vpop.f32.mrb[0].mxu0
      %v7084 = vadd.f32 0.0, %v7083
      %v7085 = vpop.f32.mrb[0].mxu0
      %7086 = vdwg.mxu0
      %v7087 = vadd.f32 %v6883, %v6961
      %v7088 = vadd.f32 %v6884, %v6964
      %v7089 = vadd.f32 %v6885, %v6969
      %v7090 = vadd.f32 %v6886, %v6972
      %v7091 = vadd.f32 %v6887, %v6977
      %v7092 = vadd.f32 %v6888, %v6980
      %v7093 = vadd.f32 %v6889, %v6985
      %v7094 = vadd.f32 %v6890, %v6988
      %v7095 = vadd.f32 %v6891, %v6993
      %v7096 = vadd.f32 %v6892, %v6996
      %v7097 = vadd.f32 %v6893, %v7001
      %v7098 = vadd.f32 %v6894, %v7004
      %v7099 = vadd.f32 %v6895, %v7009
      %v7100 = vadd.f32 %v6896, %v7012
      %v7101 = vadd.f32 %v6897, %v7017
      %v7102 = vadd.f32 %v6898, %v7020
      %v7103 = vadd.f32 %v6899, %v7025
      %v7104 = vadd.f32 %v6900, %v7028
      %v7105 = vadd.f32 %v6901, %v7033
      %v7106 = vadd.f32 %v6902, %v7036
      %v7107 = vadd.f32 %v6903, %v7041
      %v7108 = vadd.f32 %v6904, %v7044
      %v7109 = vadd.f32 %v6905, %v7049
      %v7110 = vadd.f32 %v6906, %v7052
      %v7111 = vadd.f32 %v6907, %v7057
      %v7112 = vadd.f32 %v6908, %v7060
      %v7113 = vadd.f32 %v6909, %v7065
      %v7114 = vadd.f32 %v6910, %v7068
      %v7115 = vadd.f32 %v6911, %v7073
      %v7116 = vadd.f32 %v6912, %v7076
      %v7117 = vadd.f32 %v6913, %v7081
      %v7118 = vadd.f32 %v6914, %v7084
      %v7119 = vld [vmem:[%s4] sm:$0x1]
      %v7121 = vlaneseq
      %v7122 = vshrl.u32 %v7121, 7
      %v7123 = vsub.s32 0, %v7122
      %v7124 = vrot.slane %v7119, %v7123
      %v7126 = vadd.f32 %v7087, %v7124
      %v7127 = vadd.f32 %v7088, %v7124
      %v7128 = vadd.f32 %v7089, %v7124
      %v7129 = vadd.f32 %v7090, %v7124
      %v7130 = vadd.f32 %v7091, %v7124
      %v7131 = vadd.f32 %v7092, %v7124
      %v7132 = vadd.f32 %v7093, %v7124
      %v7133 = vadd.f32 %v7094, %v7124
      %v7134 = vadd.f32 %v7095, %v7124
      %v7135 = vadd.f32 %v7096, %v7124
      %v7136 = vadd.f32 %v7097, %v7124
      %v7137 = vadd.f32 %v7098, %v7124
      %v7138 = vadd.f32 %v7099, %v7124
      %v7139 = vadd.f32 %v7100, %v7124
      %v7140 = vadd.f32 %v7101, %v7124
      %v7141 = vadd.f32 %v7102, %v7124
      %v7142 = vadd.f32 %v7103, %v7124
      %v7143 = vadd.f32 %v7104, %v7124
      %v7144 = vadd.f32 %v7105, %v7124
      %v7145 = vadd.f32 %v7106, %v7124
      %v7146 = vadd.f32 %v7107, %v7124
      %v7147 = vadd.f32 %v7108, %v7124
      %v7148 = vadd.f32 %v7109, %v7124
      %v7149 = vadd.f32 %v7110, %v7124
      %v7150 = vadd.f32 %v7111, %v7124
      %v7151 = vadd.f32 %v7112, %v7124
      %v7152 = vadd.f32 %v7113, %v7124
      %v7153 = vadd.f32 %v7114, %v7124
      %v7154 = vadd.f32 %v7115, %v7124
      %v7155 = vadd.f32 %v7116, %v7124
      %v7156 = vadd.f32 %v7117, %v7124
      %v7157 = vadd.f32 %v7118, %v7124
      %v7158 = vmax.f32 %v7126, 0.0
      %v7159 = vmax.f32 %v7127, 0.0
      %v7160 = vmax.f32 %v7128, 0.0
      %v7161 = vmax.f32 %v7129, 0.0
      %v7162 = vmax.f32 %v7130, 0.0
      %v7163 = vmax.f32 %v7131, 0.0
      %v7164 = vmax.f32 %v7132, 0.0
      %v7165 = vmax.f32 %v7133, 0.0
      %v7166 = vmax.f32 %v7134, 0.0
      %v7167 = vmax.f32 %v7135, 0.0
      %v7168 = vmax.f32 %v7136, 0.0
      %v7169 = vmax.f32 %v7137, 0.0
      %v7170 = vmax.f32 %v7138, 0.0
      %v7171 = vmax.f32 %v7139, 0.0
      %v7172 = vmax.f32 %v7140, 0.0
      %v7173 = vmax.f32 %v7141, 0.0
      %v7174 = vmax.f32 %v7142, 0.0
      %v7175 = vmax.f32 %v7143, 0.0
      %v7176 = vmax.f32 %v7144, 0.0
      %v7177 = vmax.f32 %v7145, 0.0
      %v7178 = vmax.f32 %v7146, 0.0
      %v7179 = vmax.f32 %v7147, 0.0
      %v7180 = vmax.f32 %v7148, 0.0
      %v7181 = vmax.f32 %v7149, 0.0
      %v7182 = vmax.f32 %v7150, 0.0
      %v7183 = vmax.f32 %v7151, 0.0
      %v7184 = vmax.f32 %v7152, 0.0
      %v7185 = vmax.f32 %v7153, 0.0
      %v7186 = vmax.f32 %v7154, 0.0
      %v7187 = vmax.f32 %v7155, 0.0
      %v7188 = vmax.f32 %v7156, 0.0
      %v7189 = vmax.f32 %v7157, 0.0
      %7190 = vst.msk [vmem:[%s224] sm:$0xff] %vm4439, %v7158
      %7191 = vst.msk [vmem:[%s224 + $0x8] sm:$0xff] %vm4439, %v7159
      %7192 = vst.msk [vmem:[%s224 + $0x10] sm:$0xff] %vm4439, %v7160
      %7193 = vst.msk [vmem:[%s224 + $0x18] sm:$0xff] %vm4439, %v7161
      %7194 = vst.msk [vmem:[%s224 + $0x20] sm:$0xff] %vm4439, %v7162
      %7195 = vst.msk [vmem:[%s224 + $0x28] sm:$0xff] %vm4439, %v7163
      %7196 = vst.msk [vmem:[%s224 + $0x30] sm:$0xff] %vm4439, %v7164
      %7197 = vst.msk [vmem:[%s224 + $0x38] sm:$0xff] %vm4439, %v7165
      %7198 = vst.msk [vmem:[%s224 + $0x40] sm:$0xff] %vm4439, %v7166
      %7199 = vst.msk [vmem:[%s224 + $0x48] sm:$0xff] %vm4439, %v7167
      %7200 = vst.msk [vmem:[%s224 + $0x50] sm:$0xff] %vm4439, %v7168
      %7201 = vst.msk [vmem:[%s224 + $0x58] sm:$0xff] %vm4439, %v7169
      %7202 = vst.msk [vmem:[%s224 + $0x60] sm:$0xff] %vm4439, %v7170
      %7203 = vst.msk [vmem:[%s224 + $0x68] sm:$0xff] %vm4439, %v7171
      %7204 = vst.msk [vmem:[%s224 + $0x70] sm:$0xff] %vm4439, %v7172
      %7205 = vst.msk [vmem:[%s224 + $0x78] sm:$0xff] %vm4439, %v7173
      %7206 = vst.msk [vmem:[%s224 + $0x80] sm:$0xff] %vm4439, %v7174
      %7207 = vst.msk [vmem:[%s224 + $0x88] sm:$0xff] %vm4439, %v7175
      %7208 = vst.msk [vmem:[%s224 + $0x90] sm:$0xff] %vm4439, %v7176
      %7209 = vst.msk [vmem:[%s224 + $0x98] sm:$0xff] %vm4439, %v7177
      %7210 = vst.msk [vmem:[%s224 + $0xa0] sm:$0xff] %vm4439, %v7178
      %7211 = vst.msk [vmem:[%s224 + $0xa8] sm:$0xff] %vm4439, %v7179
      %7212 = vst.msk [vmem:[%s224 + $0xb0] sm:$0xff] %vm4439, %v7180
      %7213 = vst.msk [vmem:[%s224 + $0xb8] sm:$0xff] %vm4439, %v7181
      %7214 = vst.msk [vmem:[%s224 + $0xc0] sm:$0xff] %vm4439, %v7182
      %7215 = vst.msk [vmem:[%s224 + $0xc8] sm:$0xff] %vm4439, %v7183
      %7216 = vst.msk [vmem:[%s224 + $0xd0] sm:$0xff] %vm4439, %v7184
      %7217 = vst.msk [vmem:[%s224 + $0xd8] sm:$0xff] %vm4439, %v7185
      %7218 = vst.msk [vmem:[%s224 + $0xe0] sm:$0xff] %vm4439, %v7186
      %7219 = vst.msk [vmem:[%s224 + $0xe8] sm:$0xff] %vm4439, %v7187
      %7220 = vst.msk [vmem:[%s224 + $0xf0] sm:$0xff] %vm4439, %v7188
      %7221 = vst.msk [vmem:[%s224 + $0xf8] sm:$0xff] %vm4439, %v7189
      %p7222 = scmp.lt.s32.totalorder %s16, 1
      %s7223 = scalar_select %p7222, %s16, 1
      %s7224 = smul.addr %s7223, 32
      %s7225 = smul.addr %s7224, 8
      %s7226 = scalar_lea.vmem %s5, %s7225
      // Predicated region
      $region41: #{double_conv.1} parent=39 // pred_check
        %p7227 = pneg %p144
      $region42: #{double_conv.1} parent=39 // pred_check_branch
        %7229 = sbr.rel (%p7227) target = $region44
      $region43: #{double_conv.1} parent=39 // pred_region
        _
      $region44: #{double_conv.1} parent=39 // pred_fallthru
        _
    $region40: #{double_conv.1} parent=5 // pred_fallthru
      _
    %p7230 = scmp.le.s32.totalorder 2, %s11
    // Predicated region
    $region45: #{double_conv.1} parent=5 // pred_check
      %p7231 = pneg %p7230
    $region46: #{double_conv.1} parent=5 // pred_check_branch
      %7233 = sbr.rel (%p7231) target = $region48
    $region47: #{double_conv.1} parent=5 // pred_region
      %s7234 = ssub.s32 %s11, 2
      // Predicated region
      $region49: #{double_conv.1} parent=47 // pred_check
        %p7235 = pneg %p150
      $region50: #{double_conv.1} parent=47 // pred_check_branch
        %7237 = sbr.rel (%p7235) target = $region52
      $region51: #{double_conv.1} parent=47 // pred_region
        %p7238 = scmp.lt.s32.totalorder %s17, 1
        %s7239 = scalar_select %p7238, %s17, 1
        %s7240 = smul.addr %s7239, 32
        %s7241 = smul.addr %s7240, 8
        %s7242 = scalar_lea.vmem %s5, %s7241
      $region52: #{double_conv.1} parent=47 // pred_fallthru
        _
    $region48: #{double_conv.1} parent=5 // pred_fallthru
      _
  $region6: #{double_conv.1} parent=0 // loop_footer
    %s15 = sadd.s32 1, %s11
  $region7: #{double_conv.1} parent=0 // loop_footer_branch
    %10 = sbr.rel target = $region3
  $region8: #{double_conv.1} parent=0 // loop_exit
    _

</llo_original>
